<compile_context>
chip_gen: v5e
topology: v5e:2x2
jax: 0.10.0
libtpu: 0.0.40
codegen_flags: <defaults>
</compile_context>

<pallas_src>
import functools

import jax
import jax.numpy as jnp
from jax import lax
from jax.experimental import pallas as pl
from jax.experimental.pallas import tpu as pltpu

CONTEXT_SIZE = 64
NHEAD = 6
HEAD_SIZE = 32
N_EMBD = NHEAD * HEAD_SIZE          # 192


def _mha_kernel(x_ref, w_ref, o_ref, proj_ref, *, use_bf16):
    """One batch block, all heads fused.

    x_ref    : (Bblk, T, C)   input block
    w_ref    : (C, 3*N)       fused head-major [K_h*scale | Q_h | V_h] weights,
                              resident in VMEM across the whole grid
    o_ref    : (Bblk, T, N)   lane-dense output (heads concatenated on last dim)
    proj_ref : (Bblk*T, 3*N)  VMEM scratch staging the fused QKV projection
    """
    bblk, t, c = x_ref.shape
    hs = HEAD_SIZE

    # Fused QKV projection for all heads / all batch elements in this block.
    # M = Bblk*T (>= 256 for Bblk >= 4) keeps the MXU rows full.
    x2d = x_ref[...].reshape(bblk * t, c)
    w = w_ref[...]
    if use_bf16:
        x2d = x2d.astype(jnp.bfloat16)
        w = w.astype(jnp.bfloat16)
    proj_ref[...] = jnp.dot(x2d, w, preferred_element_type=jnp.float32)

    # Causal mask built once per grid step, shared by every head / batch elem.
    row = lax.broadcasted_iota(jnp.int32, (t, t), 0)
    col = lax.broadcasted_iota(jnp.int32, (t, t), 1)
    causal = col <= row
    neg_inf = jnp.float32(-jnp.inf)   # safe: every row keeps its diagonal

    outs = []
    for h in range(NHEAD):            # static unroll; 6 heads
        base = h * 3 * hs
        # One contiguous 96-lane read per head (K_h | Q_h | V_h), then split.
        blk = proj_ref[:, base:base + 3 * hs].reshape(bblk, t, 3 * hs)
        k_h = blk[..., 0:hs]                 # already scaled by C**-0.5
        q_h = blk[..., hs:2 * hs]
        v_h = blk[..., 2 * hs:3 * hs]
        if use_bf16:
            k_h = k_h.astype(jnp.bfloat16)
            q_h = q_h.astype(jnp.bfloat16)
            v_h = v_h.astype(jnp.bfloat16)

        # wei[b, i, j] = kw[b, i] . qw[b, j]  (kw @ qw^T) -- contract the last
        # dims directly with a batch dim, no explicit transpose.
        wei = lax.dot_general(
            k_h, q_h, (((2,), (2,)), ((0,), (0,))),
            preferred_element_type=jnp.float32)            # (Bblk, T, T)
        wei = jnp.where(causal, wei, neg_inf)

        # Softmax over the last axis (f32 accumulation throughout).
        m = jnp.max(wei, axis=-1, keepdims=True)
        p = jnp.exp(wei - m)
        denom = jnp.sum(p, axis=-1, keepdims=True)
        p = p * pl.reciprocal(denom, approx=True)

        if use_bf16:
            p = p.astype(jnp.bfloat16)
        outs.append(lax.dot_general(
            p, v_h, (((2,), (1,)), ((0,), (0,))),
            preferred_element_type=jnp.float32))           # (Bblk, T, hs)

    # Assemble the concatenated-head result in vregs and write the output
    # once, lane-dense (192 lanes), instead of six masked 32-lane stores.
    o_ref[...] = jnp.concatenate(outs, axis=-1).astype(o_ref.dtype)


def multihead_attention(x, w_qkv, *, block_b=None, use_bf16=False):
    """x: (B, T, C) f32; w_qkv: (C, 3*nhead*head_size) fused head-major weights.

    Returns (B, T, nhead*head_size), matching MultiheadAttention.forward.
    """
    B, T, C = x.shape
    three_n = w_qkv.shape[1]
    N = three_n // 3
    assert T == CONTEXT_SIZE, "tril buffer semantics require T == context_size"
    assert C == N_EMBD and N == NHEAD * HEAD_SIZE

    if block_b is None:
        # Bblk = 4 -> M = Bblk*T = 256 fills the v6e/v7x MXU rows (2x v5e's
        # 128 rows) while keeping the grid as long as possible so the pipeline
        # has steps to overlap and v7x's two TensorCores each get >= 1 step.
        # Working set per step is < 3 MB, far below any VMEM limit on any
        # generation, so tile sizing is driven purely by MXU shape.
        for cand in (4, 2, 1):
            if B % cand == 0:
                block_b = cand
                break
    assert B % block_b == 0, (B, block_b)

    kernel = functools.partial(_mha_kernel, use_bf16=use_bf16)
    return pl.pallas_call(
        kernel,
        out_shape=jax.ShapeDtypeStruct((B, T, N), x.dtype),
        grid_spec=pltpu.PrefetchScalarGridSpec(
            num_scalar_prefetch=0,
            grid=(B // block_b,),
            in_specs=[
                pl.BlockSpec((block_b, T, C), lambda b: (b, 0, 0)),
                # Fused weight, constant block index -> DMA'd once, resident
                # in VMEM across the whole grid.
                pl.BlockSpec((C, three_n), lambda b: (0, 0)),
            ],
            out_specs=pl.BlockSpec((block_b, T, N), lambda b: (b, 0, 0)),
            scratch_shapes=[pltpu.VMEM((block_b * T, three_n), jnp.float32)],
        ),
        compiler_params=pltpu.CompilerParams(
            # Batch-block axis is parallel -> shardable over v7x's 2 cores.
            dimension_semantics=("parallel",),
        ),
    )(x, w_qkv)


def _init_params(key):
    """Deterministic init mimicking nn.Linear(n_embd, head_size, bias=False).

    Per-head weights stored pre-transposed as (nhead, C, head_size) so that
    x @ W[h] == Linear(x).
    """
    bound = 1.0 / jnp.sqrt(jnp.float32(N_EMBD))
    kk, kq, kv = jax.random.split(key, 3)
    shape = (NHEAD, N_EMBD, HEAD_SIZE)
    wk = jax.random.uniform(kk, shape, jnp.float32, minval=-bound, maxval=bound)
    wq = jax.random.uniform(kq, shape, jnp.float32, minval=-bound, maxval=bound)
    wv = jax.random.uniform(kv, shape, jnp.float32, minval=-bound, maxval=bound)
    return wk, wq, wv


def _fuse_qkv_weights(wk, wq, wv):
    """(nhead, C, hs) x3 -> (C, nhead*3*hs), head-major [K_h*scale | Q_h | V_h].

    The module's score scale C**-0.5 (C = n_embd = 192, NOT head_size -- the
    reference's quirk) is folded into the K columns; this is a one-time weight
    transform at init, not a per-call wrapper op.
    """
    nhead, C, hs = wk.shape
    scale = jnp.float32(N_EMBD) ** jnp.float32(-0.5)
    w = jnp.stack([wk * scale, wq, wv], axis=1)       # (nhead, 3, C, hs)
    w = jnp.transpose(w, (2, 0, 1, 3))                # (C, nhead, 3, hs)
    return w.reshape(C, nhead * 3 * hs)


def _reference(x, wk, wq, wv):
    """Pure-JAX reference of the PyTorch forward, for a sanity check."""
    B, T, C = x.shape
    outs = []
    for h in range(NHEAD):
        kw = x @ wk[h]
        qw = x @ wq[h]
        vw = x @ wv[h]
        wei = (kw @ jnp.swapaxes(qw, -2, -1)) * (C ** -0.5)
        mask = jnp.tril(jnp.ones((T, T), bool))
        wei = jnp.where(mask, wei, -jnp.inf)
        wei = jax.nn.softmax(wei, axis=-1)
        outs.append(wei @ vw)
    return jnp.concatenate(outs, axis=-1)


if __name__ == "__main__":
    key = jax.random.PRNGKey(0)
    kx, kp = jax.random.split(key)

    # Small demo shapes: T must equal context_size (tril buffer semantics);
    # B=16 with Bblk=4 gives a 4-step grid (>= 2 steps per v7x TensorCore).
    B, T, C = 16, CONTEXT_SIZE, N_EMBD
    x = jax.random.normal(kx, (B, T, C), jnp.float32)
    wk, wq, wv = _init_params(kp)
    w_qkv = _fuse_qkv_weights(wk, wq, wv)

    y = multihead_attention(x, w_qkv)
    jax.block_until_ready(y)

    y_ref = _reference(x, wk, wq, wv)
    assert y.shape == (B, T, N_EMBD), y.shape
    # Tolerance accounts for the EUP approximate reciprocal in the softmax
    # normalization; structural errors would be orders of magnitude larger.
    err = float(jnp.max(jnp.abs(y - y_ref)))
    assert jnp.allclose(y, y_ref, atol=2e-3, rtol=2e-3), err

    print("KERNEL_OK")
</pallas_src>

<mosaic_0001>
module attributes {stable_mosaic.version = 11 : i64} {
  func.func @_mha_kernel(%arg0: i32, %arg1: memref<4x64x192xf32, #tpu.memory_space<vmem>>, %arg2: memref<192x576xf32, #tpu.memory_space<vmem>>, %arg3: memref<4x64x192xf32, #tpu.memory_space<vmem>>, %arg4: memref<256x576xf32, #tpu.memory_space<vmem>>) attributes {dimension_semantics = [#tpu.dimension_semantics<parallel>], iteration_bounds = array<i64: 4>, scalar_prefetch = 0 : i64, scratch_operands = 1 : i64, tpu.core_type = #tpu.core_type<tc>, window_params = [{transform_indices = @transform_0, window_bounds = array<i64: 4, 64, 192>}, {pipeline_mode = #tpu.pipeline_mode<synchronous>, transform_indices = @transform_1, window_bounds = array<i64: 192, 576>}, {transform_indices = @transform_2, window_bounds = array<i64: 4, 64, 192>}]} {
    %c0 = arith.constant 0 : index
    %c0_0 = arith.constant 0 : index
    %c0_1 = arith.constant 0 : index
    %0 = vector.load %arg1[%c0, %c0_0, %c0_1] : memref<4x64x192xf32, #tpu.memory_space<vmem>>, vector<4x64x192xf32>
    %1 = vector.shape_cast %0 : vector<4x64x192xf32> to vector<256x192xf32>
    %c0_2 = arith.constant 0 : index
    %c0_3 = arith.constant 0 : index
    %2 = vector.load %arg2[%c0_2, %c0_3] : memref<192x576xf32, #tpu.memory_space<vmem>>, vector<192x576xf32>
    %cst = arith.constant dense<0.000000e+00> : vector<256x576xf32>
    %3 = tpu.matmul %1, %2, %cst {dimension_numbers = #tpu.dot_dimension_numbers<[1], [0], [0], [1], [0, 0, 1, 1], [], []>} : vector<256x192xf32>, vector<192x576xf32>, vector<256x576xf32> -> vector<256x576xf32>
    %c0_4 = arith.constant 0 : index
    %c0_5 = arith.constant 0 : index
    %4 = vector.load %arg4[%c0_4, %c0_5] : memref<256x576xf32, #tpu.memory_space<vmem>>, vector<256x576xf32>
    tpu.vector_store %arg4[%c0_4, %c0_5], %3 {strides = array<i32>} : memref<256x576xf32, #tpu.memory_space<vmem>>, vector<256x576xf32>,
    %5 = tpu.iota {dimensions = array<i32: 0>} : vector<64x64xi32>
    %6 = tpu.iota {dimensions = array<i32: 1>} : vector<64x64xi32>
    %7 = arith.cmpi sle, %6, %5 : vector<64x64xi32>
    %c0_6 = arith.constant 0 : index
    %c0_7 = arith.constant 0 : index
    %8 = vector.load %arg4[%c0_6, %c0_7] : memref<256x576xf32, #tpu.memory_space<vmem>>, vector<256x96xf32>
    %9 = vector.shape_cast %8 : vector<256x96xf32> to vector<4x64x96xf32>
    %10 = vector.extract_strided_slice %9 {offsets = [0, 0, 0], sizes = [4, 64, 32], strides = [1, 1, 1]} : vector<4x64x96xf32> to vector<4x64x32xf32>
    %11 = vector.extract_strided_slice %9 {offsets = [0, 0, 32], sizes = [4, 64, 32], strides = [1, 1, 1]} : vector<4x64x96xf32> to vector<4x64x32xf32>
    %12 = vector.extract_strided_slice %9 {offsets = [0, 0, 64], sizes = [4, 64, 32], strides = [1, 1, 1]} : vector<4x64x96xf32> to vector<4x64x32xf32>
    %cst_8 = arith.constant dense<0.000000e+00> : vector<4x64x64xf32>
    %13 = tpu.matmul %10, %11, %cst_8 {dimension_numbers = #tpu.dot_dimension_numbers<[2], [2], [1], [1], [0, 0, 0, 1, 1, 1], [0], [0]>} : vector<4x64x32xf32>, vector<4x64x32xf32>, vector<4x64x64xf32> -> vector<4x64x64xf32>
    %cst_9 = arith.constant 0xFF800000 : f32
    %14 = vector.shape_cast %7 : vector<64x64xi1> to vector<1x64x64xi1>
    %15 = vector.broadcast %14 : vector<1x64x64xi1> to vector<4x64x64xi1>
    %16 = vector.broadcast %cst_9 : f32 to vector<4x64x64xf32>
    %17 = arith.select %15, %13, %16 : vector<4x64x64xi1>, vector<4x64x64xf32>
    %cst_10 = arith.constant dense<0xFF800000> : vector<4x64xf32>
    %18 = vector.multi_reduction <maximumf>, %17, %cst_10 [2] : vector<4x64x64xf32> to vector<4x64xf32>
    %19 = vector.shape_cast %18 : vector<4x64xf32> to vector<4x64x1xf32>
    %20 = vector.broadcast %19 : vector<4x64x1xf32> to vector<4x64x64xf32>
    %21 = arith.subf %17, %20 : vector<4x64x64xf32>
    %22 = math.exp %21 : vector<4x64x64xf32>
    %cst_11 = arith.constant dense<0.000000e+00> : vector<4x64xf32>
    %23 = vector.multi_reduction <add>, %22, %cst_11 [2] : vector<4x64x64xf32> to vector<4x64xf32>
    %24 = vector.shape_cast %23 : vector<4x64xf32> to vector<4x64x1xf32>
    %25 = tpu.reciprocal %24 {approx = true} : vector<4x64x1xf32> -> vector<4x64x1xf32>
    %26 = vector.broadcast %25 : vector<4x64x1xf32> to vector<4x64x64xf32>
    %27 = arith.mulf %22, %26 : vector<4x64x64xf32>
    %cst_12 = arith.constant dense<0.000000e+00> : vector<4x64x32xf32>
    %28 = tpu.matmul %27, %12, %cst_12 {dimension_numbers = #tpu.dot_dimension_numbers<[2], [1], [1], [2], [0, 0, 0, 1, 1, 2], [0], [0]>} : vector<4x64x64xf32>, vector<4x64x32xf32>, vector<4x64x32xf32> -> vector<4x64x32xf32>
    %c0_13 = arith.constant 0 : index
    %c96 = arith.constant 96 : index
    %29 = vector.load %arg4[%c0_13, %c96] : memref<256x576xf32, #tpu.memory_space<vmem>>, vector<256x96xf32>
    %30 = vector.shape_cast %29 : vector<256x96xf32> to vector<4x64x96xf32>
    %31 = vector.extract_strided_slice %30 {offsets = [0, 0, 0], sizes = [4, 64, 32], strides = [1, 1, 1]} : vector<4x64x96xf32> to vector<4x64x32xf32>
    %32 = vector.extract_strided_slice %30 {offsets = [0, 0, 32], sizes = [4, 64, 32], strides = [1, 1, 1]} : vector<4x64x96xf32> to vector<4x64x32xf32>
    %33 = vector.extract_strided_slice %30 {offsets = [0, 0, 64], sizes = [4, 64, 32], strides = [1, 1, 1]} : vector<4x64x96xf32> to vector<4x64x32xf32>
    %cst_14 = arith.constant dense<0.000000e+00> : vector<4x64x64xf32>
    %34 = tpu.matmul %31, %32, %cst_14 {dimension_numbers = #tpu.dot_dimension_numbers<[2], [2], [1], [1], [0, 0, 0, 1, 1, 1], [0], [0]>} : vector<4x64x32xf32>, vector<4x64x32xf32>, vector<4x64x64xf32> -> vector<4x64x64xf32>
    %cst_15 = arith.constant 0xFF800000 : f32
    %35 = vector.shape_cast %7 : vector<64x64xi1> to vector<1x64x64xi1>
    %36 = vector.broadcast %35 : vector<1x64x64xi1> to vector<4x64x64xi1>
    %37 = vector.broadcast %cst_15 : f32 to vector<4x64x64xf32>
    %38 = arith.select %36, %34, %37 : vector<4x64x64xi1>, vector<4x64x64xf32>
    %cst_16 = arith.constant dense<0xFF800000> : vector<4x64xf32>
    %39 = vector.multi_reduction <maximumf>, %38, %cst_16 [2] : vector<4x64x64xf32> to vector<4x64xf32>
    %40 = vector.shape_cast %39 : vector<4x64xf32> to vector<4x64x1xf32>
    %41 = vector.broadcast %40 : vector<4x64x1xf32> to vector<4x64x64xf32>
    %42 = arith.subf %38, %41 : vector<4x64x64xf32>
    %43 = math.exp %42 : vector<4x64x64xf32>
    %cst_17 = arith.constant dense<0.000000e+00> : vector<4x64xf32>
    %44 = vector.multi_reduction <add>, %43, %cst_17 [2] : vector<4x64x64xf32> to vector<4x64xf32>
    %45 = vector.shape_cast %44 : vector<4x64xf32> to vector<4x64x1xf32>
    %46 = tpu.reciprocal %45 {approx = true} : vector<4x64x1xf32> -> vector<4x64x1xf32>
    %47 = vector.broadcast %46 : vector<4x64x1xf32> to vector<4x64x64xf32>
    %48 = arith.mulf %43, %47 : vector<4x64x64xf32>
    %cst_18 = arith.constant dense<0.000000e+00> : vector<4x64x32xf32>
    %49 = tpu.matmul %48, %33, %cst_18 {dimension_numbers = #tpu.dot_dimension_numbers<[2], [1], [1], [2], [0, 0, 0, 1, 1, 2], [0], [0]>} : vector<4x64x64xf32>, vector<4x64x32xf32>, vector<4x64x32xf32> -> vector<4x64x32xf32>
    %c0_19 = arith.constant 0 : index
    %c192 = arith.constant 192 : index
    %50 = vector.load %arg4[%c0_19, %c192] : memref<256x576xf32, #tpu.memory_space<vmem>>, vector<256x96xf32>
    %51 = vector.shape_cast %50 : vector<256x96xf32> to vector<4x64x96xf32>
    %52 = vector.extract_strided_slice %51 {offsets = [0, 0, 0], sizes = [4, 64, 32], strides = [1, 1, 1]} : vector<4x64x96xf32> to vector<4x64x32xf32>
    %53 = vector.extract_strided_slice %51 {offsets = [0, 0, 32], sizes = [4, 64, 32], strides = [1, 1, 1]} : vector<4x64x96xf32> to vector<4x64x32xf32>
    %54 = vector.extract_strided_slice %51 {offsets = [0, 0, 64], sizes = [4, 64, 32], strides = [1, 1, 1]} : vector<4x64x96xf32> to vector<4x64x32xf32>
    %cst_20 = arith.constant dense<0.000000e+00> : vector<4x64x64xf32>
    %55 = tpu.matmul %52, %53, %cst_20 {dimension_numbers = #tpu.dot_dimension_numbers<[2], [2], [1], [1], [0, 0, 0, 1, 1, 1], [0], [0]>} : vector<4x64x32xf32>, vector<4x64x32xf32>, vector<4x64x64xf32> -> vector<4x64x64xf32>
    %cst_21 = arith.constant 0xFF800000 : f32
    %56 = vector.shape_cast %7 : vector<64x64xi1> to vector<1x64x64xi1>
    %57 = vector.broadcast %56 : vector<1x64x64xi1> to vector<4x64x64xi1>
    %58 = vector.broadcast %cst_21 : f32 to vector<4x64x64xf32>
    %59 = arith.select %57, %55, %58 : vector<4x64x64xi1>, vector<4x64x64xf32>
    %cst_22 = arith.constant dense<0xFF800000> : vector<4x64xf32>
    %60 = vector.multi_reduction <maximumf>, %59, %cst_22 [2] : vector<4x64x64xf32> to vector<4x64xf32>
    %61 = vector.shape_cast %60 : vector<4x64xf32> to vector<4x64x1xf32>
    %62 = vector.broadcast %61 : vector<4x64x1xf32> to vector<4x64x64xf32>
    %63 = arith.subf %59, %62 : vector<4x64x64xf32>
    %64 = math.exp %63 : vector<4x64x64xf32>
    %cst_23 = arith.constant dense<0.000000e+00> : vector<4x64xf32>
    %65 = vector.multi_reduction <add>, %64, %cst_23 [2] : vector<4x64x64xf32> to vector<4x64xf32>
    %66 = vector.shape_cast %65 : vector<4x64xf32> to vector<4x64x1xf32>
    %67 = tpu.reciprocal %66 {approx = true} : vector<4x64x1xf32> -> vector<4x64x1xf32>
    %68 = vector.broadcast %67 : vector<4x64x1xf32> to vector<4x64x64xf32>
    %69 = arith.mulf %64, %68 : vector<4x64x64xf32>
    %cst_24 = arith.constant dense<0.000000e+00> : vector<4x64x32xf32>
    %70 = tpu.matmul %69, %54, %cst_24 {dimension_numbers = #tpu.dot_dimension_numbers<[2], [1], [1], [2], [0, 0, 0, 1, 1, 2], [0], [0]>} : vector<4x64x64xf32>, vector<4x64x32xf32>, vector<4x64x32xf32> -> vector<4x64x32xf32>
    %c0_25 = arith.constant 0 : index
    %c288 = arith.constant 288 : index
    %71 = vector.load %arg4[%c0_25, %c288] : memref<256x576xf32, #tpu.memory_space<vmem>>, vector<256x96xf32>
    %72 = vector.shape_cast %71 : vector<256x96xf32> to vector<4x64x96xf32>
    %73 = vector.extract_strided_slice %72 {offsets = [0, 0, 0], sizes = [4, 64, 32], strides = [1, 1, 1]} : vector<4x64x96xf32> to vector<4x64x32xf32>
    %74 = vector.extract_strided_slice %72 {offsets = [0, 0, 32], sizes = [4, 64, 32], strides = [1, 1, 1]} : vector<4x64x96xf32> to vector<4x64x32xf32>
    %75 = vector.extract_strided_slice %72 {offsets = [0, 0, 64], sizes = [4, 64, 32], strides = [1, 1, 1]} : vector<4x64x96xf32> to vector<4x64x32xf32>
    %cst_26 = arith.constant dense<0.000000e+00> : vector<4x64x64xf32>
    %76 = tpu.matmul %73, %74, %cst_26 {dimension_numbers = #tpu.dot_dimension_numbers<[2], [2], [1], [1], [0, 0, 0, 1, 1, 1], [0], [0]>} : vector<4x64x32xf32>, vector<4x64x32xf32>, vector<4x64x64xf32> -> vector<4x64x64xf32>
    %cst_27 = arith.constant 0xFF800000 : f32
    %77 = vector.shape_cast %7 : vector<64x64xi1> to vector<1x64x64xi1>
    %78 = vector.broadcast %77 : vector<1x64x64xi1> to vector<4x64x64xi1>
    %79 = vector.broadcast %cst_27 : f32 to vector<4x64x64xf32>
    %80 = arith.select %78, %76, %79 : vector<4x64x64xi1>, vector<4x64x64xf32>
    %cst_28 = arith.constant dense<0xFF800000> : vector<4x64xf32>
    %81 = vector.multi_reduction <maximumf>, %80, %cst_28 [2] : vector<4x64x64xf32> to vector<4x64xf32>
    %82 = vector.shape_cast %81 : vector<4x64xf32> to vector<4x64x1xf32>
    %83 = vector.broadcast %82 : vector<4x64x1xf32> to vector<4x64x64xf32>
    %84 = arith.subf %80, %83 : vector<4x64x64xf32>
    %85 = math.exp %84 : vector<4x64x64xf32>
    %cst_29 = arith.constant dense<0.000000e+00> : vector<4x64xf32>
    %86 = vector.multi_reduction <add>, %85, %cst_29 [2] : vector<4x64x64xf32> to vector<4x64xf32>
    %87 = vector.shape_cast %86 : vector<4x64xf32> to vector<4x64x1xf32>
    %88 = tpu.reciprocal %87 {approx = true} : vector<4x64x1xf32> -> vector<4x64x1xf32>
    %89 = vector.broadcast %88 : vector<4x64x1xf32> to vector<4x64x64xf32>
    %90 = arith.mulf %85, %89 : vector<4x64x64xf32>
    %cst_30 = arith.constant dense<0.000000e+00> : vector<4x64x32xf32>
    %91 = tpu.matmul %90, %75, %cst_30 {dimension_numbers = #tpu.dot_dimension_numbers<[2], [1], [1], [2], [0, 0, 0, 1, 1, 2], [0], [0]>} : vector<4x64x64xf32>, vector<4x64x32xf32>, vector<4x64x32xf32> -> vector<4x64x32xf32>
    %c0_31 = arith.constant 0 : index
    %c384 = arith.constant 384 : index
    %92 = vector.load %arg4[%c0_31, %c384] : memref<256x576xf32, #tpu.memory_space<vmem>>, vector<256x96xf32>
    %93 = vector.shape_cast %92 : vector<256x96xf32> to vector<4x64x96xf32>
    %94 = vector.extract_strided_slice %93 {offsets = [0, 0, 0], sizes = [4, 64, 32], strides = [1, 1, 1]} : vector<4x64x96xf32> to vector<4x64x32xf32>
    %95 = vector.extract_strided_slice %93 {offsets = [0, 0, 32], sizes = [4, 64, 32], strides = [1, 1, 1]} : vector<4x64x96xf32> to vector<4x64x32xf32>
    %96 = vector.extract_strided_slice %93 {offsets = [0, 0, 64], sizes = [4, 64, 32], strides = [1, 1, 1]} : vector<4x64x96xf32> to vector<4x64x32xf32>
    %cst_32 = arith.constant dense<0.000000e+00> : vector<4x64x64xf32>
    %97 = tpu.matmul %94, %95, %cst_32 {dimension_numbers = #tpu.dot_dimension_numbers<[2], [2], [1], [1], [0, 0, 0, 1, 1, 1], [0], [0]>} : vector<4x64x32xf32>, vector<4x64x32xf32>, vector<4x64x64xf32> -> vector<4x64x64xf32>
    %cst_33 = arith.constant 0xFF800000 : f32
    %98 = vector.shape_cast %7 : vector<64x64xi1> to vector<1x64x64xi1>
    %99 = vector.broadcast %98 : vector<1x64x64xi1> to vector<4x64x64xi1>
    %100 = vector.broadcast %cst_33 : f32 to vector<4x64x64xf32>
    %101 = arith.select %99, %97, %100 : vector<4x64x64xi1>, vector<4x64x64xf32>
    %cst_34 = arith.constant dense<0xFF800000> : vector<4x64xf32>
    %102 = vector.multi_reduction <maximumf>, %101, %cst_34 [2] : vector<4x64x64xf32> to vector<4x64xf32>
    %103 = vector.shape_cast %102 : vector<4x64xf32> to vector<4x64x1xf32>
    %104 = vector.broadcast %103 : vector<4x64x1xf32> to vector<4x64x64xf32>
    %105 = arith.subf %101, %104 : vector<4x64x64xf32>
    %106 = math.exp %105 : vector<4x64x64xf32>
    %cst_35 = arith.constant dense<0.000000e+00> : vector<4x64xf32>
    %107 = vector.multi_reduction <add>, %106, %cst_35 [2] : vector<4x64x64xf32> to vector<4x64xf32>
    %108 = vector.shape_cast %107 : vector<4x64xf32> to vector<4x64x1xf32>
    %109 = tpu.reciprocal %108 {approx = true} : vector<4x64x1xf32> -> vector<4x64x1xf32>
    %110 = vector.broadcast %109 : vector<4x64x1xf32> to vector<4x64x64xf32>
    %111 = arith.mulf %106, %110 : vector<4x64x64xf32>
    %cst_36 = arith.constant dense<0.000000e+00> : vector<4x64x32xf32>
    %112 = tpu.matmul %111, %96, %cst_36 {dimension_numbers = #tpu.dot_dimension_numbers<[2], [1], [1], [2], [0, 0, 0, 1, 1, 2], [0], [0]>} : vector<4x64x64xf32>, vector<4x64x32xf32>, vector<4x64x32xf32> -> vector<4x64x32xf32>
    %c0_37 = arith.constant 0 : index
    %c480 = arith.constant 480 : index
    %113 = vector.load %arg4[%c0_37, %c480] : memref<256x576xf32, #tpu.memory_space<vmem>>, vector<256x96xf32>
    %114 = vector.shape_cast %113 : vector<256x96xf32> to vector<4x64x96xf32>
    %115 = vector.extract_strided_slice %114 {offsets = [0, 0, 0], sizes = [4, 64, 32], strides = [1, 1, 1]} : vector<4x64x96xf32> to vector<4x64x32xf32>
    %116 = vector.extract_strided_slice %114 {offsets = [0, 0, 32], sizes = [4, 64, 32], strides = [1, 1, 1]} : vector<4x64x96xf32> to vector<4x64x32xf32>
    %117 = vector.extract_strided_slice %114 {offsets = [0, 0, 64], sizes = [4, 64, 32], strides = [1, 1, 1]} : vector<4x64x96xf32> to vector<4x64x32xf32>
    %cst_38 = arith.constant dense<0.000000e+00> : vector<4x64x64xf32>
    %118 = tpu.matmul %115, %116, %cst_38 {dimension_numbers = #tpu.dot_dimension_numbers<[2], [2], [1], [1], [0, 0, 0, 1, 1, 1], [0], [0]>} : vector<4x64x32xf32>, vector<4x64x32xf32>, vector<4x64x64xf32> -> vector<4x64x64xf32>
    %cst_39 = arith.constant 0xFF800000 : f32
    %119 = vector.shape_cast %7 : vector<64x64xi1> to vector<1x64x64xi1>
    %120 = vector.broadcast %119 : vector<1x64x64xi1> to vector<4x64x64xi1>
    %121 = vector.broadcast %cst_39 : f32 to vector<4x64x64xf32>
    %122 = arith.select %120, %118, %121 : vector<4x64x64xi1>, vector<4x64x64xf32>
    %cst_40 = arith.constant dense<0xFF800000> : vector<4x64xf32>
    %123 = vector.multi_reduction <maximumf>, %122, %cst_40 [2] : vector<4x64x64xf32> to vector<4x64xf32>
    %124 = vector.shape_cast %123 : vector<4x64xf32> to vector<4x64x1xf32>
    %125 = vector.broadcast %124 : vector<4x64x1xf32> to vector<4x64x64xf32>
    %126 = arith.subf %122, %125 : vector<4x64x64xf32>
    %127 = math.exp %126 : vector<4x64x64xf32>
    %cst_41 = arith.constant dense<0.000000e+00> : vector<4x64xf32>
    %128 = vector.multi_reduction <add>, %127, %cst_41 [2] : vector<4x64x64xf32> to vector<4x64xf32>
    %129 = vector.shape_cast %128 : vector<4x64xf32> to vector<4x64x1xf32>
    %130 = tpu.reciprocal %129 {approx = true} : vector<4x64x1xf32> -> vector<4x64x1xf32>
    %131 = vector.broadcast %130 : vector<4x64x1xf32> to vector<4x64x64xf32>
    %132 = arith.mulf %127, %131 : vector<4x64x64xf32>
    %cst_42 = arith.constant dense<0.000000e+00> : vector<4x64x32xf32>
    %133 = tpu.matmul %132, %117, %cst_42 {dimension_numbers = #tpu.dot_dimension_numbers<[2], [1], [1], [2], [0, 0, 0, 1, 1, 2], [0], [0]>} : vector<4x64x64xf32>, vector<4x64x32xf32>, vector<4x64x32xf32> -> vector<4x64x32xf32>
    %134 = tpu.concatenate %28, %49, %70, %91, %112, %133 in 2 : vector<4x64x32xf32>, vector<4x64x32xf32>, vector<4x64x32xf32>, vector<4x64x32xf32>, vector<4x64x32xf32>, vector<4x64x32xf32> -> vector<4x64x192xf32>
    %c0_43 = arith.constant 0 : index
    %c0_44 = arith.constant 0 : index
    %c0_45 = arith.constant 0 : index
    %135 = vector.load %arg3[%c0_43, %c0_44, %c0_45] : memref<4x64x192xf32, #tpu.memory_space<vmem>>, vector<4x64x192xf32>
    tpu.vector_store %arg3[%c0_43, %c0_44, %c0_45], %134 {strides = array<i32>} : memref<4x64x192xf32, #tpu.memory_space<vmem>>, vector<4x64x192xf32>,
    return
  }
  func.func @transform_0(%arg0: i32) -> (i32, i32, i32) {
    %c0_i32 = arith.constant 0 : i32
    %c0_i32_0 = arith.constant 0 : i32
    %c0_i32_1 = arith.constant 0 : i32
    return %arg0, %c0_i32, %c0_i32_0 : i32, i32, i32
  }
  func.func @transform_1(%arg0: i32) -> (i32, i32) {
    %c0_i32 = arith.constant 0 : i32
    %c0_i32_0 = arith.constant 0 : i32
    %c0_i32_1 = arith.constant 0 : i32
    return %c0_i32, %c0_i32_0 : i32, i32
  }
  func.func @transform_2(%arg0: i32) -> (i32, i32, i32) {
    %c0_i32 = arith.constant 0 : i32
    %c0_i32_0 = arith.constant 0 : i32
    %c0_i32_1 = arith.constant 0 : i32
    return %arg0, %c0_i32, %c0_i32_0 : i32, i32, i32
  }
}

</mosaic_0001>

<llo_original>
// kernel: tpu_custom_call.1
$region0: #{tpu_custom_call.1}
  #allocation0 [shape = 'u32[]', space=smem, size = 0x4, offset = 0x4, fixed_abs, tag = 'smem constant byte address 0x4 - core index']
  #allocation1 [shape = 'u32[72,128]{1,0:T(1,128)}', space=vmem, size = 0x9000, scoped, tag = 'internal scratch']
  #allocation2 [shape = 'f32[256,576]{1,0:T(8,128)}', space=vmem, size = 0xa0000, scoped, tag = 'scratch operand']
  %s0 = inlined_call_operand.hbm [shape: f32[16,64,192], index: 0, kind: input, shape index: {}]
  %s1 = inlined_call_operand.hbm [shape: f32[192,576], index: 1, kind: input, shape index: {}]
  %s2 = inlined_call_operand.hbm [shape: f32[16,64,192], index: 2, kind: output, shape index: {}]
  %s3 = sld [smem:[#allocation0]]
  $region49: #{tpu_custom_call.1} parent=0
    _
  %s5 = ssub.s32 1, %s3
  %s6 = scalar_select 0, %s5, %s3
  $region1: #{tpu_custom_call.1} parent=0
    #allocation3 [shape = 'u8[524288]{0}', space=vmem, size = 0x80000, scoped, tag = 'input window, operand 0']
    #allocation4 [shape = 's32[2]{0}', space=sflag, size = 0x8, scoped, tag = 'scoped memory for tpu_custom_call.1']
    #allocation5 [shape = 's32[2]{0}', space=sflag, size = 0x8, scoped, tag = 'scoped memory for tpu_custom_call.1']
    #allocation6 [shape = 'u8[491520]{0}', space=vmem, size = 0x78000, scoped, tag = 'input window, operand 1, single buffered']
    #allocation7 [shape = 's32[1]{0}', space=sflag, size = 0x4, scoped, tag = 'scoped memory for tpu_custom_call.1']
    #allocation8 [shape = 'u8[524288]{0}', space=vmem, size = 0x80000, scoped, tag = 'output window, operand 0']
    %7 = vsyncpa [#allocation4], 0
    %s8 = scalar_lea.sflag [#allocation4], 1
    %9 = vsyncpa %s8, 0
    %10 = vsyncpa [#allocation7], 0
    %11 = vsyncpa [#allocation5], 0
    %s12 = scalar_lea.sflag [#allocation5], 1
    %13 = vsyncpa %s12, 0
    loop: start=0, step=1, limit=6
    $region2: #{tpu_custom_call.1} parent=1 // loop_pre_header
      _
    $region3: #{tpu_custom_call.1} parent=1 // loop_header
      %s15 = sphi 0, %s19
      %p16 = scmp.ge.s32.totalorder %s15, 6
      %s25 = sphi 0, %s27
      %s28 = sphi 0, %s25
      %s29 = sphi 0, %s28
      %s45 = sphi 0, %s29
      %s49 = sphi 0, %s49
      %s51 = sphi 0, %s49
      %s52 = sphi 0, %s51
      %s66 = sphi 0, %s52
      %s72 = sphi 0, %s74
      %s75 = sphi 0, %s72
      %s76 = sphi 0, %s75
      %s92 = sphi 0, %s76
    $region4: #{tpu_custom_call.1} parent=1 // loop_header_branch
      %18 = sbr.rel (%p16) target = $region8
    $region5: #{tpu_custom_call.1} parent=1 // loop_body
      %s20 = ssub.s32 %s15, 1
      %s21 = ssub.s32 %s15, 2
      %s22 = sadd.s32 %s15, 1
      %s23 = ssub.s32 %s15, %s22
      %p24 = scmp.eq.s32.totalorder %s23, 0
      %s26 = sadd.s32 %s25, 1
      %s27 = scalar_select %p24, %s25, %s26
      %p30 = pneg %p24
      %p31 = scmp.eq.s32.totalorder %s15, 3
      %p32 = por %p30, %p31
      %p33 = scmp.ne.s32.totalorder %s25, %s28
      %p34 = scmp.eq.s32.totalorder %s15, 0
      %p35 = por %p33, %p34
      %p36 = scmp.ne.s32.totalorder %s25, %s28
      %p37 = scmp.eq.s32.totalorder %s20, 3
      %p38 = por %p36, %p37
      %p39 = scmp.ne.s32.totalorder %s28, %s29
      %p40 = scmp.eq.s32.totalorder %s20, 0
      %p41 = por %p39, %p40
      %p42 = scmp.ne.s32.totalorder %s28, %s29
      %p43 = scmp.eq.s32.totalorder %s21, 3
      %p44 = por %p42, %p43
      %p46 = scmp.ne.s32.totalorder %s29, %s45
      %p47 = scmp.eq.s32.totalorder %s21, 0
      %p48 = por %p46, %p47
      %s50 = sadd.s32 %s49, 1
      %p53 = scmp.eq.s32.totalorder %s15, 3
      %p54 = scmp.ne.s32.totalorder %s49, %s51
      %p55 = scmp.eq.s32.totalorder %s15, 0
      %p56 = por %p54, %p55
      %p57 = scmp.ne.s32.totalorder %s49, %s51
      %p58 = scmp.eq.s32.totalorder %s20, 3
      %p59 = por %p57, %p58
      %p60 = scmp.ne.s32.totalorder %s51, %s52
      %p61 = scmp.eq.s32.totalorder %s20, 0
      %p62 = por %p60, %p61
      %p63 = scmp.ne.s32.totalorder %s51, %s52
      %p64 = scmp.eq.s32.totalorder %s21, 3
      %p65 = por %p63, %p64
      %p67 = scmp.ne.s32.totalorder %s52, %s66
      %p68 = scmp.eq.s32.totalorder %s21, 0
      %p69 = por %p67, %p68
      %s70 = ssub.s32 %s15, %s22
      %p71 = scmp.eq.s32.totalorder %s70, 0
      %s73 = sadd.s32 %s72, 1
      %s74 = scalar_select %p71, %s72, %s73
      %p77 = pneg %p71
      %p78 = scmp.eq.s32.totalorder %s15, 3
      %p79 = por %p77, %p78
      %p80 = scmp.ne.s32.totalorder %s72, %s75
      %p81 = scmp.eq.s32.totalorder %s15, 0
      %p82 = por %p80, %p81
      %p83 = scmp.ne.s32.totalorder %s72, %s75
      %p84 = scmp.eq.s32.totalorder %s20, 3
      %p85 = por %p83, %p84
      %p86 = scmp.ne.s32.totalorder %s75, %s76
      %p87 = scmp.eq.s32.totalorder %s20, 0
      %p88 = por %p86, %p87
      %p89 = scmp.ne.s32.totalorder %s75, %s76
      %p90 = scmp.eq.s32.totalorder %s21, 3
      %p91 = por %p89, %p90
      %p93 = scmp.ne.s32.totalorder %s76, %s92
      %p94 = scmp.eq.s32.totalorder %s21, 0
      %p95 = por %p93, %p94
      %p96 = scmp.le.s32.totalorder 1, %s15
      %p97 = scmp.lt.s32.totalorder %s15, 5
      %p98 = pnand %p96, %p97
      %p99 = pneg %p98
      // Predicated region
      $region9: #{tpu_custom_call.1} parent=5 // pred_check
        _
      $region10: #{tpu_custom_call.1} parent=5 // pred_check_branch
        %101 = sbr.rel (%p98) target = $region12
      $region11: #{tpu_custom_call.1} parent=5 // pred_region
        %s102 = ssub.s32 %s15, 1
        // Predicated region
        $region13: #{tpu_custom_call.1} parent=11 // pred_check
          %p103 = pneg %p62
        $region14: #{tpu_custom_call.1} parent=11 // pred_check_branch
          %105 = sbr.rel (%p103) target = $region16
        $region15: #{tpu_custom_call.1} parent=11 // pred_region
          %107 = vsyncadd [#allocation7], 0
          %s108 = sshll.u32 %s1, 4
          %s109 = int_to_ptr.hbm [resolvable:$true] %s108
          %s110 = sshll.u32 [#allocation6], 4
          %s111 = int_to_ptr.vmem [resolvable:$true] %s110
          %116 = dma.hbm_to_vmem [thread:$0]  %s109, 15360, %s111, [#allocation7], 640, 640, 40
        $region16: #{tpu_custom_call.1} parent=11 // pred_fallthru
          _
      $region12: #{tpu_custom_call.1} parent=5 // pred_fallthru
        _
      %p117 = scmp.lt.s32.totalorder %s15, 4
      // Predicated region
      $region17: #{tpu_custom_call.1} parent=5 // pred_check
        %p118 = pneg %p117
      $region18: #{tpu_custom_call.1} parent=5 // pred_check_branch
        %120 = sbr.rel (%p118) target = $region20
      $region19: #{tpu_custom_call.1} parent=5 // pred_region
        // Predicated region
        $region21: #{tpu_custom_call.1} parent=19 // pred_check
          %p121 = pneg %p35
        $region22: #{tpu_custom_call.1} parent=19 // pred_check_branch
          %123 = sbr.rel (%p121) target = $region24
        $region23: #{tpu_custom_call.1} parent=19 // pred_region
          %s124 = sand.u32 %s25, 1
          %s125 = scalar_lea.sflag [#allocation4], %s124
          %s126 = sand.u32 %s25, 1
          %s127 = smul.addr %s126, 512
          %s128 = scalar_lea.vmem [#allocation3], %s127
          %s129 = smul.u32 4, %s15
          %131 = vsyncadd %s125, 0
          %s132 = smul.addr %s129, 16
          %s133 = smul.addr %s132, 8
          %s134 = scalar_lea.hbm %s0, %s133
          %s135 = sshll.u32 %s134, 4
          %s136 = int_to_ptr.hbm [resolvable:$true] %s135
          %s137 = sshll.u32 %s128, 4
          %s138 = int_to_ptr.vmem [resolvable:$true] %s137
          %143 = dma.hbm_to_vmem [thread:$0]  %s136, 8192, %s138, %s125, 256, 256, 16
        $region24: #{tpu_custom_call.1} parent=19 // pred_fallthru
          _
      $region20: #{tpu_custom_call.1} parent=5 // pred_fallthru
        _
      %p144 = scmp.le.s32.totalorder 1, %s15
      %p145 = scmp.lt.s32.totalorder %s15, 5
      %p146 = pnand %p144, %p145
      %p147 = pneg %p146
      // Predicated region
      $region25: #{tpu_custom_call.1} parent=5 // pred_check
        _
      $region26: #{tpu_custom_call.1} parent=5 // pred_check_branch
        %149 = sbr.rel (%p146) target = $region28
      $region27: #{tpu_custom_call.1} parent=5 // pred_region
        %s150 = ssub.s32 %s15, 1
        %s151 = sand.u32 %s28, 1
        %s152 = scalar_lea.sflag [#allocation4], %s151
        %s153 = sand.u32 %s28, 1
        %s154 = smul.addr %s153, 512
        %s155 = scalar_lea.vmem [#allocation3], %s154
        // Predicated region
        $region29: #{tpu_custom_call.1} parent=27 // pred_check
          %p156 = pneg %p41
        $region30: #{tpu_custom_call.1} parent=27 // pred_check_branch
          %158 = sbr.rel (%p156) target = $region32
        $region31: #{tpu_custom_call.1} parent=27 // pred_region
          %160 = dma.done %s152, 8192
        $region32: #{tpu_custom_call.1} parent=27 // pred_fallthru
          _
        // Predicated region
        $region33: #{tpu_custom_call.1} parent=27 // pred_check
          %p161 = pneg %p62
        $region34: #{tpu_custom_call.1} parent=27 // pred_check_branch
          %163 = sbr.rel (%p161) target = $region36
        $region35: #{tpu_custom_call.1} parent=27 // pred_region
          %165 = dma.done [#allocation7], 15360
        $region36: #{tpu_custom_call.1} parent=27 // pred_fallthru
          _
        %s166 = sand.u32 %s28, 1
        %s167 = scalar_lea.sflag [#allocation4], %s166
        %s168 = sand.u32 %s28, 1
        %s169 = smul.addr %s168, 512
        %s170 = scalar_lea.vmem [#allocation3], %s169
        %p171 = pneg %p41
        %p172 = pneg %p38
        %p173 = pneg %p62
        %p174 = pneg %p59
        %p175 = pneg %p88
        %p176 = pneg %p85
        %s177 = sand.u32 %s75, 1
        %s178 = scalar_lea.sflag [#allocation5], %s177
        %s179 = sand.u32 %s75, 1
        %s180 = smul.addr %s179, 512
        %s181 = scalar_lea.vmem [#allocation8], %s180
        %s182 = smul.u32 4, %s20
        %s183 = smul.u32 4, %s20
        %v184 = vld [vmem:[%s155] sm:$0xff]
        %v185 = vld [vmem:[%s155 + $0x8] sm:$0xff]
        %v186 = vld [vmem:[%s155 + $0x10] sm:$0xff]
        %v187 = vld [vmem:[%s155 + $0x18] sm:$0xff]
        %v188 = vld [vmem:[%s155 + $0x20] sm:$0xff]
        %v189 = vld [vmem:[%s155 + $0x28] sm:$0xff]
        %v190 = vld [vmem:[%s155 + $0x30] sm:$0xff]
        %v191 = vld [vmem:[%s155 + $0x38] sm:$0xff]
        %v192 = vld [vmem:[%s155 + $0x40] sm:$0xff]
        %v193 = vld [vmem:[%s155 + $0x48] sm:$0xff]
        %v194 = vld [vmem:[%s155 + $0x50] sm:$0xff]
        %v195 = vld [vmem:[%s155 + $0x58] sm:$0xff]
        %v196 = vld [vmem:[%s155 + $0x60] sm:$0xff]
        %v197 = vld [vmem:[%s155 + $0x68] sm:$0xff]
        %v198 = vld [vmem:[%s155 + $0x70] sm:$0xff]
        %v199 = vld [vmem:[%s155 + $0x78] sm:$0xff]
        %v200 = vld [vmem:[%s155 + $0x80] sm:$0xff]
        %v201 = vld [vmem:[%s155 + $0x88] sm:$0xff]
        %v202 = vld [vmem:[%s155 + $0x90] sm:$0xff]
        %v203 = vld [vmem:[%s155 + $0x98] sm:$0xff]
        %v204 = vld [vmem:[%s155 + $0xa0] sm:$0xff]
        %v205 = vld [vmem:[%s155 + $0xa8] sm:$0xff]
        %v206 = vld [vmem:[%s155 + $0xb0] sm:$0xff]
        %v207 = vld [vmem:[%s155 + $0xb8] sm:$0xff]
        %v208 = vld [vmem:[%s155 + $0xc0] sm:$0xff]
        %v209 = vld [vmem:[%s155 + $0xc8] sm:$0xff]
        %v210 = vld [vmem:[%s155 + $0xd0] sm:$0xff]
        %v211 = vld [vmem:[%s155 + $0xd8] sm:$0xff]
        %v212 = vld [vmem:[%s155 + $0xe0] sm:$0xff]
        %v213 = vld [vmem:[%s155 + $0xe8] sm:$0xff]
        %v214 = vld [vmem:[%s155 + $0xf0] sm:$0xff]
        %v215 = vld [vmem:[%s155 + $0xf8] sm:$0xff]
        %v216 = vld [vmem:[%s155 + $0x100] sm:$0xff]
        %v217 = vld [vmem:[%s155 + $0x108] sm:$0xff]
        %v218 = vld [vmem:[%s155 + $0x110] sm:$0xff]
        %v219 = vld [vmem:[%s155 + $0x118] sm:$0xff]
        %v220 = vld [vmem:[%s155 + $0x120] sm:$0xff]
        %v221 = vld [vmem:[%s155 + $0x128] sm:$0xff]
        %v222 = vld [vmem:[%s155 + $0x130] sm:$0xff]
        %v223 = vld [vmem:[%s155 + $0x138] sm:$0xff]
        %v224 = vld [vmem:[%s155 + $0x140] sm:$0xff]
        %v225 = vld [vmem:[%s155 + $0x148] sm:$0xff]
        %v226 = vld [vmem:[%s155 + $0x150] sm:$0xff]
        %v227 = vld [vmem:[%s155 + $0x158] sm:$0xff]
        %v228 = vld [vmem:[%s155 + $0x160] sm:$0xff]
        %v229 = vld [vmem:[%s155 + $0x168] sm:$0xff]
        %v230 = vld [vmem:[%s155 + $0x170] sm:$0xff]
        %v231 = vld [vmem:[%s155 + $0x178] sm:$0xff]
        %v232 = vld [vmem:[%s155 + $0x180] sm:$0xff]
        %v233 = vld [vmem:[%s155 + $0x188] sm:$0xff]
        %v234 = vld [vmem:[%s155 + $0x190] sm:$0xff]
        %v235 = vld [vmem:[%s155 + $0x198] sm:$0xff]
        %v236 = vld [vmem:[%s155 + $0x1a0] sm:$0xff]
        %v237 = vld [vmem:[%s155 + $0x1a8] sm:$0xff]
        %v238 = vld [vmem:[%s155 + $0x1b0] sm:$0xff]
        %v239 = vld [vmem:[%s155 + $0x1b8] sm:$0xff]
        %v240 = vld [vmem:[%s155 + $0x1c0] sm:$0xff]
        %v241 = vld [vmem:[%s155 + $0x1c8] sm:$0xff]
        %v242 = vld [vmem:[%s155 + $0x1d0] sm:$0xff]
        %v243 = vld [vmem:[%s155 + $0x1d8] sm:$0xff]
        %v244 = vld [vmem:[%s155 + $0x1e0] sm:$0xff]
        %v245 = vld [vmem:[%s155 + $0x1e8] sm:$0xff]
        %v246 = vld [vmem:[%s155 + $0x1f0] sm:$0xff]
        %v247 = vld [vmem:[%s155 + $0x1f8] sm:$0xff]
        %v248 = vld [vmem:[#allocation6] sm:$0xff]
        %v249 = vld [vmem:[#allocation6 + $0x8] sm:$0xff]
        %v250 = vld [vmem:[#allocation6 + $0x10] sm:$0xff]
        %v251 = vld [vmem:[#allocation6 + $0x18] sm:$0xff]
        %v252 = vld [vmem:[#allocation6 + $0x20] sm:$0xff]
        %v253 = vld [vmem:[#allocation6 + $0x28] sm:$0xff]
        %v254 = vld [vmem:[#allocation6 + $0x30] sm:$0xff]
        %v255 = vld [vmem:[#allocation6 + $0x38] sm:$0xff]
        %v256 = vld [vmem:[#allocation6 + $0x40] sm:$0xff]
        %v257 = vld [vmem:[#allocation6 + $0x48] sm:$0xff]
        %v258 = vld [vmem:[#allocation6 + $0x50] sm:$0xff]
        %v259 = vld [vmem:[#allocation6 + $0x58] sm:$0xff]
        %v260 = vld [vmem:[#allocation6 + $0x60] sm:$0xff]
        %v261 = vld [vmem:[#allocation6 + $0x68] sm:$0xff]
        %v262 = vld [vmem:[#allocation6 + $0x70] sm:$0xff]
        %v263 = vld [vmem:[#allocation6 + $0x78] sm:$0xff]
        %v264 = vld [vmem:[#allocation6 + $0x80] sm:$0xff]
        %v265 = vld [vmem:[#allocation6 + $0x88] sm:$0xff]
        %v266 = vld [vmem:[#allocation6 + $0x90] sm:$0xff]
        %v267 = vld [vmem:[#allocation6 + $0x98] sm:$0xff]
        %v268 = vld [vmem:[#allocation6 + $0xa0] sm:$0xff]
        %v269 = vld [vmem:[#allocation6 + $0xa8] sm:$0xff]
        %v270 = vld [vmem:[#allocation6 + $0xb0] sm:$0xff]
        %v271 = vld [vmem:[#allocation6 + $0xb8] sm:$0xff]
        %v272 = vld [vmem:[#allocation6 + $0xc0] sm:$0xff]
        %v273 = vld [vmem:[#allocation6 + $0xc8] sm:$0xff]
        %v274 = vld [vmem:[#allocation6 + $0xd0] sm:$0xff]
        %v275 = vld [vmem:[#allocation6 + $0xd8] sm:$0xff]
        %v276 = vld [vmem:[#allocation6 + $0xe0] sm:$0xff]
        %v277 = vld [vmem:[#allocation6 + $0xe8] sm:$0xff]
        %v278 = vld [vmem:[#allocation6 + $0xf0] sm:$0xff]
        %v279 = vld [vmem:[#allocation6 + $0xf8] sm:$0xff]
        %v280 = vld [vmem:[#allocation6 + $0x100] sm:$0xff]
        %v281 = vld [vmem:[#allocation6 + $0x108] sm:$0xff]
        %v282 = vld [vmem:[#allocation6 + $0x110] sm:$0xff]
        %v283 = vld [vmem:[#allocation6 + $0x118] sm:$0xff]
        %v284 = vld [vmem:[#allocation6 + $0x120] sm:$0xff]
        %v285 = vld [vmem:[#allocation6 + $0x128] sm:$0xff]
        %v286 = vld [vmem:[#allocation6 + $0x130] sm:$0xff]
        %v287 = vld [vmem:[#allocation6 + $0x138] sm:$0xff]
        %v288 = vld [vmem:[#allocation6 + $0x140] sm:$0xff]
        %v289 = vld [vmem:[#allocation6 + $0x148] sm:$0xff]
        %v290 = vld [vmem:[#allocation6 + $0x150] sm:$0xff]
        %v291 = vld [vmem:[#allocation6 + $0x158] sm:$0xff]
        %v292 = vld [vmem:[#allocation6 + $0x160] sm:$0xff]
        %v293 = vld [vmem:[#allocation6 + $0x168] sm:$0xff]
        %v294 = vld [vmem:[#allocation6 + $0x170] sm:$0xff]
        %v295 = vld [vmem:[#allocation6 + $0x178] sm:$0xff]
        %v296 = vld [vmem:[#allocation6 + $0x180] sm:$0xff]
        %v297 = vld [vmem:[#allocation6 + $0x188] sm:$0xff]
        %v298 = vld [vmem:[#allocation6 + $0x190] sm:$0xff]
        %v299 = vld [vmem:[#allocation6 + $0x198] sm:$0xff]
        %v300 = vld [vmem:[#allocation6 + $0x1a0] sm:$0xff]
        %v301 = vld [vmem:[#allocation6 + $0x1a8] sm:$0xff]
        %v302 = vld [vmem:[#allocation6 + $0x1b0] sm:$0xff]
        %v303 = vld [vmem:[#allocation6 + $0x1b8] sm:$0xff]
        %v304 = vld [vmem:[#allocation6 + $0x1c0] sm:$0xff]
        %v305 = vld [vmem:[#allocation6 + $0x1c8] sm:$0xff]
        %v306 = vld [vmem:[#allocation6 + $0x1d0] sm:$0xff]
        %v307 = vld [vmem:[#allocation6 + $0x1d8] sm:$0xff]
        %v308 = vld [vmem:[#allocation6 + $0x1e0] sm:$0xff]
        %v309 = vld [vmem:[#allocation6 + $0x1e8] sm:$0xff]
        %v310 = vld [vmem:[#allocation6 + $0x1f0] sm:$0xff]
        %v311 = vld [vmem:[#allocation6 + $0x1f8] sm:$0xff]
        %v312 = vld [vmem:[#allocation6 + $0x200] sm:$0xff]
        %v313 = vld [vmem:[#allocation6 + $0x208] sm:$0xff]
        %v314 = vld [vmem:[#allocation6 + $0x210] sm:$0xff]
        %v315 = vld [vmem:[#allocation6 + $0x218] sm:$0xff]
        %v316 = vld [vmem:[#allocation6 + $0x220] sm:$0xff]
        %v317 = vld [vmem:[#allocation6 + $0x228] sm:$0xff]
        %v318 = vld [vmem:[#allocation6 + $0x230] sm:$0xff]
        %v319 = vld [vmem:[#allocation6 + $0x238] sm:$0xff]
        %v320 = vld [vmem:[#allocation6 + $0x240] sm:$0xff]
        %v321 = vld [vmem:[#allocation6 + $0x248] sm:$0xff]
        %v322 = vld [vmem:[#allocation6 + $0x250] sm:$0xff]
        %v323 = vld [vmem:[#allocation6 + $0x258] sm:$0xff]
        %v324 = vld [vmem:[#allocation6 + $0x260] sm:$0xff]
        %v325 = vld [vmem:[#allocation6 + $0x268] sm:$0xff]
        %v326 = vld [vmem:[#allocation6 + $0x270] sm:$0xff]
        %v327 = vld [vmem:[#allocation6 + $0x278] sm:$0xff]
        %v328 = vld [vmem:[#allocation6 + $0x280] sm:$0xff]
        %v329 = vld [vmem:[#allocation6 + $0x288] sm:$0xff]
        %v330 = vld [vmem:[#allocation6 + $0x290] sm:$0xff]
        %v331 = vld [vmem:[#allocation6 + $0x298] sm:$0xff]
        %v332 = vld [vmem:[#allocation6 + $0x2a0] sm:$0xff]
        %v333 = vld [vmem:[#allocation6 + $0x2a8] sm:$0xff]
        %v334 = vld [vmem:[#allocation6 + $0x2b0] sm:$0xff]
        %v335 = vld [vmem:[#allocation6 + $0x2b8] sm:$0xff]
        %v336 = vld [vmem:[#allocation6 + $0x2c0] sm:$0xff]
        %v337 = vld [vmem:[#allocation6 + $0x2c8] sm:$0xff]
        %v338 = vld [vmem:[#allocation6 + $0x2d0] sm:$0xff]
        %v339 = vld [vmem:[#allocation6 + $0x2d8] sm:$0xff]
        %v340 = vld [vmem:[#allocation6 + $0x2e0] sm:$0xff]
        %v341 = vld [vmem:[#allocation6 + $0x2e8] sm:$0xff]
        %v342 = vld [vmem:[#allocation6 + $0x2f0] sm:$0xff]
        %v343 = vld [vmem:[#allocation6 + $0x2f8] sm:$0xff]
        %v344 = vld [vmem:[#allocation6 + $0x300] sm:$0xff]
        %v345 = vld [vmem:[#allocation6 + $0x308] sm:$0xff]
        %v346 = vld [vmem:[#allocation6 + $0x310] sm:$0xff]
        %v347 = vld [vmem:[#allocation6 + $0x318] sm:$0xff]
        %v348 = vld [vmem:[#allocation6 + $0x320] sm:$0xff]
        %v349 = vld [vmem:[#allocation6 + $0x328] sm:$0xff]
        %v350 = vld [vmem:[#allocation6 + $0x330] sm:$0xff]
        %v351 = vld [vmem:[#allocation6 + $0x338] sm:$0xff]
        %v352 = vld [vmem:[#allocation6 + $0x340] sm:$0xff]
        %v353 = vld [vmem:[#allocation6 + $0x348] sm:$0xff]
        %v354 = vld [vmem:[#allocation6 + $0x350] sm:$0xff]
        %v355 = vld [vmem:[#allocation6 + $0x358] sm:$0xff]
        %v356 = vld [vmem:[#allocation6 + $0x360] sm:$0xff]
        %v357 = vld [vmem:[#allocation6 + $0x368] sm:$0xff]
        %v358 = vld [vmem:[#allocation6 + $0x370] sm:$0xff]
        %v359 = vld [vmem:[#allocation6 + $0x378] sm:$0xff]
        %v360 = vld [vmem:[#allocation6 + $0x380] sm:$0xff]
        %v361 = vld [vmem:[#allocation6 + $0x388] sm:$0xff]
        %v362 = vld [vmem:[#allocation6 + $0x390] sm:$0xff]
        %v363 = vld [vmem:[#allocation6 + $0x398] sm:$0xff]
        %v364 = vld [vmem:[#allocation6 + $0x3a0] sm:$0xff]
        %v365 = vld [vmem:[#allocation6 + $0x3a8] sm:$0xff]
        %v366 = vld [vmem:[#allocation6 + $0x3b0] sm:$0xff]
        %v367 = vld [vmem:[#allocation6 + $0x3b8] sm:$0xff]
        %vm368 = vcmask 523264
        %v370 = vsel %vm368, %v185, 0
        %v373 = vsel %vm368, %v187, 0
        %v376 = vsel %vm368, %v189, 0
        %v379 = vsel %vm368, %v191, 0
        %v382 = vsel %vm368, %v193, 0
        %v385 = vsel %vm368, %v195, 0
        %v388 = vsel %vm368, %v197, 0
        %v391 = vsel %vm368, %v199, 0
        %v394 = vsel %vm368, %v201, 0
        %v397 = vsel %vm368, %v203, 0
        %v400 = vsel %vm368, %v205, 0
        %v403 = vsel %vm368, %v207, 0
        %v406 = vsel %vm368, %v209, 0
        %v409 = vsel %vm368, %v211, 0
        %v412 = vsel %vm368, %v213, 0
        %v415 = vsel %vm368, %v215, 0
        %v418 = vsel %vm368, %v217, 0
        %v421 = vsel %vm368, %v219, 0
        %v424 = vsel %vm368, %v221, 0
        %v427 = vsel %vm368, %v223, 0
        %v430 = vsel %vm368, %v225, 0
        %v433 = vsel %vm368, %v227, 0
        %v436 = vsel %vm368, %v229, 0
        %v439 = vsel %vm368, %v231, 0
        %v442 = vsel %vm368, %v233, 0
        %v445 = vsel %vm368, %v235, 0
        %v448 = vsel %vm368, %v237, 0
        %v451 = vsel %vm368, %v239, 0
        %v454 = vsel %vm368, %v241, 0
        %v457 = vsel %vm368, %v243, 0
        %v460 = vsel %vm368, %v245, 0
        %v463 = vsel %vm368, %v247, 0
        %465 = vmatpush.msra.mxu0 %v323
        %466 = vmatpush.msra.mxu0 %v318
        %467 = vmatpush.msra.mxu0 %v313
        %468 = vmatpush.msra.mxu0 %v308
        %469 = vmatpush.msra.mxu0 %v303
        %470 = vmatpush.msra.mxu0 %v298
        %471 = vmatpush.msra.mxu0 %v293
        %472 = vmatpush.msra.mxu0 %v288
        %473 = vmatpush.msra.mxu0 %v283
        %474 = vmatpush.msra.mxu0 %v278
        %475 = vmatpush.msra.mxu0 %v273
        %476 = vmatpush.msra.mxu0 %v268
        %477 = vmatpush.msra.mxu0 %v263
        %478 = vmatpush.msra.mxu0 %v258
        %479 = vmatpush.msra.mxu0 %v253
        %480 = vmatpush.msra.mxu0 %v248
        %481 = vmatmul.f32.gmra.mxu0 %v184
        %v482 = vpop.f32.mrf.mxu0
        %v483 = vadd.f32 0.0, %v482
        %484 = vmatmul.f32.gmra.mxu0 %v186
        %v485 = vpop.f32.mrf.mxu0
        %v486 = vadd.f32 0.0, %v485
        %487 = vmatmul.f32.gmra.mxu0 %v188
        %v488 = vpop.f32.mrf.mxu0
        %v489 = vadd.f32 0.0, %v488
        %490 = vmatmul.f32.gmra.mxu0 %v190
        %v491 = vpop.f32.mrf.mxu0
        %v492 = vadd.f32 0.0, %v491
        %493 = vmatmul.f32.gmra.mxu0 %v192
        %v494 = vpop.f32.mrf.mxu0
        %v495 = vadd.f32 0.0, %v494
        %496 = vmatmul.f32.gmra.mxu0 %v194
        %v497 = vpop.f32.mrf.mxu0
        %v498 = vadd.f32 0.0, %v497
        %499 = vmatmul.f32.gmra.mxu0 %v196
        %v500 = vpop.f32.mrf.mxu0
        %v501 = vadd.f32 0.0, %v500
        %502 = vmatmul.f32.gmra.mxu0 %v198
        %v503 = vpop.f32.mrf.mxu0
        %v504 = vadd.f32 0.0, %v503
        %505 = vmatmul.f32.gmra.mxu0 %v200
        %v506 = vpop.f32.mrf.mxu0
        %v507 = vadd.f32 0.0, %v506
        %508 = vmatmul.f32.gmra.mxu0 %v202
        %v509 = vpop.f32.mrf.mxu0
        %v510 = vadd.f32 0.0, %v509
        %511 = vmatmul.f32.gmra.mxu0 %v204
        %v512 = vpop.f32.mrf.mxu0
        %v513 = vadd.f32 0.0, %v512
        %514 = vmatmul.f32.gmra.mxu0 %v206
        %v515 = vpop.f32.mrf.mxu0
        %v516 = vadd.f32 0.0, %v515
        %517 = vmatmul.f32.gmra.mxu0 %v208
        %v518 = vpop.f32.mrf.mxu0
        %v519 = vadd.f32 0.0, %v518
        %520 = vmatmul.f32.gmra.mxu0 %v210
        %v521 = vpop.f32.mrf.mxu0
        %v522 = vadd.f32 0.0, %v521
        %523 = vmatmul.f32.gmra.mxu0 %v212
        %v524 = vpop.f32.mrf.mxu0
        %v525 = vadd.f32 0.0, %v524
        %526 = vmatmul.f32.gmra.mxu0 %v214
        %v527 = vpop.f32.mrf.mxu0
        %v528 = vadd.f32 0.0, %v527
        %529 = vmatmul.f32.gmra.mxu0 %v216
        %v530 = vpop.f32.mrf.mxu0
        %v531 = vadd.f32 0.0, %v530
        %532 = vmatmul.f32.gmra.mxu0 %v218
        %v533 = vpop.f32.mrf.mxu0
        %v534 = vadd.f32 0.0, %v533
        %535 = vmatmul.f32.gmra.mxu0 %v220
        %v536 = vpop.f32.mrf.mxu0
        %v537 = vadd.f32 0.0, %v536
        %538 = vmatmul.f32.gmra.mxu0 %v222
        %v539 = vpop.f32.mrf.mxu0
        %v540 = vadd.f32 0.0, %v539
        %541 = vmatmul.f32.gmra.mxu0 %v224
        %v542 = vpop.f32.mrf.mxu0
        %v543 = vadd.f32 0.0, %v542
        %544 = vmatmul.f32.gmra.mxu0 %v226
        %v545 = vpop.f32.mrf.mxu0
        %v546 = vadd.f32 0.0, %v545
        %547 = vmatmul.f32.gmra.mxu0 %v228
        %v548 = vpop.f32.mrf.mxu0
        %v549 = vadd.f32 0.0, %v548
        %550 = vmatmul.f32.gmra.mxu0 %v230
        %v551 = vpop.f32.mrf.mxu0
        %v552 = vadd.f32 0.0, %v551
        %553 = vmatmul.f32.gmra.mxu0 %v232
        %v554 = vpop.f32.mrf.mxu0
        %v555 = vadd.f32 0.0, %v554
        %556 = vmatmul.f32.gmra.mxu0 %v234
        %v557 = vpop.f32.mrf.mxu0
        %v558 = vadd.f32 0.0, %v557
        %559 = vmatmul.f32.gmra.mxu0 %v236
        %v560 = vpop.f32.mrf.mxu0
        %v561 = vadd.f32 0.0, %v560
        %562 = vmatmul.f32.gmra.mxu0 %v238
        %v563 = vpop.f32.mrf.mxu0
        %v564 = vadd.f32 0.0, %v563
        %565 = vmatmul.f32.gmra.mxu0 %v240
        %v566 = vpop.f32.mrf.mxu0
        %v567 = vadd.f32 0.0, %v566
        %568 = vmatmul.f32.gmra.mxu0 %v242
        %v569 = vpop.f32.mrf.mxu0
        %v570 = vadd.f32 0.0, %v569
        %571 = vmatmul.f32.gmra.mxu0 %v244
        %v572 = vpop.f32.mrf.mxu0
        %v573 = vadd.f32 0.0, %v572
        %574 = vmatmul.f32.gmra.mxu0 %v246
        %v575 = vpop.f32.mrf.mxu0
        %v576 = vadd.f32 0.0, %v575
        %577 = vdwg.mxu0
        %578 = vmatpush.msra.mxu0 0.0
        %579 = vmatpush.msra.mxu0 0.0
        %580 = vmatpush.msra.mxu0 0.0
        %581 = vmatpush.msra.mxu0 0.0
        %582 = vmatpush.msra.mxu0 0.0
        %583 = vmatpush.msra.mxu0 0.0
        %584 = vmatpush.msra.mxu0 0.0
        %585 = vmatpush.msra.mxu0 0.0
        %586 = vmatpush.msra.mxu0 %v363
        %587 = vmatpush.msra.mxu0 %v358
        %588 = vmatpush.msra.mxu0 %v353
        %589 = vmatpush.msra.mxu0 %v348
        %590 = vmatpush.msra.mxu0 %v343
        %591 = vmatpush.msra.mxu0 %v338
        %592 = vmatpush.msra.mxu0 %v333
        %593 = vmatpush.msra.mxu0 %v328
        %594 = vmatmul.f32.gmra.mxu0 %v370
        %v595 = vpop.f32.mrf.mxu0
        %v596 = vadd.f32 %v483, %v595
        %597 = vmatmul.f32.gmra.mxu0 %v373
        %v598 = vpop.f32.mrf.mxu0
        %v599 = vadd.f32 %v486, %v598
        %600 = vmatmul.f32.gmra.mxu0 %v376
        %v601 = vpop.f32.mrf.mxu0
        %v602 = vadd.f32 %v489, %v601
        %603 = vmatmul.f32.gmra.mxu0 %v379
        %v604 = vpop.f32.mrf.mxu0
        %v605 = vadd.f32 %v492, %v604
        %606 = vmatmul.f32.gmra.mxu0 %v382
        %v607 = vpop.f32.mrf.mxu0
        %v608 = vadd.f32 %v495, %v607
        %609 = vmatmul.f32.gmra.mxu0 %v385
        %v610 = vpop.f32.mrf.mxu0
        %v611 = vadd.f32 %v498, %v610
        %612 = vmatmul.f32.gmra.mxu0 %v388
        %v613 = vpop.f32.mrf.mxu0
        %v614 = vadd.f32 %v501, %v613
        %615 = vmatmul.f32.gmra.mxu0 %v391
        %v616 = vpop.f32.mrf.mxu0
        %v617 = vadd.f32 %v504, %v616
        %618 = vmatmul.f32.gmra.mxu0 %v394
        %v619 = vpop.f32.mrf.mxu0
        %v620 = vadd.f32 %v507, %v619
        %621 = vmatmul.f32.gmra.mxu0 %v397
        %v622 = vpop.f32.mrf.mxu0
        %v623 = vadd.f32 %v510, %v622
        %624 = vmatmul.f32.gmra.mxu0 %v400
        %v625 = vpop.f32.mrf.mxu0
        %v626 = vadd.f32 %v513, %v625
        %627 = vmatmul.f32.gmra.mxu0 %v403
        %v628 = vpop.f32.mrf.mxu0
        %v629 = vadd.f32 %v516, %v628
        %630 = vmatmul.f32.gmra.mxu0 %v406
        %v631 = vpop.f32.mrf.mxu0
        %v632 = vadd.f32 %v519, %v631
        %633 = vmatmul.f32.gmra.mxu0 %v409
        %v634 = vpop.f32.mrf.mxu0
        %v635 = vadd.f32 %v522, %v634
        %636 = vmatmul.f32.gmra.mxu0 %v412
        %v637 = vpop.f32.mrf.mxu0
        %v638 = vadd.f32 %v525, %v637
        %639 = vmatmul.f32.gmra.mxu0 %v415
        %v640 = vpop.f32.mrf.mxu0
        %v641 = vadd.f32 %v528, %v640
        %642 = vmatmul.f32.gmra.mxu0 %v418
        %v643 = vpop.f32.mrf.mxu0
        %v644 = vadd.f32 %v531, %v643
        %645 = vmatmul.f32.gmra.mxu0 %v421
        %v646 = vpop.f32.mrf.mxu0
        %v647 = vadd.f32 %v534, %v646
        %648 = vmatmul.f32.gmra.mxu0 %v424
        %v649 = vpop.f32.mrf.mxu0
        %v650 = vadd.f32 %v537, %v649
        %651 = vmatmul.f32.gmra.mxu0 %v427
        %v652 = vpop.f32.mrf.mxu0
        %v653 = vadd.f32 %v540, %v652
        %654 = vmatmul.f32.gmra.mxu0 %v430
        %v655 = vpop.f32.mrf.mxu0
        %v656 = vadd.f32 %v543, %v655
        %657 = vmatmul.f32.gmra.mxu0 %v433
        %v658 = vpop.f32.mrf.mxu0
        %v659 = vadd.f32 %v546, %v658
        %660 = vmatmul.f32.gmra.mxu0 %v436
        %v661 = vpop.f32.mrf.mxu0
        %v662 = vadd.f32 %v549, %v661
        %663 = vmatmul.f32.gmra.mxu0 %v439
        %v664 = vpop.f32.mrf.mxu0
        %v665 = vadd.f32 %v552, %v664
        %666 = vmatmul.f32.gmra.mxu0 %v442
        %v667 = vpop.f32.mrf.mxu0
        %v668 = vadd.f32 %v555, %v667
        %669 = vmatmul.f32.gmra.mxu0 %v445
        %v670 = vpop.f32.mrf.mxu0
        %v671 = vadd.f32 %v558, %v670
        %672 = vmatmul.f32.gmra.mxu0 %v448
        %v673 = vpop.f32.mrf.mxu0
        %v674 = vadd.f32 %v561, %v673
        %675 = vmatmul.f32.gmra.mxu0 %v451
        %v676 = vpop.f32.mrf.mxu0
        %v677 = vadd.f32 %v564, %v676
        %678 = vmatmul.f32.gmra.mxu0 %v454
        %v679 = vpop.f32.mrf.mxu0
        %v680 = vadd.f32 %v567, %v679
        %681 = vmatmul.f32.gmra.mxu0 %v457
        %v682 = vpop.f32.mrf.mxu0
        %v683 = vadd.f32 %v570, %v682
        %684 = vmatmul.f32.gmra.mxu0 %v460
        %v685 = vpop.f32.mrf.mxu0
        %v686 = vadd.f32 %v573, %v685
        %687 = vmatmul.f32.gmra.mxu0 %v463
        %v688 = vpop.f32.mrf.mxu0
        %v689 = vadd.f32 %v576, %v688
        %690 = vdwg.mxu0
        %691 = vmatpush.msra.mxu0 %v324
        %692 = vmatpush.msra.mxu0 %v319
        %693 = vmatpush.msra.mxu0 %v314
        %694 = vmatpush.msra.mxu0 %v309
        %695 = vmatpush.msra.mxu0 %v304
        %696 = vmatpush.msra.mxu0 %v299
        %697 = vmatpush.msra.mxu0 %v294
        %698 = vmatpush.msra.mxu0 %v289
        %699 = vmatpush.msra.mxu0 %v284
        %700 = vmatpush.msra.mxu0 %v279
        %701 = vmatpush.msra.mxu0 %v274
        %702 = vmatpush.msra.mxu0 %v269
        %703 = vmatpush.msra.mxu0 %v264
        %704 = vmatpush.msra.mxu0 %v259
        %705 = vmatpush.msra.mxu0 %v254
        %706 = vmatpush.msra.mxu0 %v249
        %707 = vmatmul.f32.gmra.mxu0 %v184
        %v708 = vpop.f32.mrf.mxu0
        %v709 = vadd.f32 0.0, %v708
        %710 = vmatmul.f32.gmra.mxu0 %v186
        %v711 = vpop.f32.mrf.mxu0
        %v712 = vadd.f32 0.0, %v711
        %713 = vmatmul.f32.gmra.mxu0 %v188
        %v714 = vpop.f32.mrf.mxu0
        %v715 = vadd.f32 0.0, %v714
        %716 = vmatmul.f32.gmra.mxu0 %v190
        %v717 = vpop.f32.mrf.mxu0
        %v718 = vadd.f32 0.0, %v717
        %719 = vmatmul.f32.gmra.mxu0 %v192
        %v720 = vpop.f32.mrf.mxu0
        %v721 = vadd.f32 0.0, %v720
        %722 = vmatmul.f32.gmra.mxu0 %v194
        %v723 = vpop.f32.mrf.mxu0
        %v724 = vadd.f32 0.0, %v723
        %725 = vmatmul.f32.gmra.mxu0 %v196
        %v726 = vpop.f32.mrf.mxu0
        %v727 = vadd.f32 0.0, %v726
        %728 = vmatmul.f32.gmra.mxu0 %v198
        %v729 = vpop.f32.mrf.mxu0
        %v730 = vadd.f32 0.0, %v729
        %731 = vmatmul.f32.gmra.mxu0 %v200
        %v732 = vpop.f32.mrf.mxu0
        %v733 = vadd.f32 0.0, %v732
        %734 = vmatmul.f32.gmra.mxu0 %v202
        %v735 = vpop.f32.mrf.mxu0
        %v736 = vadd.f32 0.0, %v735
        %737 = vmatmul.f32.gmra.mxu0 %v204
        %v738 = vpop.f32.mrf.mxu0
        %v739 = vadd.f32 0.0, %v738
        %740 = vmatmul.f32.gmra.mxu0 %v206
        %v741 = vpop.f32.mrf.mxu0
        %v742 = vadd.f32 0.0, %v741
        %743 = vmatmul.f32.gmra.mxu0 %v208
        %v744 = vpop.f32.mrf.mxu0
        %v745 = vadd.f32 0.0, %v744
        %746 = vmatmul.f32.gmra.mxu0 %v210
        %v747 = vpop.f32.mrf.mxu0
        %v748 = vadd.f32 0.0, %v747
        %749 = vmatmul.f32.gmra.mxu0 %v212
        %v750 = vpop.f32.mrf.mxu0
        %v751 = vadd.f32 0.0, %v750
        %752 = vmatmul.f32.gmra.mxu0 %v214
        %v753 = vpop.f32.mrf.mxu0
        %v754 = vadd.f32 0.0, %v753
        %755 = vmatmul.f32.gmra.mxu0 %v216
        %v756 = vpop.f32.mrf.mxu0
        %v757 = vadd.f32 0.0, %v756
        %758 = vmatmul.f32.gmra.mxu0 %v218
        %v759 = vpop.f32.mrf.mxu0
        %v760 = vadd.f32 0.0, %v759
        %761 = vmatmul.f32.gmra.mxu0 %v220
        %v762 = vpop.f32.mrf.mxu0
        %v763 = vadd.f32 0.0, %v762
        %764 = vmatmul.f32.gmra.mxu0 %v222
        %v765 = vpop.f32.mrf.mxu0
        %v766 = vadd.f32 0.0, %v765
        %767 = vmatmul.f32.gmra.mxu0 %v224
        %v768 = vpop.f32.mrf.mxu0
        %v769 = vadd.f32 0.0, %v768
        %770 = vmatmul.f32.gmra.mxu0 %v226
        %v771 = vpop.f32.mrf.mxu0
        %v772 = vadd.f32 0.0, %v771
        %773 = vmatmul.f32.gmra.mxu0 %v228
        %v774 = vpop.f32.mrf.mxu0
        %v775 = vadd.f32 0.0, %v774
        %776 = vmatmul.f32.gmra.mxu0 %v230
        %v777 = vpop.f32.mrf.mxu0
        %v778 = vadd.f32 0.0, %v777
        %779 = vmatmul.f32.gmra.mxu0 %v232
        %v780 = vpop.f32.mrf.mxu0
        %v781 = vadd.f32 0.0, %v780
        %782 = vmatmul.f32.gmra.mxu0 %v234
        %v783 = vpop.f32.mrf.mxu0
        %v784 = vadd.f32 0.0, %v783
        %785 = vmatmul.f32.gmra.mxu0 %v236
        %v786 = vpop.f32.mrf.mxu0
        %v787 = vadd.f32 0.0, %v786
        %788 = vmatmul.f32.gmra.mxu0 %v238
        %v789 = vpop.f32.mrf.mxu0
        %v790 = vadd.f32 0.0, %v789
        %791 = vmatmul.f32.gmra.mxu0 %v240
        %v792 = vpop.f32.mrf.mxu0
        %v793 = vadd.f32 0.0, %v792
        %794 = vmatmul.f32.gmra.mxu0 %v242
        %v795 = vpop.f32.mrf.mxu0
        %v796 = vadd.f32 0.0, %v795
        %797 = vmatmul.f32.gmra.mxu0 %v244
        %v798 = vpop.f32.mrf.mxu0
        %v799 = vadd.f32 0.0, %v798
        %800 = vmatmul.f32.gmra.mxu0 %v246
        %v801 = vpop.f32.mrf.mxu0
        %v802 = vadd.f32 0.0, %v801
        %803 = vdwg.mxu0
        %804 = vmatpush.msra.mxu0 0.0
        %805 = vmatpush.msra.mxu0 0.0
        %806 = vmatpush.msra.mxu0 0.0
        %807 = vmatpush.msra.mxu0 0.0
        %808 = vmatpush.msra.mxu0 0.0
        %809 = vmatpush.msra.mxu0 0.0
        %810 = vmatpush.msra.mxu0 0.0
        %811 = vmatpush.msra.mxu0 0.0
        %812 = vmatpush.msra.mxu0 %v364
        %813 = vmatpush.msra.mxu0 %v359
        %814 = vmatpush.msra.mxu0 %v354
        %815 = vmatpush.msra.mxu0 %v349
        %816 = vmatpush.msra.mxu0 %v344
        %817 = vmatpush.msra.mxu0 %v339
        %818 = vmatpush.msra.mxu0 %v334
        %819 = vmatpush.msra.mxu0 %v329
        %820 = vmatmul.f32.gmra.mxu0 %v370
        %v821 = vpop.f32.mrf.mxu0
        %v822 = vadd.f32 %v709, %v821
        %823 = vmatmul.f32.gmra.mxu0 %v373
        %v824 = vpop.f32.mrf.mxu0
        %v825 = vadd.f32 %v712, %v824
        %826 = vmatmul.f32.gmra.mxu0 %v376
        %v827 = vpop.f32.mrf.mxu0
        %v828 = vadd.f32 %v715, %v827
        %829 = vmatmul.f32.gmra.mxu0 %v379
        %v830 = vpop.f32.mrf.mxu0
        %v831 = vadd.f32 %v718, %v830
        %832 = vmatmul.f32.gmra.mxu0 %v382
        %v833 = vpop.f32.mrf.mxu0
        %v834 = vadd.f32 %v721, %v833
        %835 = vmatmul.f32.gmra.mxu0 %v385
        %v836 = vpop.f32.mrf.mxu0
        %v837 = vadd.f32 %v724, %v836
        %838 = vmatmul.f32.gmra.mxu0 %v388
        %v839 = vpop.f32.mrf.mxu0
        %v840 = vadd.f32 %v727, %v839
        %841 = vmatmul.f32.gmra.mxu0 %v391
        %v842 = vpop.f32.mrf.mxu0
        %v843 = vadd.f32 %v730, %v842
        %844 = vmatmul.f32.gmra.mxu0 %v394
        %v845 = vpop.f32.mrf.mxu0
        %v846 = vadd.f32 %v733, %v845
        %847 = vmatmul.f32.gmra.mxu0 %v397
        %v848 = vpop.f32.mrf.mxu0
        %v849 = vadd.f32 %v736, %v848
        %850 = vmatmul.f32.gmra.mxu0 %v400
        %v851 = vpop.f32.mrf.mxu0
        %v852 = vadd.f32 %v739, %v851
        %853 = vmatmul.f32.gmra.mxu0 %v403
        %v854 = vpop.f32.mrf.mxu0
        %v855 = vadd.f32 %v742, %v854
        %856 = vmatmul.f32.gmra.mxu0 %v406
        %v857 = vpop.f32.mrf.mxu0
        %v858 = vadd.f32 %v745, %v857
        %859 = vmatmul.f32.gmra.mxu0 %v409
        %v860 = vpop.f32.mrf.mxu0
        %v861 = vadd.f32 %v748, %v860
        %862 = vmatmul.f32.gmra.mxu0 %v412
        %v863 = vpop.f32.mrf.mxu0
        %v864 = vadd.f32 %v751, %v863
        %865 = vmatmul.f32.gmra.mxu0 %v415
        %v866 = vpop.f32.mrf.mxu0
        %v867 = vadd.f32 %v754, %v866
        %868 = vmatmul.f32.gmra.mxu0 %v418
        %v869 = vpop.f32.mrf.mxu0
        %v870 = vadd.f32 %v757, %v869
        %871 = vmatmul.f32.gmra.mxu0 %v421
        %v872 = vpop.f32.mrf.mxu0
        %v873 = vadd.f32 %v760, %v872
        %874 = vmatmul.f32.gmra.mxu0 %v424
        %v875 = vpop.f32.mrf.mxu0
        %v876 = vadd.f32 %v763, %v875
        %877 = vmatmul.f32.gmra.mxu0 %v427
        %v878 = vpop.f32.mrf.mxu0
        %v879 = vadd.f32 %v766, %v878
        %880 = vmatmul.f32.gmra.mxu0 %v430
        %v881 = vpop.f32.mrf.mxu0
        %v882 = vadd.f32 %v769, %v881
        %883 = vmatmul.f32.gmra.mxu0 %v433
        %v884 = vpop.f32.mrf.mxu0
        %v885 = vadd.f32 %v772, %v884
        %886 = vmatmul.f32.gmra.mxu0 %v436
        %v887 = vpop.f32.mrf.mxu0
        %v888 = vadd.f32 %v775, %v887
        %889 = vmatmul.f32.gmra.mxu0 %v439
        %v890 = vpop.f32.mrf.mxu0
        %v891 = vadd.f32 %v778, %v890
        %892 = vmatmul.f32.gmra.mxu0 %v442
        %v893 = vpop.f32.mrf.mxu0
        %v894 = vadd.f32 %v781, %v893
        %895 = vmatmul.f32.gmra.mxu0 %v445
        %v896 = vpop.f32.mrf.mxu0
        %v897 = vadd.f32 %v784, %v896
        %898 = vmatmul.f32.gmra.mxu0 %v448
        %v899 = vpop.f32.mrf.mxu0
        %v900 = vadd.f32 %v787, %v899
        %901 = vmatmul.f32.gmra.mxu0 %v451
        %v902 = vpop.f32.mrf.mxu0
        %v903 = vadd.f32 %v790, %v902
        %904 = vmatmul.f32.gmra.mxu0 %v454
        %v905 = vpop.f32.mrf.mxu0
        %v906 = vadd.f32 %v793, %v905
        %907 = vmatmul.f32.gmra.mxu0 %v457
        %v908 = vpop.f32.mrf.mxu0
        %v909 = vadd.f32 %v796, %v908
        %910 = vmatmul.f32.gmra.mxu0 %v460
        %v911 = vpop.f32.mrf.mxu0
        %v912 = vadd.f32 %v799, %v911
        %913 = vmatmul.f32.gmra.mxu0 %v463
        %v914 = vpop.f32.mrf.mxu0
        %v915 = vadd.f32 %v802, %v914
        %916 = vdwg.mxu0
        %917 = vmatpush.msra.mxu0 %v325
        %918 = vmatpush.msra.mxu0 %v320
        %919 = vmatpush.msra.mxu0 %v315
        %920 = vmatpush.msra.mxu0 %v310
        %921 = vmatpush.msra.mxu0 %v305
        %922 = vmatpush.msra.mxu0 %v300
        %923 = vmatpush.msra.mxu0 %v295
        %924 = vmatpush.msra.mxu0 %v290
        %925 = vmatpush.msra.mxu0 %v285
        %926 = vmatpush.msra.mxu0 %v280
        %927 = vmatpush.msra.mxu0 %v275
        %928 = vmatpush.msra.mxu0 %v270
        %929 = vmatpush.msra.mxu0 %v265
        %930 = vmatpush.msra.mxu0 %v260
        %931 = vmatpush.msra.mxu0 %v255
        %932 = vmatpush.msra.mxu0 %v250
        %933 = vmatmul.f32.gmra.mxu0 %v184
        %v934 = vpop.f32.mrf.mxu0
        %v935 = vadd.f32 0.0, %v934
        %936 = vmatmul.f32.gmra.mxu0 %v186
        %v937 = vpop.f32.mrf.mxu0
        %v938 = vadd.f32 0.0, %v937
        %939 = vmatmul.f32.gmra.mxu0 %v188
        %v940 = vpop.f32.mrf.mxu0
        %v941 = vadd.f32 0.0, %v940
        %942 = vmatmul.f32.gmra.mxu0 %v190
        %v943 = vpop.f32.mrf.mxu0
        %v944 = vadd.f32 0.0, %v943
        %945 = vmatmul.f32.gmra.mxu0 %v192
        %v946 = vpop.f32.mrf.mxu0
        %v947 = vadd.f32 0.0, %v946
        %948 = vmatmul.f32.gmra.mxu0 %v194
        %v949 = vpop.f32.mrf.mxu0
        %v950 = vadd.f32 0.0, %v949
        %951 = vmatmul.f32.gmra.mxu0 %v196
        %v952 = vpop.f32.mrf.mxu0
        %v953 = vadd.f32 0.0, %v952
        %954 = vmatmul.f32.gmra.mxu0 %v198
        %v955 = vpop.f32.mrf.mxu0
        %v956 = vadd.f32 0.0, %v955
        %957 = vmatmul.f32.gmra.mxu0 %v200
        %v958 = vpop.f32.mrf.mxu0
        %v959 = vadd.f32 0.0, %v958
        %960 = vmatmul.f32.gmra.mxu0 %v202
        %v961 = vpop.f32.mrf.mxu0
        %v962 = vadd.f32 0.0, %v961
        %963 = vmatmul.f32.gmra.mxu0 %v204
        %v964 = vpop.f32.mrf.mxu0
        %v965 = vadd.f32 0.0, %v964
        %966 = vmatmul.f32.gmra.mxu0 %v206
        %v967 = vpop.f32.mrf.mxu0
        %v968 = vadd.f32 0.0, %v967
        %969 = vmatmul.f32.gmra.mxu0 %v208
        %v970 = vpop.f32.mrf.mxu0
        %v971 = vadd.f32 0.0, %v970
        %972 = vmatmul.f32.gmra.mxu0 %v210
        %v973 = vpop.f32.mrf.mxu0
        %v974 = vadd.f32 0.0, %v973
        %975 = vmatmul.f32.gmra.mxu0 %v212
        %v976 = vpop.f32.mrf.mxu0
        %v977 = vadd.f32 0.0, %v976
        %978 = vmatmul.f32.gmra.mxu0 %v214
        %v979 = vpop.f32.mrf.mxu0
        %v980 = vadd.f32 0.0, %v979
        %981 = vmatmul.f32.gmra.mxu0 %v216
        %v982 = vpop.f32.mrf.mxu0
        %v983 = vadd.f32 0.0, %v982
        %984 = vmatmul.f32.gmra.mxu0 %v218
        %v985 = vpop.f32.mrf.mxu0
        %v986 = vadd.f32 0.0, %v985
        %987 = vmatmul.f32.gmra.mxu0 %v220
        %v988 = vpop.f32.mrf.mxu0
        %v989 = vadd.f32 0.0, %v988
        %990 = vmatmul.f32.gmra.mxu0 %v222
        %v991 = vpop.f32.mrf.mxu0
        %v992 = vadd.f32 0.0, %v991
        %993 = vmatmul.f32.gmra.mxu0 %v224
        %v994 = vpop.f32.mrf.mxu0
        %v995 = vadd.f32 0.0, %v994
        %996 = vmatmul.f32.gmra.mxu0 %v226
        %v997 = vpop.f32.mrf.mxu0
        %v998 = vadd.f32 0.0, %v997
        %999 = vmatmul.f32.gmra.mxu0 %v228
        %v1000 = vpop.f32.mrf.mxu0
        %v1001 = vadd.f32 0.0, %v1000
        %1002 = vmatmul.f32.gmra.mxu0 %v230
        %v1003 = vpop.f32.mrf.mxu0
        %v1004 = vadd.f32 0.0, %v1003
        %1005 = vmatmul.f32.gmra.mxu0 %v232
        %v1006 = vpop.f32.mrf.mxu0
        %v1007 = vadd.f32 0.0, %v1006
        %1008 = vmatmul.f32.gmra.mxu0 %v234
        %v1009 = vpop.f32.mrf.mxu0
        %v1010 = vadd.f32 0.0, %v1009
        %1011 = vmatmul.f32.gmra.mxu0 %v236
        %v1012 = vpop.f32.mrf.mxu0
        %v1013 = vadd.f32 0.0, %v1012
        %1014 = vmatmul.f32.gmra.mxu0 %v238
        %v1015 = vpop.f32.mrf.mxu0
        %v1016 = vadd.f32 0.0, %v1015
        %1017 = vmatmul.f32.gmra.mxu0 %v240
        %v1018 = vpop.f32.mrf.mxu0
        %v1019 = vadd.f32 0.0, %v1018
        %1020 = vmatmul.f32.gmra.mxu0 %v242
        %v1021 = vpop.f32.mrf.mxu0
        %v1022 = vadd.f32 0.0, %v1021
        %1023 = vmatmul.f32.gmra.mxu0 %v244
        %v1024 = vpop.f32.mrf.mxu0
        %v1025 = vadd.f32 0.0, %v1024
        %1026 = vmatmul.f32.gmra.mxu0 %v246
        %v1027 = vpop.f32.mrf.mxu0
        %v1028 = vadd.f32 0.0, %v1027
        %1029 = vdwg.mxu0
        %1030 = vmatpush.msra.mxu0 0.0
        %1031 = vmatpush.msra.mxu0 0.0
        %1032 = vmatpush.msra.mxu0 0.0
        %1033 = vmatpush.msra.mxu0 0.0
        %1034 = vmatpush.msra.mxu0 0.0
        %1035 = vmatpush.msra.mxu0 0.0
        %1036 = vmatpush.msra.mxu0 0.0
        %1037 = vmatpush.msra.mxu0 0.0
        %1038 = vmatpush.msra.mxu0 %v365
        %1039 = vmatpush.msra.mxu0 %v360
        %1040 = vmatpush.msra.mxu0 %v355
        %1041 = vmatpush.msra.mxu0 %v350
        %1042 = vmatpush.msra.mxu0 %v345
        %1043 = vmatpush.msra.mxu0 %v340
        %1044 = vmatpush.msra.mxu0 %v335
        %1045 = vmatpush.msra.mxu0 %v330
        %1046 = vmatmul.f32.gmra.mxu0 %v370
        %v1047 = vpop.f32.mrf.mxu0
        %v1048 = vadd.f32 %v935, %v1047
        %1049 = vmatmul.f32.gmra.mxu0 %v373
        %v1050 = vpop.f32.mrf.mxu0
        %v1051 = vadd.f32 %v938, %v1050
        %1052 = vmatmul.f32.gmra.mxu0 %v376
        %v1053 = vpop.f32.mrf.mxu0
        %v1054 = vadd.f32 %v941, %v1053
        %1055 = vmatmul.f32.gmra.mxu0 %v379
        %v1056 = vpop.f32.mrf.mxu0
        %v1057 = vadd.f32 %v944, %v1056
        %1058 = vmatmul.f32.gmra.mxu0 %v382
        %v1059 = vpop.f32.mrf.mxu0
        %v1060 = vadd.f32 %v947, %v1059
        %1061 = vmatmul.f32.gmra.mxu0 %v385
        %v1062 = vpop.f32.mrf.mxu0
        %v1063 = vadd.f32 %v950, %v1062
        %1064 = vmatmul.f32.gmra.mxu0 %v388
        %v1065 = vpop.f32.mrf.mxu0
        %v1066 = vadd.f32 %v953, %v1065
        %1067 = vmatmul.f32.gmra.mxu0 %v391
        %v1068 = vpop.f32.mrf.mxu0
        %v1069 = vadd.f32 %v956, %v1068
        %1070 = vmatmul.f32.gmra.mxu0 %v394
        %v1071 = vpop.f32.mrf.mxu0
        %v1072 = vadd.f32 %v959, %v1071
        %1073 = vmatmul.f32.gmra.mxu0 %v397
        %v1074 = vpop.f32.mrf.mxu0
        %v1075 = vadd.f32 %v962, %v1074
        %1076 = vmatmul.f32.gmra.mxu0 %v400
        %v1077 = vpop.f32.mrf.mxu0
        %v1078 = vadd.f32 %v965, %v1077
        %1079 = vmatmul.f32.gmra.mxu0 %v403
        %v1080 = vpop.f32.mrf.mxu0
        %v1081 = vadd.f32 %v968, %v1080
        %1082 = vmatmul.f32.gmra.mxu0 %v406
        %v1083 = vpop.f32.mrf.mxu0
        %v1084 = vadd.f32 %v971, %v1083
        %1085 = vmatmul.f32.gmra.mxu0 %v409
        %v1086 = vpop.f32.mrf.mxu0
        %v1087 = vadd.f32 %v974, %v1086
        %1088 = vmatmul.f32.gmra.mxu0 %v412
        %v1089 = vpop.f32.mrf.mxu0
        %v1090 = vadd.f32 %v977, %v1089
        %1091 = vmatmul.f32.gmra.mxu0 %v415
        %v1092 = vpop.f32.mrf.mxu0
        %v1093 = vadd.f32 %v980, %v1092
        %1094 = vmatmul.f32.gmra.mxu0 %v418
        %v1095 = vpop.f32.mrf.mxu0
        %v1096 = vadd.f32 %v983, %v1095
        %1097 = vmatmul.f32.gmra.mxu0 %v421
        %v1098 = vpop.f32.mrf.mxu0
        %v1099 = vadd.f32 %v986, %v1098
        %1100 = vmatmul.f32.gmra.mxu0 %v424
        %v1101 = vpop.f32.mrf.mxu0
        %v1102 = vadd.f32 %v989, %v1101
        %1103 = vmatmul.f32.gmra.mxu0 %v427
        %v1104 = vpop.f32.mrf.mxu0
        %v1105 = vadd.f32 %v992, %v1104
        %1106 = vmatmul.f32.gmra.mxu0 %v430
        %v1107 = vpop.f32.mrf.mxu0
        %v1108 = vadd.f32 %v995, %v1107
        %1109 = vmatmul.f32.gmra.mxu0 %v433
        %v1110 = vpop.f32.mrf.mxu0
        %v1111 = vadd.f32 %v998, %v1110
        %1112 = vmatmul.f32.gmra.mxu0 %v436
        %v1113 = vpop.f32.mrf.mxu0
        %v1114 = vadd.f32 %v1001, %v1113
        %1115 = vmatmul.f32.gmra.mxu0 %v439
        %v1116 = vpop.f32.mrf.mxu0
        %v1117 = vadd.f32 %v1004, %v1116
        %1118 = vmatmul.f32.gmra.mxu0 %v442
        %v1119 = vpop.f32.mrf.mxu0
        %v1120 = vadd.f32 %v1007, %v1119
        %1121 = vmatmul.f32.gmra.mxu0 %v445
        %v1122 = vpop.f32.mrf.mxu0
        %v1123 = vadd.f32 %v1010, %v1122
        %1124 = vmatmul.f32.gmra.mxu0 %v448
        %v1125 = vpop.f32.mrf.mxu0
        %v1126 = vadd.f32 %v1013, %v1125
        %1127 = vmatmul.f32.gmra.mxu0 %v451
        %v1128 = vpop.f32.mrf.mxu0
        %v1129 = vadd.f32 %v1016, %v1128
        %1130 = vmatmul.f32.gmra.mxu0 %v454
        %v1131 = vpop.f32.mrf.mxu0
        %v1132 = vadd.f32 %v1019, %v1131
        %1133 = vmatmul.f32.gmra.mxu0 %v457
        %v1134 = vpop.f32.mrf.mxu0
        %v1135 = vadd.f32 %v1022, %v1134
        %1136 = vmatmul.f32.gmra.mxu0 %v460
        %v1137 = vpop.f32.mrf.mxu0
        %v1138 = vadd.f32 %v1025, %v1137
        %1139 = vmatmul.f32.gmra.mxu0 %v463
        %v1140 = vpop.f32.mrf.mxu0
        %v1141 = vadd.f32 %v1028, %v1140
        %1142 = vdwg.mxu0
        %1143 = vmatpush.msra.mxu0 %v326
        %1144 = vmatpush.msra.mxu0 %v321
        %1145 = vmatpush.msra.mxu0 %v316
        %1146 = vmatpush.msra.mxu0 %v311
        %1147 = vmatpush.msra.mxu0 %v306
        %1148 = vmatpush.msra.mxu0 %v301
        %1149 = vmatpush.msra.mxu0 %v296
        %1150 = vmatpush.msra.mxu0 %v291
        %1151 = vmatpush.msra.mxu0 %v286
        %1152 = vmatpush.msra.mxu0 %v281
        %1153 = vmatpush.msra.mxu0 %v276
        %1154 = vmatpush.msra.mxu0 %v271
        %1155 = vmatpush.msra.mxu0 %v266
        %1156 = vmatpush.msra.mxu0 %v261
        %1157 = vmatpush.msra.mxu0 %v256
        %1158 = vmatpush.msra.mxu0 %v251
        %1159 = vmatmul.f32.gmra.mxu0 %v184
        %v1160 = vpop.f32.mrf.mxu0
        %v1161 = vadd.f32 0.0, %v1160
        %1162 = vmatmul.f32.gmra.mxu0 %v186
        %v1163 = vpop.f32.mrf.mxu0
        %v1164 = vadd.f32 0.0, %v1163
        %1165 = vmatmul.f32.gmra.mxu0 %v188
        %v1166 = vpop.f32.mrf.mxu0
        %v1167 = vadd.f32 0.0, %v1166
        %1168 = vmatmul.f32.gmra.mxu0 %v190
        %v1169 = vpop.f32.mrf.mxu0
        %v1170 = vadd.f32 0.0, %v1169
        %1171 = vmatmul.f32.gmra.mxu0 %v192
        %v1172 = vpop.f32.mrf.mxu0
        %v1173 = vadd.f32 0.0, %v1172
        %1174 = vmatmul.f32.gmra.mxu0 %v194
        %v1175 = vpop.f32.mrf.mxu0
        %v1176 = vadd.f32 0.0, %v1175
        %1177 = vmatmul.f32.gmra.mxu0 %v196
        %v1178 = vpop.f32.mrf.mxu0
        %v1179 = vadd.f32 0.0, %v1178
        %1180 = vmatmul.f32.gmra.mxu0 %v198
        %v1181 = vpop.f32.mrf.mxu0
        %v1182 = vadd.f32 0.0, %v1181
        %1183 = vmatmul.f32.gmra.mxu0 %v200
        %v1184 = vpop.f32.mrf.mxu0
        %v1185 = vadd.f32 0.0, %v1184
        %1186 = vmatmul.f32.gmra.mxu0 %v202
        %v1187 = vpop.f32.mrf.mxu0
        %v1188 = vadd.f32 0.0, %v1187
        %1189 = vmatmul.f32.gmra.mxu0 %v204
        %v1190 = vpop.f32.mrf.mxu0
        %v1191 = vadd.f32 0.0, %v1190
        %1192 = vmatmul.f32.gmra.mxu0 %v206
        %v1193 = vpop.f32.mrf.mxu0
        %v1194 = vadd.f32 0.0, %v1193
        %1195 = vmatmul.f32.gmra.mxu0 %v208
        %v1196 = vpop.f32.mrf.mxu0
        %v1197 = vadd.f32 0.0, %v1196
        %1198 = vmatmul.f32.gmra.mxu0 %v210
        %v1199 = vpop.f32.mrf.mxu0
        %v1200 = vadd.f32 0.0, %v1199
        %1201 = vmatmul.f32.gmra.mxu0 %v212
        %v1202 = vpop.f32.mrf.mxu0
        %v1203 = vadd.f32 0.0, %v1202
        %1204 = vmatmul.f32.gmra.mxu0 %v214
        %v1205 = vpop.f32.mrf.mxu0
        %v1206 = vadd.f32 0.0, %v1205
        %1207 = vmatmul.f32.gmra.mxu0 %v216
        %v1208 = vpop.f32.mrf.mxu0
        %v1209 = vadd.f32 0.0, %v1208
        %1210 = vmatmul.f32.gmra.mxu0 %v218
        %v1211 = vpop.f32.mrf.mxu0
        %v1212 = vadd.f32 0.0, %v1211
        %1213 = vmatmul.f32.gmra.mxu0 %v220
        %v1214 = vpop.f32.mrf.mxu0
        %v1215 = vadd.f32 0.0, %v1214
        %1216 = vmatmul.f32.gmra.mxu0 %v222
        %v1217 = vpop.f32.mrf.mxu0
        %v1218 = vadd.f32 0.0, %v1217
        %1219 = vmatmul.f32.gmra.mxu0 %v224
        %v1220 = vpop.f32.mrf.mxu0
        %v1221 = vadd.f32 0.0, %v1220
        %1222 = vmatmul.f32.gmra.mxu0 %v226
        %v1223 = vpop.f32.mrf.mxu0
        %v1224 = vadd.f32 0.0, %v1223
        %1225 = vmatmul.f32.gmra.mxu0 %v228
        %v1226 = vpop.f32.mrf.mxu0
        %v1227 = vadd.f32 0.0, %v1226
        %1228 = vmatmul.f32.gmra.mxu0 %v230
        %v1229 = vpop.f32.mrf.mxu0
        %v1230 = vadd.f32 0.0, %v1229
        %1231 = vmatmul.f32.gmra.mxu0 %v232
        %v1232 = vpop.f32.mrf.mxu0
        %v1233 = vadd.f32 0.0, %v1232
        %1234 = vmatmul.f32.gmra.mxu0 %v234
        %v1235 = vpop.f32.mrf.mxu0
        %v1236 = vadd.f32 0.0, %v1235
        %1237 = vmatmul.f32.gmra.mxu0 %v236
        %v1238 = vpop.f32.mrf.mxu0
        %v1239 = vadd.f32 0.0, %v1238
        %1240 = vmatmul.f32.gmra.mxu0 %v238
        %v1241 = vpop.f32.mrf.mxu0
        %v1242 = vadd.f32 0.0, %v1241
        %1243 = vmatmul.f32.gmra.mxu0 %v240
        %v1244 = vpop.f32.mrf.mxu0
        %v1245 = vadd.f32 0.0, %v1244
        %1246 = vmatmul.f32.gmra.mxu0 %v242
        %v1247 = vpop.f32.mrf.mxu0
        %v1248 = vadd.f32 0.0, %v1247
        %1249 = vmatmul.f32.gmra.mxu0 %v244
        %v1250 = vpop.f32.mrf.mxu0
        %v1251 = vadd.f32 0.0, %v1250
        %1252 = vmatmul.f32.gmra.mxu0 %v246
        %v1253 = vpop.f32.mrf.mxu0
        %v1254 = vadd.f32 0.0, %v1253
        %1255 = vdwg.mxu0
        %1256 = vmatpush.msra.mxu0 0.0
        %1257 = vmatpush.msra.mxu0 0.0
        %1258 = vmatpush.msra.mxu0 0.0
        %1259 = vmatpush.msra.mxu0 0.0
        %1260 = vmatpush.msra.mxu0 0.0
        %1261 = vmatpush.msra.mxu0 0.0
        %1262 = vmatpush.msra.mxu0 0.0
        %1263 = vmatpush.msra.mxu0 0.0
        %1264 = vmatpush.msra.mxu0 %v366
        %1265 = vmatpush.msra.mxu0 %v361
        %1266 = vmatpush.msra.mxu0 %v356
        %1267 = vmatpush.msra.mxu0 %v351
        %1268 = vmatpush.msra.mxu0 %v346
        %1269 = vmatpush.msra.mxu0 %v341
        %1270 = vmatpush.msra.mxu0 %v336
        %1271 = vmatpush.msra.mxu0 %v331
        %1272 = vmatmul.f32.gmra.mxu0 %v370
        %v1273 = vpop.f32.mrf.mxu0
        %v1274 = vadd.f32 %v1161, %v1273
        %1275 = vmatmul.f32.gmra.mxu0 %v373
        %v1276 = vpop.f32.mrf.mxu0
        %v1277 = vadd.f32 %v1164, %v1276
        %1278 = vmatmul.f32.gmra.mxu0 %v376
        %v1279 = vpop.f32.mrf.mxu0
        %v1280 = vadd.f32 %v1167, %v1279
        %1281 = vmatmul.f32.gmra.mxu0 %v379
        %v1282 = vpop.f32.mrf.mxu0
        %v1283 = vadd.f32 %v1170, %v1282
        %1284 = vmatmul.f32.gmra.mxu0 %v382
        %v1285 = vpop.f32.mrf.mxu0
        %v1286 = vadd.f32 %v1173, %v1285
        %1287 = vmatmul.f32.gmra.mxu0 %v385
        %v1288 = vpop.f32.mrf.mxu0
        %v1289 = vadd.f32 %v1176, %v1288
        %1290 = vmatmul.f32.gmra.mxu0 %v388
        %v1291 = vpop.f32.mrf.mxu0
        %v1292 = vadd.f32 %v1179, %v1291
        %1293 = vmatmul.f32.gmra.mxu0 %v391
        %v1294 = vpop.f32.mrf.mxu0
        %v1295 = vadd.f32 %v1182, %v1294
        %1296 = vmatmul.f32.gmra.mxu0 %v394
        %v1297 = vpop.f32.mrf.mxu0
        %v1298 = vadd.f32 %v1185, %v1297
        %1299 = vmatmul.f32.gmra.mxu0 %v397
        %v1300 = vpop.f32.mrf.mxu0
        %v1301 = vadd.f32 %v1188, %v1300
        %1302 = vmatmul.f32.gmra.mxu0 %v400
        %v1303 = vpop.f32.mrf.mxu0
        %v1304 = vadd.f32 %v1191, %v1303
        %1305 = vmatmul.f32.gmra.mxu0 %v403
        %v1306 = vpop.f32.mrf.mxu0
        %v1307 = vadd.f32 %v1194, %v1306
        %1308 = vmatmul.f32.gmra.mxu0 %v406
        %v1309 = vpop.f32.mrf.mxu0
        %v1310 = vadd.f32 %v1197, %v1309
        %1311 = vmatmul.f32.gmra.mxu0 %v409
        %v1312 = vpop.f32.mrf.mxu0
        %v1313 = vadd.f32 %v1200, %v1312
        %1314 = vmatmul.f32.gmra.mxu0 %v412
        %v1315 = vpop.f32.mrf.mxu0
        %v1316 = vadd.f32 %v1203, %v1315
        %1317 = vmatmul.f32.gmra.mxu0 %v415
        %v1318 = vpop.f32.mrf.mxu0
        %v1319 = vadd.f32 %v1206, %v1318
        %1320 = vmatmul.f32.gmra.mxu0 %v418
        %v1321 = vpop.f32.mrf.mxu0
        %v1322 = vadd.f32 %v1209, %v1321
        %1323 = vmatmul.f32.gmra.mxu0 %v421
        %v1324 = vpop.f32.mrf.mxu0
        %v1325 = vadd.f32 %v1212, %v1324
        %1326 = vmatmul.f32.gmra.mxu0 %v424
        %v1327 = vpop.f32.mrf.mxu0
        %v1328 = vadd.f32 %v1215, %v1327
        %1329 = vmatmul.f32.gmra.mxu0 %v427
        %v1330 = vpop.f32.mrf.mxu0
        %v1331 = vadd.f32 %v1218, %v1330
        %1332 = vmatmul.f32.gmra.mxu0 %v430
        %v1333 = vpop.f32.mrf.mxu0
        %v1334 = vadd.f32 %v1221, %v1333
        %1335 = vmatmul.f32.gmra.mxu0 %v433
        %v1336 = vpop.f32.mrf.mxu0
        %v1337 = vadd.f32 %v1224, %v1336
        %1338 = vmatmul.f32.gmra.mxu0 %v436
        %v1339 = vpop.f32.mrf.mxu0
        %v1340 = vadd.f32 %v1227, %v1339
        %1341 = vmatmul.f32.gmra.mxu0 %v439
        %v1342 = vpop.f32.mrf.mxu0
        %v1343 = vadd.f32 %v1230, %v1342
        %1344 = vmatmul.f32.gmra.mxu0 %v442
        %v1345 = vpop.f32.mrf.mxu0
        %v1346 = vadd.f32 %v1233, %v1345
        %1347 = vmatmul.f32.gmra.mxu0 %v445
        %v1348 = vpop.f32.mrf.mxu0
        %v1349 = vadd.f32 %v1236, %v1348
        %1350 = vmatmul.f32.gmra.mxu0 %v448
        %v1351 = vpop.f32.mrf.mxu0
        %v1352 = vadd.f32 %v1239, %v1351
        %1353 = vmatmul.f32.gmra.mxu0 %v451
        %v1354 = vpop.f32.mrf.mxu0
        %v1355 = vadd.f32 %v1242, %v1354
        %1356 = vmatmul.f32.gmra.mxu0 %v454
        %v1357 = vpop.f32.mrf.mxu0
        %v1358 = vadd.f32 %v1245, %v1357
        %1359 = vmatmul.f32.gmra.mxu0 %v457
        %v1360 = vpop.f32.mrf.mxu0
        %v1361 = vadd.f32 %v1248, %v1360
        %1362 = vmatmul.f32.gmra.mxu0 %v460
        %v1363 = vpop.f32.mrf.mxu0
        %v1364 = vadd.f32 %v1251, %v1363
        %1365 = vmatmul.f32.gmra.mxu0 %v463
        %v1366 = vpop.f32.mrf.mxu0
        %v1367 = vadd.f32 %v1254, %v1366
        %1368 = vdwg.mxu0
        %1369 = vmatpush.msra.mxu0 %v327
        %1370 = vmatpush.msra.mxu0 %v322
        %1371 = vmatpush.msra.mxu0 %v317
        %1372 = vmatpush.msra.mxu0 %v312
        %1373 = vmatpush.msra.mxu0 %v307
        %1374 = vmatpush.msra.mxu0 %v302
        %1375 = vmatpush.msra.mxu0 %v297
        %1376 = vmatpush.msra.mxu0 %v292
        %1377 = vmatpush.msra.mxu0 %v287
        %1378 = vmatpush.msra.mxu0 %v282
        %1379 = vmatpush.msra.mxu0 %v277
        %1380 = vmatpush.msra.mxu0 %v272
        %1381 = vmatpush.msra.mxu0 %v267
        %1382 = vmatpush.msra.mxu0 %v262
        %1383 = vmatpush.msra.mxu0 %v257
        %1384 = vmatpush.msra.mxu0 %v252
        %1385 = vmatmul.f32.gmra.mxu0 %v184
        %v1386 = vpop.f32.mrf.mxu0
        %v1387 = vadd.f32 0.0, %v1386
        %1388 = vmatmul.f32.gmra.mxu0 %v186
        %v1389 = vpop.f32.mrf.mxu0
        %v1390 = vadd.f32 0.0, %v1389
        %1391 = vmatmul.f32.gmra.mxu0 %v188
        %v1392 = vpop.f32.mrf.mxu0
        %v1393 = vadd.f32 0.0, %v1392
        %1394 = vmatmul.f32.gmra.mxu0 %v190
        %v1395 = vpop.f32.mrf.mxu0
        %v1396 = vadd.f32 0.0, %v1395
        %1397 = vmatmul.f32.gmra.mxu0 %v192
        %v1398 = vpop.f32.mrf.mxu0
        %v1399 = vadd.f32 0.0, %v1398
        %1400 = vmatmul.f32.gmra.mxu0 %v194
        %v1401 = vpop.f32.mrf.mxu0
        %v1402 = vadd.f32 0.0, %v1401
        %1403 = vmatmul.f32.gmra.mxu0 %v196
        %v1404 = vpop.f32.mrf.mxu0
        %v1405 = vadd.f32 0.0, %v1404
        %1406 = vmatmul.f32.gmra.mxu0 %v198
        %v1407 = vpop.f32.mrf.mxu0
        %v1408 = vadd.f32 0.0, %v1407
        %1409 = vmatmul.f32.gmra.mxu0 %v200
        %v1410 = vpop.f32.mrf.mxu0
        %v1411 = vadd.f32 0.0, %v1410
        %1412 = vmatmul.f32.gmra.mxu0 %v202
        %v1413 = vpop.f32.mrf.mxu0
        %v1414 = vadd.f32 0.0, %v1413
        %1415 = vmatmul.f32.gmra.mxu0 %v204
        %v1416 = vpop.f32.mrf.mxu0
        %v1417 = vadd.f32 0.0, %v1416
        %1418 = vmatmul.f32.gmra.mxu0 %v206
        %v1419 = vpop.f32.mrf.mxu0
        %v1420 = vadd.f32 0.0, %v1419
        %1421 = vmatmul.f32.gmra.mxu0 %v208
        %v1422 = vpop.f32.mrf.mxu0
        %v1423 = vadd.f32 0.0, %v1422
        %1424 = vmatmul.f32.gmra.mxu0 %v210
        %v1425 = vpop.f32.mrf.mxu0
        %v1426 = vadd.f32 0.0, %v1425
        %1427 = vmatmul.f32.gmra.mxu0 %v212
        %v1428 = vpop.f32.mrf.mxu0
        %v1429 = vadd.f32 0.0, %v1428
        %1430 = vmatmul.f32.gmra.mxu0 %v214
        %v1431 = vpop.f32.mrf.mxu0
        %v1432 = vadd.f32 0.0, %v1431
        %1433 = vmatmul.f32.gmra.mxu0 %v216
        %v1434 = vpop.f32.mrf.mxu0
        %v1435 = vadd.f32 0.0, %v1434
        %1436 = vmatmul.f32.gmra.mxu0 %v218
        %v1437 = vpop.f32.mrf.mxu0
        %v1438 = vadd.f32 0.0, %v1437
        %1439 = vmatmul.f32.gmra.mxu0 %v220
        %v1440 = vpop.f32.mrf.mxu0
        %v1441 = vadd.f32 0.0, %v1440
        %1442 = vmatmul.f32.gmra.mxu0 %v222
        %v1443 = vpop.f32.mrf.mxu0
        %v1444 = vadd.f32 0.0, %v1443
        %1445 = vmatmul.f32.gmra.mxu0 %v224
        %v1446 = vpop.f32.mrf.mxu0
        %v1447 = vadd.f32 0.0, %v1446
        %1448 = vmatmul.f32.gmra.mxu0 %v226
        %v1449 = vpop.f32.mrf.mxu0
        %v1450 = vadd.f32 0.0, %v1449
        %1451 = vmatmul.f32.gmra.mxu0 %v228
        %v1452 = vpop.f32.mrf.mxu0
        %v1453 = vadd.f32 0.0, %v1452
        %1454 = vmatmul.f32.gmra.mxu0 %v230
        %v1455 = vpop.f32.mrf.mxu0
        %v1456 = vadd.f32 0.0, %v1455
        %1457 = vmatmul.f32.gmra.mxu0 %v232
        %v1458 = vpop.f32.mrf.mxu0
        %v1459 = vadd.f32 0.0, %v1458
        %1460 = vmatmul.f32.gmra.mxu0 %v234
        %v1461 = vpop.f32.mrf.mxu0
        %v1462 = vadd.f32 0.0, %v1461
        %1463 = vmatmul.f32.gmra.mxu0 %v236
        %v1464 = vpop.f32.mrf.mxu0
        %v1465 = vadd.f32 0.0, %v1464
        %1466 = vmatmul.f32.gmra.mxu0 %v238
        %v1467 = vpop.f32.mrf.mxu0
        %v1468 = vadd.f32 0.0, %v1467
        %1469 = vmatmul.f32.gmra.mxu0 %v240
        %v1470 = vpop.f32.mrf.mxu0
        %v1471 = vadd.f32 0.0, %v1470
        %1472 = vmatmul.f32.gmra.mxu0 %v242
        %v1473 = vpop.f32.mrf.mxu0
        %v1474 = vadd.f32 0.0, %v1473
        %1475 = vmatmul.f32.gmra.mxu0 %v244
        %v1476 = vpop.f32.mrf.mxu0
        %v1477 = vadd.f32 0.0, %v1476
        %1478 = vmatmul.f32.gmra.mxu0 %v246
        %v1479 = vpop.f32.mrf.mxu0
        %v1480 = vadd.f32 0.0, %v1479
        %1481 = vdwg.mxu0
        %1482 = vmatpush.msra.mxu0 0.0
        %1483 = vmatpush.msra.mxu0 0.0
        %1484 = vmatpush.msra.mxu0 0.0
        %1485 = vmatpush.msra.mxu0 0.0
        %1486 = vmatpush.msra.mxu0 0.0
        %1487 = vmatpush.msra.mxu0 0.0
        %1488 = vmatpush.msra.mxu0 0.0
        %1489 = vmatpush.msra.mxu0 0.0
        %1490 = vmatpush.msra.mxu0 %v367
        %1491 = vmatpush.msra.mxu0 %v362
        %1492 = vmatpush.msra.mxu0 %v357
        %1493 = vmatpush.msra.mxu0 %v352
        %1494 = vmatpush.msra.mxu0 %v347
        %1495 = vmatpush.msra.mxu0 %v342
        %1496 = vmatpush.msra.mxu0 %v337
        %1497 = vmatpush.msra.mxu0 %v332
        %1498 = vmatmul.f32.gmra.mxu0 %v370
        %v1499 = vpop.f32.mrf.mxu0
        %v1500 = vadd.f32 %v1387, %v1499
        %1501 = vmatmul.f32.gmra.mxu0 %v373
        %v1502 = vpop.f32.mrf.mxu0
        %v1503 = vadd.f32 %v1390, %v1502
        %1504 = vmatmul.f32.gmra.mxu0 %v376
        %v1505 = vpop.f32.mrf.mxu0
        %v1506 = vadd.f32 %v1393, %v1505
        %1507 = vmatmul.f32.gmra.mxu0 %v379
        %v1508 = vpop.f32.mrf.mxu0
        %v1509 = vadd.f32 %v1396, %v1508
        %1510 = vmatmul.f32.gmra.mxu0 %v382
        %v1511 = vpop.f32.mrf.mxu0
        %v1512 = vadd.f32 %v1399, %v1511
        %1513 = vmatmul.f32.gmra.mxu0 %v385
        %v1514 = vpop.f32.mrf.mxu0
        %v1515 = vadd.f32 %v1402, %v1514
        %1516 = vmatmul.f32.gmra.mxu0 %v388
        %v1517 = vpop.f32.mrf.mxu0
        %v1518 = vadd.f32 %v1405, %v1517
        %1519 = vmatmul.f32.gmra.mxu0 %v391
        %v1520 = vpop.f32.mrf.mxu0
        %v1521 = vadd.f32 %v1408, %v1520
        %1522 = vmatmul.f32.gmra.mxu0 %v394
        %v1523 = vpop.f32.mrf.mxu0
        %v1524 = vadd.f32 %v1411, %v1523
        %1525 = vmatmul.f32.gmra.mxu0 %v397
        %v1526 = vpop.f32.mrf.mxu0
        %v1527 = vadd.f32 %v1414, %v1526
        %1528 = vmatmul.f32.gmra.mxu0 %v400
        %v1529 = vpop.f32.mrf.mxu0
        %v1530 = vadd.f32 %v1417, %v1529
        %1531 = vmatmul.f32.gmra.mxu0 %v403
        %v1532 = vpop.f32.mrf.mxu0
        %v1533 = vadd.f32 %v1420, %v1532
        %1534 = vmatmul.f32.gmra.mxu0 %v406
        %v1535 = vpop.f32.mrf.mxu0
        %v1536 = vadd.f32 %v1423, %v1535
        %1537 = vmatmul.f32.gmra.mxu0 %v409
        %v1538 = vpop.f32.mrf.mxu0
        %v1539 = vadd.f32 %v1426, %v1538
        %1540 = vmatmul.f32.gmra.mxu0 %v412
        %v1541 = vpop.f32.mrf.mxu0
        %v1542 = vadd.f32 %v1429, %v1541
        %1543 = vmatmul.f32.gmra.mxu0 %v415
        %v1544 = vpop.f32.mrf.mxu0
        %v1545 = vadd.f32 %v1432, %v1544
        %1546 = vmatmul.f32.gmra.mxu0 %v418
        %v1547 = vpop.f32.mrf.mxu0
        %v1548 = vadd.f32 %v1435, %v1547
        %1549 = vmatmul.f32.gmra.mxu0 %v421
        %v1550 = vpop.f32.mrf.mxu0
        %v1551 = vadd.f32 %v1438, %v1550
        %1552 = vmatmul.f32.gmra.mxu0 %v424
        %v1553 = vpop.f32.mrf.mxu0
        %v1554 = vadd.f32 %v1441, %v1553
        %1555 = vmatmul.f32.gmra.mxu0 %v427
        %v1556 = vpop.f32.mrf.mxu0
        %v1557 = vadd.f32 %v1444, %v1556
        %1558 = vmatmul.f32.gmra.mxu0 %v430
        %v1559 = vpop.f32.mrf.mxu0
        %v1560 = vadd.f32 %v1447, %v1559
        %1561 = vmatmul.f32.gmra.mxu0 %v433
        %v1562 = vpop.f32.mrf.mxu0
        %v1563 = vadd.f32 %v1450, %v1562
        %1564 = vmatmul.f32.gmra.mxu0 %v436
        %v1565 = vpop.f32.mrf.mxu0
        %v1566 = vadd.f32 %v1453, %v1565
        %1567 = vmatmul.f32.gmra.mxu0 %v439
        %v1568 = vpop.f32.mrf.mxu0
        %v1569 = vadd.f32 %v1456, %v1568
        %1570 = vmatmul.f32.gmra.mxu0 %v442
        %v1571 = vpop.f32.mrf.mxu0
        %v1572 = vadd.f32 %v1459, %v1571
        %1573 = vmatmul.f32.gmra.mxu0 %v445
        %v1574 = vpop.f32.mrf.mxu0
        %v1575 = vadd.f32 %v1462, %v1574
        %1576 = vmatmul.f32.gmra.mxu0 %v448
        %v1577 = vpop.f32.mrf.mxu0
        %v1578 = vadd.f32 %v1465, %v1577
        %1579 = vmatmul.f32.gmra.mxu0 %v451
        %v1580 = vpop.f32.mrf.mxu0
        %v1581 = vadd.f32 %v1468, %v1580
        %1582 = vmatmul.f32.gmra.mxu0 %v454
        %v1583 = vpop.f32.mrf.mxu0
        %v1584 = vadd.f32 %v1471, %v1583
        %1585 = vmatmul.f32.gmra.mxu0 %v457
        %v1586 = vpop.f32.mrf.mxu0
        %v1587 = vadd.f32 %v1474, %v1586
        %1588 = vmatmul.f32.gmra.mxu0 %v460
        %v1589 = vpop.f32.mrf.mxu0
        %v1590 = vadd.f32 %v1477, %v1589
        %1591 = vmatmul.f32.gmra.mxu0 %v463
        %v1592 = vpop.f32.mrf.mxu0
        %v1593 = vadd.f32 %v1480, %v1592
        %1594 = vdwg.mxu0
        %1595 = vst [vmem:[#allocation2] sm:$0xff] %v596
        %1596 = vst [vmem:[#allocation2 + $0x8] sm:$0xff] %v822
        %1597 = vst [vmem:[#allocation2 + $0x10] sm:$0xff] %v1048
        %1598 = vst [vmem:[#allocation2 + $0x18] sm:$0xff] %v1274
        %1599 = vst.msk [vmem:[#allocation2 + $0x20] sm:$0xff] %vm368, %v1500
        %1600 = vst [vmem:[#allocation2 + $0x28] sm:$0xff] %v599
        %1601 = vst [vmem:[#allocation2 + $0x30] sm:$0xff] %v825
        %1602 = vst [vmem:[#allocation2 + $0x38] sm:$0xff] %v1051
        %1603 = vst [vmem:[#allocation2 + $0x40] sm:$0xff] %v1277
        %1604 = vst.msk [vmem:[#allocation2 + $0x48] sm:$0xff] %vm368, %v1503
        %1605 = vst [vmem:[#allocation2 + $0x50] sm:$0xff] %v602
        %1606 = vst [vmem:[#allocation2 + $0x58] sm:$0xff] %v828
        %1607 = vst [vmem:[#allocation2 + $0x60] sm:$0xff] %v1054
        %1608 = vst [vmem:[#allocation2 + $0x68] sm:$0xff] %v1280
        %1609 = vst.msk [vmem:[#allocation2 + $0x70] sm:$0xff] %vm368, %v1506
        %1610 = vst [vmem:[#allocation2 + $0x78] sm:$0xff] %v605
        %1611 = vst [vmem:[#allocation2 + $0x80] sm:$0xff] %v831
        %1612 = vst [vmem:[#allocation2 + $0x88] sm:$0xff] %v1057
        %1613 = vst [vmem:[#allocation2 + $0x90] sm:$0xff] %v1283
        %1614 = vst.msk [vmem:[#allocation2 + $0x98] sm:$0xff] %vm368, %v1509
        %1615 = vst [vmem:[#allocation2 + $0xa0] sm:$0xff] %v608
        %1616 = vst [vmem:[#allocation2 + $0xa8] sm:$0xff] %v834
        %1617 = vst [vmem:[#allocation2 + $0xb0] sm:$0xff] %v1060
        %1618 = vst [vmem:[#allocation2 + $0xb8] sm:$0xff] %v1286
        %1619 = vst.msk [vmem:[#allocation2 + $0xc0] sm:$0xff] %vm368, %v1512
        %1620 = vst [vmem:[#allocation2 + $0xc8] sm:$0xff] %v611
        %1621 = vst [vmem:[#allocation2 + $0xd0] sm:$0xff] %v837
        %1622 = vst [vmem:[#allocation2 + $0xd8] sm:$0xff] %v1063
        %1623 = vst [vmem:[#allocation2 + $0xe0] sm:$0xff] %v1289
        %1624 = vst.msk [vmem:[#allocation2 + $0xe8] sm:$0xff] %vm368, %v1515
        %1625 = vst [vmem:[#allocation2 + $0xf0] sm:$0xff] %v614
        %1626 = vst [vmem:[#allocation2 + $0xf8] sm:$0xff] %v840
        %1627 = vst [vmem:[#allocation2 + $0x100] sm:$0xff] %v1066
        %1628 = vst [vmem:[#allocation2 + $0x108] sm:$0xff] %v1292
        %1629 = vst.msk [vmem:[#allocation2 + $0x110] sm:$0xff] %vm368, %v1518
        %1630 = vst [vmem:[#allocation2 + $0x118] sm:$0xff] %v617
        %1631 = vst [vmem:[#allocation2 + $0x120] sm:$0xff] %v843
        %1632 = vst [vmem:[#allocation2 + $0x128] sm:$0xff] %v1069
        %1633 = vst [vmem:[#allocation2 + $0x130] sm:$0xff] %v1295
        %1634 = vst.msk [vmem:[#allocation2 + $0x138] sm:$0xff] %vm368, %v1521
        %1635 = vst [vmem:[#allocation2 + $0x140] sm:$0xff] %v620
        %1636 = vst [vmem:[#allocation2 + $0x148] sm:$0xff] %v846
        %1637 = vst [vmem:[#allocation2 + $0x150] sm:$0xff] %v1072
        %1638 = vst [vmem:[#allocation2 + $0x158] sm:$0xff] %v1298
        %1639 = vst.msk [vmem:[#allocation2 + $0x160] sm:$0xff] %vm368, %v1524
        %1640 = vst [vmem:[#allocation2 + $0x168] sm:$0xff] %v623
        %1641 = vst [vmem:[#allocation2 + $0x170] sm:$0xff] %v849
        %1642 = vst [vmem:[#allocation2 + $0x178] sm:$0xff] %v1075
        %1643 = vst [vmem:[#allocation2 + $0x180] sm:$0xff] %v1301
        %1644 = vst.msk [vmem:[#allocation2 + $0x188] sm:$0xff] %vm368, %v1527
        %1645 = vst [vmem:[#allocation2 + $0x190] sm:$0xff] %v626
        %1646 = vst [vmem:[#allocation2 + $0x198] sm:$0xff] %v852
        %1647 = vst [vmem:[#allocation2 + $0x1a0] sm:$0xff] %v1078
        %1648 = vst [vmem:[#allocation2 + $0x1a8] sm:$0xff] %v1304
        %1649 = vst.msk [vmem:[#allocation2 + $0x1b0] sm:$0xff] %vm368, %v1530
        %1650 = vst [vmem:[#allocation2 + $0x1b8] sm:$0xff] %v629
        %1651 = vst [vmem:[#allocation2 + $0x1c0] sm:$0xff] %v855
        %1652 = vst [vmem:[#allocation2 + $0x1c8] sm:$0xff] %v1081
        %1653 = vst [vmem:[#allocation2 + $0x1d0] sm:$0xff] %v1307
        %1654 = vst.msk [vmem:[#allocation2 + $0x1d8] sm:$0xff] %vm368, %v1533
        %1655 = vst [vmem:[#allocation2 + $0x1e0] sm:$0xff] %v632
        %1656 = vst [vmem:[#allocation2 + $0x1e8] sm:$0xff] %v858
        %1657 = vst [vmem:[#allocation2 + $0x1f0] sm:$0xff] %v1084
        %1658 = vst [vmem:[#allocation2 + $0x1f8] sm:$0xff] %v1310
        %1659 = vst.msk [vmem:[#allocation2 + $0x200] sm:$0xff] %vm368, %v1536
        %1660 = vst [vmem:[#allocation2 + $0x208] sm:$0xff] %v635
        %1661 = vst [vmem:[#allocation2 + $0x210] sm:$0xff] %v861
        %1662 = vst [vmem:[#allocation2 + $0x218] sm:$0xff] %v1087
        %1663 = vst [vmem:[#allocation2 + $0x220] sm:$0xff] %v1313
        %1664 = vst.msk [vmem:[#allocation2 + $0x228] sm:$0xff] %vm368, %v1539
        %1665 = vst [vmem:[#allocation2 + $0x230] sm:$0xff] %v638
        %1666 = vst [vmem:[#allocation2 + $0x238] sm:$0xff] %v864
        %1667 = vst [vmem:[#allocation2 + $0x240] sm:$0xff] %v1090
        %1668 = vst [vmem:[#allocation2 + $0x248] sm:$0xff] %v1316
        %1669 = vst.msk [vmem:[#allocation2 + $0x250] sm:$0xff] %vm368, %v1542
        %1670 = vst [vmem:[#allocation2 + $0x258] sm:$0xff] %v641
        %1671 = vst [vmem:[#allocation2 + $0x260] sm:$0xff] %v867
        %1672 = vst [vmem:[#allocation2 + $0x268] sm:$0xff] %v1093
        %1673 = vst [vmem:[#allocation2 + $0x270] sm:$0xff] %v1319
        %1674 = vst.msk [vmem:[#allocation2 + $0x278] sm:$0xff] %vm368, %v1545
        %1675 = vst [vmem:[#allocation2 + $0x280] sm:$0xff] %v644
        %1676 = vst [vmem:[#allocation2 + $0x288] sm:$0xff] %v870
        %1677 = vst [vmem:[#allocation2 + $0x290] sm:$0xff] %v1096
        %1678 = vst [vmem:[#allocation2 + $0x298] sm:$0xff] %v1322
        %1679 = vst.msk [vmem:[#allocation2 + $0x2a0] sm:$0xff] %vm368, %v1548
        %1680 = vst [vmem:[#allocation2 + $0x2a8] sm:$0xff] %v647
        %1681 = vst [vmem:[#allocation2 + $0x2b0] sm:$0xff] %v873
        %1682 = vst [vmem:[#allocation2 + $0x2b8] sm:$0xff] %v1099
        %1683 = vst [vmem:[#allocation2 + $0x2c0] sm:$0xff] %v1325
        %1684 = vst.msk [vmem:[#allocation2 + $0x2c8] sm:$0xff] %vm368, %v1551
        %1685 = vst [vmem:[#allocation2 + $0x2d0] sm:$0xff] %v650
        %1686 = vst [vmem:[#allocation2 + $0x2d8] sm:$0xff] %v876
        %1687 = vst [vmem:[#allocation2 + $0x2e0] sm:$0xff] %v1102
        %1688 = vst [vmem:[#allocation2 + $0x2e8] sm:$0xff] %v1328
        %1689 = vst.msk [vmem:[#allocation2 + $0x2f0] sm:$0xff] %vm368, %v1554
        %1690 = vst [vmem:[#allocation2 + $0x2f8] sm:$0xff] %v653
        %1691 = vst [vmem:[#allocation2 + $0x300] sm:$0xff] %v879
        %1692 = vst [vmem:[#allocation2 + $0x308] sm:$0xff] %v1105
        %1693 = vst [vmem:[#allocation2 + $0x310] sm:$0xff] %v1331
        %1694 = vst.msk [vmem:[#allocation2 + $0x318] sm:$0xff] %vm368, %v1557
        %1695 = vst [vmem:[#allocation2 + $0x320] sm:$0xff] %v656
        %1696 = vst [vmem:[#allocation2 + $0x328] sm:$0xff] %v882
        %1697 = vst [vmem:[#allocation2 + $0x330] sm:$0xff] %v1108
        %1698 = vst [vmem:[#allocation2 + $0x338] sm:$0xff] %v1334
        %1699 = vst.msk [vmem:[#allocation2 + $0x340] sm:$0xff] %vm368, %v1560
        %1700 = vst [vmem:[#allocation2 + $0x348] sm:$0xff] %v659
        %1701 = vst [vmem:[#allocation2 + $0x350] sm:$0xff] %v885
        %1702 = vst [vmem:[#allocation2 + $0x358] sm:$0xff] %v1111
        %1703 = vst [vmem:[#allocation2 + $0x360] sm:$0xff] %v1337
        %1704 = vst.msk [vmem:[#allocation2 + $0x368] sm:$0xff] %vm368, %v1563
        %1705 = vst [vmem:[#allocation2 + $0x370] sm:$0xff] %v662
        %1706 = vst [vmem:[#allocation2 + $0x378] sm:$0xff] %v888
        %1707 = vst [vmem:[#allocation2 + $0x380] sm:$0xff] %v1114
        %1708 = vst [vmem:[#allocation2 + $0x388] sm:$0xff] %v1340
        %1709 = vst.msk [vmem:[#allocation2 + $0x390] sm:$0xff] %vm368, %v1566
        %1710 = vst [vmem:[#allocation2 + $0x398] sm:$0xff] %v665
        %1711 = vst [vmem:[#allocation2 + $0x3a0] sm:$0xff] %v891
        %1712 = vst [vmem:[#allocation2 + $0x3a8] sm:$0xff] %v1117
        %1713 = vst [vmem:[#allocation2 + $0x3b0] sm:$0xff] %v1343
        %1714 = vst.msk [vmem:[#allocation2 + $0x3b8] sm:$0xff] %vm368, %v1569
        %1715 = vst [vmem:[#allocation2 + $0x3c0] sm:$0xff] %v668
        %1716 = vst [vmem:[#allocation2 + $0x3c8] sm:$0xff] %v894
        %1717 = vst [vmem:[#allocation2 + $0x3d0] sm:$0xff] %v1120
        %1718 = vst [vmem:[#allocation2 + $0x3d8] sm:$0xff] %v1346
        %1719 = vst.msk [vmem:[#allocation2 + $0x3e0] sm:$0xff] %vm368, %v1572
        %1720 = vst [vmem:[#allocation2 + $0x3e8] sm:$0xff] %v671
        %1721 = vst [vmem:[#allocation2 + $0x3f0] sm:$0xff] %v897
        %1722 = vst [vmem:[#allocation2 + $0x3f8] sm:$0xff] %v1123
        %1723 = vst [vmem:[#allocation2 + $0x400] sm:$0xff] %v1349
        %1724 = vst.msk [vmem:[#allocation2 + $0x408] sm:$0xff] %vm368, %v1575
        %1725 = vst [vmem:[#allocation2 + $0x410] sm:$0xff] %v674
        %1726 = vst [vmem:[#allocation2 + $0x418] sm:$0xff] %v900
        %1727 = vst [vmem:[#allocation2 + $0x420] sm:$0xff] %v1126
        %1728 = vst [vmem:[#allocation2 + $0x428] sm:$0xff] %v1352
        %1729 = vst.msk [vmem:[#allocation2 + $0x430] sm:$0xff] %vm368, %v1578
        %1730 = vst [vmem:[#allocation2 + $0x438] sm:$0xff] %v677
        %1731 = vst [vmem:[#allocation2 + $0x440] sm:$0xff] %v903
        %1732 = vst [vmem:[#allocation2 + $0x448] sm:$0xff] %v1129
        %1733 = vst [vmem:[#allocation2 + $0x450] sm:$0xff] %v1355
        %1734 = vst.msk [vmem:[#allocation2 + $0x458] sm:$0xff] %vm368, %v1581
        %1735 = vst [vmem:[#allocation2 + $0x460] sm:$0xff] %v680
        %1736 = vst [vmem:[#allocation2 + $0x468] sm:$0xff] %v906
        %1737 = vst [vmem:[#allocation2 + $0x470] sm:$0xff] %v1132
        %1738 = vst [vmem:[#allocation2 + $0x478] sm:$0xff] %v1358
        %1739 = vst.msk [vmem:[#allocation2 + $0x480] sm:$0xff] %vm368, %v1584
        %1740 = vst [vmem:[#allocation2 + $0x488] sm:$0xff] %v683
        %1741 = vst [vmem:[#allocation2 + $0x490] sm:$0xff] %v909
        %1742 = vst [vmem:[#allocation2 + $0x498] sm:$0xff] %v1135
        %1743 = vst [vmem:[#allocation2 + $0x4a0] sm:$0xff] %v1361
        %1744 = vst.msk [vmem:[#allocation2 + $0x4a8] sm:$0xff] %vm368, %v1587
        %1745 = vst [vmem:[#allocation2 + $0x4b0] sm:$0xff] %v686
        %1746 = vst [vmem:[#allocation2 + $0x4b8] sm:$0xff] %v912
        %1747 = vst [vmem:[#allocation2 + $0x4c0] sm:$0xff] %v1138
        %1748 = vst [vmem:[#allocation2 + $0x4c8] sm:$0xff] %v1364
        %1749 = vst.msk [vmem:[#allocation2 + $0x4d0] sm:$0xff] %vm368, %v1590
        %1750 = vst [vmem:[#allocation2 + $0x4d8] sm:$0xff] %v689
        %1751 = vst [vmem:[#allocation2 + $0x4e0] sm:$0xff] %v915
        %1752 = vst [vmem:[#allocation2 + $0x4e8] sm:$0xff] %v1141
        %1753 = vst [vmem:[#allocation2 + $0x4f0] sm:$0xff] %v1367
        %1754 = vst.msk [vmem:[#allocation2 + $0x4f8] sm:$0xff] %vm368, %v1593
        %v1755 = vlaneseq
        %v1756 = vshrl.u32 %v1755, 7
        %v1757 = vadd.s32 %v1756, 8
        %v1758 = vadd.s32 %v1756, 16
        %v1759 = vadd.s32 %v1756, 24
        %v1760 = vadd.s32 %v1756, 32
        %v1761 = vadd.s32 %v1756, 40
        %v1762 = vadd.s32 %v1756, 48
        %v1763 = vadd.s32 %v1756, 56
        %v1764 = vlaneseq
        %v1765 = vand.u32 %v1764, 127
        %vm1766 = vcmp.le.s32.totalorder %v1765, %v1756
        %vm1767 = vcmp.le.s32.totalorder %v1765, %v1757
        %vm1768 = vcmp.le.s32.totalorder %v1765, %v1758
        %vm1769 = vcmp.le.s32.totalorder %v1765, %v1759
        %vm1770 = vcmp.le.s32.totalorder %v1765, %v1760
        %vm1771 = vcmp.le.s32.totalorder %v1765, %v1761
        %vm1772 = vcmp.le.s32.totalorder %v1765, %v1762
        %vm1773 = vcmp.le.s32.totalorder %v1765, %v1763
        %v1774 = vld [vmem:[#allocation2] sm:$0xff]
        %v1775 = vld [vmem:[#allocation2 + $0x28] sm:$0xff]
        %v1776 = vld [vmem:[#allocation2 + $0x50] sm:$0xff]
        %v1777 = vld [vmem:[#allocation2 + $0x78] sm:$0xff]
        %v1778 = vld [vmem:[#allocation2 + $0xa0] sm:$0xff]
        %v1779 = vld [vmem:[#allocation2 + $0xc8] sm:$0xff]
        %v1780 = vld [vmem:[#allocation2 + $0xf0] sm:$0xff]
        %v1781 = vld [vmem:[#allocation2 + $0x118] sm:$0xff]
        %v1782 = vld [vmem:[#allocation2 + $0x140] sm:$0xff]
        %v1783 = vld [vmem:[#allocation2 + $0x168] sm:$0xff]
        %v1784 = vld [vmem:[#allocation2 + $0x190] sm:$0xff]
        %v1785 = vld [vmem:[#allocation2 + $0x1b8] sm:$0xff]
        %v1786 = vld [vmem:[#allocation2 + $0x1e0] sm:$0xff]
        %v1787 = vld [vmem:[#allocation2 + $0x208] sm:$0xff]
        %v1788 = vld [vmem:[#allocation2 + $0x230] sm:$0xff]
        %v1789 = vld [vmem:[#allocation2 + $0x258] sm:$0xff]
        %v1790 = vld [vmem:[#allocation2 + $0x280] sm:$0xff]
        %v1791 = vld [vmem:[#allocation2 + $0x2a8] sm:$0xff]
        %v1792 = vld [vmem:[#allocation2 + $0x2d0] sm:$0xff]
        %v1793 = vld [vmem:[#allocation2 + $0x2f8] sm:$0xff]
        %v1794 = vld [vmem:[#allocation2 + $0x320] sm:$0xff]
        %v1795 = vld [vmem:[#allocation2 + $0x348] sm:$0xff]
        %v1796 = vld [vmem:[#allocation2 + $0x370] sm:$0xff]
        %v1797 = vld [vmem:[#allocation2 + $0x398] sm:$0xff]
        %v1798 = vld [vmem:[#allocation2 + $0x3c0] sm:$0xff]
        %v1799 = vld [vmem:[#allocation2 + $0x3e8] sm:$0xff]
        %v1800 = vld [vmem:[#allocation2 + $0x410] sm:$0xff]
        %v1801 = vld [vmem:[#allocation2 + $0x438] sm:$0xff]
        %v1802 = vld [vmem:[#allocation2 + $0x460] sm:$0xff]
        %v1803 = vld [vmem:[#allocation2 + $0x488] sm:$0xff]
        %v1804 = vld [vmem:[#allocation2 + $0x4b0] sm:$0xff]
        %v1805 = vld [vmem:[#allocation2 + $0x4d8] sm:$0xff]
        %1814 = vrot.lane.b32.xlu0 %v1774, 96
        %v1815 = vpop.permute.xlu0 %1814
        %1816 = vrot.lane.b32.xlu0 %v1775, 96
        %v1817 = vpop.permute.xlu0 %1816
        %1818 = vrot.lane.b32.xlu0 %v1776, 96
        %v1819 = vpop.permute.xlu0 %1818
        %1820 = vrot.lane.b32.xlu0 %v1777, 96
        %v1821 = vpop.permute.xlu0 %1820
        %1822 = vrot.lane.b32.xlu0 %v1778, 96
        %v1823 = vpop.permute.xlu0 %1822
        %1824 = vrot.lane.b32.xlu0 %v1779, 96
        %v1825 = vpop.permute.xlu0 %1824
        %1826 = vrot.lane.b32.xlu0 %v1780, 96
        %v1827 = vpop.permute.xlu0 %1826
        %1828 = vrot.lane.b32.xlu0 %v1781, 96
        %v1829 = vpop.permute.xlu0 %1828
        %vm1830 = vcmask 261120
        %v1831 = vsel %vm1830, %v1774, 0
        %v1833 = vsel %vm1830, %v1775, 0
        %v1835 = vsel %vm1830, %v1776, 0
        %v1837 = vsel %vm1830, %v1777, 0
        %v1839 = vsel %vm1830, %v1778, 0
        %v1841 = vsel %vm1830, %v1779, 0
        %v1843 = vsel %vm1830, %v1780, 0
        %v1845 = vsel %vm1830, %v1781, 0
        %v1847 = vsel %vm1830, %v1815, 0
        %v1849 = vsel %vm1830, %v1817, 0
        %v1851 = vsel %vm1830, %v1819, 0
        %v1853 = vsel %vm1830, %v1821, 0
        %v1855 = vsel %vm1830, %v1823, 0
        %v1857 = vsel %vm1830, %v1825, 0
        %v1859 = vsel %vm1830, %v1827, 0
        %v1861 = vsel %vm1830, %v1829, 0
        %1863 = vmatpush.xpose.msra.mxu0 0.0
        %1864 = vmatpush.xpose.msra.mxu0 0.0
        %1865 = vmatpush.xpose.msra.mxu0 0.0
        %1866 = vmatpush.xpose.msra.mxu0 0.0
        %1867 = vmatpush.xpose.msra.mxu0 0.0
        %1868 = vmatpush.xpose.msra.mxu0 0.0
        %1869 = vmatpush.xpose.msra.mxu0 0.0
        %1870 = vmatpush.xpose.msra.mxu0 0.0
        %1871 = vmatpush.xpose.msra.mxu0 %v1861
        %1872 = vmatpush.xpose.msra.mxu0 %v1859
        %1873 = vmatpush.xpose.msra.mxu0 %v1857
        %1874 = vmatpush.xpose.msra.mxu0 %v1855
        %1875 = vmatpush.xpose.msra.mxu0 %v1853
        %1876 = vmatpush.xpose.msra.mxu0 %v1851
        %1877 = vmatpush.xpose.msra.mxu0 %v1849
        %1878 = vmatpush.xpose.msra.mxu0 %v1847
        %1879 = vmatmul.f32.gmra.mxu0 %v1831
        %v1880 = vpop.f32.mrf.mxu0
        %v1881 = vadd.f32 0.0, %v1880
        %1882 = vmatmul.f32.gmra.mxu0 %v1833
        %v1883 = vpop.f32.mrf.mxu0
        %v1884 = vadd.f32 0.0, %v1883
        %1885 = vmatmul.f32.gmra.mxu0 %v1835
        %v1886 = vpop.f32.mrf.mxu0
        %v1887 = vadd.f32 0.0, %v1886
        %1888 = vmatmul.f32.gmra.mxu0 %v1837
        %v1889 = vpop.f32.mrf.mxu0
        %v1890 = vadd.f32 0.0, %v1889
        %1891 = vmatmul.f32.gmra.mxu0 %v1839
        %v1892 = vpop.f32.mrf.mxu0
        %v1893 = vadd.f32 0.0, %v1892
        %1894 = vmatmul.f32.gmra.mxu0 %v1841
        %v1895 = vpop.f32.mrf.mxu0
        %v1896 = vadd.f32 0.0, %v1895
        %1897 = vmatmul.f32.gmra.mxu0 %v1843
        %v1898 = vpop.f32.mrf.mxu0
        %v1899 = vadd.f32 0.0, %v1898
        %1900 = vmatmul.f32.gmra.mxu0 %v1845
        %v1901 = vpop.f32.mrf.mxu0
        %v1902 = vadd.f32 0.0, %v1901
        %1903 = vdwg.mxu0
        %1912 = vrot.lane.b32.xlu0 %v1782, 96
        %v1913 = vpop.permute.xlu0 %1912
        %1914 = vrot.lane.b32.xlu0 %v1783, 96
        %v1915 = vpop.permute.xlu0 %1914
        %1916 = vrot.lane.b32.xlu0 %v1784, 96
        %v1917 = vpop.permute.xlu0 %1916
        %1918 = vrot.lane.b32.xlu0 %v1785, 96
        %v1919 = vpop.permute.xlu0 %1918
        %1920 = vrot.lane.b32.xlu0 %v1786, 96
        %v1921 = vpop.permute.xlu0 %1920
        %1922 = vrot.lane.b32.xlu0 %v1787, 96
        %v1923 = vpop.permute.xlu0 %1922
        %1924 = vrot.lane.b32.xlu0 %v1788, 96
        %v1925 = vpop.permute.xlu0 %1924
        %1926 = vrot.lane.b32.xlu0 %v1789, 96
        %v1927 = vpop.permute.xlu0 %1926
        %v1928 = vsel %vm1830, %v1782, 0
        %v1930 = vsel %vm1830, %v1783, 0
        %v1932 = vsel %vm1830, %v1784, 0
        %v1934 = vsel %vm1830, %v1785, 0
        %v1936 = vsel %vm1830, %v1786, 0
        %v1938 = vsel %vm1830, %v1787, 0
        %v1940 = vsel %vm1830, %v1788, 0
        %v1942 = vsel %vm1830, %v1789, 0
        %v1944 = vsel %vm1830, %v1913, 0
        %v1946 = vsel %vm1830, %v1915, 0
        %v1948 = vsel %vm1830, %v1917, 0
        %v1950 = vsel %vm1830, %v1919, 0
        %v1952 = vsel %vm1830, %v1921, 0
        %v1954 = vsel %vm1830, %v1923, 0
        %v1956 = vsel %vm1830, %v1925, 0
        %v1958 = vsel %vm1830, %v1927, 0
        %1960 = vmatpush.xpose.msra.mxu0 0.0
        %1961 = vmatpush.xpose.msra.mxu0 0.0
        %1962 = vmatpush.xpose.msra.mxu0 0.0
        %1963 = vmatpush.xpose.msra.mxu0 0.0
        %1964 = vmatpush.xpose.msra.mxu0 0.0
        %1965 = vmatpush.xpose.msra.mxu0 0.0
        %1966 = vmatpush.xpose.msra.mxu0 0.0
        %1967 = vmatpush.xpose.msra.mxu0 0.0
        %1968 = vmatpush.xpose.msra.mxu0 %v1958
        %1969 = vmatpush.xpose.msra.mxu0 %v1956
        %1970 = vmatpush.xpose.msra.mxu0 %v1954
        %1971 = vmatpush.xpose.msra.mxu0 %v1952
        %1972 = vmatpush.xpose.msra.mxu0 %v1950
        %1973 = vmatpush.xpose.msra.mxu0 %v1948
        %1974 = vmatpush.xpose.msra.mxu0 %v1946
        %1975 = vmatpush.xpose.msra.mxu0 %v1944
        %1976 = vmatmul.f32.gmra.mxu0 %v1928
        %v1977 = vpop.f32.mrf.mxu0
        %v1978 = vadd.f32 0.0, %v1977
        %1979 = vmatmul.f32.gmra.mxu0 %v1930
        %v1980 = vpop.f32.mrf.mxu0
        %v1981 = vadd.f32 0.0, %v1980
        %1982 = vmatmul.f32.gmra.mxu0 %v1932
        %v1983 = vpop.f32.mrf.mxu0
        %v1984 = vadd.f32 0.0, %v1983
        %1985 = vmatmul.f32.gmra.mxu0 %v1934
        %v1986 = vpop.f32.mrf.mxu0
        %v1987 = vadd.f32 0.0, %v1986
        %1988 = vmatmul.f32.gmra.mxu0 %v1936
        %v1989 = vpop.f32.mrf.mxu0
        %v1990 = vadd.f32 0.0, %v1989
        %1991 = vmatmul.f32.gmra.mxu0 %v1938
        %v1992 = vpop.f32.mrf.mxu0
        %v1993 = vadd.f32 0.0, %v1992
        %1994 = vmatmul.f32.gmra.mxu0 %v1940
        %v1995 = vpop.f32.mrf.mxu0
        %v1996 = vadd.f32 0.0, %v1995
        %1997 = vmatmul.f32.gmra.mxu0 %v1942
        %v1998 = vpop.f32.mrf.mxu0
        %v1999 = vadd.f32 0.0, %v1998
        %2000 = vdwg.mxu0
        %2009 = vrot.lane.b32.xlu0 %v1790, 96
        %v2010 = vpop.permute.xlu0 %2009
        %2011 = vrot.lane.b32.xlu0 %v1791, 96
        %v2012 = vpop.permute.xlu0 %2011
        %2013 = vrot.lane.b32.xlu0 %v1792, 96
        %v2014 = vpop.permute.xlu0 %2013
        %2015 = vrot.lane.b32.xlu0 %v1793, 96
        %v2016 = vpop.permute.xlu0 %2015
        %2017 = vrot.lane.b32.xlu0 %v1794, 96
        %v2018 = vpop.permute.xlu0 %2017
        %2019 = vrot.lane.b32.xlu0 %v1795, 96
        %v2020 = vpop.permute.xlu0 %2019
        %2021 = vrot.lane.b32.xlu0 %v1796, 96
        %v2022 = vpop.permute.xlu0 %2021
        %2023 = vrot.lane.b32.xlu0 %v1797, 96
        %v2024 = vpop.permute.xlu0 %2023
        %v2025 = vsel %vm1830, %v1790, 0
        %v2027 = vsel %vm1830, %v1791, 0
        %v2029 = vsel %vm1830, %v1792, 0
        %v2031 = vsel %vm1830, %v1793, 0
        %v2033 = vsel %vm1830, %v1794, 0
        %v2035 = vsel %vm1830, %v1795, 0
        %v2037 = vsel %vm1830, %v1796, 0
        %v2039 = vsel %vm1830, %v1797, 0
        %v2041 = vsel %vm1830, %v2010, 0
        %v2043 = vsel %vm1830, %v2012, 0
        %v2045 = vsel %vm1830, %v2014, 0
        %v2047 = vsel %vm1830, %v2016, 0
        %v2049 = vsel %vm1830, %v2018, 0
        %v2051 = vsel %vm1830, %v2020, 0
        %v2053 = vsel %vm1830, %v2022, 0
        %v2055 = vsel %vm1830, %v2024, 0
        %2057 = vmatpush.xpose.msra.mxu0 0.0
        %2058 = vmatpush.xpose.msra.mxu0 0.0
        %2059 = vmatpush.xpose.msra.mxu0 0.0
        %2060 = vmatpush.xpose.msra.mxu0 0.0
        %2061 = vmatpush.xpose.msra.mxu0 0.0
        %2062 = vmatpush.xpose.msra.mxu0 0.0
        %2063 = vmatpush.xpose.msra.mxu0 0.0
        %2064 = vmatpush.xpose.msra.mxu0 0.0
        %2065 = vmatpush.xpose.msra.mxu0 %v2055
        %2066 = vmatpush.xpose.msra.mxu0 %v2053
        %2067 = vmatpush.xpose.msra.mxu0 %v2051
        %2068 = vmatpush.xpose.msra.mxu0 %v2049
        %2069 = vmatpush.xpose.msra.mxu0 %v2047
        %2070 = vmatpush.xpose.msra.mxu0 %v2045
        %2071 = vmatpush.xpose.msra.mxu0 %v2043
        %2072 = vmatpush.xpose.msra.mxu0 %v2041
        %2073 = vmatmul.f32.gmra.mxu0 %v2025
        %v2074 = vpop.f32.mrf.mxu0
        %v2075 = vadd.f32 0.0, %v2074
        %2076 = vmatmul.f32.gmra.mxu0 %v2027
        %v2077 = vpop.f32.mrf.mxu0
        %v2078 = vadd.f32 0.0, %v2077
        %2079 = vmatmul.f32.gmra.mxu0 %v2029
        %v2080 = vpop.f32.mrf.mxu0
        %v2081 = vadd.f32 0.0, %v2080
        %2082 = vmatmul.f32.gmra.mxu0 %v2031
        %v2083 = vpop.f32.mrf.mxu0
        %v2084 = vadd.f32 0.0, %v2083
        %2085 = vmatmul.f32.gmra.mxu0 %v2033
        %v2086 = vpop.f32.mrf.mxu0
        %v2087 = vadd.f32 0.0, %v2086
        %2088 = vmatmul.f32.gmra.mxu0 %v2035
        %v2089 = vpop.f32.mrf.mxu0
        %v2090 = vadd.f32 0.0, %v2089
        %2091 = vmatmul.f32.gmra.mxu0 %v2037
        %v2092 = vpop.f32.mrf.mxu0
        %v2093 = vadd.f32 0.0, %v2092
        %2094 = vmatmul.f32.gmra.mxu0 %v2039
        %v2095 = vpop.f32.mrf.mxu0
        %v2096 = vadd.f32 0.0, %v2095
        %2097 = vdwg.mxu0
        %2106 = vrot.lane.b32.xlu0 %v1798, 96
        %v2107 = vpop.permute.xlu0 %2106
        %2108 = vrot.lane.b32.xlu0 %v1799, 96
        %v2109 = vpop.permute.xlu0 %2108
        %2110 = vrot.lane.b32.xlu0 %v1800, 96
        %v2111 = vpop.permute.xlu0 %2110
        %2112 = vrot.lane.b32.xlu0 %v1801, 96
        %v2113 = vpop.permute.xlu0 %2112
        %2114 = vrot.lane.b32.xlu0 %v1802, 96
        %v2115 = vpop.permute.xlu0 %2114
        %2116 = vrot.lane.b32.xlu0 %v1803, 96
        %v2117 = vpop.permute.xlu0 %2116
        %2118 = vrot.lane.b32.xlu0 %v1804, 96
        %v2119 = vpop.permute.xlu0 %2118
        %2120 = vrot.lane.b32.xlu0 %v1805, 96
        %v2121 = vpop.permute.xlu0 %2120
        %v2122 = vsel %vm1830, %v1798, 0
        %v2124 = vsel %vm1830, %v1799, 0
        %v2126 = vsel %vm1830, %v1800, 0
        %v2128 = vsel %vm1830, %v1801, 0
        %v2130 = vsel %vm1830, %v1802, 0
        %v2132 = vsel %vm1830, %v1803, 0
        %v2134 = vsel %vm1830, %v1804, 0
        %v2136 = vsel %vm1830, %v1805, 0
        %v2138 = vsel %vm1830, %v2107, 0
        %v2140 = vsel %vm1830, %v2109, 0
        %v2142 = vsel %vm1830, %v2111, 0
        %v2144 = vsel %vm1830, %v2113, 0
        %v2146 = vsel %vm1830, %v2115, 0
        %v2148 = vsel %vm1830, %v2117, 0
        %v2150 = vsel %vm1830, %v2119, 0
        %v2152 = vsel %vm1830, %v2121, 0
        %2154 = vmatpush.xpose.msra.mxu0 0.0
        %2155 = vmatpush.xpose.msra.mxu0 0.0
        %2156 = vmatpush.xpose.msra.mxu0 0.0
        %2157 = vmatpush.xpose.msra.mxu0 0.0
        %2158 = vmatpush.xpose.msra.mxu0 0.0
        %2159 = vmatpush.xpose.msra.mxu0 0.0
        %2160 = vmatpush.xpose.msra.mxu0 0.0
        %2161 = vmatpush.xpose.msra.mxu0 0.0
        %2162 = vmatpush.xpose.msra.mxu0 %v2152
        %2163 = vmatpush.xpose.msra.mxu0 %v2150
        %2164 = vmatpush.xpose.msra.mxu0 %v2148
        %2165 = vmatpush.xpose.msra.mxu0 %v2146
        %2166 = vmatpush.xpose.msra.mxu0 %v2144
        %2167 = vmatpush.xpose.msra.mxu0 %v2142
        %2168 = vmatpush.xpose.msra.mxu0 %v2140
        %2169 = vmatpush.xpose.msra.mxu0 %v2138
        %2170 = vmatmul.f32.gmra.mxu0 %v2122
        %v2171 = vpop.f32.mrf.mxu0
        %v2172 = vadd.f32 0.0, %v2171
        %2173 = vmatmul.f32.gmra.mxu0 %v2124
        %v2174 = vpop.f32.mrf.mxu0
        %v2175 = vadd.f32 0.0, %v2174
        %2176 = vmatmul.f32.gmra.mxu0 %v2126
        %v2177 = vpop.f32.mrf.mxu0
        %v2178 = vadd.f32 0.0, %v2177
        %2179 = vmatmul.f32.gmra.mxu0 %v2128
        %v2180 = vpop.f32.mrf.mxu0
        %v2181 = vadd.f32 0.0, %v2180
        %2182 = vmatmul.f32.gmra.mxu0 %v2130
        %v2183 = vpop.f32.mrf.mxu0
        %v2184 = vadd.f32 0.0, %v2183
        %2185 = vmatmul.f32.gmra.mxu0 %v2132
        %v2186 = vpop.f32.mrf.mxu0
        %v2187 = vadd.f32 0.0, %v2186
        %2188 = vmatmul.f32.gmra.mxu0 %v2134
        %v2189 = vpop.f32.mrf.mxu0
        %v2190 = vadd.f32 0.0, %v2189
        %2191 = vmatmul.f32.gmra.mxu0 %v2136
        %v2192 = vpop.f32.mrf.mxu0
        %v2193 = vadd.f32 0.0, %v2192
        %2194 = vdwg.mxu0
        %v2195 = vsel %vm1766, 1, 0
        %v2196 = vsel %vm1767, 1, 0
        %v2197 = vsel %vm1768, 1, 0
        %v2198 = vsel %vm1769, 1, 0
        %v2199 = vsel %vm1770, 1, 0
        %v2200 = vsel %vm1771, 1, 0
        %v2201 = vsel %vm1772, 1, 0
        %v2202 = vsel %vm1773, 1, 0
        %vm2203 = vcmp.eq.s32.totalorder %v2195, 1
        %vm2204 = vcmp.eq.s32.totalorder %v2196, 1
        %vm2205 = vcmp.eq.s32.totalorder %v2197, 1
        %vm2206 = vcmp.eq.s32.totalorder %v2198, 1
        %vm2207 = vcmp.eq.s32.totalorder %v2199, 1
        %vm2208 = vcmp.eq.s32.totalorder %v2200, 1
        %vm2209 = vcmp.eq.s32.totalorder %v2201, 1
        %vm2210 = vcmp.eq.s32.totalorder %v2202, 1
        %v2211 = vsel %vm2203, %v1881, -inf
        %v2212 = vsel %vm2204, %v1884, -inf
        %v2213 = vsel %vm2205, %v1887, -inf
        %v2214 = vsel %vm2206, %v1890, -inf
        %v2215 = vsel %vm2207, %v1893, -inf
        %v2216 = vsel %vm2208, %v1896, -inf
        %v2217 = vsel %vm2209, %v1899, -inf
        %v2218 = vsel %vm2210, %v1902, -inf
        %v2219 = vsel %vm2203, %v1978, -inf
        %v2220 = vsel %vm2204, %v1981, -inf
        %v2221 = vsel %vm2205, %v1984, -inf
        %v2222 = vsel %vm2206, %v1987, -inf
        %v2223 = vsel %vm2207, %v1990, -inf
        %v2224 = vsel %vm2208, %v1993, -inf
        %v2225 = vsel %vm2209, %v1996, -inf
        %v2226 = vsel %vm2210, %v1999, -inf
        %v2227 = vsel %vm2203, %v2075, -inf
        %v2228 = vsel %vm2204, %v2078, -inf
        %v2229 = vsel %vm2205, %v2081, -inf
        %v2230 = vsel %vm2206, %v2084, -inf
        %v2231 = vsel %vm2207, %v2087, -inf
        %v2232 = vsel %vm2208, %v2090, -inf
        %v2233 = vsel %vm2209, %v2093, -inf
        %v2234 = vsel %vm2210, %v2096, -inf
        %v2235 = vsel %vm2203, %v2172, -inf
        %v2236 = vsel %vm2204, %v2175, -inf
        %v2237 = vsel %vm2205, %v2178, -inf
        %v2238 = vsel %vm2206, %v2181, -inf
        %v2239 = vsel %vm2207, %v2184, -inf
        %v2240 = vsel %vm2208, %v2187, -inf
        %v2241 = vsel %vm2209, %v2190, -inf
        %v2242 = vsel %vm2210, %v2193, -inf
        %v2243 = vsel %vm368, %v2211, -inf
        %2244 = vmax.xlane.f32.xlu0 %v2243
        %v2245 = vpop.xlane.xlu0 %2244
        %v2246 = vsel %vm368, %v2212, -inf
        %2247 = vmax.xlane.f32.xlu0 %v2246
        %v2248 = vpop.xlane.xlu0 %2247
        %v2249 = vsel %vm368, %v2213, -inf
        %2250 = vmax.xlane.f32.xlu0 %v2249
        %v2251 = vpop.xlane.xlu0 %2250
        %v2252 = vsel %vm368, %v2214, -inf
        %2253 = vmax.xlane.f32.xlu0 %v2252
        %v2254 = vpop.xlane.xlu0 %2253
        %v2255 = vsel %vm368, %v2215, -inf
        %2256 = vmax.xlane.f32.xlu0 %v2255
        %v2257 = vpop.xlane.xlu0 %2256
        %v2258 = vsel %vm368, %v2216, -inf
        %2259 = vmax.xlane.f32.xlu0 %v2258
        %v2260 = vpop.xlane.xlu0 %2259
        %v2261 = vsel %vm368, %v2217, -inf
        %2262 = vmax.xlane.f32.xlu0 %v2261
        %v2263 = vpop.xlane.xlu0 %2262
        %v2264 = vsel %vm368, %v2218, -inf
        %2265 = vmax.xlane.f32.xlu0 %v2264
        %v2266 = vpop.xlane.xlu0 %2265
        %v2267 = vsel %vm368, %v2219, -inf
        %2268 = vmax.xlane.f32.xlu0 %v2267
        %v2269 = vpop.xlane.xlu0 %2268
        %v2270 = vsel %vm368, %v2220, -inf
        %2271 = vmax.xlane.f32.xlu0 %v2270
        %v2272 = vpop.xlane.xlu0 %2271
        %v2273 = vsel %vm368, %v2221, -inf
        %2274 = vmax.xlane.f32.xlu0 %v2273
        %v2275 = vpop.xlane.xlu0 %2274
        %v2276 = vsel %vm368, %v2222, -inf
        %2277 = vmax.xlane.f32.xlu0 %v2276
        %v2278 = vpop.xlane.xlu0 %2277
        %v2279 = vsel %vm368, %v2223, -inf
        %2280 = vmax.xlane.f32.xlu0 %v2279
        %v2281 = vpop.xlane.xlu0 %2280
        %v2282 = vsel %vm368, %v2224, -inf
        %2283 = vmax.xlane.f32.xlu0 %v2282
        %v2284 = vpop.xlane.xlu0 %2283
        %v2285 = vsel %vm368, %v2225, -inf
        %2286 = vmax.xlane.f32.xlu0 %v2285
        %v2287 = vpop.xlane.xlu0 %2286
        %v2288 = vsel %vm368, %v2226, -inf
        %2289 = vmax.xlane.f32.xlu0 %v2288
        %v2290 = vpop.xlane.xlu0 %2289
        %v2291 = vsel %vm368, %v2227, -inf
        %2292 = vmax.xlane.f32.xlu0 %v2291
        %v2293 = vpop.xlane.xlu0 %2292
        %v2294 = vsel %vm368, %v2228, -inf
        %2295 = vmax.xlane.f32.xlu0 %v2294
        %v2296 = vpop.xlane.xlu0 %2295
        %v2297 = vsel %vm368, %v2229, -inf
        %2298 = vmax.xlane.f32.xlu0 %v2297
        %v2299 = vpop.xlane.xlu0 %2298
        %v2300 = vsel %vm368, %v2230, -inf
        %2301 = vmax.xlane.f32.xlu0 %v2300
        %v2302 = vpop.xlane.xlu0 %2301
        %v2303 = vsel %vm368, %v2231, -inf
        %2304 = vmax.xlane.f32.xlu0 %v2303
        %v2305 = vpop.xlane.xlu0 %2304
        %v2306 = vsel %vm368, %v2232, -inf
        %2307 = vmax.xlane.f32.xlu0 %v2306
        %v2308 = vpop.xlane.xlu0 %2307
        %v2309 = vsel %vm368, %v2233, -inf
        %2310 = vmax.xlane.f32.xlu0 %v2309
        %v2311 = vpop.xlane.xlu0 %2310
        %v2312 = vsel %vm368, %v2234, -inf
        %2313 = vmax.xlane.f32.xlu0 %v2312
        %v2314 = vpop.xlane.xlu0 %2313
        %v2315 = vsel %vm368, %v2235, -inf
        %2316 = vmax.xlane.f32.xlu0 %v2315
        %v2317 = vpop.xlane.xlu0 %2316
        %v2318 = vsel %vm368, %v2236, -inf
        %2319 = vmax.xlane.f32.xlu0 %v2318
        %v2320 = vpop.xlane.xlu0 %2319
        %v2321 = vsel %vm368, %v2237, -inf
        %2322 = vmax.xlane.f32.xlu0 %v2321
        %v2323 = vpop.xlane.xlu0 %2322
        %v2324 = vsel %vm368, %v2238, -inf
        %2325 = vmax.xlane.f32.xlu0 %v2324
        %v2326 = vpop.xlane.xlu0 %2325
        %v2327 = vsel %vm368, %v2239, -inf
        %2328 = vmax.xlane.f32.xlu0 %v2327
        %v2329 = vpop.xlane.xlu0 %2328
        %v2330 = vsel %vm368, %v2240, -inf
        %2331 = vmax.xlane.f32.xlu0 %v2330
        %v2332 = vpop.xlane.xlu0 %2331
        %v2333 = vsel %vm368, %v2241, -inf
        %2334 = vmax.xlane.f32.xlu0 %v2333
        %v2335 = vpop.xlane.xlu0 %2334
        %v2336 = vsel %vm368, %v2242, -inf
        %2337 = vmax.xlane.f32.xlu0 %v2336
        %v2338 = vpop.xlane.xlu0 %2337
        %v2339 = vsub.f32 %v2211, %v2245
        %v2340 = vsub.f32 %v2212, %v2248
        %v2341 = vsub.f32 %v2213, %v2251
        %v2342 = vsub.f32 %v2214, %v2254
        %v2343 = vsub.f32 %v2215, %v2257
        %v2344 = vsub.f32 %v2216, %v2260
        %v2345 = vsub.f32 %v2217, %v2263
        %v2346 = vsub.f32 %v2218, %v2266
        %v2347 = vsub.f32 %v2219, %v2269
        %v2348 = vsub.f32 %v2220, %v2272
        %v2349 = vsub.f32 %v2221, %v2275
        %v2350 = vsub.f32 %v2222, %v2278
        %v2351 = vsub.f32 %v2223, %v2281
        %v2352 = vsub.f32 %v2224, %v2284
        %v2353 = vsub.f32 %v2225, %v2287
        %v2354 = vsub.f32 %v2226, %v2290
        %v2355 = vsub.f32 %v2227, %v2293
        %v2356 = vsub.f32 %v2228, %v2296
        %v2357 = vsub.f32 %v2229, %v2299
        %v2358 = vsub.f32 %v2230, %v2302
        %v2359 = vsub.f32 %v2231, %v2305
        %v2360 = vsub.f32 %v2232, %v2308
        %v2361 = vsub.f32 %v2233, %v2311
        %v2362 = vsub.f32 %v2234, %v2314
        %v2363 = vsub.f32 %v2235, %v2317
        %v2364 = vsub.f32 %v2236, %v2320
        %v2365 = vsub.f32 %v2237, %v2323
        %v2366 = vsub.f32 %v2238, %v2326
        %v2367 = vsub.f32 %v2239, %v2329
        %v2368 = vsub.f32 %v2240, %v2332
        %v2369 = vsub.f32 %v2241, %v2335
        %v2370 = vsub.f32 %v2242, %v2338
        %v2371 = vmul.f32 %v2339, 1.442695
        %v2372 = vpow.pop %v2371
        %v2373 = vmul.f32 %v2340, 1.442695
        %v2374 = vpow.pop %v2373
        %v2375 = vmul.f32 %v2341, 1.442695
        %v2376 = vpow.pop %v2375
        %v2377 = vmul.f32 %v2342, 1.442695
        %v2378 = vpow.pop %v2377
        %v2379 = vmul.f32 %v2343, 1.442695
        %v2380 = vpow.pop %v2379
        %v2381 = vmul.f32 %v2344, 1.442695
        %v2382 = vpow.pop %v2381
        %v2383 = vmul.f32 %v2345, 1.442695
        %v2384 = vpow.pop %v2383
        %v2385 = vmul.f32 %v2346, 1.442695
        %v2386 = vpow.pop %v2385
        %v2387 = vmul.f32 %v2347, 1.442695
        %v2388 = vpow.pop %v2387
        %v2389 = vmul.f32 %v2348, 1.442695
        %v2390 = vpow.pop %v2389
        %v2391 = vmul.f32 %v2349, 1.442695
        %v2392 = vpow.pop %v2391
        %v2393 = vmul.f32 %v2350, 1.442695
        %v2394 = vpow.pop %v2393
        %v2395 = vmul.f32 %v2351, 1.442695
        %v2396 = vpow.pop %v2395
        %v2397 = vmul.f32 %v2352, 1.442695
        %v2398 = vpow.pop %v2397
        %v2399 = vmul.f32 %v2353, 1.442695
        %v2400 = vpow.pop %v2399
        %v2401 = vmul.f32 %v2354, 1.442695
        %v2402 = vpow.pop %v2401
        %v2403 = vmul.f32 %v2355, 1.442695
        %v2404 = vpow.pop %v2403
        %v2405 = vmul.f32 %v2356, 1.442695
        %v2406 = vpow.pop %v2405
        %v2407 = vmul.f32 %v2357, 1.442695
        %v2408 = vpow.pop %v2407
        %v2409 = vmul.f32 %v2358, 1.442695
        %v2410 = vpow.pop %v2409
        %v2411 = vmul.f32 %v2359, 1.442695
        %v2412 = vpow.pop %v2411
        %v2413 = vmul.f32 %v2360, 1.442695
        %v2414 = vpow.pop %v2413
        %v2415 = vmul.f32 %v2361, 1.442695
        %v2416 = vpow.pop %v2415
        %v2417 = vmul.f32 %v2362, 1.442695
        %v2418 = vpow.pop %v2417
        %v2419 = vmul.f32 %v2363, 1.442695
        %v2420 = vpow.pop %v2419
        %v2421 = vmul.f32 %v2364, 1.442695
        %v2422 = vpow.pop %v2421
        %v2423 = vmul.f32 %v2365, 1.442695
        %v2424 = vpow.pop %v2423
        %v2425 = vmul.f32 %v2366, 1.442695
        %v2426 = vpow.pop %v2425
        %v2427 = vmul.f32 %v2367, 1.442695
        %v2428 = vpow.pop %v2427
        %v2429 = vmul.f32 %v2368, 1.442695
        %v2430 = vpow.pop %v2429
        %v2431 = vmul.f32 %v2369, 1.442695
        %v2432 = vpow.pop %v2431
        %v2433 = vmul.f32 %v2370, 1.442695
        %v2434 = vpow.pop %v2433
        %v2435 = vsel %vm368, %v2372, 0.0
        %2436 = vadd.xlane.f32.xlu0 %v2435
        %v2437 = vpop.xlane.xlu0 %2436
        %v2438 = vsel %vm368, %v2374, 0.0
        %2439 = vadd.xlane.f32.xlu0 %v2438
        %v2440 = vpop.xlane.xlu0 %2439
        %v2441 = vsel %vm368, %v2376, 0.0
        %2442 = vadd.xlane.f32.xlu0 %v2441
        %v2443 = vpop.xlane.xlu0 %2442
        %v2444 = vsel %vm368, %v2378, 0.0
        %2445 = vadd.xlane.f32.xlu0 %v2444
        %v2446 = vpop.xlane.xlu0 %2445
        %v2447 = vsel %vm368, %v2380, 0.0
        %2448 = vadd.xlane.f32.xlu0 %v2447
        %v2449 = vpop.xlane.xlu0 %2448
        %v2450 = vsel %vm368, %v2382, 0.0
        %2451 = vadd.xlane.f32.xlu0 %v2450
        %v2452 = vpop.xlane.xlu0 %2451
        %v2453 = vsel %vm368, %v2384, 0.0
        %2454 = vadd.xlane.f32.xlu0 %v2453
        %v2455 = vpop.xlane.xlu0 %2454
        %v2456 = vsel %vm368, %v2386, 0.0
        %2457 = vadd.xlane.f32.xlu0 %v2456
        %v2458 = vpop.xlane.xlu0 %2457
        %v2459 = vsel %vm368, %v2388, 0.0
        %2460 = vadd.xlane.f32.xlu0 %v2459
        %v2461 = vpop.xlane.xlu0 %2460
        %v2462 = vsel %vm368, %v2390, 0.0
        %2463 = vadd.xlane.f32.xlu0 %v2462
        %v2464 = vpop.xlane.xlu0 %2463
        %v2465 = vsel %vm368, %v2392, 0.0
        %2466 = vadd.xlane.f32.xlu0 %v2465
        %v2467 = vpop.xlane.xlu0 %2466
        %v2468 = vsel %vm368, %v2394, 0.0
        %2469 = vadd.xlane.f32.xlu0 %v2468
        %v2470 = vpop.xlane.xlu0 %2469
        %v2471 = vsel %vm368, %v2396, 0.0
        %2472 = vadd.xlane.f32.xlu0 %v2471
        %v2473 = vpop.xlane.xlu0 %2472
        %v2474 = vsel %vm368, %v2398, 0.0
        %2475 = vadd.xlane.f32.xlu0 %v2474
        %v2476 = vpop.xlane.xlu0 %2475
        %v2477 = vsel %vm368, %v2400, 0.0
        %2478 = vadd.xlane.f32.xlu0 %v2477
        %v2479 = vpop.xlane.xlu0 %2478
        %v2480 = vsel %vm368, %v2402, 0.0
        %2481 = vadd.xlane.f32.xlu0 %v2480
        %v2482 = vpop.xlane.xlu0 %2481
        %v2483 = vsel %vm368, %v2404, 0.0
        %2484 = vadd.xlane.f32.xlu0 %v2483
        %v2485 = vpop.xlane.xlu0 %2484
        %v2486 = vsel %vm368, %v2406, 0.0
        %2487 = vadd.xlane.f32.xlu0 %v2486
        %v2488 = vpop.xlane.xlu0 %2487
        %v2489 = vsel %vm368, %v2408, 0.0
        %2490 = vadd.xlane.f32.xlu0 %v2489
        %v2491 = vpop.xlane.xlu0 %2490
        %v2492 = vsel %vm368, %v2410, 0.0
        %2493 = vadd.xlane.f32.xlu0 %v2492
        %v2494 = vpop.xlane.xlu0 %2493
        %v2495 = vsel %vm368, %v2412, 0.0
        %2496 = vadd.xlane.f32.xlu0 %v2495
        %v2497 = vpop.xlane.xlu0 %2496
        %v2498 = vsel %vm368, %v2414, 0.0
        %2499 = vadd.xlane.f32.xlu0 %v2498
        %v2500 = vpop.xlane.xlu0 %2499
        %v2501 = vsel %vm368, %v2416, 0.0
        %2502 = vadd.xlane.f32.xlu0 %v2501
        %v2503 = vpop.xlane.xlu0 %2502
        %v2504 = vsel %vm368, %v2418, 0.0
        %2505 = vadd.xlane.f32.xlu0 %v2504
        %v2506 = vpop.xlane.xlu0 %2505
        %v2507 = vsel %vm368, %v2420, 0.0
        %2508 = vadd.xlane.f32.xlu0 %v2507
        %v2509 = vpop.xlane.xlu0 %2508
        %v2510 = vsel %vm368, %v2422, 0.0
        %2511 = vadd.xlane.f32.xlu0 %v2510
        %v2512 = vpop.xlane.xlu0 %2511
        %v2513 = vsel %vm368, %v2424, 0.0
        %2514 = vadd.xlane.f32.xlu0 %v2513
        %v2515 = vpop.xlane.xlu0 %2514
        %v2516 = vsel %vm368, %v2426, 0.0
        %2517 = vadd.xlane.f32.xlu0 %v2516
        %v2518 = vpop.xlane.xlu0 %2517
        %v2519 = vsel %vm368, %v2428, 0.0
        %2520 = vadd.xlane.f32.xlu0 %v2519
        %v2521 = vpop.xlane.xlu0 %2520
        %v2522 = vsel %vm368, %v2430, 0.0
        %2523 = vadd.xlane.f32.xlu0 %v2522
        %v2524 = vpop.xlane.xlu0 %2523
        %v2525 = vsel %vm368, %v2432, 0.0
        %2526 = vadd.xlane.f32.xlu0 %v2525
        %v2527 = vpop.xlane.xlu0 %2526
        %v2528 = vsel %vm368, %v2434, 0.0
        %2529 = vadd.xlane.f32.xlu0 %v2528
        %v2530 = vpop.xlane.xlu0 %2529
        %v2531 = vrcp.pop %v2437
        %v2532 = vrcp.pop %v2440
        %v2533 = vrcp.pop %v2443
        %v2534 = vrcp.pop %v2446
        %v2535 = vrcp.pop %v2449
        %v2536 = vrcp.pop %v2452
        %v2537 = vrcp.pop %v2455
        %v2538 = vrcp.pop %v2458
        %v2539 = vrcp.pop %v2461
        %v2540 = vrcp.pop %v2464
        %v2541 = vrcp.pop %v2467
        %v2542 = vrcp.pop %v2470
        %v2543 = vrcp.pop %v2473
        %v2544 = vrcp.pop %v2476
        %v2545 = vrcp.pop %v2479
        %v2546 = vrcp.pop %v2482
        %v2547 = vrcp.pop %v2485
        %v2548 = vrcp.pop %v2488
        %v2549 = vrcp.pop %v2491
        %v2550 = vrcp.pop %v2494
        %v2551 = vrcp.pop %v2497
        %v2552 = vrcp.pop %v2500
        %v2553 = vrcp.pop %v2503
        %v2554 = vrcp.pop %v2506
        %v2555 = vrcp.pop %v2509
        %v2556 = vrcp.pop %v2512
        %v2557 = vrcp.pop %v2515
        %v2558 = vrcp.pop %v2518
        %v2559 = vrcp.pop %v2521
        %v2560 = vrcp.pop %v2524
        %v2561 = vrcp.pop %v2527
        %v2562 = vrcp.pop %v2530
        %v2563 = vmul.f32 %v2372, %v2531
        %v2564 = vmul.f32 %v2374, %v2532
        %v2565 = vmul.f32 %v2376, %v2533
        %v2566 = vmul.f32 %v2378, %v2534
        %v2567 = vmul.f32 %v2380, %v2535
        %v2568 = vmul.f32 %v2382, %v2536
        %v2569 = vmul.f32 %v2384, %v2537
        %v2570 = vmul.f32 %v2386, %v2538
        %v2571 = vmul.f32 %v2388, %v2539
        %v2572 = vmul.f32 %v2390, %v2540
        %v2573 = vmul.f32 %v2392, %v2541
        %v2574 = vmul.f32 %v2394, %v2542
        %v2575 = vmul.f32 %v2396, %v2543
        %v2576 = vmul.f32 %v2398, %v2544
        %v2577 = vmul.f32 %v2400, %v2545
        %v2578 = vmul.f32 %v2402, %v2546
        %v2579 = vmul.f32 %v2404, %v2547
        %v2580 = vmul.f32 %v2406, %v2548
        %v2581 = vmul.f32 %v2408, %v2549
        %v2582 = vmul.f32 %v2410, %v2550
        %v2583 = vmul.f32 %v2412, %v2551
        %v2584 = vmul.f32 %v2414, %v2552
        %v2585 = vmul.f32 %v2416, %v2553
        %v2586 = vmul.f32 %v2418, %v2554
        %v2587 = vmul.f32 %v2420, %v2555
        %v2588 = vmul.f32 %v2422, %v2556
        %v2589 = vmul.f32 %v2424, %v2557
        %v2590 = vmul.f32 %v2426, %v2558
        %v2591 = vmul.f32 %v2428, %v2559
        %v2592 = vmul.f32 %v2430, %v2560
        %v2593 = vmul.f32 %v2432, %v2561
        %v2594 = vmul.f32 %v2434, %v2562
        %2595 = vrot.lane.b32.xlu0 %v1774, 64
        %v2596 = vpop.permute.xlu0 %2595
        %2597 = vrot.lane.b32.xlu0 %v1775, 64
        %v2598 = vpop.permute.xlu0 %2597
        %2599 = vrot.lane.b32.xlu0 %v1776, 64
        %v2600 = vpop.permute.xlu0 %2599
        %2601 = vrot.lane.b32.xlu0 %v1777, 64
        %v2602 = vpop.permute.xlu0 %2601
        %2603 = vrot.lane.b32.xlu0 %v1778, 64
        %v2604 = vpop.permute.xlu0 %2603
        %2605 = vrot.lane.b32.xlu0 %v1779, 64
        %v2606 = vpop.permute.xlu0 %2605
        %2607 = vrot.lane.b32.xlu0 %v1780, 64
        %v2608 = vpop.permute.xlu0 %2607
        %2609 = vrot.lane.b32.xlu0 %v1781, 64
        %v2610 = vpop.permute.xlu0 %2609
        %v2620 = vsel %vm368, %v2563, 0
        %v2623 = vsel %vm368, %v2564, 0
        %v2626 = vsel %vm368, %v2565, 0
        %v2629 = vsel %vm368, %v2566, 0
        %v2632 = vsel %vm368, %v2567, 0
        %v2635 = vsel %vm368, %v2568, 0
        %v2638 = vsel %vm368, %v2569, 0
        %v2641 = vsel %vm368, %v2570, 0
        %2643 = vmatpush.msra.mxu0 0.0
        %2644 = vmatpush.msra.mxu0 0.0
        %2645 = vmatpush.msra.mxu0 0.0
        %2646 = vmatpush.msra.mxu0 0.0
        %2647 = vmatpush.msra.mxu0 0.0
        %2648 = vmatpush.msra.mxu0 0.0
        %2649 = vmatpush.msra.mxu0 0.0
        %2650 = vmatpush.msra.mxu0 0.0
        %2651 = vmatpush.msra.mxu0 %v2610
        %2652 = vmatpush.msra.mxu0 %v2608
        %2653 = vmatpush.msra.mxu0 %v2606
        %2654 = vmatpush.msra.mxu0 %v2604
        %2655 = vmatpush.msra.mxu0 %v2602
        %2656 = vmatpush.msra.mxu0 %v2600
        %2657 = vmatpush.msra.mxu0 %v2598
        %2658 = vmatpush.msra.mxu0 %v2596
        %2659 = vmatmul.f32.gmra.mxu0 %v2620
        %v2660 = vpop.f32.mrf.mxu0
        %v2661 = vadd.f32 0.0, %v2660
        %2662 = vmatmul.f32.gmra.mxu0 %v2623
        %v2663 = vpop.f32.mrf.mxu0
        %v2664 = vadd.f32 0.0, %v2663
        %2665 = vmatmul.f32.gmra.mxu0 %v2626
        %v2666 = vpop.f32.mrf.mxu0
        %v2667 = vadd.f32 0.0, %v2666
        %2668 = vmatmul.f32.gmra.mxu0 %v2629
        %v2669 = vpop.f32.mrf.mxu0
        %v2670 = vadd.f32 0.0, %v2669
        %2671 = vmatmul.f32.gmra.mxu0 %v2632
        %v2672 = vpop.f32.mrf.mxu0
        %v2673 = vadd.f32 0.0, %v2672
        %2674 = vmatmul.f32.gmra.mxu0 %v2635
        %v2675 = vpop.f32.mrf.mxu0
        %v2676 = vadd.f32 0.0, %v2675
        %2677 = vmatmul.f32.gmra.mxu0 %v2638
        %v2678 = vpop.f32.mrf.mxu0
        %v2679 = vadd.f32 0.0, %v2678
        %2680 = vmatmul.f32.gmra.mxu0 %v2641
        %v2681 = vpop.f32.mrf.mxu0
        %v2682 = vadd.f32 0.0, %v2681
        %2683 = vdwg.mxu0
        %2684 = vrot.lane.b32.xlu0 %v1782, 64
        %v2685 = vpop.permute.xlu0 %2684
        %2686 = vrot.lane.b32.xlu0 %v1783, 64
        %v2687 = vpop.permute.xlu0 %2686
        %2688 = vrot.lane.b32.xlu0 %v1784, 64
        %v2689 = vpop.permute.xlu0 %2688
        %2690 = vrot.lane.b32.xlu0 %v1785, 64
        %v2691 = vpop.permute.xlu0 %2690
        %2692 = vrot.lane.b32.xlu0 %v1786, 64
        %v2693 = vpop.permute.xlu0 %2692
        %2694 = vrot.lane.b32.xlu0 %v1787, 64
        %v2695 = vpop.permute.xlu0 %2694
        %2696 = vrot.lane.b32.xlu0 %v1788, 64
        %v2697 = vpop.permute.xlu0 %2696
        %2698 = vrot.lane.b32.xlu0 %v1789, 64
        %v2699 = vpop.permute.xlu0 %2698
        %v2709 = vsel %vm368, %v2571, 0
        %v2712 = vsel %vm368, %v2572, 0
        %v2715 = vsel %vm368, %v2573, 0
        %v2718 = vsel %vm368, %v2574, 0
        %v2721 = vsel %vm368, %v2575, 0
        %v2724 = vsel %vm368, %v2576, 0
        %v2727 = vsel %vm368, %v2577, 0
        %v2730 = vsel %vm368, %v2578, 0
        %2732 = vmatpush.msra.mxu0 0.0
        %2733 = vmatpush.msra.mxu0 0.0
        %2734 = vmatpush.msra.mxu0 0.0
        %2735 = vmatpush.msra.mxu0 0.0
        %2736 = vmatpush.msra.mxu0 0.0
        %2737 = vmatpush.msra.mxu0 0.0
        %2738 = vmatpush.msra.mxu0 0.0
        %2739 = vmatpush.msra.mxu0 0.0
        %2740 = vmatpush.msra.mxu0 %v2699
        %2741 = vmatpush.msra.mxu0 %v2697
        %2742 = vmatpush.msra.mxu0 %v2695
        %2743 = vmatpush.msra.mxu0 %v2693
        %2744 = vmatpush.msra.mxu0 %v2691
        %2745 = vmatpush.msra.mxu0 %v2689
        %2746 = vmatpush.msra.mxu0 %v2687
        %2747 = vmatpush.msra.mxu0 %v2685
        %2748 = vmatmul.f32.gmra.mxu0 %v2709
        %v2749 = vpop.f32.mrf.mxu0
        %v2750 = vadd.f32 0.0, %v2749
        %2751 = vmatmul.f32.gmra.mxu0 %v2712
        %v2752 = vpop.f32.mrf.mxu0
        %v2753 = vadd.f32 0.0, %v2752
        %2754 = vmatmul.f32.gmra.mxu0 %v2715
        %v2755 = vpop.f32.mrf.mxu0
        %v2756 = vadd.f32 0.0, %v2755
        %2757 = vmatmul.f32.gmra.mxu0 %v2718
        %v2758 = vpop.f32.mrf.mxu0
        %v2759 = vadd.f32 0.0, %v2758
        %2760 = vmatmul.f32.gmra.mxu0 %v2721
        %v2761 = vpop.f32.mrf.mxu0
        %v2762 = vadd.f32 0.0, %v2761
        %2763 = vmatmul.f32.gmra.mxu0 %v2724
        %v2764 = vpop.f32.mrf.mxu0
        %v2765 = vadd.f32 0.0, %v2764
        %2766 = vmatmul.f32.gmra.mxu0 %v2727
        %v2767 = vpop.f32.mrf.mxu0
        %v2768 = vadd.f32 0.0, %v2767
        %2769 = vmatmul.f32.gmra.mxu0 %v2730
        %v2770 = vpop.f32.mrf.mxu0
        %v2771 = vadd.f32 0.0, %v2770
        %2772 = vdwg.mxu0
        %2773 = vrot.lane.b32.xlu0 %v1790, 64
        %v2774 = vpop.permute.xlu0 %2773
        %2775 = vrot.lane.b32.xlu0 %v1791, 64
        %v2776 = vpop.permute.xlu0 %2775
        %2777 = vrot.lane.b32.xlu0 %v1792, 64
        %v2778 = vpop.permute.xlu0 %2777
        %2779 = vrot.lane.b32.xlu0 %v1793, 64
        %v2780 = vpop.permute.xlu0 %2779
        %2781 = vrot.lane.b32.xlu0 %v1794, 64
        %v2782 = vpop.permute.xlu0 %2781
        %2783 = vrot.lane.b32.xlu0 %v1795, 64
        %v2784 = vpop.permute.xlu0 %2783
        %2785 = vrot.lane.b32.xlu0 %v1796, 64
        %v2786 = vpop.permute.xlu0 %2785
        %2787 = vrot.lane.b32.xlu0 %v1797, 64
        %v2788 = vpop.permute.xlu0 %2787
        %v2798 = vsel %vm368, %v2579, 0
        %v2801 = vsel %vm368, %v2580, 0
        %v2804 = vsel %vm368, %v2581, 0
        %v2807 = vsel %vm368, %v2582, 0
        %v2810 = vsel %vm368, %v2583, 0
        %v2813 = vsel %vm368, %v2584, 0
        %v2816 = vsel %vm368, %v2585, 0
        %v2819 = vsel %vm368, %v2586, 0
        %2821 = vmatpush.msra.mxu0 0.0
        %2822 = vmatpush.msra.mxu0 0.0
        %2823 = vmatpush.msra.mxu0 0.0
        %2824 = vmatpush.msra.mxu0 0.0
        %2825 = vmatpush.msra.mxu0 0.0
        %2826 = vmatpush.msra.mxu0 0.0
        %2827 = vmatpush.msra.mxu0 0.0
        %2828 = vmatpush.msra.mxu0 0.0
        %2829 = vmatpush.msra.mxu0 %v2788
        %2830 = vmatpush.msra.mxu0 %v2786
        %2831 = vmatpush.msra.mxu0 %v2784
        %2832 = vmatpush.msra.mxu0 %v2782
        %2833 = vmatpush.msra.mxu0 %v2780
        %2834 = vmatpush.msra.mxu0 %v2778
        %2835 = vmatpush.msra.mxu0 %v2776
        %2836 = vmatpush.msra.mxu0 %v2774
        %2837 = vmatmul.f32.gmra.mxu0 %v2798
        %v2838 = vpop.f32.mrf.mxu0
        %v2839 = vadd.f32 0.0, %v2838
        %2840 = vmatmul.f32.gmra.mxu0 %v2801
        %v2841 = vpop.f32.mrf.mxu0
        %v2842 = vadd.f32 0.0, %v2841
        %2843 = vmatmul.f32.gmra.mxu0 %v2804
        %v2844 = vpop.f32.mrf.mxu0
        %v2845 = vadd.f32 0.0, %v2844
        %2846 = vmatmul.f32.gmra.mxu0 %v2807
        %v2847 = vpop.f32.mrf.mxu0
        %v2848 = vadd.f32 0.0, %v2847
        %2849 = vmatmul.f32.gmra.mxu0 %v2810
        %v2850 = vpop.f32.mrf.mxu0
        %v2851 = vadd.f32 0.0, %v2850
        %2852 = vmatmul.f32.gmra.mxu0 %v2813
        %v2853 = vpop.f32.mrf.mxu0
        %v2854 = vadd.f32 0.0, %v2853
        %2855 = vmatmul.f32.gmra.mxu0 %v2816
        %v2856 = vpop.f32.mrf.mxu0
        %v2857 = vadd.f32 0.0, %v2856
        %2858 = vmatmul.f32.gmra.mxu0 %v2819
        %v2859 = vpop.f32.mrf.mxu0
        %v2860 = vadd.f32 0.0, %v2859
        %2861 = vdwg.mxu0
        %2862 = vrot.lane.b32.xlu0 %v1798, 64
        %v2863 = vpop.permute.xlu0 %2862
        %2864 = vrot.lane.b32.xlu0 %v1799, 64
        %v2865 = vpop.permute.xlu0 %2864
        %2866 = vrot.lane.b32.xlu0 %v1800, 64
        %v2867 = vpop.permute.xlu0 %2866
        %2868 = vrot.lane.b32.xlu0 %v1801, 64
        %v2869 = vpop.permute.xlu0 %2868
        %2870 = vrot.lane.b32.xlu0 %v1802, 64
        %v2871 = vpop.permute.xlu0 %2870
        %2872 = vrot.lane.b32.xlu0 %v1803, 64
        %v2873 = vpop.permute.xlu0 %2872
        %2874 = vrot.lane.b32.xlu0 %v1804, 64
        %v2875 = vpop.permute.xlu0 %2874
        %2876 = vrot.lane.b32.xlu0 %v1805, 64
        %v2877 = vpop.permute.xlu0 %2876
        %v2887 = vsel %vm368, %v2587, 0
        %v2890 = vsel %vm368, %v2588, 0
        %v2893 = vsel %vm368, %v2589, 0
        %v2896 = vsel %vm368, %v2590, 0
        %v2899 = vsel %vm368, %v2591, 0
        %v2902 = vsel %vm368, %v2592, 0
        %v2905 = vsel %vm368, %v2593, 0
        %v2908 = vsel %vm368, %v2594, 0
        %2910 = vmatpush.msra.mxu0 0.0
        %2911 = vmatpush.msra.mxu0 0.0
        %2912 = vmatpush.msra.mxu0 0.0
        %2913 = vmatpush.msra.mxu0 0.0
        %2914 = vmatpush.msra.mxu0 0.0
        %2915 = vmatpush.msra.mxu0 0.0
        %2916 = vmatpush.msra.mxu0 0.0
        %2917 = vmatpush.msra.mxu0 0.0
        %2918 = vmatpush.msra.mxu0 %v2877
        %2919 = vmatpush.msra.mxu0 %v2875
        %2920 = vmatpush.msra.mxu0 %v2873
        %2921 = vmatpush.msra.mxu0 %v2871
        %2922 = vmatpush.msra.mxu0 %v2869
        %2923 = vmatpush.msra.mxu0 %v2867
        %2924 = vmatpush.msra.mxu0 %v2865
        %2925 = vmatpush.msra.mxu0 %v2863
        %2926 = vmatmul.f32.gmra.mxu0 %v2887
        %v2927 = vpop.f32.mrf.mxu0
        %v2928 = vadd.f32 0.0, %v2927
        %2929 = vmatmul.f32.gmra.mxu0 %v2890
        %v2930 = vpop.f32.mrf.mxu0
        %v2931 = vadd.f32 0.0, %v2930
        %2932 = vmatmul.f32.gmra.mxu0 %v2893
        %v2933 = vpop.f32.mrf.mxu0
        %v2934 = vadd.f32 0.0, %v2933
        %2935 = vmatmul.f32.gmra.mxu0 %v2896
        %v2936 = vpop.f32.mrf.mxu0
        %v2937 = vadd.f32 0.0, %v2936
        %2938 = vmatmul.f32.gmra.mxu0 %v2899
        %v2939 = vpop.f32.mrf.mxu0
        %v2940 = vadd.f32 0.0, %v2939
        %2941 = vmatmul.f32.gmra.mxu0 %v2902
        %v2942 = vpop.f32.mrf.mxu0
        %v2943 = vadd.f32 0.0, %v2942
        %2944 = vmatmul.f32.gmra.mxu0 %v2905
        %v2945 = vpop.f32.mrf.mxu0
        %v2946 = vadd.f32 0.0, %v2945
        %2947 = vmatmul.f32.gmra.mxu0 %v2908
        %v2948 = vpop.f32.mrf.mxu0
        %v2949 = vadd.f32 0.0, %v2948
        %2950 = vdwg.mxu0
        %v2951 = vld [vmem:[#allocation2] sm:$0xff]
        %v2952 = vld [vmem:[#allocation2 + $0x8] sm:$0xff]
        %v2953 = vld [vmem:[#allocation2 + $0x28] sm:$0xff]
        %v2954 = vld [vmem:[#allocation2 + $0x30] sm:$0xff]
        %v2955 = vld [vmem:[#allocation2 + $0x50] sm:$0xff]
        %v2956 = vld [vmem:[#allocation2 + $0x58] sm:$0xff]
        %v2957 = vld [vmem:[#allocation2 + $0x78] sm:$0xff]
        %v2958 = vld [vmem:[#allocation2 + $0x80] sm:$0xff]
        %v2959 = vld [vmem:[#allocation2 + $0xa0] sm:$0xff]
        %v2960 = vld [vmem:[#allocation2 + $0xa8] sm:$0xff]
        %v2961 = vld [vmem:[#allocation2 + $0xc8] sm:$0xff]
        %v2962 = vld [vmem:[#allocation2 + $0xd0] sm:$0xff]
        %v2963 = vld [vmem:[#allocation2 + $0xf0] sm:$0xff]
        %v2964 = vld [vmem:[#allocation2 + $0xf8] sm:$0xff]
        %v2965 = vld [vmem:[#allocation2 + $0x118] sm:$0xff]
        %v2966 = vld [vmem:[#allocation2 + $0x120] sm:$0xff]
        %v2967 = vld [vmem:[#allocation2 + $0x140] sm:$0xff]
        %v2968 = vld [vmem:[#allocation2 + $0x148] sm:$0xff]
        %v2969 = vld [vmem:[#allocation2 + $0x168] sm:$0xff]
        %v2970 = vld [vmem:[#allocation2 + $0x170] sm:$0xff]
        %v2971 = vld [vmem:[#allocation2 + $0x190] sm:$0xff]
        %v2972 = vld [vmem:[#allocation2 + $0x198] sm:$0xff]
        %v2973 = vld [vmem:[#allocation2 + $0x1b8] sm:$0xff]
        %v2974 = vld [vmem:[#allocation2 + $0x1c0] sm:$0xff]
        %v2975 = vld [vmem:[#allocation2 + $0x1e0] sm:$0xff]
        %v2976 = vld [vmem:[#allocation2 + $0x1e8] sm:$0xff]
        %v2977 = vld [vmem:[#allocation2 + $0x208] sm:$0xff]
        %v2978 = vld [vmem:[#allocation2 + $0x210] sm:$0xff]
        %v2979 = vld [vmem:[#allocation2 + $0x230] sm:$0xff]
        %v2980 = vld [vmem:[#allocation2 + $0x238] sm:$0xff]
        %v2981 = vld [vmem:[#allocation2 + $0x258] sm:$0xff]
        %v2982 = vld [vmem:[#allocation2 + $0x260] sm:$0xff]
        %v2983 = vld [vmem:[#allocation2 + $0x280] sm:$0xff]
        %v2984 = vld [vmem:[#allocation2 + $0x288] sm:$0xff]
        %v2985 = vld [vmem:[#allocation2 + $0x2a8] sm:$0xff]
        %v2986 = vld [vmem:[#allocation2 + $0x2b0] sm:$0xff]
        %v2987 = vld [vmem:[#allocation2 + $0x2d0] sm:$0xff]
        %v2988 = vld [vmem:[#allocation2 + $0x2d8] sm:$0xff]
        %v2989 = vld [vmem:[#allocation2 + $0x2f8] sm:$0xff]
        %v2990 = vld [vmem:[#allocation2 + $0x300] sm:$0xff]
        %v2991 = vld [vmem:[#allocation2 + $0x320] sm:$0xff]
        %v2992 = vld [vmem:[#allocation2 + $0x328] sm:$0xff]
        %v2993 = vld [vmem:[#allocation2 + $0x348] sm:$0xff]
        %v2994 = vld [vmem:[#allocation2 + $0x350] sm:$0xff]
        %v2995 = vld [vmem:[#allocation2 + $0x370] sm:$0xff]
        %v2996 = vld [vmem:[#allocation2 + $0x378] sm:$0xff]
        %v2997 = vld [vmem:[#allocation2 + $0x398] sm:$0xff]
        %v2998 = vld [vmem:[#allocation2 + $0x3a0] sm:$0xff]
        %v2999 = vld [vmem:[#allocation2 + $0x3c0] sm:$0xff]
        %v3000 = vld [vmem:[#allocation2 + $0x3c8] sm:$0xff]
        %v3001 = vld [vmem:[#allocation2 + $0x3e8] sm:$0xff]
        %v3002 = vld [vmem:[#allocation2 + $0x3f0] sm:$0xff]
        %v3003 = vld [vmem:[#allocation2 + $0x410] sm:$0xff]
        %v3004 = vld [vmem:[#allocation2 + $0x418] sm:$0xff]
        %v3005 = vld [vmem:[#allocation2 + $0x438] sm:$0xff]
        %v3006 = vld [vmem:[#allocation2 + $0x440] sm:$0xff]
        %v3007 = vld [vmem:[#allocation2 + $0x460] sm:$0xff]
        %v3008 = vld [vmem:[#allocation2 + $0x468] sm:$0xff]
        %v3009 = vld [vmem:[#allocation2 + $0x488] sm:$0xff]
        %v3010 = vld [vmem:[#allocation2 + $0x490] sm:$0xff]
        %v3011 = vld [vmem:[#allocation2 + $0x4b0] sm:$0xff]
        %v3012 = vld [vmem:[#allocation2 + $0x4b8] sm:$0xff]
        %v3013 = vld [vmem:[#allocation2 + $0x4d8] sm:$0xff]
        %v3014 = vld [vmem:[#allocation2 + $0x4e0] sm:$0xff]
        %3023 = vrot.lane.b32.xlu0 %v2951, 32
        %v3024 = vpop.permute.xlu0 %3023
        %3025 = vrot.lane.b32.xlu0 %v2953, 32
        %v3026 = vpop.permute.xlu0 %3025
        %3027 = vrot.lane.b32.xlu0 %v2955, 32
        %v3028 = vpop.permute.xlu0 %3027
        %3029 = vrot.lane.b32.xlu0 %v2957, 32
        %v3030 = vpop.permute.xlu0 %3029
        %3031 = vrot.lane.b32.xlu0 %v2959, 32
        %v3032 = vpop.permute.xlu0 %3031
        %3033 = vrot.lane.b32.xlu0 %v2961, 32
        %v3034 = vpop.permute.xlu0 %3033
        %3035 = vrot.lane.b32.xlu0 %v2963, 32
        %v3036 = vpop.permute.xlu0 %3035
        %3037 = vrot.lane.b32.xlu0 %v2965, 32
        %v3038 = vpop.permute.xlu0 %3037
        %v3039 = vsel %vm1830, %v3024, 0
        %v3041 = vsel %vm1830, %v3026, 0
        %v3043 = vsel %vm1830, %v3028, 0
        %v3045 = vsel %vm1830, %v3030, 0
        %v3047 = vsel %vm1830, %v3032, 0
        %v3049 = vsel %vm1830, %v3034, 0
        %v3051 = vsel %vm1830, %v3036, 0
        %v3053 = vsel %vm1830, %v3038, 0
        %v3056 = vsel %vm1830, %v2952, 0
        %v3059 = vsel %vm1830, %v2954, 0
        %v3062 = vsel %vm1830, %v2956, 0
        %v3065 = vsel %vm1830, %v2958, 0
        %v3068 = vsel %vm1830, %v2960, 0
        %v3071 = vsel %vm1830, %v2962, 0
        %v3074 = vsel %vm1830, %v2964, 0
        %v3077 = vsel %vm1830, %v2966, 0
        %3079 = vmatpush.xpose.msra.mxu0 0.0
        %3080 = vmatpush.xpose.msra.mxu0 0.0
        %3081 = vmatpush.xpose.msra.mxu0 0.0
        %3082 = vmatpush.xpose.msra.mxu0 0.0
        %3083 = vmatpush.xpose.msra.mxu0 0.0
        %3084 = vmatpush.xpose.msra.mxu0 0.0
        %3085 = vmatpush.xpose.msra.mxu0 0.0
        %3086 = vmatpush.xpose.msra.mxu0 0.0
        %3087 = vmatpush.xpose.msra.mxu0 %v3077
        %3088 = vmatpush.xpose.msra.mxu0 %v3074
        %3089 = vmatpush.xpose.msra.mxu0 %v3071
        %3090 = vmatpush.xpose.msra.mxu0 %v3068
        %3091 = vmatpush.xpose.msra.mxu0 %v3065
        %3092 = vmatpush.xpose.msra.mxu0 %v3062
        %3093 = vmatpush.xpose.msra.mxu0 %v3059
        %3094 = vmatpush.xpose.msra.mxu0 %v3056
        %3095 = vmatmul.f32.gmra.mxu0 %v3039
        %v3096 = vpop.f32.mrf.mxu0
        %v3097 = vadd.f32 0.0, %v3096
        %3098 = vmatmul.f32.gmra.mxu0 %v3041
        %v3099 = vpop.f32.mrf.mxu0
        %v3100 = vadd.f32 0.0, %v3099
        %3101 = vmatmul.f32.gmra.mxu0 %v3043
        %v3102 = vpop.f32.mrf.mxu0
        %v3103 = vadd.f32 0.0, %v3102
        %3104 = vmatmul.f32.gmra.mxu0 %v3045
        %v3105 = vpop.f32.mrf.mxu0
        %v3106 = vadd.f32 0.0, %v3105
        %3107 = vmatmul.f32.gmra.mxu0 %v3047
        %v3108 = vpop.f32.mrf.mxu0
        %v3109 = vadd.f32 0.0, %v3108
        %3110 = vmatmul.f32.gmra.mxu0 %v3049
        %v3111 = vpop.f32.mrf.mxu0
        %v3112 = vadd.f32 0.0, %v3111
        %3113 = vmatmul.f32.gmra.mxu0 %v3051
        %v3114 = vpop.f32.mrf.mxu0
        %v3115 = vadd.f32 0.0, %v3114
        %3116 = vmatmul.f32.gmra.mxu0 %v3053
        %v3117 = vpop.f32.mrf.mxu0
        %v3118 = vadd.f32 0.0, %v3117
        %3119 = vdwg.mxu0
        %3128 = vrot.lane.b32.xlu0 %v2967, 32
        %v3129 = vpop.permute.xlu0 %3128
        %3130 = vrot.lane.b32.xlu0 %v2969, 32
        %v3131 = vpop.permute.xlu0 %3130
        %3132 = vrot.lane.b32.xlu0 %v2971, 32
        %v3133 = vpop.permute.xlu0 %3132
        %3134 = vrot.lane.b32.xlu0 %v2973, 32
        %v3135 = vpop.permute.xlu0 %3134
        %3136 = vrot.lane.b32.xlu0 %v2975, 32
        %v3137 = vpop.permute.xlu0 %3136
        %3138 = vrot.lane.b32.xlu0 %v2977, 32
        %v3139 = vpop.permute.xlu0 %3138
        %3140 = vrot.lane.b32.xlu0 %v2979, 32
        %v3141 = vpop.permute.xlu0 %3140
        %3142 = vrot.lane.b32.xlu0 %v2981, 32
        %v3143 = vpop.permute.xlu0 %3142
        %v3144 = vsel %vm1830, %v3129, 0
        %v3146 = vsel %vm1830, %v3131, 0
        %v3148 = vsel %vm1830, %v3133, 0
        %v3150 = vsel %vm1830, %v3135, 0
        %v3152 = vsel %vm1830, %v3137, 0
        %v3154 = vsel %vm1830, %v3139, 0
        %v3156 = vsel %vm1830, %v3141, 0
        %v3158 = vsel %vm1830, %v3143, 0
        %v3161 = vsel %vm1830, %v2968, 0
        %v3164 = vsel %vm1830, %v2970, 0
        %v3167 = vsel %vm1830, %v2972, 0
        %v3170 = vsel %vm1830, %v2974, 0
        %v3173 = vsel %vm1830, %v2976, 0
        %v3176 = vsel %vm1830, %v2978, 0
        %v3179 = vsel %vm1830, %v2980, 0
        %v3182 = vsel %vm1830, %v2982, 0
        %3184 = vmatpush.xpose.msra.mxu0 0.0
        %3185 = vmatpush.xpose.msra.mxu0 0.0
        %3186 = vmatpush.xpose.msra.mxu0 0.0
        %3187 = vmatpush.xpose.msra.mxu0 0.0
        %3188 = vmatpush.xpose.msra.mxu0 0.0
        %3189 = vmatpush.xpose.msra.mxu0 0.0
        %3190 = vmatpush.xpose.msra.mxu0 0.0
        %3191 = vmatpush.xpose.msra.mxu0 0.0
        %3192 = vmatpush.xpose.msra.mxu0 %v3182
        %3193 = vmatpush.xpose.msra.mxu0 %v3179
        %3194 = vmatpush.xpose.msra.mxu0 %v3176
        %3195 = vmatpush.xpose.msra.mxu0 %v3173
        %3196 = vmatpush.xpose.msra.mxu0 %v3170
        %3197 = vmatpush.xpose.msra.mxu0 %v3167
        %3198 = vmatpush.xpose.msra.mxu0 %v3164
        %3199 = vmatpush.xpose.msra.mxu0 %v3161
        %3200 = vmatmul.f32.gmra.mxu0 %v3144
        %v3201 = vpop.f32.mrf.mxu0
        %v3202 = vadd.f32 0.0, %v3201
        %3203 = vmatmul.f32.gmra.mxu0 %v3146
        %v3204 = vpop.f32.mrf.mxu0
        %v3205 = vadd.f32 0.0, %v3204
        %3206 = vmatmul.f32.gmra.mxu0 %v3148
        %v3207 = vpop.f32.mrf.mxu0
        %v3208 = vadd.f32 0.0, %v3207
        %3209 = vmatmul.f32.gmra.mxu0 %v3150
        %v3210 = vpop.f32.mrf.mxu0
        %v3211 = vadd.f32 0.0, %v3210
        %3212 = vmatmul.f32.gmra.mxu0 %v3152
        %v3213 = vpop.f32.mrf.mxu0
        %v3214 = vadd.f32 0.0, %v3213
        %3215 = vmatmul.f32.gmra.mxu0 %v3154
        %v3216 = vpop.f32.mrf.mxu0
        %v3217 = vadd.f32 0.0, %v3216
        %3218 = vmatmul.f32.gmra.mxu0 %v3156
        %v3219 = vpop.f32.mrf.mxu0
        %v3220 = vadd.f32 0.0, %v3219
        %3221 = vmatmul.f32.gmra.mxu0 %v3158
        %v3222 = vpop.f32.mrf.mxu0
        %v3223 = vadd.f32 0.0, %v3222
        %3224 = vdwg.mxu0
        %3233 = vrot.lane.b32.xlu0 %v2983, 32
        %v3234 = vpop.permute.xlu0 %3233
        %3235 = vrot.lane.b32.xlu0 %v2985, 32
        %v3236 = vpop.permute.xlu0 %3235
        %3237 = vrot.lane.b32.xlu0 %v2987, 32
        %v3238 = vpop.permute.xlu0 %3237
        %3239 = vrot.lane.b32.xlu0 %v2989, 32
        %v3240 = vpop.permute.xlu0 %3239
        %3241 = vrot.lane.b32.xlu0 %v2991, 32
        %v3242 = vpop.permute.xlu0 %3241
        %3243 = vrot.lane.b32.xlu0 %v2993, 32
        %v3244 = vpop.permute.xlu0 %3243
        %3245 = vrot.lane.b32.xlu0 %v2995, 32
        %v3246 = vpop.permute.xlu0 %3245
        %3247 = vrot.lane.b32.xlu0 %v2997, 32
        %v3248 = vpop.permute.xlu0 %3247
        %v3249 = vsel %vm1830, %v3234, 0
        %v3251 = vsel %vm1830, %v3236, 0
        %v3253 = vsel %vm1830, %v3238, 0
        %v3255 = vsel %vm1830, %v3240, 0
        %v3257 = vsel %vm1830, %v3242, 0
        %v3259 = vsel %vm1830, %v3244, 0
        %v3261 = vsel %vm1830, %v3246, 0
        %v3263 = vsel %vm1830, %v3248, 0
        %v3266 = vsel %vm1830, %v2984, 0
        %v3269 = vsel %vm1830, %v2986, 0
        %v3272 = vsel %vm1830, %v2988, 0
        %v3275 = vsel %vm1830, %v2990, 0
        %v3278 = vsel %vm1830, %v2992, 0
        %v3281 = vsel %vm1830, %v2994, 0
        %v3284 = vsel %vm1830, %v2996, 0
        %v3287 = vsel %vm1830, %v2998, 0
        %3289 = vmatpush.xpose.msra.mxu0 0.0
        %3290 = vmatpush.xpose.msra.mxu0 0.0
        %3291 = vmatpush.xpose.msra.mxu0 0.0
        %3292 = vmatpush.xpose.msra.mxu0 0.0
        %3293 = vmatpush.xpose.msra.mxu0 0.0
        %3294 = vmatpush.xpose.msra.mxu0 0.0
        %3295 = vmatpush.xpose.msra.mxu0 0.0
        %3296 = vmatpush.xpose.msra.mxu0 0.0
        %3297 = vmatpush.xpose.msra.mxu0 %v3287
        %3298 = vmatpush.xpose.msra.mxu0 %v3284
        %3299 = vmatpush.xpose.msra.mxu0 %v3281
        %3300 = vmatpush.xpose.msra.mxu0 %v3278
        %3301 = vmatpush.xpose.msra.mxu0 %v3275
        %3302 = vmatpush.xpose.msra.mxu0 %v3272
        %3303 = vmatpush.xpose.msra.mxu0 %v3269
        %3304 = vmatpush.xpose.msra.mxu0 %v3266
        %3305 = vmatmul.f32.gmra.mxu0 %v3249
        %v3306 = vpop.f32.mrf.mxu0
        %v3307 = vadd.f32 0.0, %v3306
        %3308 = vmatmul.f32.gmra.mxu0 %v3251
        %v3309 = vpop.f32.mrf.mxu0
        %v3310 = vadd.f32 0.0, %v3309
        %3311 = vmatmul.f32.gmra.mxu0 %v3253
        %v3312 = vpop.f32.mrf.mxu0
        %v3313 = vadd.f32 0.0, %v3312
        %3314 = vmatmul.f32.gmra.mxu0 %v3255
        %v3315 = vpop.f32.mrf.mxu0
        %v3316 = vadd.f32 0.0, %v3315
        %3317 = vmatmul.f32.gmra.mxu0 %v3257
        %v3318 = vpop.f32.mrf.mxu0
        %v3319 = vadd.f32 0.0, %v3318
        %3320 = vmatmul.f32.gmra.mxu0 %v3259
        %v3321 = vpop.f32.mrf.mxu0
        %v3322 = vadd.f32 0.0, %v3321
        %3323 = vmatmul.f32.gmra.mxu0 %v3261
        %v3324 = vpop.f32.mrf.mxu0
        %v3325 = vadd.f32 0.0, %v3324
        %3326 = vmatmul.f32.gmra.mxu0 %v3263
        %v3327 = vpop.f32.mrf.mxu0
        %v3328 = vadd.f32 0.0, %v3327
        %3329 = vdwg.mxu0
        %3338 = vrot.lane.b32.xlu0 %v2999, 32
        %v3339 = vpop.permute.xlu0 %3338
        %3340 = vrot.lane.b32.xlu0 %v3001, 32
        %v3341 = vpop.permute.xlu0 %3340
        %3342 = vrot.lane.b32.xlu0 %v3003, 32
        %v3343 = vpop.permute.xlu0 %3342
        %3344 = vrot.lane.b32.xlu0 %v3005, 32
        %v3345 = vpop.permute.xlu0 %3344
        %3346 = vrot.lane.b32.xlu0 %v3007, 32
        %v3347 = vpop.permute.xlu0 %3346
        %3348 = vrot.lane.b32.xlu0 %v3009, 32
        %v3349 = vpop.permute.xlu0 %3348
        %3350 = vrot.lane.b32.xlu0 %v3011, 32
        %v3351 = vpop.permute.xlu0 %3350
        %3352 = vrot.lane.b32.xlu0 %v3013, 32
        %v3353 = vpop.permute.xlu0 %3352
        %v3354 = vsel %vm1830, %v3339, 0
        %v3356 = vsel %vm1830, %v3341, 0
        %v3358 = vsel %vm1830, %v3343, 0
        %v3360 = vsel %vm1830, %v3345, 0
        %v3362 = vsel %vm1830, %v3347, 0
        %v3364 = vsel %vm1830, %v3349, 0
        %v3366 = vsel %vm1830, %v3351, 0
        %v3368 = vsel %vm1830, %v3353, 0
        %v3371 = vsel %vm1830, %v3000, 0
        %v3374 = vsel %vm1830, %v3002, 0
        %v3377 = vsel %vm1830, %v3004, 0
        %v3380 = vsel %vm1830, %v3006, 0
        %v3383 = vsel %vm1830, %v3008, 0
        %v3386 = vsel %vm1830, %v3010, 0
        %v3389 = vsel %vm1830, %v3012, 0
        %v3392 = vsel %vm1830, %v3014, 0
        %3394 = vmatpush.xpose.msra.mxu0 0.0
        %3395 = vmatpush.xpose.msra.mxu0 0.0
        %3396 = vmatpush.xpose.msra.mxu0 0.0
        %3397 = vmatpush.xpose.msra.mxu0 0.0
        %3398 = vmatpush.xpose.msra.mxu0 0.0
        %3399 = vmatpush.xpose.msra.mxu0 0.0
        %3400 = vmatpush.xpose.msra.mxu0 0.0
        %3401 = vmatpush.xpose.msra.mxu0 0.0
        %3402 = vmatpush.xpose.msra.mxu0 %v3392
        %3403 = vmatpush.xpose.msra.mxu0 %v3389
        %3404 = vmatpush.xpose.msra.mxu0 %v3386
        %3405 = vmatpush.xpose.msra.mxu0 %v3383
        %3406 = vmatpush.xpose.msra.mxu0 %v3380
        %3407 = vmatpush.xpose.msra.mxu0 %v3377
        %3408 = vmatpush.xpose.msra.mxu0 %v3374
        %3409 = vmatpush.xpose.msra.mxu0 %v3371
        %3410 = vmatmul.f32.gmra.mxu0 %v3354
        %v3411 = vpop.f32.mrf.mxu0
        %v3412 = vadd.f32 0.0, %v3411
        %3413 = vmatmul.f32.gmra.mxu0 %v3356
        %v3414 = vpop.f32.mrf.mxu0
        %v3415 = vadd.f32 0.0, %v3414
        %3416 = vmatmul.f32.gmra.mxu0 %v3358
        %v3417 = vpop.f32.mrf.mxu0
        %v3418 = vadd.f32 0.0, %v3417
        %3419 = vmatmul.f32.gmra.mxu0 %v3360
        %v3420 = vpop.f32.mrf.mxu0
        %v3421 = vadd.f32 0.0, %v3420
        %3422 = vmatmul.f32.gmra.mxu0 %v3362
        %v3423 = vpop.f32.mrf.mxu0
        %v3424 = vadd.f32 0.0, %v3423
        %3425 = vmatmul.f32.gmra.mxu0 %v3364
        %v3426 = vpop.f32.mrf.mxu0
        %v3427 = vadd.f32 0.0, %v3426
        %3428 = vmatmul.f32.gmra.mxu0 %v3366
        %v3429 = vpop.f32.mrf.mxu0
        %v3430 = vadd.f32 0.0, %v3429
        %3431 = vmatmul.f32.gmra.mxu0 %v3368
        %v3432 = vpop.f32.mrf.mxu0
        %v3433 = vadd.f32 0.0, %v3432
        %3434 = vdwg.mxu0
        %v3435 = vsel %vm2203, %v3097, -inf
        %v3436 = vsel %vm2204, %v3100, -inf
        %v3437 = vsel %vm2205, %v3103, -inf
        %v3438 = vsel %vm2206, %v3106, -inf
        %v3439 = vsel %vm2207, %v3109, -inf
        %v3440 = vsel %vm2208, %v3112, -inf
        %v3441 = vsel %vm2209, %v3115, -inf
        %v3442 = vsel %vm2210, %v3118, -inf
        %v3443 = vsel %vm2203, %v3202, -inf
        %v3444 = vsel %vm2204, %v3205, -inf
        %v3445 = vsel %vm2205, %v3208, -inf
        %v3446 = vsel %vm2206, %v3211, -inf
        %v3447 = vsel %vm2207, %v3214, -inf
        %v3448 = vsel %vm2208, %v3217, -inf
        %v3449 = vsel %vm2209, %v3220, -inf
        %v3450 = vsel %vm2210, %v3223, -inf
        %v3451 = vsel %vm2203, %v3307, -inf
        %v3452 = vsel %vm2204, %v3310, -inf
        %v3453 = vsel %vm2205, %v3313, -inf
        %v3454 = vsel %vm2206, %v3316, -inf
        %v3455 = vsel %vm2207, %v3319, -inf
        %v3456 = vsel %vm2208, %v3322, -inf
        %v3457 = vsel %vm2209, %v3325, -inf
        %v3458 = vsel %vm2210, %v3328, -inf
        %v3459 = vsel %vm2203, %v3412, -inf
        %v3460 = vsel %vm2204, %v3415, -inf
        %v3461 = vsel %vm2205, %v3418, -inf
        %v3462 = vsel %vm2206, %v3421, -inf
        %v3463 = vsel %vm2207, %v3424, -inf
        %v3464 = vsel %vm2208, %v3427, -inf
        %v3465 = vsel %vm2209, %v3430, -inf
        %v3466 = vsel %vm2210, %v3433, -inf
        %v3467 = vsel %vm368, %v3435, -inf
        %3468 = vmax.xlane.f32.xlu0 %v3467
        %v3469 = vpop.xlane.xlu0 %3468
        %v3470 = vsel %vm368, %v3436, -inf
        %3471 = vmax.xlane.f32.xlu0 %v3470
        %v3472 = vpop.xlane.xlu0 %3471
        %v3473 = vsel %vm368, %v3437, -inf
        %3474 = vmax.xlane.f32.xlu0 %v3473
        %v3475 = vpop.xlane.xlu0 %3474
        %v3476 = vsel %vm368, %v3438, -inf
        %3477 = vmax.xlane.f32.xlu0 %v3476
        %v3478 = vpop.xlane.xlu0 %3477
        %v3479 = vsel %vm368, %v3439, -inf
        %3480 = vmax.xlane.f32.xlu0 %v3479
        %v3481 = vpop.xlane.xlu0 %3480
        %v3482 = vsel %vm368, %v3440, -inf
        %3483 = vmax.xlane.f32.xlu0 %v3482
        %v3484 = vpop.xlane.xlu0 %3483
        %v3485 = vsel %vm368, %v3441, -inf
        %3486 = vmax.xlane.f32.xlu0 %v3485
        %v3487 = vpop.xlane.xlu0 %3486
        %v3488 = vsel %vm368, %v3442, -inf
        %3489 = vmax.xlane.f32.xlu0 %v3488
        %v3490 = vpop.xlane.xlu0 %3489
        %v3491 = vsel %vm368, %v3443, -inf
        %3492 = vmax.xlane.f32.xlu0 %v3491
        %v3493 = vpop.xlane.xlu0 %3492
        %v3494 = vsel %vm368, %v3444, -inf
        %3495 = vmax.xlane.f32.xlu0 %v3494
        %v3496 = vpop.xlane.xlu0 %3495
        %v3497 = vsel %vm368, %v3445, -inf
        %3498 = vmax.xlane.f32.xlu0 %v3497
        %v3499 = vpop.xlane.xlu0 %3498
        %v3500 = vsel %vm368, %v3446, -inf
        %3501 = vmax.xlane.f32.xlu0 %v3500
        %v3502 = vpop.xlane.xlu0 %3501
        %v3503 = vsel %vm368, %v3447, -inf
        %3504 = vmax.xlane.f32.xlu0 %v3503
        %v3505 = vpop.xlane.xlu0 %3504
        %v3506 = vsel %vm368, %v3448, -inf
        %3507 = vmax.xlane.f32.xlu0 %v3506
        %v3508 = vpop.xlane.xlu0 %3507
        %v3509 = vsel %vm368, %v3449, -inf
        %3510 = vmax.xlane.f32.xlu0 %v3509
        %v3511 = vpop.xlane.xlu0 %3510
        %v3512 = vsel %vm368, %v3450, -inf
        %3513 = vmax.xlane.f32.xlu0 %v3512
        %v3514 = vpop.xlane.xlu0 %3513
        %v3515 = vsel %vm368, %v3451, -inf
        %3516 = vmax.xlane.f32.xlu0 %v3515
        %v3517 = vpop.xlane.xlu0 %3516
        %v3518 = vsel %vm368, %v3452, -inf
        %3519 = vmax.xlane.f32.xlu0 %v3518
        %v3520 = vpop.xlane.xlu0 %3519
        %v3521 = vsel %vm368, %v3453, -inf
        %3522 = vmax.xlane.f32.xlu0 %v3521
        %v3523 = vpop.xlane.xlu0 %3522
        %v3524 = vsel %vm368, %v3454, -inf
        %3525 = vmax.xlane.f32.xlu0 %v3524
        %v3526 = vpop.xlane.xlu0 %3525
        %v3527 = vsel %vm368, %v3455, -inf
        %3528 = vmax.xlane.f32.xlu0 %v3527
        %v3529 = vpop.xlane.xlu0 %3528
        %v3530 = vsel %vm368, %v3456, -inf
        %3531 = vmax.xlane.f32.xlu0 %v3530
        %v3532 = vpop.xlane.xlu0 %3531
        %v3533 = vsel %vm368, %v3457, -inf
        %3534 = vmax.xlane.f32.xlu0 %v3533
        %v3535 = vpop.xlane.xlu0 %3534
        %v3536 = vsel %vm368, %v3458, -inf
        %3537 = vmax.xlane.f32.xlu0 %v3536
        %v3538 = vpop.xlane.xlu0 %3537
        %v3539 = vsel %vm368, %v3459, -inf
        %3540 = vmax.xlane.f32.xlu0 %v3539
        %v3541 = vpop.xlane.xlu0 %3540
        %v3542 = vsel %vm368, %v3460, -inf
        %3543 = vmax.xlane.f32.xlu0 %v3542
        %v3544 = vpop.xlane.xlu0 %3543
        %v3545 = vsel %vm368, %v3461, -inf
        %3546 = vmax.xlane.f32.xlu0 %v3545
        %v3547 = vpop.xlane.xlu0 %3546
        %v3548 = vsel %vm368, %v3462, -inf
        %3549 = vmax.xlane.f32.xlu0 %v3548
        %v3550 = vpop.xlane.xlu0 %3549
        %v3551 = vsel %vm368, %v3463, -inf
        %3552 = vmax.xlane.f32.xlu0 %v3551
        %v3553 = vpop.xlane.xlu0 %3552
        %v3554 = vsel %vm368, %v3464, -inf
        %3555 = vmax.xlane.f32.xlu0 %v3554
        %v3556 = vpop.xlane.xlu0 %3555
        %v3557 = vsel %vm368, %v3465, -inf
        %3558 = vmax.xlane.f32.xlu0 %v3557
        %v3559 = vpop.xlane.xlu0 %3558
        %v3560 = vsel %vm368, %v3466, -inf
        %3561 = vmax.xlane.f32.xlu0 %v3560
        %v3562 = vpop.xlane.xlu0 %3561
        %v3563 = vsub.f32 %v3435, %v3469
        %v3564 = vsub.f32 %v3436, %v3472
        %v3565 = vsub.f32 %v3437, %v3475
        %v3566 = vsub.f32 %v3438, %v3478
        %v3567 = vsub.f32 %v3439, %v3481
        %v3568 = vsub.f32 %v3440, %v3484
        %v3569 = vsub.f32 %v3441, %v3487
        %v3570 = vsub.f32 %v3442, %v3490
        %v3571 = vsub.f32 %v3443, %v3493
        %v3572 = vsub.f32 %v3444, %v3496
        %v3573 = vsub.f32 %v3445, %v3499
        %v3574 = vsub.f32 %v3446, %v3502
        %v3575 = vsub.f32 %v3447, %v3505
        %v3576 = vsub.f32 %v3448, %v3508
        %v3577 = vsub.f32 %v3449, %v3511
        %v3578 = vsub.f32 %v3450, %v3514
        %v3579 = vsub.f32 %v3451, %v3517
        %v3580 = vsub.f32 %v3452, %v3520
        %v3581 = vsub.f32 %v3453, %v3523
        %v3582 = vsub.f32 %v3454, %v3526
        %v3583 = vsub.f32 %v3455, %v3529
        %v3584 = vsub.f32 %v3456, %v3532
        %v3585 = vsub.f32 %v3457, %v3535
        %v3586 = vsub.f32 %v3458, %v3538
        %v3587 = vsub.f32 %v3459, %v3541
        %v3588 = vsub.f32 %v3460, %v3544
        %v3589 = vsub.f32 %v3461, %v3547
        %v3590 = vsub.f32 %v3462, %v3550
        %v3591 = vsub.f32 %v3463, %v3553
        %v3592 = vsub.f32 %v3464, %v3556
        %v3593 = vsub.f32 %v3465, %v3559
        %v3594 = vsub.f32 %v3466, %v3562
        %v3595 = vmul.f32 %v3563, 1.442695
        %v3596 = vpow.pop %v3595
        %v3597 = vmul.f32 %v3564, 1.442695
        %v3598 = vpow.pop %v3597
        %v3599 = vmul.f32 %v3565, 1.442695
        %v3600 = vpow.pop %v3599
        %v3601 = vmul.f32 %v3566, 1.442695
        %v3602 = vpow.pop %v3601
        %v3603 = vmul.f32 %v3567, 1.442695
        %v3604 = vpow.pop %v3603
        %v3605 = vmul.f32 %v3568, 1.442695
        %v3606 = vpow.pop %v3605
        %v3607 = vmul.f32 %v3569, 1.442695
        %v3608 = vpow.pop %v3607
        %v3609 = vmul.f32 %v3570, 1.442695
        %v3610 = vpow.pop %v3609
        %v3611 = vmul.f32 %v3571, 1.442695
        %v3612 = vpow.pop %v3611
        %v3613 = vmul.f32 %v3572, 1.442695
        %v3614 = vpow.pop %v3613
        %v3615 = vmul.f32 %v3573, 1.442695
        %v3616 = vpow.pop %v3615
        %v3617 = vmul.f32 %v3574, 1.442695
        %v3618 = vpow.pop %v3617
        %v3619 = vmul.f32 %v3575, 1.442695
        %v3620 = vpow.pop %v3619
        %v3621 = vmul.f32 %v3576, 1.442695
        %v3622 = vpow.pop %v3621
        %v3623 = vmul.f32 %v3577, 1.442695
        %v3624 = vpow.pop %v3623
        %v3625 = vmul.f32 %v3578, 1.442695
        %v3626 = vpow.pop %v3625
        %v3627 = vmul.f32 %v3579, 1.442695
        %v3628 = vpow.pop %v3627
        %v3629 = vmul.f32 %v3580, 1.442695
        %v3630 = vpow.pop %v3629
        %v3631 = vmul.f32 %v3581, 1.442695
        %v3632 = vpow.pop %v3631
        %v3633 = vmul.f32 %v3582, 1.442695
        %v3634 = vpow.pop %v3633
        %v3635 = vmul.f32 %v3583, 1.442695
        %v3636 = vpow.pop %v3635
        %v3637 = vmul.f32 %v3584, 1.442695
        %v3638 = vpow.pop %v3637
        %v3639 = vmul.f32 %v3585, 1.442695
        %v3640 = vpow.pop %v3639
        %v3641 = vmul.f32 %v3586, 1.442695
        %v3642 = vpow.pop %v3641
        %v3643 = vmul.f32 %v3587, 1.442695
        %v3644 = vpow.pop %v3643
        %v3645 = vmul.f32 %v3588, 1.442695
        %v3646 = vpow.pop %v3645
        %v3647 = vmul.f32 %v3589, 1.442695
        %v3648 = vpow.pop %v3647
        %v3649 = vmul.f32 %v3590, 1.442695
        %v3650 = vpow.pop %v3649
        %v3651 = vmul.f32 %v3591, 1.442695
        %v3652 = vpow.pop %v3651
        %v3653 = vmul.f32 %v3592, 1.442695
        %v3654 = vpow.pop %v3653
        %v3655 = vmul.f32 %v3593, 1.442695
        %v3656 = vpow.pop %v3655
        %v3657 = vmul.f32 %v3594, 1.442695
        %v3658 = vpow.pop %v3657
        %v3659 = vsel %vm368, %v3596, 0.0
        %3660 = vadd.xlane.f32.xlu0 %v3659
        %v3661 = vpop.xlane.xlu0 %3660
        %v3662 = vsel %vm368, %v3598, 0.0
        %3663 = vadd.xlane.f32.xlu0 %v3662
        %v3664 = vpop.xlane.xlu0 %3663
        %v3665 = vsel %vm368, %v3600, 0.0
        %3666 = vadd.xlane.f32.xlu0 %v3665
        %v3667 = vpop.xlane.xlu0 %3666
        %v3668 = vsel %vm368, %v3602, 0.0
        %3669 = vadd.xlane.f32.xlu0 %v3668
        %v3670 = vpop.xlane.xlu0 %3669
        %v3671 = vsel %vm368, %v3604, 0.0
        %3672 = vadd.xlane.f32.xlu0 %v3671
        %v3673 = vpop.xlane.xlu0 %3672
        %v3674 = vsel %vm368, %v3606, 0.0
        %3675 = vadd.xlane.f32.xlu0 %v3674
        %v3676 = vpop.xlane.xlu0 %3675
        %v3677 = vsel %vm368, %v3608, 0.0
        %3678 = vadd.xlane.f32.xlu0 %v3677
        %v3679 = vpop.xlane.xlu0 %3678
        %v3680 = vsel %vm368, %v3610, 0.0
        %3681 = vadd.xlane.f32.xlu0 %v3680
        %v3682 = vpop.xlane.xlu0 %3681
        %v3683 = vsel %vm368, %v3612, 0.0
        %3684 = vadd.xlane.f32.xlu0 %v3683
        %v3685 = vpop.xlane.xlu0 %3684
        %v3686 = vsel %vm368, %v3614, 0.0
        %3687 = vadd.xlane.f32.xlu0 %v3686
        %v3688 = vpop.xlane.xlu0 %3687
        %v3689 = vsel %vm368, %v3616, 0.0
        %3690 = vadd.xlane.f32.xlu0 %v3689
        %v3691 = vpop.xlane.xlu0 %3690
        %v3692 = vsel %vm368, %v3618, 0.0
        %3693 = vadd.xlane.f32.xlu0 %v3692
        %v3694 = vpop.xlane.xlu0 %3693
        %v3695 = vsel %vm368, %v3620, 0.0
        %3696 = vadd.xlane.f32.xlu0 %v3695
        %v3697 = vpop.xlane.xlu0 %3696
        %v3698 = vsel %vm368, %v3622, 0.0
        %3699 = vadd.xlane.f32.xlu0 %v3698
        %v3700 = vpop.xlane.xlu0 %3699
        %v3701 = vsel %vm368, %v3624, 0.0
        %3702 = vadd.xlane.f32.xlu0 %v3701
        %v3703 = vpop.xlane.xlu0 %3702
        %v3704 = vsel %vm368, %v3626, 0.0
        %3705 = vadd.xlane.f32.xlu0 %v3704
        %v3706 = vpop.xlane.xlu0 %3705
        %v3707 = vsel %vm368, %v3628, 0.0
        %3708 = vadd.xlane.f32.xlu0 %v3707
        %v3709 = vpop.xlane.xlu0 %3708
        %v3710 = vsel %vm368, %v3630, 0.0
        %3711 = vadd.xlane.f32.xlu0 %v3710
        %v3712 = vpop.xlane.xlu0 %3711
        %v3713 = vsel %vm368, %v3632, 0.0
        %3714 = vadd.xlane.f32.xlu0 %v3713
        %v3715 = vpop.xlane.xlu0 %3714
        %v3716 = vsel %vm368, %v3634, 0.0
        %3717 = vadd.xlane.f32.xlu0 %v3716
        %v3718 = vpop.xlane.xlu0 %3717
        %v3719 = vsel %vm368, %v3636, 0.0
        %3720 = vadd.xlane.f32.xlu0 %v3719
        %v3721 = vpop.xlane.xlu0 %3720
        %v3722 = vsel %vm368, %v3638, 0.0
        %3723 = vadd.xlane.f32.xlu0 %v3722
        %v3724 = vpop.xlane.xlu0 %3723
        %v3725 = vsel %vm368, %v3640, 0.0
        %3726 = vadd.xlane.f32.xlu0 %v3725
        %v3727 = vpop.xlane.xlu0 %3726
        %v3728 = vsel %vm368, %v3642, 0.0
        %3729 = vadd.xlane.f32.xlu0 %v3728
        %v3730 = vpop.xlane.xlu0 %3729
        %v3731 = vsel %vm368, %v3644, 0.0
        %3732 = vadd.xlane.f32.xlu0 %v3731
        %v3733 = vpop.xlane.xlu0 %3732
        %v3734 = vsel %vm368, %v3646, 0.0
        %3735 = vadd.xlane.f32.xlu0 %v3734
        %v3736 = vpop.xlane.xlu0 %3735
        %v3737 = vsel %vm368, %v3648, 0.0
        %3738 = vadd.xlane.f32.xlu0 %v3737
        %v3739 = vpop.xlane.xlu0 %3738
        %v3740 = vsel %vm368, %v3650, 0.0
        %3741 = vadd.xlane.f32.xlu0 %v3740
        %v3742 = vpop.xlane.xlu0 %3741
        %v3743 = vsel %vm368, %v3652, 0.0
        %3744 = vadd.xlane.f32.xlu0 %v3743
        %v3745 = vpop.xlane.xlu0 %3744
        %v3746 = vsel %vm368, %v3654, 0.0
        %3747 = vadd.xlane.f32.xlu0 %v3746
        %v3748 = vpop.xlane.xlu0 %3747
        %v3749 = vsel %vm368, %v3656, 0.0
        %3750 = vadd.xlane.f32.xlu0 %v3749
        %v3751 = vpop.xlane.xlu0 %3750
        %v3752 = vsel %vm368, %v3658, 0.0
        %3753 = vadd.xlane.f32.xlu0 %v3752
        %v3754 = vpop.xlane.xlu0 %3753
        %v3755 = vrcp.pop %v3661
        %v3756 = vrcp.pop %v3664
        %v3757 = vrcp.pop %v3667
        %v3758 = vrcp.pop %v3670
        %v3759 = vrcp.pop %v3673
        %v3760 = vrcp.pop %v3676
        %v3761 = vrcp.pop %v3679
        %v3762 = vrcp.pop %v3682
        %v3763 = vrcp.pop %v3685
        %v3764 = vrcp.pop %v3688
        %v3765 = vrcp.pop %v3691
        %v3766 = vrcp.pop %v3694
        %v3767 = vrcp.pop %v3697
        %v3768 = vrcp.pop %v3700
        %v3769 = vrcp.pop %v3703
        %v3770 = vrcp.pop %v3706
        %v3771 = vrcp.pop %v3709
        %v3772 = vrcp.pop %v3712
        %v3773 = vrcp.pop %v3715
        %v3774 = vrcp.pop %v3718
        %v3775 = vrcp.pop %v3721
        %v3776 = vrcp.pop %v3724
        %v3777 = vrcp.pop %v3727
        %v3778 = vrcp.pop %v3730
        %v3779 = vrcp.pop %v3733
        %v3780 = vrcp.pop %v3736
        %v3781 = vrcp.pop %v3739
        %v3782 = vrcp.pop %v3742
        %v3783 = vrcp.pop %v3745
        %v3784 = vrcp.pop %v3748
        %v3785 = vrcp.pop %v3751
        %v3786 = vrcp.pop %v3754
        %v3787 = vmul.f32 %v3596, %v3755
        %v3788 = vmul.f32 %v3598, %v3756
        %v3789 = vmul.f32 %v3600, %v3757
        %v3790 = vmul.f32 %v3602, %v3758
        %v3791 = vmul.f32 %v3604, %v3759
        %v3792 = vmul.f32 %v3606, %v3760
        %v3793 = vmul.f32 %v3608, %v3761
        %v3794 = vmul.f32 %v3610, %v3762
        %v3795 = vmul.f32 %v3612, %v3763
        %v3796 = vmul.f32 %v3614, %v3764
        %v3797 = vmul.f32 %v3616, %v3765
        %v3798 = vmul.f32 %v3618, %v3766
        %v3799 = vmul.f32 %v3620, %v3767
        %v3800 = vmul.f32 %v3622, %v3768
        %v3801 = vmul.f32 %v3624, %v3769
        %v3802 = vmul.f32 %v3626, %v3770
        %v3803 = vmul.f32 %v3628, %v3771
        %v3804 = vmul.f32 %v3630, %v3772
        %v3805 = vmul.f32 %v3632, %v3773
        %v3806 = vmul.f32 %v3634, %v3774
        %v3807 = vmul.f32 %v3636, %v3775
        %v3808 = vmul.f32 %v3638, %v3776
        %v3809 = vmul.f32 %v3640, %v3777
        %v3810 = vmul.f32 %v3642, %v3778
        %v3811 = vmul.f32 %v3644, %v3779
        %v3812 = vmul.f32 %v3646, %v3780
        %v3813 = vmul.f32 %v3648, %v3781
        %v3814 = vmul.f32 %v3650, %v3782
        %v3815 = vmul.f32 %v3652, %v3783
        %v3816 = vmul.f32 %v3654, %v3784
        %v3817 = vmul.f32 %v3656, %v3785
        %v3818 = vmul.f32 %v3658, %v3786
        %3819 = vrot.lane.b32.xlu0 %v2952, 96
        %v3820 = vpop.permute.xlu0 %3819
        %3821 = vrot.lane.b32.xlu0 %v2954, 96
        %v3822 = vpop.permute.xlu0 %3821
        %3823 = vrot.lane.b32.xlu0 %v2956, 96
        %v3824 = vpop.permute.xlu0 %3823
        %3825 = vrot.lane.b32.xlu0 %v2958, 96
        %v3826 = vpop.permute.xlu0 %3825
        %3827 = vrot.lane.b32.xlu0 %v2960, 96
        %v3828 = vpop.permute.xlu0 %3827
        %3829 = vrot.lane.b32.xlu0 %v2962, 96
        %v3830 = vpop.permute.xlu0 %3829
        %3831 = vrot.lane.b32.xlu0 %v2964, 96
        %v3832 = vpop.permute.xlu0 %3831
        %3833 = vrot.lane.b32.xlu0 %v2966, 96
        %v3834 = vpop.permute.xlu0 %3833
        %v3844 = vsel %vm368, %v3787, 0
        %v3847 = vsel %vm368, %v3788, 0
        %v3850 = vsel %vm368, %v3789, 0
        %v3853 = vsel %vm368, %v3790, 0
        %v3856 = vsel %vm368, %v3791, 0
        %v3859 = vsel %vm368, %v3792, 0
        %v3862 = vsel %vm368, %v3793, 0
        %v3865 = vsel %vm368, %v3794, 0
        %3867 = vmatpush.msra.mxu0 0.0
        %3868 = vmatpush.msra.mxu0 0.0
        %3869 = vmatpush.msra.mxu0 0.0
        %3870 = vmatpush.msra.mxu0 0.0
        %3871 = vmatpush.msra.mxu0 0.0
        %3872 = vmatpush.msra.mxu0 0.0
        %3873 = vmatpush.msra.mxu0 0.0
        %3874 = vmatpush.msra.mxu0 0.0
        %3875 = vmatpush.msra.mxu0 %v3834
        %3876 = vmatpush.msra.mxu0 %v3832
        %3877 = vmatpush.msra.mxu0 %v3830
        %3878 = vmatpush.msra.mxu0 %v3828
        %3879 = vmatpush.msra.mxu0 %v3826
        %3880 = vmatpush.msra.mxu0 %v3824
        %3881 = vmatpush.msra.mxu0 %v3822
        %3882 = vmatpush.msra.mxu0 %v3820
        %3883 = vmatmul.f32.gmra.mxu0 %v3844
        %v3884 = vpop.f32.mrf.mxu0
        %v3885 = vadd.f32 0.0, %v3884
        %3886 = vmatmul.f32.gmra.mxu0 %v3847
        %v3887 = vpop.f32.mrf.mxu0
        %v3888 = vadd.f32 0.0, %v3887
        %3889 = vmatmul.f32.gmra.mxu0 %v3850
        %v3890 = vpop.f32.mrf.mxu0
        %v3891 = vadd.f32 0.0, %v3890
        %3892 = vmatmul.f32.gmra.mxu0 %v3853
        %v3893 = vpop.f32.mrf.mxu0
        %v3894 = vadd.f32 0.0, %v3893
        %3895 = vmatmul.f32.gmra.mxu0 %v3856
        %v3896 = vpop.f32.mrf.mxu0
        %v3897 = vadd.f32 0.0, %v3896
        %3898 = vmatmul.f32.gmra.mxu0 %v3859
        %v3899 = vpop.f32.mrf.mxu0
        %v3900 = vadd.f32 0.0, %v3899
        %3901 = vmatmul.f32.gmra.mxu0 %v3862
        %v3902 = vpop.f32.mrf.mxu0
        %v3903 = vadd.f32 0.0, %v3902
        %3904 = vmatmul.f32.gmra.mxu0 %v3865
        %v3905 = vpop.f32.mrf.mxu0
        %v3906 = vadd.f32 0.0, %v3905
        %3907 = vdwg.mxu0
        %3908 = vrot.lane.b32.xlu0 %v2968, 96
        %v3909 = vpop.permute.xlu0 %3908
        %3910 = vrot.lane.b32.xlu0 %v2970, 96
        %v3911 = vpop.permute.xlu0 %3910
        %3912 = vrot.lane.b32.xlu0 %v2972, 96
        %v3913 = vpop.permute.xlu0 %3912
        %3914 = vrot.lane.b32.xlu0 %v2974, 96
        %v3915 = vpop.permute.xlu0 %3914
        %3916 = vrot.lane.b32.xlu0 %v2976, 96
        %v3917 = vpop.permute.xlu0 %3916
        %3918 = vrot.lane.b32.xlu0 %v2978, 96
        %v3919 = vpop.permute.xlu0 %3918
        %3920 = vrot.lane.b32.xlu0 %v2980, 96
        %v3921 = vpop.permute.xlu0 %3920
        %3922 = vrot.lane.b32.xlu0 %v2982, 96
        %v3923 = vpop.permute.xlu0 %3922
        %v3933 = vsel %vm368, %v3795, 0
        %v3936 = vsel %vm368, %v3796, 0
        %v3939 = vsel %vm368, %v3797, 0
        %v3942 = vsel %vm368, %v3798, 0
        %v3945 = vsel %vm368, %v3799, 0
        %v3948 = vsel %vm368, %v3800, 0
        %v3951 = vsel %vm368, %v3801, 0
        %v3954 = vsel %vm368, %v3802, 0
        %3956 = vmatpush.msra.mxu0 0.0
        %3957 = vmatpush.msra.mxu0 0.0
        %3958 = vmatpush.msra.mxu0 0.0
        %3959 = vmatpush.msra.mxu0 0.0
        %3960 = vmatpush.msra.mxu0 0.0
        %3961 = vmatpush.msra.mxu0 0.0
        %3962 = vmatpush.msra.mxu0 0.0
        %3963 = vmatpush.msra.mxu0 0.0
        %3964 = vmatpush.msra.mxu0 %v3923
        %3965 = vmatpush.msra.mxu0 %v3921
        %3966 = vmatpush.msra.mxu0 %v3919
        %3967 = vmatpush.msra.mxu0 %v3917
        %3968 = vmatpush.msra.mxu0 %v3915
        %3969 = vmatpush.msra.mxu0 %v3913
        %3970 = vmatpush.msra.mxu0 %v3911
        %3971 = vmatpush.msra.mxu0 %v3909
        %3972 = vmatmul.f32.gmra.mxu0 %v3933
        %v3973 = vpop.f32.mrf.mxu0
        %v3974 = vadd.f32 0.0, %v3973
        %3975 = vmatmul.f32.gmra.mxu0 %v3936
        %v3976 = vpop.f32.mrf.mxu0
        %v3977 = vadd.f32 0.0, %v3976
        %3978 = vmatmul.f32.gmra.mxu0 %v3939
        %v3979 = vpop.f32.mrf.mxu0
        %v3980 = vadd.f32 0.0, %v3979
        %3981 = vmatmul.f32.gmra.mxu0 %v3942
        %v3982 = vpop.f32.mrf.mxu0
        %v3983 = vadd.f32 0.0, %v3982
        %3984 = vmatmul.f32.gmra.mxu0 %v3945
        %v3985 = vpop.f32.mrf.mxu0
        %v3986 = vadd.f32 0.0, %v3985
        %3987 = vmatmul.f32.gmra.mxu0 %v3948
        %v3988 = vpop.f32.mrf.mxu0
        %v3989 = vadd.f32 0.0, %v3988
        %3990 = vmatmul.f32.gmra.mxu0 %v3951
        %v3991 = vpop.f32.mrf.mxu0
        %v3992 = vadd.f32 0.0, %v3991
        %3993 = vmatmul.f32.gmra.mxu0 %v3954
        %v3994 = vpop.f32.mrf.mxu0
        %v3995 = vadd.f32 0.0, %v3994
        %3996 = vdwg.mxu0
        %3997 = vrot.lane.b32.xlu0 %v2984, 96
        %v3998 = vpop.permute.xlu0 %3997
        %3999 = vrot.lane.b32.xlu0 %v2986, 96
        %v4000 = vpop.permute.xlu0 %3999
        %4001 = vrot.lane.b32.xlu0 %v2988, 96
        %v4002 = vpop.permute.xlu0 %4001
        %4003 = vrot.lane.b32.xlu0 %v2990, 96
        %v4004 = vpop.permute.xlu0 %4003
        %4005 = vrot.lane.b32.xlu0 %v2992, 96
        %v4006 = vpop.permute.xlu0 %4005
        %4007 = vrot.lane.b32.xlu0 %v2994, 96
        %v4008 = vpop.permute.xlu0 %4007
        %4009 = vrot.lane.b32.xlu0 %v2996, 96
        %v4010 = vpop.permute.xlu0 %4009
        %4011 = vrot.lane.b32.xlu0 %v2998, 96
        %v4012 = vpop.permute.xlu0 %4011
        %v4022 = vsel %vm368, %v3803, 0
        %v4025 = vsel %vm368, %v3804, 0
        %v4028 = vsel %vm368, %v3805, 0
        %v4031 = vsel %vm368, %v3806, 0
        %v4034 = vsel %vm368, %v3807, 0
        %v4037 = vsel %vm368, %v3808, 0
        %v4040 = vsel %vm368, %v3809, 0
        %v4043 = vsel %vm368, %v3810, 0
        %4045 = vmatpush.msra.mxu0 0.0
        %4046 = vmatpush.msra.mxu0 0.0
        %4047 = vmatpush.msra.mxu0 0.0
        %4048 = vmatpush.msra.mxu0 0.0
        %4049 = vmatpush.msra.mxu0 0.0
        %4050 = vmatpush.msra.mxu0 0.0
        %4051 = vmatpush.msra.mxu0 0.0
        %4052 = vmatpush.msra.mxu0 0.0
        %4053 = vmatpush.msra.mxu0 %v4012
        %4054 = vmatpush.msra.mxu0 %v4010
        %4055 = vmatpush.msra.mxu0 %v4008
        %4056 = vmatpush.msra.mxu0 %v4006
        %4057 = vmatpush.msra.mxu0 %v4004
        %4058 = vmatpush.msra.mxu0 %v4002
        %4059 = vmatpush.msra.mxu0 %v4000
        %4060 = vmatpush.msra.mxu0 %v3998
        %4061 = vmatmul.f32.gmra.mxu0 %v4022
        %v4062 = vpop.f32.mrf.mxu0
        %v4063 = vadd.f32 0.0, %v4062
        %4064 = vmatmul.f32.gmra.mxu0 %v4025
        %v4065 = vpop.f32.mrf.mxu0
        %v4066 = vadd.f32 0.0, %v4065
        %4067 = vmatmul.f32.gmra.mxu0 %v4028
        %v4068 = vpop.f32.mrf.mxu0
        %v4069 = vadd.f32 0.0, %v4068
        %4070 = vmatmul.f32.gmra.mxu0 %v4031
        %v4071 = vpop.f32.mrf.mxu0
        %v4072 = vadd.f32 0.0, %v4071
        %4073 = vmatmul.f32.gmra.mxu0 %v4034
        %v4074 = vpop.f32.mrf.mxu0
        %v4075 = vadd.f32 0.0, %v4074
        %4076 = vmatmul.f32.gmra.mxu0 %v4037
        %v4077 = vpop.f32.mrf.mxu0
        %v4078 = vadd.f32 0.0, %v4077
        %4079 = vmatmul.f32.gmra.mxu0 %v4040
        %v4080 = vpop.f32.mrf.mxu0
        %v4081 = vadd.f32 0.0, %v4080
        %4082 = vmatmul.f32.gmra.mxu0 %v4043
        %v4083 = vpop.f32.mrf.mxu0
        %v4084 = vadd.f32 0.0, %v4083
        %4085 = vdwg.mxu0
        %4086 = vrot.lane.b32.xlu0 %v3000, 96
        %v4087 = vpop.permute.xlu0 %4086
        %4088 = vrot.lane.b32.xlu0 %v3002, 96
        %v4089 = vpop.permute.xlu0 %4088
        %4090 = vrot.lane.b32.xlu0 %v3004, 96
        %v4091 = vpop.permute.xlu0 %4090
        %4092 = vrot.lane.b32.xlu0 %v3006, 96
        %v4093 = vpop.permute.xlu0 %4092
        %4094 = vrot.lane.b32.xlu0 %v3008, 96
        %v4095 = vpop.permute.xlu0 %4094
        %4096 = vrot.lane.b32.xlu0 %v3010, 96
        %v4097 = vpop.permute.xlu0 %4096
        %4098 = vrot.lane.b32.xlu0 %v3012, 96
        %v4099 = vpop.permute.xlu0 %4098
        %4100 = vrot.lane.b32.xlu0 %v3014, 96
        %v4101 = vpop.permute.xlu0 %4100
        %v4111 = vsel %vm368, %v3811, 0
        %v4114 = vsel %vm368, %v3812, 0
        %v4117 = vsel %vm368, %v3813, 0
        %v4120 = vsel %vm368, %v3814, 0
        %v4123 = vsel %vm368, %v3815, 0
        %v4126 = vsel %vm368, %v3816, 0
        %v4129 = vsel %vm368, %v3817, 0
        %v4132 = vsel %vm368, %v3818, 0
        %4134 = vmatpush.msra.mxu0 0.0
        %4135 = vmatpush.msra.mxu0 0.0
        %4136 = vmatpush.msra.mxu0 0.0
        %4137 = vmatpush.msra.mxu0 0.0
        %4138 = vmatpush.msra.mxu0 0.0
        %4139 = vmatpush.msra.mxu0 0.0
        %4140 = vmatpush.msra.mxu0 0.0
        %4141 = vmatpush.msra.mxu0 0.0
        %4142 = vmatpush.msra.mxu0 %v4101
        %4143 = vmatpush.msra.mxu0 %v4099
        %4144 = vmatpush.msra.mxu0 %v4097
        %4145 = vmatpush.msra.mxu0 %v4095
        %4146 = vmatpush.msra.mxu0 %v4093
        %4147 = vmatpush.msra.mxu0 %v4091
        %4148 = vmatpush.msra.mxu0 %v4089
        %4149 = vmatpush.msra.mxu0 %v4087
        %4150 = vmatmul.f32.gmra.mxu0 %v4111
        %v4151 = vpop.f32.mrf.mxu0
        %v4152 = vadd.f32 0.0, %v4151
        %4153 = vmatmul.f32.gmra.mxu0 %v4114
        %v4154 = vpop.f32.mrf.mxu0
        %v4155 = vadd.f32 0.0, %v4154
        %4156 = vmatmul.f32.gmra.mxu0 %v4117
        %v4157 = vpop.f32.mrf.mxu0
        %v4158 = vadd.f32 0.0, %v4157
        %4159 = vmatmul.f32.gmra.mxu0 %v4120
        %v4160 = vpop.f32.mrf.mxu0
        %v4161 = vadd.f32 0.0, %v4160
        %4162 = vmatmul.f32.gmra.mxu0 %v4123
        %v4163 = vpop.f32.mrf.mxu0
        %v4164 = vadd.f32 0.0, %v4163
        %4165 = vmatmul.f32.gmra.mxu0 %v4126
        %v4166 = vpop.f32.mrf.mxu0
        %v4167 = vadd.f32 0.0, %v4166
        %4168 = vmatmul.f32.gmra.mxu0 %v4129
        %v4169 = vpop.f32.mrf.mxu0
        %v4170 = vadd.f32 0.0, %v4169
        %4171 = vmatmul.f32.gmra.mxu0 %v4132
        %v4172 = vpop.f32.mrf.mxu0
        %v4173 = vadd.f32 0.0, %v4172
        %4174 = vdwg.mxu0
        %v4175 = vld [vmem:[#allocation2 + $0x8] sm:$0xff]
        %v4176 = vld [vmem:[#allocation2 + $0x10] sm:$0xff]
        %v4177 = vld [vmem:[#allocation2 + $0x30] sm:$0xff]
        %v4178 = vld [vmem:[#allocation2 + $0x38] sm:$0xff]
        %v4179 = vld [vmem:[#allocation2 + $0x58] sm:$0xff]
        %v4180 = vld [vmem:[#allocation2 + $0x60] sm:$0xff]
        %v4181 = vld [vmem:[#allocation2 + $0x80] sm:$0xff]
        %v4182 = vld [vmem:[#allocation2 + $0x88] sm:$0xff]
        %v4183 = vld [vmem:[#allocation2 + $0xa8] sm:$0xff]
        %v4184 = vld [vmem:[#allocation2 + $0xb0] sm:$0xff]
        %v4185 = vld [vmem:[#allocation2 + $0xd0] sm:$0xff]
        %v4186 = vld [vmem:[#allocation2 + $0xd8] sm:$0xff]
        %v4187 = vld [vmem:[#allocation2 + $0xf8] sm:$0xff]
        %v4188 = vld [vmem:[#allocation2 + $0x100] sm:$0xff]
        %v4189 = vld [vmem:[#allocation2 + $0x120] sm:$0xff]
        %v4190 = vld [vmem:[#allocation2 + $0x128] sm:$0xff]
        %v4191 = vld [vmem:[#allocation2 + $0x148] sm:$0xff]
        %v4192 = vld [vmem:[#allocation2 + $0x150] sm:$0xff]
        %v4193 = vld [vmem:[#allocation2 + $0x170] sm:$0xff]
        %v4194 = vld [vmem:[#allocation2 + $0x178] sm:$0xff]
        %v4195 = vld [vmem:[#allocation2 + $0x198] sm:$0xff]
        %v4196 = vld [vmem:[#allocation2 + $0x1a0] sm:$0xff]
        %v4197 = vld [vmem:[#allocation2 + $0x1c0] sm:$0xff]
        %v4198 = vld [vmem:[#allocation2 + $0x1c8] sm:$0xff]
        %v4199 = vld [vmem:[#allocation2 + $0x1e8] sm:$0xff]
        %v4200 = vld [vmem:[#allocation2 + $0x1f0] sm:$0xff]
        %v4201 = vld [vmem:[#allocation2 + $0x210] sm:$0xff]
        %v4202 = vld [vmem:[#allocation2 + $0x218] sm:$0xff]
        %v4203 = vld [vmem:[#allocation2 + $0x238] sm:$0xff]
        %v4204 = vld [vmem:[#allocation2 + $0x240] sm:$0xff]
        %v4205 = vld [vmem:[#allocation2 + $0x260] sm:$0xff]
        %v4206 = vld [vmem:[#allocation2 + $0x268] sm:$0xff]
        %v4207 = vld [vmem:[#allocation2 + $0x288] sm:$0xff]
        %v4208 = vld [vmem:[#allocation2 + $0x290] sm:$0xff]
        %v4209 = vld [vmem:[#allocation2 + $0x2b0] sm:$0xff]
        %v4210 = vld [vmem:[#allocation2 + $0x2b8] sm:$0xff]
        %v4211 = vld [vmem:[#allocation2 + $0x2d8] sm:$0xff]
        %v4212 = vld [vmem:[#allocation2 + $0x2e0] sm:$0xff]
        %v4213 = vld [vmem:[#allocation2 + $0x300] sm:$0xff]
        %v4214 = vld [vmem:[#allocation2 + $0x308] sm:$0xff]
        %v4215 = vld [vmem:[#allocation2 + $0x328] sm:$0xff]
        %v4216 = vld [vmem:[#allocation2 + $0x330] sm:$0xff]
        %v4217 = vld [vmem:[#allocation2 + $0x350] sm:$0xff]
        %v4218 = vld [vmem:[#allocation2 + $0x358] sm:$0xff]
        %v4219 = vld [vmem:[#allocation2 + $0x378] sm:$0xff]
        %v4220 = vld [vmem:[#allocation2 + $0x380] sm:$0xff]
        %v4221 = vld [vmem:[#allocation2 + $0x3a0] sm:$0xff]
        %v4222 = vld [vmem:[#allocation2 + $0x3a8] sm:$0xff]
        %v4223 = vld [vmem:[#allocation2 + $0x3c8] sm:$0xff]
        %v4224 = vld [vmem:[#allocation2 + $0x3d0] sm:$0xff]
        %v4225 = vld [vmem:[#allocation2 + $0x3f0] sm:$0xff]
        %v4226 = vld [vmem:[#allocation2 + $0x3f8] sm:$0xff]
        %v4227 = vld [vmem:[#allocation2 + $0x418] sm:$0xff]
        %v4228 = vld [vmem:[#allocation2 + $0x420] sm:$0xff]
        %v4229 = vld [vmem:[#allocation2 + $0x440] sm:$0xff]
        %v4230 = vld [vmem:[#allocation2 + $0x448] sm:$0xff]
        %v4231 = vld [vmem:[#allocation2 + $0x468] sm:$0xff]
        %v4232 = vld [vmem:[#allocation2 + $0x470] sm:$0xff]
        %v4233 = vld [vmem:[#allocation2 + $0x490] sm:$0xff]
        %v4234 = vld [vmem:[#allocation2 + $0x498] sm:$0xff]
        %v4235 = vld [vmem:[#allocation2 + $0x4b8] sm:$0xff]
        %v4236 = vld [vmem:[#allocation2 + $0x4c0] sm:$0xff]
        %v4237 = vld [vmem:[#allocation2 + $0x4e0] sm:$0xff]
        %v4238 = vld [vmem:[#allocation2 + $0x4e8] sm:$0xff]
        %4247 = vrot.lane.b32.xlu0 %v4175, 64
        %v4248 = vpop.permute.xlu0 %4247
        %4249 = vrot.lane.b32.xlu0 %v4177, 64
        %v4250 = vpop.permute.xlu0 %4249
        %4251 = vrot.lane.b32.xlu0 %v4179, 64
        %v4252 = vpop.permute.xlu0 %4251
        %4253 = vrot.lane.b32.xlu0 %v4181, 64
        %v4254 = vpop.permute.xlu0 %4253
        %4255 = vrot.lane.b32.xlu0 %v4183, 64
        %v4256 = vpop.permute.xlu0 %4255
        %4257 = vrot.lane.b32.xlu0 %v4185, 64
        %v4258 = vpop.permute.xlu0 %4257
        %4259 = vrot.lane.b32.xlu0 %v4187, 64
        %v4260 = vpop.permute.xlu0 %4259
        %4261 = vrot.lane.b32.xlu0 %v4189, 64
        %v4262 = vpop.permute.xlu0 %4261
        %4263 = vrot.lane.b32.xlu0 %v4175, 32
        %v4264 = vpop.permute.xlu0 %4263
        %4265 = vrot.lane.b32.xlu0 %v4177, 32
        %v4266 = vpop.permute.xlu0 %4265
        %4267 = vrot.lane.b32.xlu0 %v4179, 32
        %v4268 = vpop.permute.xlu0 %4267
        %4269 = vrot.lane.b32.xlu0 %v4181, 32
        %v4270 = vpop.permute.xlu0 %4269
        %4271 = vrot.lane.b32.xlu0 %v4183, 32
        %v4272 = vpop.permute.xlu0 %4271
        %4273 = vrot.lane.b32.xlu0 %v4185, 32
        %v4274 = vpop.permute.xlu0 %4273
        %4275 = vrot.lane.b32.xlu0 %v4187, 32
        %v4276 = vpop.permute.xlu0 %4275
        %4277 = vrot.lane.b32.xlu0 %v4189, 32
        %v4278 = vpop.permute.xlu0 %4277
        %v4279 = vsel %vm1830, %v4248, 0
        %v4281 = vsel %vm1830, %v4250, 0
        %v4283 = vsel %vm1830, %v4252, 0
        %v4285 = vsel %vm1830, %v4254, 0
        %v4287 = vsel %vm1830, %v4256, 0
        %v4289 = vsel %vm1830, %v4258, 0
        %v4291 = vsel %vm1830, %v4260, 0
        %v4293 = vsel %vm1830, %v4262, 0
        %v4295 = vsel %vm1830, %v4264, 0
        %v4297 = vsel %vm1830, %v4266, 0
        %v4299 = vsel %vm1830, %v4268, 0
        %v4301 = vsel %vm1830, %v4270, 0
        %v4303 = vsel %vm1830, %v4272, 0
        %v4305 = vsel %vm1830, %v4274, 0
        %v4307 = vsel %vm1830, %v4276, 0
        %v4309 = vsel %vm1830, %v4278, 0
        %4311 = vmatpush.xpose.msra.mxu0 0.0
        %4312 = vmatpush.xpose.msra.mxu0 0.0
        %4313 = vmatpush.xpose.msra.mxu0 0.0
        %4314 = vmatpush.xpose.msra.mxu0 0.0
        %4315 = vmatpush.xpose.msra.mxu0 0.0
        %4316 = vmatpush.xpose.msra.mxu0 0.0
        %4317 = vmatpush.xpose.msra.mxu0 0.0
        %4318 = vmatpush.xpose.msra.mxu0 0.0
        %4319 = vmatpush.xpose.msra.mxu0 %v4309
        %4320 = vmatpush.xpose.msra.mxu0 %v4307
        %4321 = vmatpush.xpose.msra.mxu0 %v4305
        %4322 = vmatpush.xpose.msra.mxu0 %v4303
        %4323 = vmatpush.xpose.msra.mxu0 %v4301
        %4324 = vmatpush.xpose.msra.mxu0 %v4299
        %4325 = vmatpush.xpose.msra.mxu0 %v4297
        %4326 = vmatpush.xpose.msra.mxu0 %v4295
        %4327 = vmatmul.f32.gmra.mxu0 %v4279
        %v4328 = vpop.f32.mrf.mxu0
        %v4329 = vadd.f32 0.0, %v4328
        %4330 = vmatmul.f32.gmra.mxu0 %v4281
        %v4331 = vpop.f32.mrf.mxu0
        %v4332 = vadd.f32 0.0, %v4331
        %4333 = vmatmul.f32.gmra.mxu0 %v4283
        %v4334 = vpop.f32.mrf.mxu0
        %v4335 = vadd.f32 0.0, %v4334
        %4336 = vmatmul.f32.gmra.mxu0 %v4285
        %v4337 = vpop.f32.mrf.mxu0
        %v4338 = vadd.f32 0.0, %v4337
        %4339 = vmatmul.f32.gmra.mxu0 %v4287
        %v4340 = vpop.f32.mrf.mxu0
        %v4341 = vadd.f32 0.0, %v4340
        %4342 = vmatmul.f32.gmra.mxu0 %v4289
        %v4343 = vpop.f32.mrf.mxu0
        %v4344 = vadd.f32 0.0, %v4343
        %4345 = vmatmul.f32.gmra.mxu0 %v4291
        %v4346 = vpop.f32.mrf.mxu0
        %v4347 = vadd.f32 0.0, %v4346
        %4348 = vmatmul.f32.gmra.mxu0 %v4293
        %v4349 = vpop.f32.mrf.mxu0
        %v4350 = vadd.f32 0.0, %v4349
        %4351 = vdwg.mxu0
        %4360 = vrot.lane.b32.xlu0 %v4191, 64
        %v4361 = vpop.permute.xlu0 %4360
        %4362 = vrot.lane.b32.xlu0 %v4193, 64
        %v4363 = vpop.permute.xlu0 %4362
        %4364 = vrot.lane.b32.xlu0 %v4195, 64
        %v4365 = vpop.permute.xlu0 %4364
        %4366 = vrot.lane.b32.xlu0 %v4197, 64
        %v4367 = vpop.permute.xlu0 %4366
        %4368 = vrot.lane.b32.xlu0 %v4199, 64
        %v4369 = vpop.permute.xlu0 %4368
        %4370 = vrot.lane.b32.xlu0 %v4201, 64
        %v4371 = vpop.permute.xlu0 %4370
        %4372 = vrot.lane.b32.xlu0 %v4203, 64
        %v4373 = vpop.permute.xlu0 %4372
        %4374 = vrot.lane.b32.xlu0 %v4205, 64
        %v4375 = vpop.permute.xlu0 %4374
        %4376 = vrot.lane.b32.xlu0 %v4191, 32
        %v4377 = vpop.permute.xlu0 %4376
        %4378 = vrot.lane.b32.xlu0 %v4193, 32
        %v4379 = vpop.permute.xlu0 %4378
        %4380 = vrot.lane.b32.xlu0 %v4195, 32
        %v4381 = vpop.permute.xlu0 %4380
        %4382 = vrot.lane.b32.xlu0 %v4197, 32
        %v4383 = vpop.permute.xlu0 %4382
        %4384 = vrot.lane.b32.xlu0 %v4199, 32
        %v4385 = vpop.permute.xlu0 %4384
        %4386 = vrot.lane.b32.xlu0 %v4201, 32
        %v4387 = vpop.permute.xlu0 %4386
        %4388 = vrot.lane.b32.xlu0 %v4203, 32
        %v4389 = vpop.permute.xlu0 %4388
        %4390 = vrot.lane.b32.xlu0 %v4205, 32
        %v4391 = vpop.permute.xlu0 %4390
        %v4392 = vsel %vm1830, %v4361, 0
        %v4394 = vsel %vm1830, %v4363, 0
        %v4396 = vsel %vm1830, %v4365, 0
        %v4398 = vsel %vm1830, %v4367, 0
        %v4400 = vsel %vm1830, %v4369, 0
        %v4402 = vsel %vm1830, %v4371, 0
        %v4404 = vsel %vm1830, %v4373, 0
        %v4406 = vsel %vm1830, %v4375, 0
        %v4408 = vsel %vm1830, %v4377, 0
        %v4410 = vsel %vm1830, %v4379, 0
        %v4412 = vsel %vm1830, %v4381, 0
        %v4414 = vsel %vm1830, %v4383, 0
        %v4416 = vsel %vm1830, %v4385, 0
        %v4418 = vsel %vm1830, %v4387, 0
        %v4420 = vsel %vm1830, %v4389, 0
        %v4422 = vsel %vm1830, %v4391, 0
        %4424 = vmatpush.xpose.msra.mxu0 0.0
        %4425 = vmatpush.xpose.msra.mxu0 0.0
        %4426 = vmatpush.xpose.msra.mxu0 0.0
        %4427 = vmatpush.xpose.msra.mxu0 0.0
        %4428 = vmatpush.xpose.msra.mxu0 0.0
        %4429 = vmatpush.xpose.msra.mxu0 0.0
        %4430 = vmatpush.xpose.msra.mxu0 0.0
        %4431 = vmatpush.xpose.msra.mxu0 0.0
        %4432 = vmatpush.xpose.msra.mxu0 %v4422
        %4433 = vmatpush.xpose.msra.mxu0 %v4420
        %4434 = vmatpush.xpose.msra.mxu0 %v4418
        %4435 = vmatpush.xpose.msra.mxu0 %v4416
        %4436 = vmatpush.xpose.msra.mxu0 %v4414
        %4437 = vmatpush.xpose.msra.mxu0 %v4412
        %4438 = vmatpush.xpose.msra.mxu0 %v4410
        %4439 = vmatpush.xpose.msra.mxu0 %v4408
        %4440 = vmatmul.f32.gmra.mxu0 %v4392
        %v4441 = vpop.f32.mrf.mxu0
        %v4442 = vadd.f32 0.0, %v4441
        %4443 = vmatmul.f32.gmra.mxu0 %v4394
        %v4444 = vpop.f32.mrf.mxu0
        %v4445 = vadd.f32 0.0, %v4444
        %4446 = vmatmul.f32.gmra.mxu0 %v4396
        %v4447 = vpop.f32.mrf.mxu0
        %v4448 = vadd.f32 0.0, %v4447
        %4449 = vmatmul.f32.gmra.mxu0 %v4398
        %v4450 = vpop.f32.mrf.mxu0
        %v4451 = vadd.f32 0.0, %v4450
        %4452 = vmatmul.f32.gmra.mxu0 %v4400
        %v4453 = vpop.f32.mrf.mxu0
        %v4454 = vadd.f32 0.0, %v4453
        %4455 = vmatmul.f32.gmra.mxu0 %v4402
        %v4456 = vpop.f32.mrf.mxu0
        %v4457 = vadd.f32 0.0, %v4456
        %4458 = vmatmul.f32.gmra.mxu0 %v4404
        %v4459 = vpop.f32.mrf.mxu0
        %v4460 = vadd.f32 0.0, %v4459
        %4461 = vmatmul.f32.gmra.mxu0 %v4406
        %v4462 = vpop.f32.mrf.mxu0
        %v4463 = vadd.f32 0.0, %v4462
        %4464 = vdwg.mxu0
        %4473 = vrot.lane.b32.xlu0 %v4207, 64
        %v4474 = vpop.permute.xlu0 %4473
        %4475 = vrot.lane.b32.xlu0 %v4209, 64
        %v4476 = vpop.permute.xlu0 %4475
        %4477 = vrot.lane.b32.xlu0 %v4211, 64
        %v4478 = vpop.permute.xlu0 %4477
        %4479 = vrot.lane.b32.xlu0 %v4213, 64
        %v4480 = vpop.permute.xlu0 %4479
        %4481 = vrot.lane.b32.xlu0 %v4215, 64
        %v4482 = vpop.permute.xlu0 %4481
        %4483 = vrot.lane.b32.xlu0 %v4217, 64
        %v4484 = vpop.permute.xlu0 %4483
        %4485 = vrot.lane.b32.xlu0 %v4219, 64
        %v4486 = vpop.permute.xlu0 %4485
        %4487 = vrot.lane.b32.xlu0 %v4221, 64
        %v4488 = vpop.permute.xlu0 %4487
        %4489 = vrot.lane.b32.xlu0 %v4207, 32
        %v4490 = vpop.permute.xlu0 %4489
        %4491 = vrot.lane.b32.xlu0 %v4209, 32
        %v4492 = vpop.permute.xlu0 %4491
        %4493 = vrot.lane.b32.xlu0 %v4211, 32
        %v4494 = vpop.permute.xlu0 %4493
        %4495 = vrot.lane.b32.xlu0 %v4213, 32
        %v4496 = vpop.permute.xlu0 %4495
        %4497 = vrot.lane.b32.xlu0 %v4215, 32
        %v4498 = vpop.permute.xlu0 %4497
        %4499 = vrot.lane.b32.xlu0 %v4217, 32
        %v4500 = vpop.permute.xlu0 %4499
        %4501 = vrot.lane.b32.xlu0 %v4219, 32
        %v4502 = vpop.permute.xlu0 %4501
        %4503 = vrot.lane.b32.xlu0 %v4221, 32
        %v4504 = vpop.permute.xlu0 %4503
        %v4505 = vsel %vm1830, %v4474, 0
        %v4507 = vsel %vm1830, %v4476, 0
        %v4509 = vsel %vm1830, %v4478, 0
        %v4511 = vsel %vm1830, %v4480, 0
        %v4513 = vsel %vm1830, %v4482, 0
        %v4515 = vsel %vm1830, %v4484, 0
        %v4517 = vsel %vm1830, %v4486, 0
        %v4519 = vsel %vm1830, %v4488, 0
        %v4521 = vsel %vm1830, %v4490, 0
        %v4523 = vsel %vm1830, %v4492, 0
        %v4525 = vsel %vm1830, %v4494, 0
        %v4527 = vsel %vm1830, %v4496, 0
        %v4529 = vsel %vm1830, %v4498, 0
        %v4531 = vsel %vm1830, %v4500, 0
        %v4533 = vsel %vm1830, %v4502, 0
        %v4535 = vsel %vm1830, %v4504, 0
        %4537 = vmatpush.xpose.msra.mxu0 0.0
        %4538 = vmatpush.xpose.msra.mxu0 0.0
        %4539 = vmatpush.xpose.msra.mxu0 0.0
        %4540 = vmatpush.xpose.msra.mxu0 0.0
        %4541 = vmatpush.xpose.msra.mxu0 0.0
        %4542 = vmatpush.xpose.msra.mxu0 0.0
        %4543 = vmatpush.xpose.msra.mxu0 0.0
        %4544 = vmatpush.xpose.msra.mxu0 0.0
        %4545 = vmatpush.xpose.msra.mxu0 %v4535
        %4546 = vmatpush.xpose.msra.mxu0 %v4533
        %4547 = vmatpush.xpose.msra.mxu0 %v4531
        %4548 = vmatpush.xpose.msra.mxu0 %v4529
        %4549 = vmatpush.xpose.msra.mxu0 %v4527
        %4550 = vmatpush.xpose.msra.mxu0 %v4525
        %4551 = vmatpush.xpose.msra.mxu0 %v4523
        %4552 = vmatpush.xpose.msra.mxu0 %v4521
        %4553 = vmatmul.f32.gmra.mxu0 %v4505
        %v4554 = vpop.f32.mrf.mxu0
        %v4555 = vadd.f32 0.0, %v4554
        %4556 = vmatmul.f32.gmra.mxu0 %v4507
        %v4557 = vpop.f32.mrf.mxu0
        %v4558 = vadd.f32 0.0, %v4557
        %4559 = vmatmul.f32.gmra.mxu0 %v4509
        %v4560 = vpop.f32.mrf.mxu0
        %v4561 = vadd.f32 0.0, %v4560
        %4562 = vmatmul.f32.gmra.mxu0 %v4511
        %v4563 = vpop.f32.mrf.mxu0
        %v4564 = vadd.f32 0.0, %v4563
        %4565 = vmatmul.f32.gmra.mxu0 %v4513
        %v4566 = vpop.f32.mrf.mxu0
        %v4567 = vadd.f32 0.0, %v4566
        %4568 = vmatmul.f32.gmra.mxu0 %v4515
        %v4569 = vpop.f32.mrf.mxu0
        %v4570 = vadd.f32 0.0, %v4569
        %4571 = vmatmul.f32.gmra.mxu0 %v4517
        %v4572 = vpop.f32.mrf.mxu0
        %v4573 = vadd.f32 0.0, %v4572
        %4574 = vmatmul.f32.gmra.mxu0 %v4519
        %v4575 = vpop.f32.mrf.mxu0
        %v4576 = vadd.f32 0.0, %v4575
        %4577 = vdwg.mxu0
        %4586 = vrot.lane.b32.xlu0 %v4223, 64
        %v4587 = vpop.permute.xlu0 %4586
        %4588 = vrot.lane.b32.xlu0 %v4225, 64
        %v4589 = vpop.permute.xlu0 %4588
        %4590 = vrot.lane.b32.xlu0 %v4227, 64
        %v4591 = vpop.permute.xlu0 %4590
        %4592 = vrot.lane.b32.xlu0 %v4229, 64
        %v4593 = vpop.permute.xlu0 %4592
        %4594 = vrot.lane.b32.xlu0 %v4231, 64
        %v4595 = vpop.permute.xlu0 %4594
        %4596 = vrot.lane.b32.xlu0 %v4233, 64
        %v4597 = vpop.permute.xlu0 %4596
        %4598 = vrot.lane.b32.xlu0 %v4235, 64
        %v4599 = vpop.permute.xlu0 %4598
        %4600 = vrot.lane.b32.xlu0 %v4237, 64
        %v4601 = vpop.permute.xlu0 %4600
        %4602 = vrot.lane.b32.xlu0 %v4223, 32
        %v4603 = vpop.permute.xlu0 %4602
        %4604 = vrot.lane.b32.xlu0 %v4225, 32
        %v4605 = vpop.permute.xlu0 %4604
        %4606 = vrot.lane.b32.xlu0 %v4227, 32
        %v4607 = vpop.permute.xlu0 %4606
        %4608 = vrot.lane.b32.xlu0 %v4229, 32
        %v4609 = vpop.permute.xlu0 %4608
        %4610 = vrot.lane.b32.xlu0 %v4231, 32
        %v4611 = vpop.permute.xlu0 %4610
        %4612 = vrot.lane.b32.xlu0 %v4233, 32
        %v4613 = vpop.permute.xlu0 %4612
        %4614 = vrot.lane.b32.xlu0 %v4235, 32
        %v4615 = vpop.permute.xlu0 %4614
        %4616 = vrot.lane.b32.xlu0 %v4237, 32
        %v4617 = vpop.permute.xlu0 %4616
        %v4618 = vsel %vm1830, %v4587, 0
        %v4620 = vsel %vm1830, %v4589, 0
        %v4622 = vsel %vm1830, %v4591, 0
        %v4624 = vsel %vm1830, %v4593, 0
        %v4626 = vsel %vm1830, %v4595, 0
        %v4628 = vsel %vm1830, %v4597, 0
        %v4630 = vsel %vm1830, %v4599, 0
        %v4632 = vsel %vm1830, %v4601, 0
        %v4634 = vsel %vm1830, %v4603, 0
        %v4636 = vsel %vm1830, %v4605, 0
        %v4638 = vsel %vm1830, %v4607, 0
        %v4640 = vsel %vm1830, %v4609, 0
        %v4642 = vsel %vm1830, %v4611, 0
        %v4644 = vsel %vm1830, %v4613, 0
        %v4646 = vsel %vm1830, %v4615, 0
        %v4648 = vsel %vm1830, %v4617, 0
        %4650 = vmatpush.xpose.msra.mxu0 0.0
        %4651 = vmatpush.xpose.msra.mxu0 0.0
        %4652 = vmatpush.xpose.msra.mxu0 0.0
        %4653 = vmatpush.xpose.msra.mxu0 0.0
        %4654 = vmatpush.xpose.msra.mxu0 0.0
        %4655 = vmatpush.xpose.msra.mxu0 0.0
        %4656 = vmatpush.xpose.msra.mxu0 0.0
        %4657 = vmatpush.xpose.msra.mxu0 0.0
        %4658 = vmatpush.xpose.msra.mxu0 %v4648
        %4659 = vmatpush.xpose.msra.mxu0 %v4646
        %4660 = vmatpush.xpose.msra.mxu0 %v4644
        %4661 = vmatpush.xpose.msra.mxu0 %v4642
        %4662 = vmatpush.xpose.msra.mxu0 %v4640
        %4663 = vmatpush.xpose.msra.mxu0 %v4638
        %4664 = vmatpush.xpose.msra.mxu0 %v4636
        %4665 = vmatpush.xpose.msra.mxu0 %v4634
        %4666 = vmatmul.f32.gmra.mxu0 %v4618
        %v4667 = vpop.f32.mrf.mxu0
        %v4668 = vadd.f32 0.0, %v4667
        %4669 = vmatmul.f32.gmra.mxu0 %v4620
        %v4670 = vpop.f32.mrf.mxu0
        %v4671 = vadd.f32 0.0, %v4670
        %4672 = vmatmul.f32.gmra.mxu0 %v4622
        %v4673 = vpop.f32.mrf.mxu0
        %v4674 = vadd.f32 0.0, %v4673
        %4675 = vmatmul.f32.gmra.mxu0 %v4624
        %v4676 = vpop.f32.mrf.mxu0
        %v4677 = vadd.f32 0.0, %v4676
        %4678 = vmatmul.f32.gmra.mxu0 %v4626
        %v4679 = vpop.f32.mrf.mxu0
        %v4680 = vadd.f32 0.0, %v4679
        %4681 = vmatmul.f32.gmra.mxu0 %v4628
        %v4682 = vpop.f32.mrf.mxu0
        %v4683 = vadd.f32 0.0, %v4682
        %4684 = vmatmul.f32.gmra.mxu0 %v4630
        %v4685 = vpop.f32.mrf.mxu0
        %v4686 = vadd.f32 0.0, %v4685
        %4687 = vmatmul.f32.gmra.mxu0 %v4632
        %v4688 = vpop.f32.mrf.mxu0
        %v4689 = vadd.f32 0.0, %v4688
        %4690 = vdwg.mxu0
        %v4691 = vsel %vm2203, %v4329, -inf
        %v4692 = vsel %vm2204, %v4332, -inf
        %v4693 = vsel %vm2205, %v4335, -inf
        %v4694 = vsel %vm2206, %v4338, -inf
        %v4695 = vsel %vm2207, %v4341, -inf
        %v4696 = vsel %vm2208, %v4344, -inf
        %v4697 = vsel %vm2209, %v4347, -inf
        %v4698 = vsel %vm2210, %v4350, -inf
        %v4699 = vsel %vm2203, %v4442, -inf
        %v4700 = vsel %vm2204, %v4445, -inf
        %v4701 = vsel %vm2205, %v4448, -inf
        %v4702 = vsel %vm2206, %v4451, -inf
        %v4703 = vsel %vm2207, %v4454, -inf
        %v4704 = vsel %vm2208, %v4457, -inf
        %v4705 = vsel %vm2209, %v4460, -inf
        %v4706 = vsel %vm2210, %v4463, -inf
        %v4707 = vsel %vm2203, %v4555, -inf
        %v4708 = vsel %vm2204, %v4558, -inf
        %v4709 = vsel %vm2205, %v4561, -inf
        %v4710 = vsel %vm2206, %v4564, -inf
        %v4711 = vsel %vm2207, %v4567, -inf
        %v4712 = vsel %vm2208, %v4570, -inf
        %v4713 = vsel %vm2209, %v4573, -inf
        %v4714 = vsel %vm2210, %v4576, -inf
        %v4715 = vsel %vm2203, %v4668, -inf
        %v4716 = vsel %vm2204, %v4671, -inf
        %v4717 = vsel %vm2205, %v4674, -inf
        %v4718 = vsel %vm2206, %v4677, -inf
        %v4719 = vsel %vm2207, %v4680, -inf
        %v4720 = vsel %vm2208, %v4683, -inf
        %v4721 = vsel %vm2209, %v4686, -inf
        %v4722 = vsel %vm2210, %v4689, -inf
        %v4723 = vsel %vm368, %v4691, -inf
        %4724 = vmax.xlane.f32.xlu0 %v4723
        %v4725 = vpop.xlane.xlu0 %4724
        %v4726 = vsel %vm368, %v4692, -inf
        %4727 = vmax.xlane.f32.xlu0 %v4726
        %v4728 = vpop.xlane.xlu0 %4727
        %v4729 = vsel %vm368, %v4693, -inf
        %4730 = vmax.xlane.f32.xlu0 %v4729
        %v4731 = vpop.xlane.xlu0 %4730
        %v4732 = vsel %vm368, %v4694, -inf
        %4733 = vmax.xlane.f32.xlu0 %v4732
        %v4734 = vpop.xlane.xlu0 %4733
        %v4735 = vsel %vm368, %v4695, -inf
        %4736 = vmax.xlane.f32.xlu0 %v4735
        %v4737 = vpop.xlane.xlu0 %4736
        %v4738 = vsel %vm368, %v4696, -inf
        %4739 = vmax.xlane.f32.xlu0 %v4738
        %v4740 = vpop.xlane.xlu0 %4739
        %v4741 = vsel %vm368, %v4697, -inf
        %4742 = vmax.xlane.f32.xlu0 %v4741
        %v4743 = vpop.xlane.xlu0 %4742
        %v4744 = vsel %vm368, %v4698, -inf
        %4745 = vmax.xlane.f32.xlu0 %v4744
        %v4746 = vpop.xlane.xlu0 %4745
        %v4747 = vsel %vm368, %v4699, -inf
        %4748 = vmax.xlane.f32.xlu0 %v4747
        %v4749 = vpop.xlane.xlu0 %4748
        %v4750 = vsel %vm368, %v4700, -inf
        %4751 = vmax.xlane.f32.xlu0 %v4750
        %v4752 = vpop.xlane.xlu0 %4751
        %v4753 = vsel %vm368, %v4701, -inf
        %4754 = vmax.xlane.f32.xlu0 %v4753
        %v4755 = vpop.xlane.xlu0 %4754
        %v4756 = vsel %vm368, %v4702, -inf
        %4757 = vmax.xlane.f32.xlu0 %v4756
        %v4758 = vpop.xlane.xlu0 %4757
        %v4759 = vsel %vm368, %v4703, -inf
        %4760 = vmax.xlane.f32.xlu0 %v4759
        %v4761 = vpop.xlane.xlu0 %4760
        %v4762 = vsel %vm368, %v4704, -inf
        %4763 = vmax.xlane.f32.xlu0 %v4762
        %v4764 = vpop.xlane.xlu0 %4763
        %v4765 = vsel %vm368, %v4705, -inf
        %4766 = vmax.xlane.f32.xlu0 %v4765
        %v4767 = vpop.xlane.xlu0 %4766
        %v4768 = vsel %vm368, %v4706, -inf
        %4769 = vmax.xlane.f32.xlu0 %v4768
        %v4770 = vpop.xlane.xlu0 %4769
        %v4771 = vsel %vm368, %v4707, -inf
        %4772 = vmax.xlane.f32.xlu0 %v4771
        %v4773 = vpop.xlane.xlu0 %4772
        %v4774 = vsel %vm368, %v4708, -inf
        %4775 = vmax.xlane.f32.xlu0 %v4774
        %v4776 = vpop.xlane.xlu0 %4775
        %v4777 = vsel %vm368, %v4709, -inf
        %4778 = vmax.xlane.f32.xlu0 %v4777
        %v4779 = vpop.xlane.xlu0 %4778
        %v4780 = vsel %vm368, %v4710, -inf
        %4781 = vmax.xlane.f32.xlu0 %v4780
        %v4782 = vpop.xlane.xlu0 %4781
        %v4783 = vsel %vm368, %v4711, -inf
        %4784 = vmax.xlane.f32.xlu0 %v4783
        %v4785 = vpop.xlane.xlu0 %4784
        %v4786 = vsel %vm368, %v4712, -inf
        %4787 = vmax.xlane.f32.xlu0 %v4786
        %v4788 = vpop.xlane.xlu0 %4787
        %v4789 = vsel %vm368, %v4713, -inf
        %4790 = vmax.xlane.f32.xlu0 %v4789
        %v4791 = vpop.xlane.xlu0 %4790
        %v4792 = vsel %vm368, %v4714, -inf
        %4793 = vmax.xlane.f32.xlu0 %v4792
        %v4794 = vpop.xlane.xlu0 %4793
        %v4795 = vsel %vm368, %v4715, -inf
        %4796 = vmax.xlane.f32.xlu0 %v4795
        %v4797 = vpop.xlane.xlu0 %4796
        %v4798 = vsel %vm368, %v4716, -inf
        %4799 = vmax.xlane.f32.xlu0 %v4798
        %v4800 = vpop.xlane.xlu0 %4799
        %v4801 = vsel %vm368, %v4717, -inf
        %4802 = vmax.xlane.f32.xlu0 %v4801
        %v4803 = vpop.xlane.xlu0 %4802
        %v4804 = vsel %vm368, %v4718, -inf
        %4805 = vmax.xlane.f32.xlu0 %v4804
        %v4806 = vpop.xlane.xlu0 %4805
        %v4807 = vsel %vm368, %v4719, -inf
        %4808 = vmax.xlane.f32.xlu0 %v4807
        %v4809 = vpop.xlane.xlu0 %4808
        %v4810 = vsel %vm368, %v4720, -inf
        %4811 = vmax.xlane.f32.xlu0 %v4810
        %v4812 = vpop.xlane.xlu0 %4811
        %v4813 = vsel %vm368, %v4721, -inf
        %4814 = vmax.xlane.f32.xlu0 %v4813
        %v4815 = vpop.xlane.xlu0 %4814
        %v4816 = vsel %vm368, %v4722, -inf
        %4817 = vmax.xlane.f32.xlu0 %v4816
        %v4818 = vpop.xlane.xlu0 %4817
        %v4819 = vsub.f32 %v4691, %v4725
        %v4820 = vsub.f32 %v4692, %v4728
        %v4821 = vsub.f32 %v4693, %v4731
        %v4822 = vsub.f32 %v4694, %v4734
        %v4823 = vsub.f32 %v4695, %v4737
        %v4824 = vsub.f32 %v4696, %v4740
        %v4825 = vsub.f32 %v4697, %v4743
        %v4826 = vsub.f32 %v4698, %v4746
        %v4827 = vsub.f32 %v4699, %v4749
        %v4828 = vsub.f32 %v4700, %v4752
        %v4829 = vsub.f32 %v4701, %v4755
        %v4830 = vsub.f32 %v4702, %v4758
        %v4831 = vsub.f32 %v4703, %v4761
        %v4832 = vsub.f32 %v4704, %v4764
        %v4833 = vsub.f32 %v4705, %v4767
        %v4834 = vsub.f32 %v4706, %v4770
        %v4835 = vsub.f32 %v4707, %v4773
        %v4836 = vsub.f32 %v4708, %v4776
        %v4837 = vsub.f32 %v4709, %v4779
        %v4838 = vsub.f32 %v4710, %v4782
        %v4839 = vsub.f32 %v4711, %v4785
        %v4840 = vsub.f32 %v4712, %v4788
        %v4841 = vsub.f32 %v4713, %v4791
        %v4842 = vsub.f32 %v4714, %v4794
        %v4843 = vsub.f32 %v4715, %v4797
        %v4844 = vsub.f32 %v4716, %v4800
        %v4845 = vsub.f32 %v4717, %v4803
        %v4846 = vsub.f32 %v4718, %v4806
        %v4847 = vsub.f32 %v4719, %v4809
        %v4848 = vsub.f32 %v4720, %v4812
        %v4849 = vsub.f32 %v4721, %v4815
        %v4850 = vsub.f32 %v4722, %v4818
        %v4851 = vmul.f32 %v4819, 1.442695
        %v4852 = vpow.pop %v4851
        %v4853 = vmul.f32 %v4820, 1.442695
        %v4854 = vpow.pop %v4853
        %v4855 = vmul.f32 %v4821, 1.442695
        %v4856 = vpow.pop %v4855
        %v4857 = vmul.f32 %v4822, 1.442695
        %v4858 = vpow.pop %v4857
        %v4859 = vmul.f32 %v4823, 1.442695
        %v4860 = vpow.pop %v4859
        %v4861 = vmul.f32 %v4824, 1.442695
        %v4862 = vpow.pop %v4861
        %v4863 = vmul.f32 %v4825, 1.442695
        %v4864 = vpow.pop %v4863
        %v4865 = vmul.f32 %v4826, 1.442695
        %v4866 = vpow.pop %v4865
        %v4867 = vmul.f32 %v4827, 1.442695
        %v4868 = vpow.pop %v4867
        %v4869 = vmul.f32 %v4828, 1.442695
        %v4870 = vpow.pop %v4869
        %v4871 = vmul.f32 %v4829, 1.442695
        %v4872 = vpow.pop %v4871
        %v4873 = vmul.f32 %v4830, 1.442695
        %v4874 = vpow.pop %v4873
        %v4875 = vmul.f32 %v4831, 1.442695
        %v4876 = vpow.pop %v4875
        %v4877 = vmul.f32 %v4832, 1.442695
        %v4878 = vpow.pop %v4877
        %v4879 = vmul.f32 %v4833, 1.442695
        %v4880 = vpow.pop %v4879
        %v4881 = vmul.f32 %v4834, 1.442695
        %v4882 = vpow.pop %v4881
        %v4883 = vmul.f32 %v4835, 1.442695
        %v4884 = vpow.pop %v4883
        %v4885 = vmul.f32 %v4836, 1.442695
        %v4886 = vpow.pop %v4885
        %v4887 = vmul.f32 %v4837, 1.442695
        %v4888 = vpow.pop %v4887
        %v4889 = vmul.f32 %v4838, 1.442695
        %v4890 = vpow.pop %v4889
        %v4891 = vmul.f32 %v4839, 1.442695
        %v4892 = vpow.pop %v4891
        %v4893 = vmul.f32 %v4840, 1.442695
        %v4894 = vpow.pop %v4893
        %v4895 = vmul.f32 %v4841, 1.442695
        %v4896 = vpow.pop %v4895
        %v4897 = vmul.f32 %v4842, 1.442695
        %v4898 = vpow.pop %v4897
        %v4899 = vmul.f32 %v4843, 1.442695
        %v4900 = vpow.pop %v4899
        %v4901 = vmul.f32 %v4844, 1.442695
        %v4902 = vpow.pop %v4901
        %v4903 = vmul.f32 %v4845, 1.442695
        %v4904 = vpow.pop %v4903
        %v4905 = vmul.f32 %v4846, 1.442695
        %v4906 = vpow.pop %v4905
        %v4907 = vmul.f32 %v4847, 1.442695
        %v4908 = vpow.pop %v4907
        %v4909 = vmul.f32 %v4848, 1.442695
        %v4910 = vpow.pop %v4909
        %v4911 = vmul.f32 %v4849, 1.442695
        %v4912 = vpow.pop %v4911
        %v4913 = vmul.f32 %v4850, 1.442695
        %v4914 = vpow.pop %v4913
        %v4915 = vsel %vm368, %v4852, 0.0
        %4916 = vadd.xlane.f32.xlu0 %v4915
        %v4917 = vpop.xlane.xlu0 %4916
        %v4918 = vsel %vm368, %v4854, 0.0
        %4919 = vadd.xlane.f32.xlu0 %v4918
        %v4920 = vpop.xlane.xlu0 %4919
        %v4921 = vsel %vm368, %v4856, 0.0
        %4922 = vadd.xlane.f32.xlu0 %v4921
        %v4923 = vpop.xlane.xlu0 %4922
        %v4924 = vsel %vm368, %v4858, 0.0
        %4925 = vadd.xlane.f32.xlu0 %v4924
        %v4926 = vpop.xlane.xlu0 %4925
        %v4927 = vsel %vm368, %v4860, 0.0
        %4928 = vadd.xlane.f32.xlu0 %v4927
        %v4929 = vpop.xlane.xlu0 %4928
        %v4930 = vsel %vm368, %v4862, 0.0
        %4931 = vadd.xlane.f32.xlu0 %v4930
        %v4932 = vpop.xlane.xlu0 %4931
        %v4933 = vsel %vm368, %v4864, 0.0
        %4934 = vadd.xlane.f32.xlu0 %v4933
        %v4935 = vpop.xlane.xlu0 %4934
        %v4936 = vsel %vm368, %v4866, 0.0
        %4937 = vadd.xlane.f32.xlu0 %v4936
        %v4938 = vpop.xlane.xlu0 %4937
        %v4939 = vsel %vm368, %v4868, 0.0
        %4940 = vadd.xlane.f32.xlu0 %v4939
        %v4941 = vpop.xlane.xlu0 %4940
        %v4942 = vsel %vm368, %v4870, 0.0
        %4943 = vadd.xlane.f32.xlu0 %v4942
        %v4944 = vpop.xlane.xlu0 %4943
        %v4945 = vsel %vm368, %v4872, 0.0
        %4946 = vadd.xlane.f32.xlu0 %v4945
        %v4947 = vpop.xlane.xlu0 %4946
        %v4948 = vsel %vm368, %v4874, 0.0
        %4949 = vadd.xlane.f32.xlu0 %v4948
        %v4950 = vpop.xlane.xlu0 %4949
        %v4951 = vsel %vm368, %v4876, 0.0
        %4952 = vadd.xlane.f32.xlu0 %v4951
        %v4953 = vpop.xlane.xlu0 %4952
        %v4954 = vsel %vm368, %v4878, 0.0
        %4955 = vadd.xlane.f32.xlu0 %v4954
        %v4956 = vpop.xlane.xlu0 %4955
        %v4957 = vsel %vm368, %v4880, 0.0
        %4958 = vadd.xlane.f32.xlu0 %v4957
        %v4959 = vpop.xlane.xlu0 %4958
        %v4960 = vsel %vm368, %v4882, 0.0
        %4961 = vadd.xlane.f32.xlu0 %v4960
        %v4962 = vpop.xlane.xlu0 %4961
        %v4963 = vsel %vm368, %v4884, 0.0
        %4964 = vadd.xlane.f32.xlu0 %v4963
        %v4965 = vpop.xlane.xlu0 %4964
        %v4966 = vsel %vm368, %v4886, 0.0
        %4967 = vadd.xlane.f32.xlu0 %v4966
        %v4968 = vpop.xlane.xlu0 %4967
        %v4969 = vsel %vm368, %v4888, 0.0
        %4970 = vadd.xlane.f32.xlu0 %v4969
        %v4971 = vpop.xlane.xlu0 %4970
        %v4972 = vsel %vm368, %v4890, 0.0
        %4973 = vadd.xlane.f32.xlu0 %v4972
        %v4974 = vpop.xlane.xlu0 %4973
        %v4975 = vsel %vm368, %v4892, 0.0
        %4976 = vadd.xlane.f32.xlu0 %v4975
        %v4977 = vpop.xlane.xlu0 %4976
        %v4978 = vsel %vm368, %v4894, 0.0
        %4979 = vadd.xlane.f32.xlu0 %v4978
        %v4980 = vpop.xlane.xlu0 %4979
        %v4981 = vsel %vm368, %v4896, 0.0
        %4982 = vadd.xlane.f32.xlu0 %v4981
        %v4983 = vpop.xlane.xlu0 %4982
        %v4984 = vsel %vm368, %v4898, 0.0
        %4985 = vadd.xlane.f32.xlu0 %v4984
        %v4986 = vpop.xlane.xlu0 %4985
        %v4987 = vsel %vm368, %v4900, 0.0
        %4988 = vadd.xlane.f32.xlu0 %v4987
        %v4989 = vpop.xlane.xlu0 %4988
        %v4990 = vsel %vm368, %v4902, 0.0
        %4991 = vadd.xlane.f32.xlu0 %v4990
        %v4992 = vpop.xlane.xlu0 %4991
        %v4993 = vsel %vm368, %v4904, 0.0
        %4994 = vadd.xlane.f32.xlu0 %v4993
        %v4995 = vpop.xlane.xlu0 %4994
        %v4996 = vsel %vm368, %v4906, 0.0
        %4997 = vadd.xlane.f32.xlu0 %v4996
        %v4998 = vpop.xlane.xlu0 %4997
        %v4999 = vsel %vm368, %v4908, 0.0
        %5000 = vadd.xlane.f32.xlu0 %v4999
        %v5001 = vpop.xlane.xlu0 %5000
        %v5002 = vsel %vm368, %v4910, 0.0
        %5003 = vadd.xlane.f32.xlu0 %v5002
        %v5004 = vpop.xlane.xlu0 %5003
        %v5005 = vsel %vm368, %v4912, 0.0
        %5006 = vadd.xlane.f32.xlu0 %v5005
        %v5007 = vpop.xlane.xlu0 %5006
        %v5008 = vsel %vm368, %v4914, 0.0
        %5009 = vadd.xlane.f32.xlu0 %v5008
        %v5010 = vpop.xlane.xlu0 %5009
        %v5011 = vrcp.pop %v4917
        %v5012 = vrcp.pop %v4920
        %v5013 = vrcp.pop %v4923
        %v5014 = vrcp.pop %v4926
        %v5015 = vrcp.pop %v4929
        %v5016 = vrcp.pop %v4932
        %v5017 = vrcp.pop %v4935
        %v5018 = vrcp.pop %v4938
        %v5019 = vrcp.pop %v4941
        %v5020 = vrcp.pop %v4944
        %v5021 = vrcp.pop %v4947
        %v5022 = vrcp.pop %v4950
        %v5023 = vrcp.pop %v4953
        %v5024 = vrcp.pop %v4956
        %v5025 = vrcp.pop %v4959
        %v5026 = vrcp.pop %v4962
        %v5027 = vrcp.pop %v4965
        %v5028 = vrcp.pop %v4968
        %v5029 = vrcp.pop %v4971
        %v5030 = vrcp.pop %v4974
        %v5031 = vrcp.pop %v4977
        %v5032 = vrcp.pop %v4980
        %v5033 = vrcp.pop %v4983
        %v5034 = vrcp.pop %v4986
        %v5035 = vrcp.pop %v4989
        %v5036 = vrcp.pop %v4992
        %v5037 = vrcp.pop %v4995
        %v5038 = vrcp.pop %v4998
        %v5039 = vrcp.pop %v5001
        %v5040 = vrcp.pop %v5004
        %v5041 = vrcp.pop %v5007
        %v5042 = vrcp.pop %v5010
        %v5043 = vmul.f32 %v4852, %v5011
        %v5044 = vmul.f32 %v4854, %v5012
        %v5045 = vmul.f32 %v4856, %v5013
        %v5046 = vmul.f32 %v4858, %v5014
        %v5047 = vmul.f32 %v4860, %v5015
        %v5048 = vmul.f32 %v4862, %v5016
        %v5049 = vmul.f32 %v4864, %v5017
        %v5050 = vmul.f32 %v4866, %v5018
        %v5051 = vmul.f32 %v4868, %v5019
        %v5052 = vmul.f32 %v4870, %v5020
        %v5053 = vmul.f32 %v4872, %v5021
        %v5054 = vmul.f32 %v4874, %v5022
        %v5055 = vmul.f32 %v4876, %v5023
        %v5056 = vmul.f32 %v4878, %v5024
        %v5057 = vmul.f32 %v4880, %v5025
        %v5058 = vmul.f32 %v4882, %v5026
        %v5059 = vmul.f32 %v4884, %v5027
        %v5060 = vmul.f32 %v4886, %v5028
        %v5061 = vmul.f32 %v4888, %v5029
        %v5062 = vmul.f32 %v4890, %v5030
        %v5063 = vmul.f32 %v4892, %v5031
        %v5064 = vmul.f32 %v4894, %v5032
        %v5065 = vmul.f32 %v4896, %v5033
        %v5066 = vmul.f32 %v4898, %v5034
        %v5067 = vmul.f32 %v4900, %v5035
        %v5068 = vmul.f32 %v4902, %v5036
        %v5069 = vmul.f32 %v4904, %v5037
        %v5070 = vmul.f32 %v4906, %v5038
        %v5071 = vmul.f32 %v4908, %v5039
        %v5072 = vmul.f32 %v4910, %v5040
        %v5073 = vmul.f32 %v4912, %v5041
        %v5074 = vmul.f32 %v4914, %v5042
        %v5076 = vsel %vm368, %v5043, 0
        %v5079 = vsel %vm368, %v5044, 0
        %v5082 = vsel %vm368, %v5045, 0
        %v5085 = vsel %vm368, %v5046, 0
        %v5088 = vsel %vm368, %v5047, 0
        %v5091 = vsel %vm368, %v5048, 0
        %v5094 = vsel %vm368, %v5049, 0
        %v5097 = vsel %vm368, %v5050, 0
        %5099 = vmatpush.msra.mxu0 0.0
        %5100 = vmatpush.msra.mxu0 0.0
        %5101 = vmatpush.msra.mxu0 0.0
        %5102 = vmatpush.msra.mxu0 0.0
        %5103 = vmatpush.msra.mxu0 0.0
        %5104 = vmatpush.msra.mxu0 0.0
        %5105 = vmatpush.msra.mxu0 0.0
        %5106 = vmatpush.msra.mxu0 0.0
        %5107 = vmatpush.msra.mxu0 %v4190
        %5108 = vmatpush.msra.mxu0 %v4188
        %5109 = vmatpush.msra.mxu0 %v4186
        %5110 = vmatpush.msra.mxu0 %v4184
        %5111 = vmatpush.msra.mxu0 %v4182
        %5112 = vmatpush.msra.mxu0 %v4180
        %5113 = vmatpush.msra.mxu0 %v4178
        %5114 = vmatpush.msra.mxu0 %v4176
        %5115 = vmatmul.f32.gmra.mxu0 %v5076
        %v5116 = vpop.f32.mrf.mxu0
        %v5117 = vadd.f32 0.0, %v5116
        %5118 = vmatmul.f32.gmra.mxu0 %v5079
        %v5119 = vpop.f32.mrf.mxu0
        %v5120 = vadd.f32 0.0, %v5119
        %5121 = vmatmul.f32.gmra.mxu0 %v5082
        %v5122 = vpop.f32.mrf.mxu0
        %v5123 = vadd.f32 0.0, %v5122
        %5124 = vmatmul.f32.gmra.mxu0 %v5085
        %v5125 = vpop.f32.mrf.mxu0
        %v5126 = vadd.f32 0.0, %v5125
        %5127 = vmatmul.f32.gmra.mxu0 %v5088
        %v5128 = vpop.f32.mrf.mxu0
        %v5129 = vadd.f32 0.0, %v5128
        %5130 = vmatmul.f32.gmra.mxu0 %v5091
        %v5131 = vpop.f32.mrf.mxu0
        %v5132 = vadd.f32 0.0, %v5131
        %5133 = vmatmul.f32.gmra.mxu0 %v5094
        %v5134 = vpop.f32.mrf.mxu0
        %v5135 = vadd.f32 0.0, %v5134
        %5136 = vmatmul.f32.gmra.mxu0 %v5097
        %v5137 = vpop.f32.mrf.mxu0
        %v5138 = vadd.f32 0.0, %v5137
        %5139 = vdwg.mxu0
        %v5141 = vsel %vm368, %v5051, 0
        %v5144 = vsel %vm368, %v5052, 0
        %v5147 = vsel %vm368, %v5053, 0
        %v5150 = vsel %vm368, %v5054, 0
        %v5153 = vsel %vm368, %v5055, 0
        %v5156 = vsel %vm368, %v5056, 0
        %v5159 = vsel %vm368, %v5057, 0
        %v5162 = vsel %vm368, %v5058, 0
        %5164 = vmatpush.msra.mxu0 0.0
        %5165 = vmatpush.msra.mxu0 0.0
        %5166 = vmatpush.msra.mxu0 0.0
        %5167 = vmatpush.msra.mxu0 0.0
        %5168 = vmatpush.msra.mxu0 0.0
        %5169 = vmatpush.msra.mxu0 0.0
        %5170 = vmatpush.msra.mxu0 0.0
        %5171 = vmatpush.msra.mxu0 0.0
        %5172 = vmatpush.msra.mxu0 %v4206
        %5173 = vmatpush.msra.mxu0 %v4204
        %5174 = vmatpush.msra.mxu0 %v4202
        %5175 = vmatpush.msra.mxu0 %v4200
        %5176 = vmatpush.msra.mxu0 %v4198
        %5177 = vmatpush.msra.mxu0 %v4196
        %5178 = vmatpush.msra.mxu0 %v4194
        %5179 = vmatpush.msra.mxu0 %v4192
        %5180 = vmatmul.f32.gmra.mxu0 %v5141
        %v5181 = vpop.f32.mrf.mxu0
        %v5182 = vadd.f32 0.0, %v5181
        %5183 = vmatmul.f32.gmra.mxu0 %v5144
        %v5184 = vpop.f32.mrf.mxu0
        %v5185 = vadd.f32 0.0, %v5184
        %5186 = vmatmul.f32.gmra.mxu0 %v5147
        %v5187 = vpop.f32.mrf.mxu0
        %v5188 = vadd.f32 0.0, %v5187
        %5189 = vmatmul.f32.gmra.mxu0 %v5150
        %v5190 = vpop.f32.mrf.mxu0
        %v5191 = vadd.f32 0.0, %v5190
        %5192 = vmatmul.f32.gmra.mxu0 %v5153
        %v5193 = vpop.f32.mrf.mxu0
        %v5194 = vadd.f32 0.0, %v5193
        %5195 = vmatmul.f32.gmra.mxu0 %v5156
        %v5196 = vpop.f32.mrf.mxu0
        %v5197 = vadd.f32 0.0, %v5196
        %5198 = vmatmul.f32.gmra.mxu0 %v5159
        %v5199 = vpop.f32.mrf.mxu0
        %v5200 = vadd.f32 0.0, %v5199
        %5201 = vmatmul.f32.gmra.mxu0 %v5162
        %v5202 = vpop.f32.mrf.mxu0
        %v5203 = vadd.f32 0.0, %v5202
        %5204 = vdwg.mxu0
        %v5206 = vsel %vm368, %v5059, 0
        %v5209 = vsel %vm368, %v5060, 0
        %v5212 = vsel %vm368, %v5061, 0
        %v5215 = vsel %vm368, %v5062, 0
        %v5218 = vsel %vm368, %v5063, 0
        %v5221 = vsel %vm368, %v5064, 0
        %v5224 = vsel %vm368, %v5065, 0
        %v5227 = vsel %vm368, %v5066, 0
        %5229 = vmatpush.msra.mxu0 0.0
        %5230 = vmatpush.msra.mxu0 0.0
        %5231 = vmatpush.msra.mxu0 0.0
        %5232 = vmatpush.msra.mxu0 0.0
        %5233 = vmatpush.msra.mxu0 0.0
        %5234 = vmatpush.msra.mxu0 0.0
        %5235 = vmatpush.msra.mxu0 0.0
        %5236 = vmatpush.msra.mxu0 0.0
        %5237 = vmatpush.msra.mxu0 %v4222
        %5238 = vmatpush.msra.mxu0 %v4220
        %5239 = vmatpush.msra.mxu0 %v4218
        %5240 = vmatpush.msra.mxu0 %v4216
        %5241 = vmatpush.msra.mxu0 %v4214
        %5242 = vmatpush.msra.mxu0 %v4212
        %5243 = vmatpush.msra.mxu0 %v4210
        %5244 = vmatpush.msra.mxu0 %v4208
        %5245 = vmatmul.f32.gmra.mxu0 %v5206
        %v5246 = vpop.f32.mrf.mxu0
        %v5247 = vadd.f32 0.0, %v5246
        %5248 = vmatmul.f32.gmra.mxu0 %v5209
        %v5249 = vpop.f32.mrf.mxu0
        %v5250 = vadd.f32 0.0, %v5249
        %5251 = vmatmul.f32.gmra.mxu0 %v5212
        %v5252 = vpop.f32.mrf.mxu0
        %v5253 = vadd.f32 0.0, %v5252
        %5254 = vmatmul.f32.gmra.mxu0 %v5215
        %v5255 = vpop.f32.mrf.mxu0
        %v5256 = vadd.f32 0.0, %v5255
        %5257 = vmatmul.f32.gmra.mxu0 %v5218
        %v5258 = vpop.f32.mrf.mxu0
        %v5259 = vadd.f32 0.0, %v5258
        %5260 = vmatmul.f32.gmra.mxu0 %v5221
        %v5261 = vpop.f32.mrf.mxu0
        %v5262 = vadd.f32 0.0, %v5261
        %5263 = vmatmul.f32.gmra.mxu0 %v5224
        %v5264 = vpop.f32.mrf.mxu0
        %v5265 = vadd.f32 0.0, %v5264
        %5266 = vmatmul.f32.gmra.mxu0 %v5227
        %v5267 = vpop.f32.mrf.mxu0
        %v5268 = vadd.f32 0.0, %v5267
        %5269 = vdwg.mxu0
        %v5271 = vsel %vm368, %v5067, 0
        %v5274 = vsel %vm368, %v5068, 0
        %v5277 = vsel %vm368, %v5069, 0
        %v5280 = vsel %vm368, %v5070, 0
        %v5283 = vsel %vm368, %v5071, 0
        %v5286 = vsel %vm368, %v5072, 0
        %v5289 = vsel %vm368, %v5073, 0
        %v5292 = vsel %vm368, %v5074, 0
        %5294 = vmatpush.msra.mxu0 0.0
        %5295 = vmatpush.msra.mxu0 0.0
        %5296 = vmatpush.msra.mxu0 0.0
        %5297 = vmatpush.msra.mxu0 0.0
        %5298 = vmatpush.msra.mxu0 0.0
        %5299 = vmatpush.msra.mxu0 0.0
        %5300 = vmatpush.msra.mxu0 0.0
        %5301 = vmatpush.msra.mxu0 0.0
        %5302 = vmatpush.msra.mxu0 %v4238
        %5303 = vmatpush.msra.mxu0 %v4236
        %5304 = vmatpush.msra.mxu0 %v4234
        %5305 = vmatpush.msra.mxu0 %v4232
        %5306 = vmatpush.msra.mxu0 %v4230
        %5307 = vmatpush.msra.mxu0 %v4228
        %5308 = vmatpush.msra.mxu0 %v4226
        %5309 = vmatpush.msra.mxu0 %v4224
        %5310 = vmatmul.f32.gmra.mxu0 %v5271
        %v5311 = vpop.f32.mrf.mxu0
        %v5312 = vadd.f32 0.0, %v5311
        %5313 = vmatmul.f32.gmra.mxu0 %v5274
        %v5314 = vpop.f32.mrf.mxu0
        %v5315 = vadd.f32 0.0, %v5314
        %5316 = vmatmul.f32.gmra.mxu0 %v5277
        %v5317 = vpop.f32.mrf.mxu0
        %v5318 = vadd.f32 0.0, %v5317
        %5319 = vmatmul.f32.gmra.mxu0 %v5280
        %v5320 = vpop.f32.mrf.mxu0
        %v5321 = vadd.f32 0.0, %v5320
        %5322 = vmatmul.f32.gmra.mxu0 %v5283
        %v5323 = vpop.f32.mrf.mxu0
        %v5324 = vadd.f32 0.0, %v5323
        %5325 = vmatmul.f32.gmra.mxu0 %v5286
        %v5326 = vpop.f32.mrf.mxu0
        %v5327 = vadd.f32 0.0, %v5326
        %5328 = vmatmul.f32.gmra.mxu0 %v5289
        %v5329 = vpop.f32.mrf.mxu0
        %v5330 = vadd.f32 0.0, %v5329
        %5331 = vmatmul.f32.gmra.mxu0 %v5292
        %v5332 = vpop.f32.mrf.mxu0
        %v5333 = vadd.f32 0.0, %v5332
        %5334 = vdwg.mxu0
        %5343 = vrot.lane.b32.xlu0 %v4176, 96
        %v5344 = vpop.permute.xlu0 %5343
        %5345 = vrot.lane.b32.xlu0 %v4178, 96
        %v5346 = vpop.permute.xlu0 %5345
        %5347 = vrot.lane.b32.xlu0 %v4180, 96
        %v5348 = vpop.permute.xlu0 %5347
        %5349 = vrot.lane.b32.xlu0 %v4182, 96
        %v5350 = vpop.permute.xlu0 %5349
        %5351 = vrot.lane.b32.xlu0 %v4184, 96
        %v5352 = vpop.permute.xlu0 %5351
        %5353 = vrot.lane.b32.xlu0 %v4186, 96
        %v5354 = vpop.permute.xlu0 %5353
        %5355 = vrot.lane.b32.xlu0 %v4188, 96
        %v5356 = vpop.permute.xlu0 %5355
        %5357 = vrot.lane.b32.xlu0 %v4190, 96
        %v5358 = vpop.permute.xlu0 %5357
        %5359 = vrot.lane.b32.xlu0 %v4176, 64
        %v5360 = vpop.permute.xlu0 %5359
        %5361 = vrot.lane.b32.xlu0 %v4178, 64
        %v5362 = vpop.permute.xlu0 %5361
        %5363 = vrot.lane.b32.xlu0 %v4180, 64
        %v5364 = vpop.permute.xlu0 %5363
        %5365 = vrot.lane.b32.xlu0 %v4182, 64
        %v5366 = vpop.permute.xlu0 %5365
        %5367 = vrot.lane.b32.xlu0 %v4184, 64
        %v5368 = vpop.permute.xlu0 %5367
        %5369 = vrot.lane.b32.xlu0 %v4186, 64
        %v5370 = vpop.permute.xlu0 %5369
        %5371 = vrot.lane.b32.xlu0 %v4188, 64
        %v5372 = vpop.permute.xlu0 %5371
        %5373 = vrot.lane.b32.xlu0 %v4190, 64
        %v5374 = vpop.permute.xlu0 %5373
        %v5375 = vsel %vm1830, %v5344, 0
        %v5377 = vsel %vm1830, %v5346, 0
        %v5379 = vsel %vm1830, %v5348, 0
        %v5381 = vsel %vm1830, %v5350, 0
        %v5383 = vsel %vm1830, %v5352, 0
        %v5385 = vsel %vm1830, %v5354, 0
        %v5387 = vsel %vm1830, %v5356, 0
        %v5389 = vsel %vm1830, %v5358, 0
        %v5391 = vsel %vm1830, %v5360, 0
        %v5393 = vsel %vm1830, %v5362, 0
        %v5395 = vsel %vm1830, %v5364, 0
        %v5397 = vsel %vm1830, %v5366, 0
        %v5399 = vsel %vm1830, %v5368, 0
        %v5401 = vsel %vm1830, %v5370, 0
        %v5403 = vsel %vm1830, %v5372, 0
        %v5405 = vsel %vm1830, %v5374, 0
        %5407 = vmatpush.xpose.msra.mxu0 0.0
        %5408 = vmatpush.xpose.msra.mxu0 0.0
        %5409 = vmatpush.xpose.msra.mxu0 0.0
        %5410 = vmatpush.xpose.msra.mxu0 0.0
        %5411 = vmatpush.xpose.msra.mxu0 0.0
        %5412 = vmatpush.xpose.msra.mxu0 0.0
        %5413 = vmatpush.xpose.msra.mxu0 0.0
        %5414 = vmatpush.xpose.msra.mxu0 0.0
        %5415 = vmatpush.xpose.msra.mxu0 %v5405
        %5416 = vmatpush.xpose.msra.mxu0 %v5403
        %5417 = vmatpush.xpose.msra.mxu0 %v5401
        %5418 = vmatpush.xpose.msra.mxu0 %v5399
        %5419 = vmatpush.xpose.msra.mxu0 %v5397
        %5420 = vmatpush.xpose.msra.mxu0 %v5395
        %5421 = vmatpush.xpose.msra.mxu0 %v5393
        %5422 = vmatpush.xpose.msra.mxu0 %v5391
        %5423 = vmatmul.f32.gmra.mxu0 %v5375
        %v5424 = vpop.f32.mrf.mxu0
        %v5425 = vadd.f32 0.0, %v5424
        %5426 = vmatmul.f32.gmra.mxu0 %v5377
        %v5427 = vpop.f32.mrf.mxu0
        %v5428 = vadd.f32 0.0, %v5427
        %5429 = vmatmul.f32.gmra.mxu0 %v5379
        %v5430 = vpop.f32.mrf.mxu0
        %v5431 = vadd.f32 0.0, %v5430
        %5432 = vmatmul.f32.gmra.mxu0 %v5381
        %v5433 = vpop.f32.mrf.mxu0
        %v5434 = vadd.f32 0.0, %v5433
        %5435 = vmatmul.f32.gmra.mxu0 %v5383
        %v5436 = vpop.f32.mrf.mxu0
        %v5437 = vadd.f32 0.0, %v5436
        %5438 = vmatmul.f32.gmra.mxu0 %v5385
        %v5439 = vpop.f32.mrf.mxu0
        %v5440 = vadd.f32 0.0, %v5439
        %5441 = vmatmul.f32.gmra.mxu0 %v5387
        %v5442 = vpop.f32.mrf.mxu0
        %v5443 = vadd.f32 0.0, %v5442
        %5444 = vmatmul.f32.gmra.mxu0 %v5389
        %v5445 = vpop.f32.mrf.mxu0
        %v5446 = vadd.f32 0.0, %v5445
        %5447 = vdwg.mxu0
        %5456 = vrot.lane.b32.xlu0 %v4192, 96
        %v5457 = vpop.permute.xlu0 %5456
        %5458 = vrot.lane.b32.xlu0 %v4194, 96
        %v5459 = vpop.permute.xlu0 %5458
        %5460 = vrot.lane.b32.xlu0 %v4196, 96
        %v5461 = vpop.permute.xlu0 %5460
        %5462 = vrot.lane.b32.xlu0 %v4198, 96
        %v5463 = vpop.permute.xlu0 %5462
        %5464 = vrot.lane.b32.xlu0 %v4200, 96
        %v5465 = vpop.permute.xlu0 %5464
        %5466 = vrot.lane.b32.xlu0 %v4202, 96
        %v5467 = vpop.permute.xlu0 %5466
        %5468 = vrot.lane.b32.xlu0 %v4204, 96
        %v5469 = vpop.permute.xlu0 %5468
        %5470 = vrot.lane.b32.xlu0 %v4206, 96
        %v5471 = vpop.permute.xlu0 %5470
        %5472 = vrot.lane.b32.xlu0 %v4192, 64
        %v5473 = vpop.permute.xlu0 %5472
        %5474 = vrot.lane.b32.xlu0 %v4194, 64
        %v5475 = vpop.permute.xlu0 %5474
        %5476 = vrot.lane.b32.xlu0 %v4196, 64
        %v5477 = vpop.permute.xlu0 %5476
        %5478 = vrot.lane.b32.xlu0 %v4198, 64
        %v5479 = vpop.permute.xlu0 %5478
        %5480 = vrot.lane.b32.xlu0 %v4200, 64
        %v5481 = vpop.permute.xlu0 %5480
        %5482 = vrot.lane.b32.xlu0 %v4202, 64
        %v5483 = vpop.permute.xlu0 %5482
        %5484 = vrot.lane.b32.xlu0 %v4204, 64
        %v5485 = vpop.permute.xlu0 %5484
        %5486 = vrot.lane.b32.xlu0 %v4206, 64
        %v5487 = vpop.permute.xlu0 %5486
        %v5488 = vsel %vm1830, %v5457, 0
        %v5490 = vsel %vm1830, %v5459, 0
        %v5492 = vsel %vm1830, %v5461, 0
        %v5494 = vsel %vm1830, %v5463, 0
        %v5496 = vsel %vm1830, %v5465, 0
        %v5498 = vsel %vm1830, %v5467, 0
        %v5500 = vsel %vm1830, %v5469, 0
        %v5502 = vsel %vm1830, %v5471, 0
        %v5504 = vsel %vm1830, %v5473, 0
        %v5506 = vsel %vm1830, %v5475, 0
        %v5508 = vsel %vm1830, %v5477, 0
        %v5510 = vsel %vm1830, %v5479, 0
        %v5512 = vsel %vm1830, %v5481, 0
        %v5514 = vsel %vm1830, %v5483, 0
        %v5516 = vsel %vm1830, %v5485, 0
        %v5518 = vsel %vm1830, %v5487, 0
        %5520 = vmatpush.xpose.msra.mxu0 0.0
        %5521 = vmatpush.xpose.msra.mxu0 0.0
        %5522 = vmatpush.xpose.msra.mxu0 0.0
        %5523 = vmatpush.xpose.msra.mxu0 0.0
        %5524 = vmatpush.xpose.msra.mxu0 0.0
        %5525 = vmatpush.xpose.msra.mxu0 0.0
        %5526 = vmatpush.xpose.msra.mxu0 0.0
        %5527 = vmatpush.xpose.msra.mxu0 0.0
        %5528 = vmatpush.xpose.msra.mxu0 %v5518
        %5529 = vmatpush.xpose.msra.mxu0 %v5516
        %5530 = vmatpush.xpose.msra.mxu0 %v5514
        %5531 = vmatpush.xpose.msra.mxu0 %v5512
        %5532 = vmatpush.xpose.msra.mxu0 %v5510
        %5533 = vmatpush.xpose.msra.mxu0 %v5508
        %5534 = vmatpush.xpose.msra.mxu0 %v5506
        %5535 = vmatpush.xpose.msra.mxu0 %v5504
        %5536 = vmatmul.f32.gmra.mxu0 %v5488
        %v5537 = vpop.f32.mrf.mxu0
        %v5538 = vadd.f32 0.0, %v5537
        %5539 = vmatmul.f32.gmra.mxu0 %v5490
        %v5540 = vpop.f32.mrf.mxu0
        %v5541 = vadd.f32 0.0, %v5540
        %5542 = vmatmul.f32.gmra.mxu0 %v5492
        %v5543 = vpop.f32.mrf.mxu0
        %v5544 = vadd.f32 0.0, %v5543
        %5545 = vmatmul.f32.gmra.mxu0 %v5494
        %v5546 = vpop.f32.mrf.mxu0
        %v5547 = vadd.f32 0.0, %v5546
        %5548 = vmatmul.f32.gmra.mxu0 %v5496
        %v5549 = vpop.f32.mrf.mxu0
        %v5550 = vadd.f32 0.0, %v5549
        %5551 = vmatmul.f32.gmra.mxu0 %v5498
        %v5552 = vpop.f32.mrf.mxu0
        %v5553 = vadd.f32 0.0, %v5552
        %5554 = vmatmul.f32.gmra.mxu0 %v5500
        %v5555 = vpop.f32.mrf.mxu0
        %v5556 = vadd.f32 0.0, %v5555
        %5557 = vmatmul.f32.gmra.mxu0 %v5502
        %v5558 = vpop.f32.mrf.mxu0
        %v5559 = vadd.f32 0.0, %v5558
        %5560 = vdwg.mxu0
        %5569 = vrot.lane.b32.xlu0 %v4208, 96
        %v5570 = vpop.permute.xlu0 %5569
        %5571 = vrot.lane.b32.xlu0 %v4210, 96
        %v5572 = vpop.permute.xlu0 %5571
        %5573 = vrot.lane.b32.xlu0 %v4212, 96
        %v5574 = vpop.permute.xlu0 %5573
        %5575 = vrot.lane.b32.xlu0 %v4214, 96
        %v5576 = vpop.permute.xlu0 %5575
        %5577 = vrot.lane.b32.xlu0 %v4216, 96
        %v5578 = vpop.permute.xlu0 %5577
        %5579 = vrot.lane.b32.xlu0 %v4218, 96
        %v5580 = vpop.permute.xlu0 %5579
        %5581 = vrot.lane.b32.xlu0 %v4220, 96
        %v5582 = vpop.permute.xlu0 %5581
        %5583 = vrot.lane.b32.xlu0 %v4222, 96
        %v5584 = vpop.permute.xlu0 %5583
        %5585 = vrot.lane.b32.xlu0 %v4208, 64
        %v5586 = vpop.permute.xlu0 %5585
        %5587 = vrot.lane.b32.xlu0 %v4210, 64
        %v5588 = vpop.permute.xlu0 %5587
        %5589 = vrot.lane.b32.xlu0 %v4212, 64
        %v5590 = vpop.permute.xlu0 %5589
        %5591 = vrot.lane.b32.xlu0 %v4214, 64
        %v5592 = vpop.permute.xlu0 %5591
        %5593 = vrot.lane.b32.xlu0 %v4216, 64
        %v5594 = vpop.permute.xlu0 %5593
        %5595 = vrot.lane.b32.xlu0 %v4218, 64
        %v5596 = vpop.permute.xlu0 %5595
        %5597 = vrot.lane.b32.xlu0 %v4220, 64
        %v5598 = vpop.permute.xlu0 %5597
        %5599 = vrot.lane.b32.xlu0 %v4222, 64
        %v5600 = vpop.permute.xlu0 %5599
        %v5601 = vsel %vm1830, %v5570, 0
        %v5603 = vsel %vm1830, %v5572, 0
        %v5605 = vsel %vm1830, %v5574, 0
        %v5607 = vsel %vm1830, %v5576, 0
        %v5609 = vsel %vm1830, %v5578, 0
        %v5611 = vsel %vm1830, %v5580, 0
        %v5613 = vsel %vm1830, %v5582, 0
        %v5615 = vsel %vm1830, %v5584, 0
        %v5617 = vsel %vm1830, %v5586, 0
        %v5619 = vsel %vm1830, %v5588, 0
        %v5621 = vsel %vm1830, %v5590, 0
        %v5623 = vsel %vm1830, %v5592, 0
        %v5625 = vsel %vm1830, %v5594, 0
        %v5627 = vsel %vm1830, %v5596, 0
        %v5629 = vsel %vm1830, %v5598, 0
        %v5631 = vsel %vm1830, %v5600, 0
        %5633 = vmatpush.xpose.msra.mxu0 0.0
        %5634 = vmatpush.xpose.msra.mxu0 0.0
        %5635 = vmatpush.xpose.msra.mxu0 0.0
        %5636 = vmatpush.xpose.msra.mxu0 0.0
        %5637 = vmatpush.xpose.msra.mxu0 0.0
        %5638 = vmatpush.xpose.msra.mxu0 0.0
        %5639 = vmatpush.xpose.msra.mxu0 0.0
        %5640 = vmatpush.xpose.msra.mxu0 0.0
        %5641 = vmatpush.xpose.msra.mxu0 %v5631
        %5642 = vmatpush.xpose.msra.mxu0 %v5629
        %5643 = vmatpush.xpose.msra.mxu0 %v5627
        %5644 = vmatpush.xpose.msra.mxu0 %v5625
        %5645 = vmatpush.xpose.msra.mxu0 %v5623
        %5646 = vmatpush.xpose.msra.mxu0 %v5621
        %5647 = vmatpush.xpose.msra.mxu0 %v5619
        %5648 = vmatpush.xpose.msra.mxu0 %v5617
        %5649 = vmatmul.f32.gmra.mxu0 %v5601
        %v5650 = vpop.f32.mrf.mxu0
        %v5651 = vadd.f32 0.0, %v5650
        %5652 = vmatmul.f32.gmra.mxu0 %v5603
        %v5653 = vpop.f32.mrf.mxu0
        %v5654 = vadd.f32 0.0, %v5653
        %5655 = vmatmul.f32.gmra.mxu0 %v5605
        %v5656 = vpop.f32.mrf.mxu0
        %v5657 = vadd.f32 0.0, %v5656
        %5658 = vmatmul.f32.gmra.mxu0 %v5607
        %v5659 = vpop.f32.mrf.mxu0
        %v5660 = vadd.f32 0.0, %v5659
        %5661 = vmatmul.f32.gmra.mxu0 %v5609
        %v5662 = vpop.f32.mrf.mxu0
        %v5663 = vadd.f32 0.0, %v5662
        %5664 = vmatmul.f32.gmra.mxu0 %v5611
        %v5665 = vpop.f32.mrf.mxu0
        %v5666 = vadd.f32 0.0, %v5665
        %5667 = vmatmul.f32.gmra.mxu0 %v5613
        %v5668 = vpop.f32.mrf.mxu0
        %v5669 = vadd.f32 0.0, %v5668
        %5670 = vmatmul.f32.gmra.mxu0 %v5615
        %v5671 = vpop.f32.mrf.mxu0
        %v5672 = vadd.f32 0.0, %v5671
        %5673 = vdwg.mxu0
        %5682 = vrot.lane.b32.xlu0 %v4224, 96
        %v5683 = vpop.permute.xlu0 %5682
        %5684 = vrot.lane.b32.xlu0 %v4226, 96
        %v5685 = vpop.permute.xlu0 %5684
        %5686 = vrot.lane.b32.xlu0 %v4228, 96
        %v5687 = vpop.permute.xlu0 %5686
        %5688 = vrot.lane.b32.xlu0 %v4230, 96
        %v5689 = vpop.permute.xlu0 %5688
        %5690 = vrot.lane.b32.xlu0 %v4232, 96
        %v5691 = vpop.permute.xlu0 %5690
        %5692 = vrot.lane.b32.xlu0 %v4234, 96
        %v5693 = vpop.permute.xlu0 %5692
        %5694 = vrot.lane.b32.xlu0 %v4236, 96
        %v5695 = vpop.permute.xlu0 %5694
        %5696 = vrot.lane.b32.xlu0 %v4238, 96
        %v5697 = vpop.permute.xlu0 %5696
        %5698 = vrot.lane.b32.xlu0 %v4224, 64
        %v5699 = vpop.permute.xlu0 %5698
        %5700 = vrot.lane.b32.xlu0 %v4226, 64
        %v5701 = vpop.permute.xlu0 %5700
        %5702 = vrot.lane.b32.xlu0 %v4228, 64
        %v5703 = vpop.permute.xlu0 %5702
        %5704 = vrot.lane.b32.xlu0 %v4230, 64
        %v5705 = vpop.permute.xlu0 %5704
        %5706 = vrot.lane.b32.xlu0 %v4232, 64
        %v5707 = vpop.permute.xlu0 %5706
        %5708 = vrot.lane.b32.xlu0 %v4234, 64
        %v5709 = vpop.permute.xlu0 %5708
        %5710 = vrot.lane.b32.xlu0 %v4236, 64
        %v5711 = vpop.permute.xlu0 %5710
        %5712 = vrot.lane.b32.xlu0 %v4238, 64
        %v5713 = vpop.permute.xlu0 %5712
        %v5714 = vsel %vm1830, %v5683, 0
        %v5716 = vsel %vm1830, %v5685, 0
        %v5718 = vsel %vm1830, %v5687, 0
        %v5720 = vsel %vm1830, %v5689, 0
        %v5722 = vsel %vm1830, %v5691, 0
        %v5724 = vsel %vm1830, %v5693, 0
        %v5726 = vsel %vm1830, %v5695, 0
        %v5728 = vsel %vm1830, %v5697, 0
        %v5730 = vsel %vm1830, %v5699, 0
        %v5732 = vsel %vm1830, %v5701, 0
        %v5734 = vsel %vm1830, %v5703, 0
        %v5736 = vsel %vm1830, %v5705, 0
        %v5738 = vsel %vm1830, %v5707, 0
        %v5740 = vsel %vm1830, %v5709, 0
        %v5742 = vsel %vm1830, %v5711, 0
        %v5744 = vsel %vm1830, %v5713, 0
        %5746 = vmatpush.xpose.msra.mxu0 0.0
        %5747 = vmatpush.xpose.msra.mxu0 0.0
        %5748 = vmatpush.xpose.msra.mxu0 0.0
        %5749 = vmatpush.xpose.msra.mxu0 0.0
        %5750 = vmatpush.xpose.msra.mxu0 0.0
        %5751 = vmatpush.xpose.msra.mxu0 0.0
        %5752 = vmatpush.xpose.msra.mxu0 0.0
        %5753 = vmatpush.xpose.msra.mxu0 0.0
        %5754 = vmatpush.xpose.msra.mxu0 %v5744
        %5755 = vmatpush.xpose.msra.mxu0 %v5742
        %5756 = vmatpush.xpose.msra.mxu0 %v5740
        %5757 = vmatpush.xpose.msra.mxu0 %v5738
        %5758 = vmatpush.xpose.msra.mxu0 %v5736
        %5759 = vmatpush.xpose.msra.mxu0 %v5734
        %5760 = vmatpush.xpose.msra.mxu0 %v5732
        %5761 = vmatpush.xpose.msra.mxu0 %v5730
        %5762 = vmatmul.f32.gmra.mxu0 %v5714
        %v5763 = vpop.f32.mrf.mxu0
        %v5764 = vadd.f32 0.0, %v5763
        %5765 = vmatmul.f32.gmra.mxu0 %v5716
        %v5766 = vpop.f32.mrf.mxu0
        %v5767 = vadd.f32 0.0, %v5766
        %5768 = vmatmul.f32.gmra.mxu0 %v5718
        %v5769 = vpop.f32.mrf.mxu0
        %v5770 = vadd.f32 0.0, %v5769
        %5771 = vmatmul.f32.gmra.mxu0 %v5720
        %v5772 = vpop.f32.mrf.mxu0
        %v5773 = vadd.f32 0.0, %v5772
        %5774 = vmatmul.f32.gmra.mxu0 %v5722
        %v5775 = vpop.f32.mrf.mxu0
        %v5776 = vadd.f32 0.0, %v5775
        %5777 = vmatmul.f32.gmra.mxu0 %v5724
        %v5778 = vpop.f32.mrf.mxu0
        %v5779 = vadd.f32 0.0, %v5778
        %5780 = vmatmul.f32.gmra.mxu0 %v5726
        %v5781 = vpop.f32.mrf.mxu0
        %v5782 = vadd.f32 0.0, %v5781
        %5783 = vmatmul.f32.gmra.mxu0 %v5728
        %v5784 = vpop.f32.mrf.mxu0
        %v5785 = vadd.f32 0.0, %v5784
        %5786 = vdwg.mxu0
        %v5787 = vsel %vm2203, %v5425, -inf
        %v5788 = vsel %vm2204, %v5428, -inf
        %v5789 = vsel %vm2205, %v5431, -inf
        %v5790 = vsel %vm2206, %v5434, -inf
        %v5791 = vsel %vm2207, %v5437, -inf
        %v5792 = vsel %vm2208, %v5440, -inf
        %v5793 = vsel %vm2209, %v5443, -inf
        %v5794 = vsel %vm2210, %v5446, -inf
        %v5795 = vsel %vm2203, %v5538, -inf
        %v5796 = vsel %vm2204, %v5541, -inf
        %v5797 = vsel %vm2205, %v5544, -inf
        %v5798 = vsel %vm2206, %v5547, -inf
        %v5799 = vsel %vm2207, %v5550, -inf
        %v5800 = vsel %vm2208, %v5553, -inf
        %v5801 = vsel %vm2209, %v5556, -inf
        %v5802 = vsel %vm2210, %v5559, -inf
        %v5803 = vsel %vm2203, %v5651, -inf
        %v5804 = vsel %vm2204, %v5654, -inf
        %v5805 = vsel %vm2205, %v5657, -inf
        %v5806 = vsel %vm2206, %v5660, -inf
        %v5807 = vsel %vm2207, %v5663, -inf
        %v5808 = vsel %vm2208, %v5666, -inf
        %v5809 = vsel %vm2209, %v5669, -inf
        %v5810 = vsel %vm2210, %v5672, -inf
        %v5811 = vsel %vm2203, %v5764, -inf
        %v5812 = vsel %vm2204, %v5767, -inf
        %v5813 = vsel %vm2205, %v5770, -inf
        %v5814 = vsel %vm2206, %v5773, -inf
        %v5815 = vsel %vm2207, %v5776, -inf
        %v5816 = vsel %vm2208, %v5779, -inf
        %v5817 = vsel %vm2209, %v5782, -inf
        %v5818 = vsel %vm2210, %v5785, -inf
        %v5819 = vsel %vm368, %v5787, -inf
        %5820 = vmax.xlane.f32.xlu0 %v5819
        %v5821 = vpop.xlane.xlu0 %5820
        %v5822 = vsel %vm368, %v5788, -inf
        %5823 = vmax.xlane.f32.xlu0 %v5822
        %v5824 = vpop.xlane.xlu0 %5823
        %v5825 = vsel %vm368, %v5789, -inf
        %5826 = vmax.xlane.f32.xlu0 %v5825
        %v5827 = vpop.xlane.xlu0 %5826
        %v5828 = vsel %vm368, %v5790, -inf
        %5829 = vmax.xlane.f32.xlu0 %v5828
        %v5830 = vpop.xlane.xlu0 %5829
        %v5831 = vsel %vm368, %v5791, -inf
        %5832 = vmax.xlane.f32.xlu0 %v5831
        %v5833 = vpop.xlane.xlu0 %5832
        %v5834 = vsel %vm368, %v5792, -inf
        %5835 = vmax.xlane.f32.xlu0 %v5834
        %v5836 = vpop.xlane.xlu0 %5835
        %v5837 = vsel %vm368, %v5793, -inf
        %5838 = vmax.xlane.f32.xlu0 %v5837
        %v5839 = vpop.xlane.xlu0 %5838
        %v5840 = vsel %vm368, %v5794, -inf
        %5841 = vmax.xlane.f32.xlu0 %v5840
        %v5842 = vpop.xlane.xlu0 %5841
        %v5843 = vsel %vm368, %v5795, -inf
        %5844 = vmax.xlane.f32.xlu0 %v5843
        %v5845 = vpop.xlane.xlu0 %5844
        %v5846 = vsel %vm368, %v5796, -inf
        %5847 = vmax.xlane.f32.xlu0 %v5846
        %v5848 = vpop.xlane.xlu0 %5847
        %v5849 = vsel %vm368, %v5797, -inf
        %5850 = vmax.xlane.f32.xlu0 %v5849
        %v5851 = vpop.xlane.xlu0 %5850
        %v5852 = vsel %vm368, %v5798, -inf
        %5853 = vmax.xlane.f32.xlu0 %v5852
        %v5854 = vpop.xlane.xlu0 %5853
        %v5855 = vsel %vm368, %v5799, -inf
        %5856 = vmax.xlane.f32.xlu0 %v5855
        %v5857 = vpop.xlane.xlu0 %5856
        %v5858 = vsel %vm368, %v5800, -inf
        %5859 = vmax.xlane.f32.xlu0 %v5858
        %v5860 = vpop.xlane.xlu0 %5859
        %v5861 = vsel %vm368, %v5801, -inf
        %5862 = vmax.xlane.f32.xlu0 %v5861
        %v5863 = vpop.xlane.xlu0 %5862
        %v5864 = vsel %vm368, %v5802, -inf
        %5865 = vmax.xlane.f32.xlu0 %v5864
        %v5866 = vpop.xlane.xlu0 %5865
        %v5867 = vsel %vm368, %v5803, -inf
        %5868 = vmax.xlane.f32.xlu0 %v5867
        %v5869 = vpop.xlane.xlu0 %5868
        %v5870 = vsel %vm368, %v5804, -inf
        %5871 = vmax.xlane.f32.xlu0 %v5870
        %v5872 = vpop.xlane.xlu0 %5871
        %v5873 = vsel %vm368, %v5805, -inf
        %5874 = vmax.xlane.f32.xlu0 %v5873
        %v5875 = vpop.xlane.xlu0 %5874
        %v5876 = vsel %vm368, %v5806, -inf
        %5877 = vmax.xlane.f32.xlu0 %v5876
        %v5878 = vpop.xlane.xlu0 %5877
        %v5879 = vsel %vm368, %v5807, -inf
        %5880 = vmax.xlane.f32.xlu0 %v5879
        %v5881 = vpop.xlane.xlu0 %5880
        %v5882 = vsel %vm368, %v5808, -inf
        %5883 = vmax.xlane.f32.xlu0 %v5882
        %v5884 = vpop.xlane.xlu0 %5883
        %v5885 = vsel %vm368, %v5809, -inf
        %5886 = vmax.xlane.f32.xlu0 %v5885
        %v5887 = vpop.xlane.xlu0 %5886
        %v5888 = vsel %vm368, %v5810, -inf
        %5889 = vmax.xlane.f32.xlu0 %v5888
        %v5890 = vpop.xlane.xlu0 %5889
        %v5891 = vsel %vm368, %v5811, -inf
        %5892 = vmax.xlane.f32.xlu0 %v5891
        %v5893 = vpop.xlane.xlu0 %5892
        %v5894 = vsel %vm368, %v5812, -inf
        %5895 = vmax.xlane.f32.xlu0 %v5894
        %v5896 = vpop.xlane.xlu0 %5895
        %v5897 = vsel %vm368, %v5813, -inf
        %5898 = vmax.xlane.f32.xlu0 %v5897
        %v5899 = vpop.xlane.xlu0 %5898
        %v5900 = vsel %vm368, %v5814, -inf
        %5901 = vmax.xlane.f32.xlu0 %v5900
        %v5902 = vpop.xlane.xlu0 %5901
        %v5903 = vsel %vm368, %v5815, -inf
        %5904 = vmax.xlane.f32.xlu0 %v5903
        %v5905 = vpop.xlane.xlu0 %5904
        %v5906 = vsel %vm368, %v5816, -inf
        %5907 = vmax.xlane.f32.xlu0 %v5906
        %v5908 = vpop.xlane.xlu0 %5907
        %v5909 = vsel %vm368, %v5817, -inf
        %5910 = vmax.xlane.f32.xlu0 %v5909
        %v5911 = vpop.xlane.xlu0 %5910
        %v5912 = vsel %vm368, %v5818, -inf
        %5913 = vmax.xlane.f32.xlu0 %v5912
        %v5914 = vpop.xlane.xlu0 %5913
        %v5915 = vsub.f32 %v5787, %v5821
        %v5916 = vsub.f32 %v5788, %v5824
        %v5917 = vsub.f32 %v5789, %v5827
        %v5918 = vsub.f32 %v5790, %v5830
        %v5919 = vsub.f32 %v5791, %v5833
        %v5920 = vsub.f32 %v5792, %v5836
        %v5921 = vsub.f32 %v5793, %v5839
        %v5922 = vsub.f32 %v5794, %v5842
        %v5923 = vsub.f32 %v5795, %v5845
        %v5924 = vsub.f32 %v5796, %v5848
        %v5925 = vsub.f32 %v5797, %v5851
        %v5926 = vsub.f32 %v5798, %v5854
        %v5927 = vsub.f32 %v5799, %v5857
        %v5928 = vsub.f32 %v5800, %v5860
        %v5929 = vsub.f32 %v5801, %v5863
        %v5930 = vsub.f32 %v5802, %v5866
        %v5931 = vsub.f32 %v5803, %v5869
        %v5932 = vsub.f32 %v5804, %v5872
        %v5933 = vsub.f32 %v5805, %v5875
        %v5934 = vsub.f32 %v5806, %v5878
        %v5935 = vsub.f32 %v5807, %v5881
        %v5936 = vsub.f32 %v5808, %v5884
        %v5937 = vsub.f32 %v5809, %v5887
        %v5938 = vsub.f32 %v5810, %v5890
        %v5939 = vsub.f32 %v5811, %v5893
        %v5940 = vsub.f32 %v5812, %v5896
        %v5941 = vsub.f32 %v5813, %v5899
        %v5942 = vsub.f32 %v5814, %v5902
        %v5943 = vsub.f32 %v5815, %v5905
        %v5944 = vsub.f32 %v5816, %v5908
        %v5945 = vsub.f32 %v5817, %v5911
        %v5946 = vsub.f32 %v5818, %v5914
        %v5947 = vmul.f32 %v5915, 1.442695
        %v5948 = vpow.pop %v5947
        %v5949 = vmul.f32 %v5916, 1.442695
        %v5950 = vpow.pop %v5949
        %v5951 = vmul.f32 %v5917, 1.442695
        %v5952 = vpow.pop %v5951
        %v5953 = vmul.f32 %v5918, 1.442695
        %v5954 = vpow.pop %v5953
        %v5955 = vmul.f32 %v5919, 1.442695
        %v5956 = vpow.pop %v5955
        %v5957 = vmul.f32 %v5920, 1.442695
        %v5958 = vpow.pop %v5957
        %v5959 = vmul.f32 %v5921, 1.442695
        %v5960 = vpow.pop %v5959
        %v5961 = vmul.f32 %v5922, 1.442695
        %v5962 = vpow.pop %v5961
        %v5963 = vmul.f32 %v5923, 1.442695
        %v5964 = vpow.pop %v5963
        %v5965 = vmul.f32 %v5924, 1.442695
        %v5966 = vpow.pop %v5965
        %v5967 = vmul.f32 %v5925, 1.442695
        %v5968 = vpow.pop %v5967
        %v5969 = vmul.f32 %v5926, 1.442695
        %v5970 = vpow.pop %v5969
        %v5971 = vmul.f32 %v5927, 1.442695
        %v5972 = vpow.pop %v5971
        %v5973 = vmul.f32 %v5928, 1.442695
        %v5974 = vpow.pop %v5973
        %v5975 = vmul.f32 %v5929, 1.442695
        %v5976 = vpow.pop %v5975
        %v5977 = vmul.f32 %v5930, 1.442695
        %v5978 = vpow.pop %v5977
        %v5979 = vmul.f32 %v5931, 1.442695
        %v5980 = vpow.pop %v5979
        %v5981 = vmul.f32 %v5932, 1.442695
        %v5982 = vpow.pop %v5981
        %v5983 = vmul.f32 %v5933, 1.442695
        %v5984 = vpow.pop %v5983
        %v5985 = vmul.f32 %v5934, 1.442695
        %v5986 = vpow.pop %v5985
        %v5987 = vmul.f32 %v5935, 1.442695
        %v5988 = vpow.pop %v5987
        %v5989 = vmul.f32 %v5936, 1.442695
        %v5990 = vpow.pop %v5989
        %v5991 = vmul.f32 %v5937, 1.442695
        %v5992 = vpow.pop %v5991
        %v5993 = vmul.f32 %v5938, 1.442695
        %v5994 = vpow.pop %v5993
        %v5995 = vmul.f32 %v5939, 1.442695
        %v5996 = vpow.pop %v5995
        %v5997 = vmul.f32 %v5940, 1.442695
        %v5998 = vpow.pop %v5997
        %v5999 = vmul.f32 %v5941, 1.442695
        %v6000 = vpow.pop %v5999
        %v6001 = vmul.f32 %v5942, 1.442695
        %v6002 = vpow.pop %v6001
        %v6003 = vmul.f32 %v5943, 1.442695
        %v6004 = vpow.pop %v6003
        %v6005 = vmul.f32 %v5944, 1.442695
        %v6006 = vpow.pop %v6005
        %v6007 = vmul.f32 %v5945, 1.442695
        %v6008 = vpow.pop %v6007
        %v6009 = vmul.f32 %v5946, 1.442695
        %v6010 = vpow.pop %v6009
        %v6011 = vsel %vm368, %v5948, 0.0
        %6012 = vadd.xlane.f32.xlu0 %v6011
        %v6013 = vpop.xlane.xlu0 %6012
        %v6014 = vsel %vm368, %v5950, 0.0
        %6015 = vadd.xlane.f32.xlu0 %v6014
        %v6016 = vpop.xlane.xlu0 %6015
        %v6017 = vsel %vm368, %v5952, 0.0
        %6018 = vadd.xlane.f32.xlu0 %v6017
        %v6019 = vpop.xlane.xlu0 %6018
        %v6020 = vsel %vm368, %v5954, 0.0
        %6021 = vadd.xlane.f32.xlu0 %v6020
        %v6022 = vpop.xlane.xlu0 %6021
        %v6023 = vsel %vm368, %v5956, 0.0
        %6024 = vadd.xlane.f32.xlu0 %v6023
        %v6025 = vpop.xlane.xlu0 %6024
        %v6026 = vsel %vm368, %v5958, 0.0
        %6027 = vadd.xlane.f32.xlu0 %v6026
        %v6028 = vpop.xlane.xlu0 %6027
        %v6029 = vsel %vm368, %v5960, 0.0
        %6030 = vadd.xlane.f32.xlu0 %v6029
        %v6031 = vpop.xlane.xlu0 %6030
        %v6032 = vsel %vm368, %v5962, 0.0
        %6033 = vadd.xlane.f32.xlu0 %v6032
        %v6034 = vpop.xlane.xlu0 %6033
        %v6035 = vsel %vm368, %v5964, 0.0
        %6036 = vadd.xlane.f32.xlu0 %v6035
        %v6037 = vpop.xlane.xlu0 %6036
        %v6038 = vsel %vm368, %v5966, 0.0
        %6039 = vadd.xlane.f32.xlu0 %v6038
        %v6040 = vpop.xlane.xlu0 %6039
        %v6041 = vsel %vm368, %v5968, 0.0
        %6042 = vadd.xlane.f32.xlu0 %v6041
        %v6043 = vpop.xlane.xlu0 %6042
        %v6044 = vsel %vm368, %v5970, 0.0
        %6045 = vadd.xlane.f32.xlu0 %v6044
        %v6046 = vpop.xlane.xlu0 %6045
        %v6047 = vsel %vm368, %v5972, 0.0
        %6048 = vadd.xlane.f32.xlu0 %v6047
        %v6049 = vpop.xlane.xlu0 %6048
        %v6050 = vsel %vm368, %v5974, 0.0
        %6051 = vadd.xlane.f32.xlu0 %v6050
        %v6052 = vpop.xlane.xlu0 %6051
        %v6053 = vsel %vm368, %v5976, 0.0
        %6054 = vadd.xlane.f32.xlu0 %v6053
        %v6055 = vpop.xlane.xlu0 %6054
        %v6056 = vsel %vm368, %v5978, 0.0
        %6057 = vadd.xlane.f32.xlu0 %v6056
        %v6058 = vpop.xlane.xlu0 %6057
        %v6059 = vsel %vm368, %v5980, 0.0
        %6060 = vadd.xlane.f32.xlu0 %v6059
        %v6061 = vpop.xlane.xlu0 %6060
        %v6062 = vsel %vm368, %v5982, 0.0
        %6063 = vadd.xlane.f32.xlu0 %v6062
        %v6064 = vpop.xlane.xlu0 %6063
        %v6065 = vsel %vm368, %v5984, 0.0
        %6066 = vadd.xlane.f32.xlu0 %v6065
        %v6067 = vpop.xlane.xlu0 %6066
        %v6068 = vsel %vm368, %v5986, 0.0
        %6069 = vadd.xlane.f32.xlu0 %v6068
        %v6070 = vpop.xlane.xlu0 %6069
        %v6071 = vsel %vm368, %v5988, 0.0
        %6072 = vadd.xlane.f32.xlu0 %v6071
        %v6073 = vpop.xlane.xlu0 %6072
        %v6074 = vsel %vm368, %v5990, 0.0
        %6075 = vadd.xlane.f32.xlu0 %v6074
        %v6076 = vpop.xlane.xlu0 %6075
        %v6077 = vsel %vm368, %v5992, 0.0
        %6078 = vadd.xlane.f32.xlu0 %v6077
        %v6079 = vpop.xlane.xlu0 %6078
        %v6080 = vsel %vm368, %v5994, 0.0
        %6081 = vadd.xlane.f32.xlu0 %v6080
        %v6082 = vpop.xlane.xlu0 %6081
        %v6083 = vsel %vm368, %v5996, 0.0
        %6084 = vadd.xlane.f32.xlu0 %v6083
        %v6085 = vpop.xlane.xlu0 %6084
        %v6086 = vsel %vm368, %v5998, 0.0
        %6087 = vadd.xlane.f32.xlu0 %v6086
        %v6088 = vpop.xlane.xlu0 %6087
        %v6089 = vsel %vm368, %v6000, 0.0
        %6090 = vadd.xlane.f32.xlu0 %v6089
        %v6091 = vpop.xlane.xlu0 %6090
        %v6092 = vsel %vm368, %v6002, 0.0
        %6093 = vadd.xlane.f32.xlu0 %v6092
        %v6094 = vpop.xlane.xlu0 %6093
        %v6095 = vsel %vm368, %v6004, 0.0
        %6096 = vadd.xlane.f32.xlu0 %v6095
        %v6097 = vpop.xlane.xlu0 %6096
        %v6098 = vsel %vm368, %v6006, 0.0
        %6099 = vadd.xlane.f32.xlu0 %v6098
        %v6100 = vpop.xlane.xlu0 %6099
        %v6101 = vsel %vm368, %v6008, 0.0
        %6102 = vadd.xlane.f32.xlu0 %v6101
        %v6103 = vpop.xlane.xlu0 %6102
        %v6104 = vsel %vm368, %v6010, 0.0
        %6105 = vadd.xlane.f32.xlu0 %v6104
        %v6106 = vpop.xlane.xlu0 %6105
        %v6107 = vrcp.pop %v6013
        %v6108 = vrcp.pop %v6016
        %v6109 = vrcp.pop %v6019
        %v6110 = vrcp.pop %v6022
        %v6111 = vrcp.pop %v6025
        %v6112 = vrcp.pop %v6028
        %v6113 = vrcp.pop %v6031
        %v6114 = vrcp.pop %v6034
        %v6115 = vrcp.pop %v6037
        %v6116 = vrcp.pop %v6040
        %v6117 = vrcp.pop %v6043
        %v6118 = vrcp.pop %v6046
        %v6119 = vrcp.pop %v6049
        %v6120 = vrcp.pop %v6052
        %v6121 = vrcp.pop %v6055
        %v6122 = vrcp.pop %v6058
        %v6123 = vrcp.pop %v6061
        %v6124 = vrcp.pop %v6064
        %v6125 = vrcp.pop %v6067
        %v6126 = vrcp.pop %v6070
        %v6127 = vrcp.pop %v6073
        %v6128 = vrcp.pop %v6076
        %v6129 = vrcp.pop %v6079
        %v6130 = vrcp.pop %v6082
        %v6131 = vrcp.pop %v6085
        %v6132 = vrcp.pop %v6088
        %v6133 = vrcp.pop %v6091
        %v6134 = vrcp.pop %v6094
        %v6135 = vrcp.pop %v6097
        %v6136 = vrcp.pop %v6100
        %v6137 = vrcp.pop %v6103
        %v6138 = vrcp.pop %v6106
        %v6139 = vmul.f32 %v5948, %v6107
        %v6140 = vmul.f32 %v5950, %v6108
        %v6141 = vmul.f32 %v5952, %v6109
        %v6142 = vmul.f32 %v5954, %v6110
        %v6143 = vmul.f32 %v5956, %v6111
        %v6144 = vmul.f32 %v5958, %v6112
        %v6145 = vmul.f32 %v5960, %v6113
        %v6146 = vmul.f32 %v5962, %v6114
        %v6147 = vmul.f32 %v5964, %v6115
        %v6148 = vmul.f32 %v5966, %v6116
        %v6149 = vmul.f32 %v5968, %v6117
        %v6150 = vmul.f32 %v5970, %v6118
        %v6151 = vmul.f32 %v5972, %v6119
        %v6152 = vmul.f32 %v5974, %v6120
        %v6153 = vmul.f32 %v5976, %v6121
        %v6154 = vmul.f32 %v5978, %v6122
        %v6155 = vmul.f32 %v5980, %v6123
        %v6156 = vmul.f32 %v5982, %v6124
        %v6157 = vmul.f32 %v5984, %v6125
        %v6158 = vmul.f32 %v5986, %v6126
        %v6159 = vmul.f32 %v5988, %v6127
        %v6160 = vmul.f32 %v5990, %v6128
        %v6161 = vmul.f32 %v5992, %v6129
        %v6162 = vmul.f32 %v5994, %v6130
        %v6163 = vmul.f32 %v5996, %v6131
        %v6164 = vmul.f32 %v5998, %v6132
        %v6165 = vmul.f32 %v6000, %v6133
        %v6166 = vmul.f32 %v6002, %v6134
        %v6167 = vmul.f32 %v6004, %v6135
        %v6168 = vmul.f32 %v6006, %v6136
        %v6169 = vmul.f32 %v6008, %v6137
        %v6170 = vmul.f32 %v6010, %v6138
        %6171 = vrot.lane.b32.xlu0 %v4176, 32
        %v6172 = vpop.permute.xlu0 %6171
        %6173 = vrot.lane.b32.xlu0 %v4178, 32
        %v6174 = vpop.permute.xlu0 %6173
        %6175 = vrot.lane.b32.xlu0 %v4180, 32
        %v6176 = vpop.permute.xlu0 %6175
        %6177 = vrot.lane.b32.xlu0 %v4182, 32
        %v6178 = vpop.permute.xlu0 %6177
        %6179 = vrot.lane.b32.xlu0 %v4184, 32
        %v6180 = vpop.permute.xlu0 %6179
        %6181 = vrot.lane.b32.xlu0 %v4186, 32
        %v6182 = vpop.permute.xlu0 %6181
        %6183 = vrot.lane.b32.xlu0 %v4188, 32
        %v6184 = vpop.permute.xlu0 %6183
        %6185 = vrot.lane.b32.xlu0 %v4190, 32
        %v6186 = vpop.permute.xlu0 %6185
        %v6196 = vsel %vm368, %v6139, 0
        %v6199 = vsel %vm368, %v6140, 0
        %v6202 = vsel %vm368, %v6141, 0
        %v6205 = vsel %vm368, %v6142, 0
        %v6208 = vsel %vm368, %v6143, 0
        %v6211 = vsel %vm368, %v6144, 0
        %v6214 = vsel %vm368, %v6145, 0
        %v6217 = vsel %vm368, %v6146, 0
        %6219 = vmatpush.msra.mxu0 0.0
        %6220 = vmatpush.msra.mxu0 0.0
        %6221 = vmatpush.msra.mxu0 0.0
        %6222 = vmatpush.msra.mxu0 0.0
        %6223 = vmatpush.msra.mxu0 0.0
        %6224 = vmatpush.msra.mxu0 0.0
        %6225 = vmatpush.msra.mxu0 0.0
        %6226 = vmatpush.msra.mxu0 0.0
        %6227 = vmatpush.msra.mxu0 %v6186
        %6228 = vmatpush.msra.mxu0 %v6184
        %6229 = vmatpush.msra.mxu0 %v6182
        %6230 = vmatpush.msra.mxu0 %v6180
        %6231 = vmatpush.msra.mxu0 %v6178
        %6232 = vmatpush.msra.mxu0 %v6176
        %6233 = vmatpush.msra.mxu0 %v6174
        %6234 = vmatpush.msra.mxu0 %v6172
        %6235 = vmatmul.f32.gmra.mxu0 %v6196
        %v6236 = vpop.f32.mrf.mxu0
        %v6237 = vadd.f32 0.0, %v6236
        %6238 = vmatmul.f32.gmra.mxu0 %v6199
        %v6239 = vpop.f32.mrf.mxu0
        %v6240 = vadd.f32 0.0, %v6239
        %6241 = vmatmul.f32.gmra.mxu0 %v6202
        %v6242 = vpop.f32.mrf.mxu0
        %v6243 = vadd.f32 0.0, %v6242
        %6244 = vmatmul.f32.gmra.mxu0 %v6205
        %v6245 = vpop.f32.mrf.mxu0
        %v6246 = vadd.f32 0.0, %v6245
        %6247 = vmatmul.f32.gmra.mxu0 %v6208
        %v6248 = vpop.f32.mrf.mxu0
        %v6249 = vadd.f32 0.0, %v6248
        %6250 = vmatmul.f32.gmra.mxu0 %v6211
        %v6251 = vpop.f32.mrf.mxu0
        %v6252 = vadd.f32 0.0, %v6251
        %6253 = vmatmul.f32.gmra.mxu0 %v6214
        %v6254 = vpop.f32.mrf.mxu0
        %v6255 = vadd.f32 0.0, %v6254
        %6256 = vmatmul.f32.gmra.mxu0 %v6217
        %v6257 = vpop.f32.mrf.mxu0
        %v6258 = vadd.f32 0.0, %v6257
        %6259 = vdwg.mxu0
        %6260 = vrot.lane.b32.xlu0 %v4192, 32
        %v6261 = vpop.permute.xlu0 %6260
        %6262 = vrot.lane.b32.xlu0 %v4194, 32
        %v6263 = vpop.permute.xlu0 %6262
        %6264 = vrot.lane.b32.xlu0 %v4196, 32
        %v6265 = vpop.permute.xlu0 %6264
        %6266 = vrot.lane.b32.xlu0 %v4198, 32
        %v6267 = vpop.permute.xlu0 %6266
        %6268 = vrot.lane.b32.xlu0 %v4200, 32
        %v6269 = vpop.permute.xlu0 %6268
        %6270 = vrot.lane.b32.xlu0 %v4202, 32
        %v6271 = vpop.permute.xlu0 %6270
        %6272 = vrot.lane.b32.xlu0 %v4204, 32
        %v6273 = vpop.permute.xlu0 %6272
        %6274 = vrot.lane.b32.xlu0 %v4206, 32
        %v6275 = vpop.permute.xlu0 %6274
        %v6285 = vsel %vm368, %v6147, 0
        %v6288 = vsel %vm368, %v6148, 0
        %v6291 = vsel %vm368, %v6149, 0
        %v6294 = vsel %vm368, %v6150, 0
        %v6297 = vsel %vm368, %v6151, 0
        %v6300 = vsel %vm368, %v6152, 0
        %v6303 = vsel %vm368, %v6153, 0
        %v6306 = vsel %vm368, %v6154, 0
        %6308 = vmatpush.msra.mxu0 0.0
        %6309 = vmatpush.msra.mxu0 0.0
        %6310 = vmatpush.msra.mxu0 0.0
        %6311 = vmatpush.msra.mxu0 0.0
        %6312 = vmatpush.msra.mxu0 0.0
        %6313 = vmatpush.msra.mxu0 0.0
        %6314 = vmatpush.msra.mxu0 0.0
        %6315 = vmatpush.msra.mxu0 0.0
        %6316 = vmatpush.msra.mxu0 %v6275
        %6317 = vmatpush.msra.mxu0 %v6273
        %6318 = vmatpush.msra.mxu0 %v6271
        %6319 = vmatpush.msra.mxu0 %v6269
        %6320 = vmatpush.msra.mxu0 %v6267
        %6321 = vmatpush.msra.mxu0 %v6265
        %6322 = vmatpush.msra.mxu0 %v6263
        %6323 = vmatpush.msra.mxu0 %v6261
        %6324 = vmatmul.f32.gmra.mxu0 %v6285
        %v6325 = vpop.f32.mrf.mxu0
        %v6326 = vadd.f32 0.0, %v6325
        %6327 = vmatmul.f32.gmra.mxu0 %v6288
        %v6328 = vpop.f32.mrf.mxu0
        %v6329 = vadd.f32 0.0, %v6328
        %6330 = vmatmul.f32.gmra.mxu0 %v6291
        %v6331 = vpop.f32.mrf.mxu0
        %v6332 = vadd.f32 0.0, %v6331
        %6333 = vmatmul.f32.gmra.mxu0 %v6294
        %v6334 = vpop.f32.mrf.mxu0
        %v6335 = vadd.f32 0.0, %v6334
        %6336 = vmatmul.f32.gmra.mxu0 %v6297
        %v6337 = vpop.f32.mrf.mxu0
        %v6338 = vadd.f32 0.0, %v6337
        %6339 = vmatmul.f32.gmra.mxu0 %v6300
        %v6340 = vpop.f32.mrf.mxu0
        %v6341 = vadd.f32 0.0, %v6340
        %6342 = vmatmul.f32.gmra.mxu0 %v6303
        %v6343 = vpop.f32.mrf.mxu0
        %v6344 = vadd.f32 0.0, %v6343
        %6345 = vmatmul.f32.gmra.mxu0 %v6306
        %v6346 = vpop.f32.mrf.mxu0
        %v6347 = vadd.f32 0.0, %v6346
        %6348 = vdwg.mxu0
        %6349 = vrot.lane.b32.xlu0 %v4208, 32
        %v6350 = vpop.permute.xlu0 %6349
        %6351 = vrot.lane.b32.xlu0 %v4210, 32
        %v6352 = vpop.permute.xlu0 %6351
        %6353 = vrot.lane.b32.xlu0 %v4212, 32
        %v6354 = vpop.permute.xlu0 %6353
        %6355 = vrot.lane.b32.xlu0 %v4214, 32
        %v6356 = vpop.permute.xlu0 %6355
        %6357 = vrot.lane.b32.xlu0 %v4216, 32
        %v6358 = vpop.permute.xlu0 %6357
        %6359 = vrot.lane.b32.xlu0 %v4218, 32
        %v6360 = vpop.permute.xlu0 %6359
        %6361 = vrot.lane.b32.xlu0 %v4220, 32
        %v6362 = vpop.permute.xlu0 %6361
        %6363 = vrot.lane.b32.xlu0 %v4222, 32
        %v6364 = vpop.permute.xlu0 %6363
        %v6374 = vsel %vm368, %v6155, 0
        %v6377 = vsel %vm368, %v6156, 0
        %v6380 = vsel %vm368, %v6157, 0
        %v6383 = vsel %vm368, %v6158, 0
        %v6386 = vsel %vm368, %v6159, 0
        %v6389 = vsel %vm368, %v6160, 0
        %v6392 = vsel %vm368, %v6161, 0
        %v6395 = vsel %vm368, %v6162, 0
        %6397 = vmatpush.msra.mxu0 0.0
        %6398 = vmatpush.msra.mxu0 0.0
        %6399 = vmatpush.msra.mxu0 0.0
        %6400 = vmatpush.msra.mxu0 0.0
        %6401 = vmatpush.msra.mxu0 0.0
        %6402 = vmatpush.msra.mxu0 0.0
        %6403 = vmatpush.msra.mxu0 0.0
        %6404 = vmatpush.msra.mxu0 0.0
        %6405 = vmatpush.msra.mxu0 %v6364
        %6406 = vmatpush.msra.mxu0 %v6362
        %6407 = vmatpush.msra.mxu0 %v6360
        %6408 = vmatpush.msra.mxu0 %v6358
        %6409 = vmatpush.msra.mxu0 %v6356
        %6410 = vmatpush.msra.mxu0 %v6354
        %6411 = vmatpush.msra.mxu0 %v6352
        %6412 = vmatpush.msra.mxu0 %v6350
        %6413 = vmatmul.f32.gmra.mxu0 %v6374
        %v6414 = vpop.f32.mrf.mxu0
        %v6415 = vadd.f32 0.0, %v6414
        %6416 = vmatmul.f32.gmra.mxu0 %v6377
        %v6417 = vpop.f32.mrf.mxu0
        %v6418 = vadd.f32 0.0, %v6417
        %6419 = vmatmul.f32.gmra.mxu0 %v6380
        %v6420 = vpop.f32.mrf.mxu0
        %v6421 = vadd.f32 0.0, %v6420
        %6422 = vmatmul.f32.gmra.mxu0 %v6383
        %v6423 = vpop.f32.mrf.mxu0
        %v6424 = vadd.f32 0.0, %v6423
        %6425 = vmatmul.f32.gmra.mxu0 %v6386
        %v6426 = vpop.f32.mrf.mxu0
        %v6427 = vadd.f32 0.0, %v6426
        %6428 = vmatmul.f32.gmra.mxu0 %v6389
        %v6429 = vpop.f32.mrf.mxu0
        %v6430 = vadd.f32 0.0, %v6429
        %6431 = vmatmul.f32.gmra.mxu0 %v6392
        %v6432 = vpop.f32.mrf.mxu0
        %v6433 = vadd.f32 0.0, %v6432
        %6434 = vmatmul.f32.gmra.mxu0 %v6395
        %v6435 = vpop.f32.mrf.mxu0
        %v6436 = vadd.f32 0.0, %v6435
        %6437 = vdwg.mxu0
        %6438 = vrot.lane.b32.xlu0 %v4224, 32
        %v6439 = vpop.permute.xlu0 %6438
        %6440 = vrot.lane.b32.xlu0 %v4226, 32
        %v6441 = vpop.permute.xlu0 %6440
        %6442 = vrot.lane.b32.xlu0 %v4228, 32
        %v6443 = vpop.permute.xlu0 %6442
        %6444 = vrot.lane.b32.xlu0 %v4230, 32
        %v6445 = vpop.permute.xlu0 %6444
        %6446 = vrot.lane.b32.xlu0 %v4232, 32
        %v6447 = vpop.permute.xlu0 %6446
        %6448 = vrot.lane.b32.xlu0 %v4234, 32
        %v6449 = vpop.permute.xlu0 %6448
        %6450 = vrot.lane.b32.xlu0 %v4236, 32
        %v6451 = vpop.permute.xlu0 %6450
        %6452 = vrot.lane.b32.xlu0 %v4238, 32
        %v6453 = vpop.permute.xlu0 %6452
        %v6463 = vsel %vm368, %v6163, 0
        %v6466 = vsel %vm368, %v6164, 0
        %v6469 = vsel %vm368, %v6165, 0
        %v6472 = vsel %vm368, %v6166, 0
        %v6475 = vsel %vm368, %v6167, 0
        %v6478 = vsel %vm368, %v6168, 0
        %v6481 = vsel %vm368, %v6169, 0
        %v6484 = vsel %vm368, %v6170, 0
        %6486 = vmatpush.msra.mxu0 0.0
        %6487 = vmatpush.msra.mxu0 0.0
        %6488 = vmatpush.msra.mxu0 0.0
        %6489 = vmatpush.msra.mxu0 0.0
        %6490 = vmatpush.msra.mxu0 0.0
        %6491 = vmatpush.msra.mxu0 0.0
        %6492 = vmatpush.msra.mxu0 0.0
        %6493 = vmatpush.msra.mxu0 0.0
        %6494 = vmatpush.msra.mxu0 %v6453
        %6495 = vmatpush.msra.mxu0 %v6451
        %6496 = vmatpush.msra.mxu0 %v6449
        %6497 = vmatpush.msra.mxu0 %v6447
        %6498 = vmatpush.msra.mxu0 %v6445
        %6499 = vmatpush.msra.mxu0 %v6443
        %6500 = vmatpush.msra.mxu0 %v6441
        %6501 = vmatpush.msra.mxu0 %v6439
        %6502 = vmatmul.f32.gmra.mxu0 %v6463
        %v6503 = vpop.f32.mrf.mxu0
        %v6504 = vadd.f32 0.0, %v6503
        %6505 = vmatmul.f32.gmra.mxu0 %v6466
        %v6506 = vpop.f32.mrf.mxu0
        %v6507 = vadd.f32 0.0, %v6506
        %6508 = vmatmul.f32.gmra.mxu0 %v6469
        %v6509 = vpop.f32.mrf.mxu0
        %v6510 = vadd.f32 0.0, %v6509
        %6511 = vmatmul.f32.gmra.mxu0 %v6472
        %v6512 = vpop.f32.mrf.mxu0
        %v6513 = vadd.f32 0.0, %v6512
        %6514 = vmatmul.f32.gmra.mxu0 %v6475
        %v6515 = vpop.f32.mrf.mxu0
        %v6516 = vadd.f32 0.0, %v6515
        %6517 = vmatmul.f32.gmra.mxu0 %v6478
        %v6518 = vpop.f32.mrf.mxu0
        %v6519 = vadd.f32 0.0, %v6518
        %6520 = vmatmul.f32.gmra.mxu0 %v6481
        %v6521 = vpop.f32.mrf.mxu0
        %v6522 = vadd.f32 0.0, %v6521
        %6523 = vmatmul.f32.gmra.mxu0 %v6484
        %v6524 = vpop.f32.mrf.mxu0
        %v6525 = vadd.f32 0.0, %v6524
        %6526 = vdwg.mxu0
        %v6527 = vld [vmem:[#allocation2 + $0x18] sm:$0xff]
        %v6528 = vld [vmem:[#allocation2 + $0x40] sm:$0xff]
        %v6529 = vld [vmem:[#allocation2 + $0x68] sm:$0xff]
        %v6530 = vld [vmem:[#allocation2 + $0x90] sm:$0xff]
        %v6531 = vld [vmem:[#allocation2 + $0xb8] sm:$0xff]
        %v6532 = vld [vmem:[#allocation2 + $0xe0] sm:$0xff]
        %v6533 = vld [vmem:[#allocation2 + $0x108] sm:$0xff]
        %v6534 = vld [vmem:[#allocation2 + $0x130] sm:$0xff]
        %v6535 = vld [vmem:[#allocation2 + $0x158] sm:$0xff]
        %v6536 = vld [vmem:[#allocation2 + $0x180] sm:$0xff]
        %v6537 = vld [vmem:[#allocation2 + $0x1a8] sm:$0xff]
        %v6538 = vld [vmem:[#allocation2 + $0x1d0] sm:$0xff]
        %v6539 = vld [vmem:[#allocation2 + $0x1f8] sm:$0xff]
        %v6540 = vld [vmem:[#allocation2 + $0x220] sm:$0xff]
        %v6541 = vld [vmem:[#allocation2 + $0x248] sm:$0xff]
        %v6542 = vld [vmem:[#allocation2 + $0x270] sm:$0xff]
        %v6543 = vld [vmem:[#allocation2 + $0x298] sm:$0xff]
        %v6544 = vld [vmem:[#allocation2 + $0x2c0] sm:$0xff]
        %v6545 = vld [vmem:[#allocation2 + $0x2e8] sm:$0xff]
        %v6546 = vld [vmem:[#allocation2 + $0x310] sm:$0xff]
        %v6547 = vld [vmem:[#allocation2 + $0x338] sm:$0xff]
        %v6548 = vld [vmem:[#allocation2 + $0x360] sm:$0xff]
        %v6549 = vld [vmem:[#allocation2 + $0x388] sm:$0xff]
        %v6550 = vld [vmem:[#allocation2 + $0x3b0] sm:$0xff]
        %v6551 = vld [vmem:[#allocation2 + $0x3d8] sm:$0xff]
        %v6552 = vld [vmem:[#allocation2 + $0x400] sm:$0xff]
        %v6553 = vld [vmem:[#allocation2 + $0x428] sm:$0xff]
        %v6554 = vld [vmem:[#allocation2 + $0x450] sm:$0xff]
        %v6555 = vld [vmem:[#allocation2 + $0x478] sm:$0xff]
        %v6556 = vld [vmem:[#allocation2 + $0x4a0] sm:$0xff]
        %v6557 = vld [vmem:[#allocation2 + $0x4c8] sm:$0xff]
        %v6558 = vld [vmem:[#allocation2 + $0x4f0] sm:$0xff]
        %6567 = vrot.lane.b32.xlu0 %v6527, 96
        %v6568 = vpop.permute.xlu0 %6567
        %6569 = vrot.lane.b32.xlu0 %v6528, 96
        %v6570 = vpop.permute.xlu0 %6569
        %6571 = vrot.lane.b32.xlu0 %v6529, 96
        %v6572 = vpop.permute.xlu0 %6571
        %6573 = vrot.lane.b32.xlu0 %v6530, 96
        %v6574 = vpop.permute.xlu0 %6573
        %6575 = vrot.lane.b32.xlu0 %v6531, 96
        %v6576 = vpop.permute.xlu0 %6575
        %6577 = vrot.lane.b32.xlu0 %v6532, 96
        %v6578 = vpop.permute.xlu0 %6577
        %6579 = vrot.lane.b32.xlu0 %v6533, 96
        %v6580 = vpop.permute.xlu0 %6579
        %6581 = vrot.lane.b32.xlu0 %v6534, 96
        %v6582 = vpop.permute.xlu0 %6581
        %v6583 = vsel %vm1830, %v6527, 0
        %v6585 = vsel %vm1830, %v6528, 0
        %v6587 = vsel %vm1830, %v6529, 0
        %v6589 = vsel %vm1830, %v6530, 0
        %v6591 = vsel %vm1830, %v6531, 0
        %v6593 = vsel %vm1830, %v6532, 0
        %v6595 = vsel %vm1830, %v6533, 0
        %v6597 = vsel %vm1830, %v6534, 0
        %v6599 = vsel %vm1830, %v6568, 0
        %v6601 = vsel %vm1830, %v6570, 0
        %v6603 = vsel %vm1830, %v6572, 0
        %v6605 = vsel %vm1830, %v6574, 0
        %v6607 = vsel %vm1830, %v6576, 0
        %v6609 = vsel %vm1830, %v6578, 0
        %v6611 = vsel %vm1830, %v6580, 0
        %v6613 = vsel %vm1830, %v6582, 0
        %6615 = vmatpush.xpose.msra.mxu0 0.0
        %6616 = vmatpush.xpose.msra.mxu0 0.0
        %6617 = vmatpush.xpose.msra.mxu0 0.0
        %6618 = vmatpush.xpose.msra.mxu0 0.0
        %6619 = vmatpush.xpose.msra.mxu0 0.0
        %6620 = vmatpush.xpose.msra.mxu0 0.0
        %6621 = vmatpush.xpose.msra.mxu0 0.0
        %6622 = vmatpush.xpose.msra.mxu0 0.0
        %6623 = vmatpush.xpose.msra.mxu0 %v6613
        %6624 = vmatpush.xpose.msra.mxu0 %v6611
        %6625 = vmatpush.xpose.msra.mxu0 %v6609
        %6626 = vmatpush.xpose.msra.mxu0 %v6607
        %6627 = vmatpush.xpose.msra.mxu0 %v6605
        %6628 = vmatpush.xpose.msra.mxu0 %v6603
        %6629 = vmatpush.xpose.msra.mxu0 %v6601
        %6630 = vmatpush.xpose.msra.mxu0 %v6599
        %6631 = vmatmul.f32.gmra.mxu0 %v6583
        %v6632 = vpop.f32.mrf.mxu0
        %v6633 = vadd.f32 0.0, %v6632
        %6634 = vmatmul.f32.gmra.mxu0 %v6585
        %v6635 = vpop.f32.mrf.mxu0
        %v6636 = vadd.f32 0.0, %v6635
        %6637 = vmatmul.f32.gmra.mxu0 %v6587
        %v6638 = vpop.f32.mrf.mxu0
        %v6639 = vadd.f32 0.0, %v6638
        %6640 = vmatmul.f32.gmra.mxu0 %v6589
        %v6641 = vpop.f32.mrf.mxu0
        %v6642 = vadd.f32 0.0, %v6641
        %6643 = vmatmul.f32.gmra.mxu0 %v6591
        %v6644 = vpop.f32.mrf.mxu0
        %v6645 = vadd.f32 0.0, %v6644
        %6646 = vmatmul.f32.gmra.mxu0 %v6593
        %v6647 = vpop.f32.mrf.mxu0
        %v6648 = vadd.f32 0.0, %v6647
        %6649 = vmatmul.f32.gmra.mxu0 %v6595
        %v6650 = vpop.f32.mrf.mxu0
        %v6651 = vadd.f32 0.0, %v6650
        %6652 = vmatmul.f32.gmra.mxu0 %v6597
        %v6653 = vpop.f32.mrf.mxu0
        %v6654 = vadd.f32 0.0, %v6653
        %6655 = vdwg.mxu0
        %6664 = vrot.lane.b32.xlu0 %v6535, 96
        %v6665 = vpop.permute.xlu0 %6664
        %6666 = vrot.lane.b32.xlu0 %v6536, 96
        %v6667 = vpop.permute.xlu0 %6666
        %6668 = vrot.lane.b32.xlu0 %v6537, 96
        %v6669 = vpop.permute.xlu0 %6668
        %6670 = vrot.lane.b32.xlu0 %v6538, 96
        %v6671 = vpop.permute.xlu0 %6670
        %6672 = vrot.lane.b32.xlu0 %v6539, 96
        %v6673 = vpop.permute.xlu0 %6672
        %6674 = vrot.lane.b32.xlu0 %v6540, 96
        %v6675 = vpop.permute.xlu0 %6674
        %6676 = vrot.lane.b32.xlu0 %v6541, 96
        %v6677 = vpop.permute.xlu0 %6676
        %6678 = vrot.lane.b32.xlu0 %v6542, 96
        %v6679 = vpop.permute.xlu0 %6678
        %v6680 = vsel %vm1830, %v6535, 0
        %v6682 = vsel %vm1830, %v6536, 0
        %v6684 = vsel %vm1830, %v6537, 0
        %v6686 = vsel %vm1830, %v6538, 0
        %v6688 = vsel %vm1830, %v6539, 0
        %v6690 = vsel %vm1830, %v6540, 0
        %v6692 = vsel %vm1830, %v6541, 0
        %v6694 = vsel %vm1830, %v6542, 0
        %v6696 = vsel %vm1830, %v6665, 0
        %v6698 = vsel %vm1830, %v6667, 0
        %v6700 = vsel %vm1830, %v6669, 0
        %v6702 = vsel %vm1830, %v6671, 0
        %v6704 = vsel %vm1830, %v6673, 0
        %v6706 = vsel %vm1830, %v6675, 0
        %v6708 = vsel %vm1830, %v6677, 0
        %v6710 = vsel %vm1830, %v6679, 0
        %6712 = vmatpush.xpose.msra.mxu0 0.0
        %6713 = vmatpush.xpose.msra.mxu0 0.0
        %6714 = vmatpush.xpose.msra.mxu0 0.0
        %6715 = vmatpush.xpose.msra.mxu0 0.0
        %6716 = vmatpush.xpose.msra.mxu0 0.0
        %6717 = vmatpush.xpose.msra.mxu0 0.0
        %6718 = vmatpush.xpose.msra.mxu0 0.0
        %6719 = vmatpush.xpose.msra.mxu0 0.0
        %6720 = vmatpush.xpose.msra.mxu0 %v6710
        %6721 = vmatpush.xpose.msra.mxu0 %v6708
        %6722 = vmatpush.xpose.msra.mxu0 %v6706
        %6723 = vmatpush.xpose.msra.mxu0 %v6704
        %6724 = vmatpush.xpose.msra.mxu0 %v6702
        %6725 = vmatpush.xpose.msra.mxu0 %v6700
        %6726 = vmatpush.xpose.msra.mxu0 %v6698
        %6727 = vmatpush.xpose.msra.mxu0 %v6696
        %6728 = vmatmul.f32.gmra.mxu0 %v6680
        %v6729 = vpop.f32.mrf.mxu0
        %v6730 = vadd.f32 0.0, %v6729
        %6731 = vmatmul.f32.gmra.mxu0 %v6682
        %v6732 = vpop.f32.mrf.mxu0
        %v6733 = vadd.f32 0.0, %v6732
        %6734 = vmatmul.f32.gmra.mxu0 %v6684
        %v6735 = vpop.f32.mrf.mxu0
        %v6736 = vadd.f32 0.0, %v6735
        %6737 = vmatmul.f32.gmra.mxu0 %v6686
        %v6738 = vpop.f32.mrf.mxu0
        %v6739 = vadd.f32 0.0, %v6738
        %6740 = vmatmul.f32.gmra.mxu0 %v6688
        %v6741 = vpop.f32.mrf.mxu0
        %v6742 = vadd.f32 0.0, %v6741
        %6743 = vmatmul.f32.gmra.mxu0 %v6690
        %v6744 = vpop.f32.mrf.mxu0
        %v6745 = vadd.f32 0.0, %v6744
        %6746 = vmatmul.f32.gmra.mxu0 %v6692
        %v6747 = vpop.f32.mrf.mxu0
        %v6748 = vadd.f32 0.0, %v6747
        %6749 = vmatmul.f32.gmra.mxu0 %v6694
        %v6750 = vpop.f32.mrf.mxu0
        %v6751 = vadd.f32 0.0, %v6750
        %6752 = vdwg.mxu0
        %6761 = vrot.lane.b32.xlu0 %v6543, 96
        %v6762 = vpop.permute.xlu0 %6761
        %6763 = vrot.lane.b32.xlu0 %v6544, 96
        %v6764 = vpop.permute.xlu0 %6763
        %6765 = vrot.lane.b32.xlu0 %v6545, 96
        %v6766 = vpop.permute.xlu0 %6765
        %6767 = vrot.lane.b32.xlu0 %v6546, 96
        %v6768 = vpop.permute.xlu0 %6767
        %6769 = vrot.lane.b32.xlu0 %v6547, 96
        %v6770 = vpop.permute.xlu0 %6769
        %6771 = vrot.lane.b32.xlu0 %v6548, 96
        %v6772 = vpop.permute.xlu0 %6771
        %6773 = vrot.lane.b32.xlu0 %v6549, 96
        %v6774 = vpop.permute.xlu0 %6773
        %6775 = vrot.lane.b32.xlu0 %v6550, 96
        %v6776 = vpop.permute.xlu0 %6775
        %v6777 = vsel %vm1830, %v6543, 0
        %v6779 = vsel %vm1830, %v6544, 0
        %v6781 = vsel %vm1830, %v6545, 0
        %v6783 = vsel %vm1830, %v6546, 0
        %v6785 = vsel %vm1830, %v6547, 0
        %v6787 = vsel %vm1830, %v6548, 0
        %v6789 = vsel %vm1830, %v6549, 0
        %v6791 = vsel %vm1830, %v6550, 0
        %v6793 = vsel %vm1830, %v6762, 0
        %v6795 = vsel %vm1830, %v6764, 0
        %v6797 = vsel %vm1830, %v6766, 0
        %v6799 = vsel %vm1830, %v6768, 0
        %v6801 = vsel %vm1830, %v6770, 0
        %v6803 = vsel %vm1830, %v6772, 0
        %v6805 = vsel %vm1830, %v6774, 0
        %v6807 = vsel %vm1830, %v6776, 0
        %6809 = vmatpush.xpose.msra.mxu0 0.0
        %6810 = vmatpush.xpose.msra.mxu0 0.0
        %6811 = vmatpush.xpose.msra.mxu0 0.0
        %6812 = vmatpush.xpose.msra.mxu0 0.0
        %6813 = vmatpush.xpose.msra.mxu0 0.0
        %6814 = vmatpush.xpose.msra.mxu0 0.0
        %6815 = vmatpush.xpose.msra.mxu0 0.0
        %6816 = vmatpush.xpose.msra.mxu0 0.0
        %6817 = vmatpush.xpose.msra.mxu0 %v6807
        %6818 = vmatpush.xpose.msra.mxu0 %v6805
        %6819 = vmatpush.xpose.msra.mxu0 %v6803
        %6820 = vmatpush.xpose.msra.mxu0 %v6801
        %6821 = vmatpush.xpose.msra.mxu0 %v6799
        %6822 = vmatpush.xpose.msra.mxu0 %v6797
        %6823 = vmatpush.xpose.msra.mxu0 %v6795
        %6824 = vmatpush.xpose.msra.mxu0 %v6793
        %6825 = vmatmul.f32.gmra.mxu0 %v6777
        %v6826 = vpop.f32.mrf.mxu0
        %v6827 = vadd.f32 0.0, %v6826
        %6828 = vmatmul.f32.gmra.mxu0 %v6779
        %v6829 = vpop.f32.mrf.mxu0
        %v6830 = vadd.f32 0.0, %v6829
        %6831 = vmatmul.f32.gmra.mxu0 %v6781
        %v6832 = vpop.f32.mrf.mxu0
        %v6833 = vadd.f32 0.0, %v6832
        %6834 = vmatmul.f32.gmra.mxu0 %v6783
        %v6835 = vpop.f32.mrf.mxu0
        %v6836 = vadd.f32 0.0, %v6835
        %6837 = vmatmul.f32.gmra.mxu0 %v6785
        %v6838 = vpop.f32.mrf.mxu0
        %v6839 = vadd.f32 0.0, %v6838
        %6840 = vmatmul.f32.gmra.mxu0 %v6787
        %v6841 = vpop.f32.mrf.mxu0
        %v6842 = vadd.f32 0.0, %v6841
        %6843 = vmatmul.f32.gmra.mxu0 %v6789
        %v6844 = vpop.f32.mrf.mxu0
        %v6845 = vadd.f32 0.0, %v6844
        %6846 = vmatmul.f32.gmra.mxu0 %v6791
        %v6847 = vpop.f32.mrf.mxu0
        %v6848 = vadd.f32 0.0, %v6847
        %6849 = vdwg.mxu0
        %6858 = vrot.lane.b32.xlu0 %v6551, 96
        %v6859 = vpop.permute.xlu0 %6858
        %6860 = vrot.lane.b32.xlu0 %v6552, 96
        %v6861 = vpop.permute.xlu0 %6860
        %6862 = vrot.lane.b32.xlu0 %v6553, 96
        %v6863 = vpop.permute.xlu0 %6862
        %6864 = vrot.lane.b32.xlu0 %v6554, 96
        %v6865 = vpop.permute.xlu0 %6864
        %6866 = vrot.lane.b32.xlu0 %v6555, 96
        %v6867 = vpop.permute.xlu0 %6866
        %6868 = vrot.lane.b32.xlu0 %v6556, 96
        %v6869 = vpop.permute.xlu0 %6868
        %6870 = vrot.lane.b32.xlu0 %v6557, 96
        %v6871 = vpop.permute.xlu0 %6870
        %6872 = vrot.lane.b32.xlu0 %v6558, 96
        %v6873 = vpop.permute.xlu0 %6872
        %v6874 = vsel %vm1830, %v6551, 0
        %v6876 = vsel %vm1830, %v6552, 0
        %v6878 = vsel %vm1830, %v6553, 0
        %v6880 = vsel %vm1830, %v6554, 0
        %v6882 = vsel %vm1830, %v6555, 0
        %v6884 = vsel %vm1830, %v6556, 0
        %v6886 = vsel %vm1830, %v6557, 0
        %v6888 = vsel %vm1830, %v6558, 0
        %v6890 = vsel %vm1830, %v6859, 0
        %v6892 = vsel %vm1830, %v6861, 0
        %v6894 = vsel %vm1830, %v6863, 0
        %v6896 = vsel %vm1830, %v6865, 0
        %v6898 = vsel %vm1830, %v6867, 0
        %v6900 = vsel %vm1830, %v6869, 0
        %v6902 = vsel %vm1830, %v6871, 0
        %v6904 = vsel %vm1830, %v6873, 0
        %6906 = vmatpush.xpose.msra.mxu0 0.0
        %6907 = vmatpush.xpose.msra.mxu0 0.0
        %6908 = vmatpush.xpose.msra.mxu0 0.0
        %6909 = vmatpush.xpose.msra.mxu0 0.0
        %6910 = vmatpush.xpose.msra.mxu0 0.0
        %6911 = vmatpush.xpose.msra.mxu0 0.0
        %6912 = vmatpush.xpose.msra.mxu0 0.0
        %6913 = vmatpush.xpose.msra.mxu0 0.0
        %6914 = vmatpush.xpose.msra.mxu0 %v6904
        %6915 = vmatpush.xpose.msra.mxu0 %v6902
        %6916 = vmatpush.xpose.msra.mxu0 %v6900
        %6917 = vmatpush.xpose.msra.mxu0 %v6898
        %6918 = vmatpush.xpose.msra.mxu0 %v6896
        %6919 = vmatpush.xpose.msra.mxu0 %v6894
        %6920 = vmatpush.xpose.msra.mxu0 %v6892
        %6921 = vmatpush.xpose.msra.mxu0 %v6890
        %6922 = vmatmul.f32.gmra.mxu0 %v6874
        %v6923 = vpop.f32.mrf.mxu0
        %v6924 = vadd.f32 0.0, %v6923
        %6925 = vmatmul.f32.gmra.mxu0 %v6876
        %v6926 = vpop.f32.mrf.mxu0
        %v6927 = vadd.f32 0.0, %v6926
        %6928 = vmatmul.f32.gmra.mxu0 %v6878
        %v6929 = vpop.f32.mrf.mxu0
        %v6930 = vadd.f32 0.0, %v6929
        %6931 = vmatmul.f32.gmra.mxu0 %v6880
        %v6932 = vpop.f32.mrf.mxu0
        %v6933 = vadd.f32 0.0, %v6932
        %6934 = vmatmul.f32.gmra.mxu0 %v6882
        %v6935 = vpop.f32.mrf.mxu0
        %v6936 = vadd.f32 0.0, %v6935
        %6937 = vmatmul.f32.gmra.mxu0 %v6884
        %v6938 = vpop.f32.mrf.mxu0
        %v6939 = vadd.f32 0.0, %v6938
        %6940 = vmatmul.f32.gmra.mxu0 %v6886
        %v6941 = vpop.f32.mrf.mxu0
        %v6942 = vadd.f32 0.0, %v6941
        %6943 = vmatmul.f32.gmra.mxu0 %v6888
        %v6944 = vpop.f32.mrf.mxu0
        %v6945 = vadd.f32 0.0, %v6944
        %6946 = vdwg.mxu0
        %v6947 = vsel %vm2203, %v6633, -inf
        %v6948 = vsel %vm2204, %v6636, -inf
        %v6949 = vsel %vm2205, %v6639, -inf
        %v6950 = vsel %vm2206, %v6642, -inf
        %v6951 = vsel %vm2207, %v6645, -inf
        %v6952 = vsel %vm2208, %v6648, -inf
        %v6953 = vsel %vm2209, %v6651, -inf
        %v6954 = vsel %vm2210, %v6654, -inf
        %v6955 = vsel %vm2203, %v6730, -inf
        %v6956 = vsel %vm2204, %v6733, -inf
        %v6957 = vsel %vm2205, %v6736, -inf
        %v6958 = vsel %vm2206, %v6739, -inf
        %v6959 = vsel %vm2207, %v6742, -inf
        %v6960 = vsel %vm2208, %v6745, -inf
        %v6961 = vsel %vm2209, %v6748, -inf
        %v6962 = vsel %vm2210, %v6751, -inf
        %v6963 = vsel %vm2203, %v6827, -inf
        %v6964 = vsel %vm2204, %v6830, -inf
        %v6965 = vsel %vm2205, %v6833, -inf
        %v6966 = vsel %vm2206, %v6836, -inf
        %v6967 = vsel %vm2207, %v6839, -inf
        %v6968 = vsel %vm2208, %v6842, -inf
        %v6969 = vsel %vm2209, %v6845, -inf
        %v6970 = vsel %vm2210, %v6848, -inf
        %v6971 = vsel %vm2203, %v6924, -inf
        %v6972 = vsel %vm2204, %v6927, -inf
        %v6973 = vsel %vm2205, %v6930, -inf
        %v6974 = vsel %vm2206, %v6933, -inf
        %v6975 = vsel %vm2207, %v6936, -inf
        %v6976 = vsel %vm2208, %v6939, -inf
        %v6977 = vsel %vm2209, %v6942, -inf
        %v6978 = vsel %vm2210, %v6945, -inf
        %v6979 = vsel %vm368, %v6947, -inf
        %6980 = vmax.xlane.f32.xlu0 %v6979
        %v6981 = vpop.xlane.xlu0 %6980
        %v6982 = vsel %vm368, %v6948, -inf
        %6983 = vmax.xlane.f32.xlu0 %v6982
        %v6984 = vpop.xlane.xlu0 %6983
        %v6985 = vsel %vm368, %v6949, -inf
        %6986 = vmax.xlane.f32.xlu0 %v6985
        %v6987 = vpop.xlane.xlu0 %6986
        %v6988 = vsel %vm368, %v6950, -inf
        %6989 = vmax.xlane.f32.xlu0 %v6988
        %v6990 = vpop.xlane.xlu0 %6989
        %v6991 = vsel %vm368, %v6951, -inf
        %6992 = vmax.xlane.f32.xlu0 %v6991
        %v6993 = vpop.xlane.xlu0 %6992
        %v6994 = vsel %vm368, %v6952, -inf
        %6995 = vmax.xlane.f32.xlu0 %v6994
        %v6996 = vpop.xlane.xlu0 %6995
        %v6997 = vsel %vm368, %v6953, -inf
        %6998 = vmax.xlane.f32.xlu0 %v6997
        %v6999 = vpop.xlane.xlu0 %6998
        %v7000 = vsel %vm368, %v6954, -inf
        %7001 = vmax.xlane.f32.xlu0 %v7000
        %v7002 = vpop.xlane.xlu0 %7001
        %v7003 = vsel %vm368, %v6955, -inf
        %7004 = vmax.xlane.f32.xlu0 %v7003
        %v7005 = vpop.xlane.xlu0 %7004
        %v7006 = vsel %vm368, %v6956, -inf
        %7007 = vmax.xlane.f32.xlu0 %v7006
        %v7008 = vpop.xlane.xlu0 %7007
        %v7009 = vsel %vm368, %v6957, -inf
        %7010 = vmax.xlane.f32.xlu0 %v7009
        %v7011 = vpop.xlane.xlu0 %7010
        %v7012 = vsel %vm368, %v6958, -inf
        %7013 = vmax.xlane.f32.xlu0 %v7012
        %v7014 = vpop.xlane.xlu0 %7013
        %v7015 = vsel %vm368, %v6959, -inf
        %7016 = vmax.xlane.f32.xlu0 %v7015
        %v7017 = vpop.xlane.xlu0 %7016
        %v7018 = vsel %vm368, %v6960, -inf
        %7019 = vmax.xlane.f32.xlu0 %v7018
        %v7020 = vpop.xlane.xlu0 %7019
        %v7021 = vsel %vm368, %v6961, -inf
        %7022 = vmax.xlane.f32.xlu0 %v7021
        %v7023 = vpop.xlane.xlu0 %7022
        %v7024 = vsel %vm368, %v6962, -inf
        %7025 = vmax.xlane.f32.xlu0 %v7024
        %v7026 = vpop.xlane.xlu0 %7025
        %v7027 = vsel %vm368, %v6963, -inf
        %7028 = vmax.xlane.f32.xlu0 %v7027
        %v7029 = vpop.xlane.xlu0 %7028
        %v7030 = vsel %vm368, %v6964, -inf
        %7031 = vmax.xlane.f32.xlu0 %v7030
        %v7032 = vpop.xlane.xlu0 %7031
        %v7033 = vsel %vm368, %v6965, -inf
        %7034 = vmax.xlane.f32.xlu0 %v7033
        %v7035 = vpop.xlane.xlu0 %7034
        %v7036 = vsel %vm368, %v6966, -inf
        %7037 = vmax.xlane.f32.xlu0 %v7036
        %v7038 = vpop.xlane.xlu0 %7037
        %v7039 = vsel %vm368, %v6967, -inf
        %7040 = vmax.xlane.f32.xlu0 %v7039
        %v7041 = vpop.xlane.xlu0 %7040
        %v7042 = vsel %vm368, %v6968, -inf
        %7043 = vmax.xlane.f32.xlu0 %v7042
        %v7044 = vpop.xlane.xlu0 %7043
        %v7045 = vsel %vm368, %v6969, -inf
        %7046 = vmax.xlane.f32.xlu0 %v7045
        %v7047 = vpop.xlane.xlu0 %7046
        %v7048 = vsel %vm368, %v6970, -inf
        %7049 = vmax.xlane.f32.xlu0 %v7048
        %v7050 = vpop.xlane.xlu0 %7049
        %v7051 = vsel %vm368, %v6971, -inf
        %7052 = vmax.xlane.f32.xlu0 %v7051
        %v7053 = vpop.xlane.xlu0 %7052
        %v7054 = vsel %vm368, %v6972, -inf
        %7055 = vmax.xlane.f32.xlu0 %v7054
        %v7056 = vpop.xlane.xlu0 %7055
        %v7057 = vsel %vm368, %v6973, -inf
        %7058 = vmax.xlane.f32.xlu0 %v7057
        %v7059 = vpop.xlane.xlu0 %7058
        %v7060 = vsel %vm368, %v6974, -inf
        %7061 = vmax.xlane.f32.xlu0 %v7060
        %v7062 = vpop.xlane.xlu0 %7061
        %v7063 = vsel %vm368, %v6975, -inf
        %7064 = vmax.xlane.f32.xlu0 %v7063
        %v7065 = vpop.xlane.xlu0 %7064
        %v7066 = vsel %vm368, %v6976, -inf
        %7067 = vmax.xlane.f32.xlu0 %v7066
        %v7068 = vpop.xlane.xlu0 %7067
        %v7069 = vsel %vm368, %v6977, -inf
        %7070 = vmax.xlane.f32.xlu0 %v7069
        %v7071 = vpop.xlane.xlu0 %7070
        %v7072 = vsel %vm368, %v6978, -inf
        %7073 = vmax.xlane.f32.xlu0 %v7072
        %v7074 = vpop.xlane.xlu0 %7073
        %v7075 = vsub.f32 %v6947, %v6981
        %v7076 = vsub.f32 %v6948, %v6984
        %v7077 = vsub.f32 %v6949, %v6987
        %v7078 = vsub.f32 %v6950, %v6990
        %v7079 = vsub.f32 %v6951, %v6993
        %v7080 = vsub.f32 %v6952, %v6996
        %v7081 = vsub.f32 %v6953, %v6999
        %v7082 = vsub.f32 %v6954, %v7002
        %v7083 = vsub.f32 %v6955, %v7005
        %v7084 = vsub.f32 %v6956, %v7008
        %v7085 = vsub.f32 %v6957, %v7011
        %v7086 = vsub.f32 %v6958, %v7014
        %v7087 = vsub.f32 %v6959, %v7017
        %v7088 = vsub.f32 %v6960, %v7020
        %v7089 = vsub.f32 %v6961, %v7023
        %v7090 = vsub.f32 %v6962, %v7026
        %v7091 = vsub.f32 %v6963, %v7029
        %v7092 = vsub.f32 %v6964, %v7032
        %v7093 = vsub.f32 %v6965, %v7035
        %v7094 = vsub.f32 %v6966, %v7038
        %v7095 = vsub.f32 %v6967, %v7041
        %v7096 = vsub.f32 %v6968, %v7044
        %v7097 = vsub.f32 %v6969, %v7047
        %v7098 = vsub.f32 %v6970, %v7050
        %v7099 = vsub.f32 %v6971, %v7053
        %v7100 = vsub.f32 %v6972, %v7056
        %v7101 = vsub.f32 %v6973, %v7059
        %v7102 = vsub.f32 %v6974, %v7062
        %v7103 = vsub.f32 %v6975, %v7065
        %v7104 = vsub.f32 %v6976, %v7068
        %v7105 = vsub.f32 %v6977, %v7071
        %v7106 = vsub.f32 %v6978, %v7074
        %v7107 = vmul.f32 %v7075, 1.442695
        %v7108 = vpow.pop %v7107
        %v7109 = vmul.f32 %v7076, 1.442695
        %v7110 = vpow.pop %v7109
        %v7111 = vmul.f32 %v7077, 1.442695
        %v7112 = vpow.pop %v7111
        %v7113 = vmul.f32 %v7078, 1.442695
        %v7114 = vpow.pop %v7113
        %v7115 = vmul.f32 %v7079, 1.442695
        %v7116 = vpow.pop %v7115
        %v7117 = vmul.f32 %v7080, 1.442695
        %v7118 = vpow.pop %v7117
        %v7119 = vmul.f32 %v7081, 1.442695
        %v7120 = vpow.pop %v7119
        %v7121 = vmul.f32 %v7082, 1.442695
        %v7122 = vpow.pop %v7121
        %v7123 = vmul.f32 %v7083, 1.442695
        %v7124 = vpow.pop %v7123
        %v7125 = vmul.f32 %v7084, 1.442695
        %v7126 = vpow.pop %v7125
        %v7127 = vmul.f32 %v7085, 1.442695
        %v7128 = vpow.pop %v7127
        %v7129 = vmul.f32 %v7086, 1.442695
        %v7130 = vpow.pop %v7129
        %v7131 = vmul.f32 %v7087, 1.442695
        %v7132 = vpow.pop %v7131
        %v7133 = vmul.f32 %v7088, 1.442695
        %v7134 = vpow.pop %v7133
        %v7135 = vmul.f32 %v7089, 1.442695
        %v7136 = vpow.pop %v7135
        %v7137 = vmul.f32 %v7090, 1.442695
        %v7138 = vpow.pop %v7137
        %v7139 = vmul.f32 %v7091, 1.442695
        %v7140 = vpow.pop %v7139
        %v7141 = vmul.f32 %v7092, 1.442695
        %v7142 = vpow.pop %v7141
        %v7143 = vmul.f32 %v7093, 1.442695
        %v7144 = vpow.pop %v7143
        %v7145 = vmul.f32 %v7094, 1.442695
        %v7146 = vpow.pop %v7145
        %v7147 = vmul.f32 %v7095, 1.442695
        %v7148 = vpow.pop %v7147
        %v7149 = vmul.f32 %v7096, 1.442695
        %v7150 = vpow.pop %v7149
        %v7151 = vmul.f32 %v7097, 1.442695
        %v7152 = vpow.pop %v7151
        %v7153 = vmul.f32 %v7098, 1.442695
        %v7154 = vpow.pop %v7153
        %v7155 = vmul.f32 %v7099, 1.442695
        %v7156 = vpow.pop %v7155
        %v7157 = vmul.f32 %v7100, 1.442695
        %v7158 = vpow.pop %v7157
        %v7159 = vmul.f32 %v7101, 1.442695
        %v7160 = vpow.pop %v7159
        %v7161 = vmul.f32 %v7102, 1.442695
        %v7162 = vpow.pop %v7161
        %v7163 = vmul.f32 %v7103, 1.442695
        %v7164 = vpow.pop %v7163
        %v7165 = vmul.f32 %v7104, 1.442695
        %v7166 = vpow.pop %v7165
        %v7167 = vmul.f32 %v7105, 1.442695
        %v7168 = vpow.pop %v7167
        %v7169 = vmul.f32 %v7106, 1.442695
        %v7170 = vpow.pop %v7169
        %v7171 = vsel %vm368, %v7108, 0.0
        %7172 = vadd.xlane.f32.xlu0 %v7171
        %v7173 = vpop.xlane.xlu0 %7172
        %v7174 = vsel %vm368, %v7110, 0.0
        %7175 = vadd.xlane.f32.xlu0 %v7174
        %v7176 = vpop.xlane.xlu0 %7175
        %v7177 = vsel %vm368, %v7112, 0.0
        %7178 = vadd.xlane.f32.xlu0 %v7177
        %v7179 = vpop.xlane.xlu0 %7178
        %v7180 = vsel %vm368, %v7114, 0.0
        %7181 = vadd.xlane.f32.xlu0 %v7180
        %v7182 = vpop.xlane.xlu0 %7181
        %v7183 = vsel %vm368, %v7116, 0.0
        %7184 = vadd.xlane.f32.xlu0 %v7183
        %v7185 = vpop.xlane.xlu0 %7184
        %v7186 = vsel %vm368, %v7118, 0.0
        %7187 = vadd.xlane.f32.xlu0 %v7186
        %v7188 = vpop.xlane.xlu0 %7187
        %v7189 = vsel %vm368, %v7120, 0.0
        %7190 = vadd.xlane.f32.xlu0 %v7189
        %v7191 = vpop.xlane.xlu0 %7190
        %v7192 = vsel %vm368, %v7122, 0.0
        %7193 = vadd.xlane.f32.xlu0 %v7192
        %v7194 = vpop.xlane.xlu0 %7193
        %v7195 = vsel %vm368, %v7124, 0.0
        %7196 = vadd.xlane.f32.xlu0 %v7195
        %v7197 = vpop.xlane.xlu0 %7196
        %v7198 = vsel %vm368, %v7126, 0.0
        %7199 = vadd.xlane.f32.xlu0 %v7198
        %v7200 = vpop.xlane.xlu0 %7199
        %v7201 = vsel %vm368, %v7128, 0.0
        %7202 = vadd.xlane.f32.xlu0 %v7201
        %v7203 = vpop.xlane.xlu0 %7202
        %v7204 = vsel %vm368, %v7130, 0.0
        %7205 = vadd.xlane.f32.xlu0 %v7204
        %v7206 = vpop.xlane.xlu0 %7205
        %v7207 = vsel %vm368, %v7132, 0.0
        %7208 = vadd.xlane.f32.xlu0 %v7207
        %v7209 = vpop.xlane.xlu0 %7208
        %v7210 = vsel %vm368, %v7134, 0.0
        %7211 = vadd.xlane.f32.xlu0 %v7210
        %v7212 = vpop.xlane.xlu0 %7211
        %v7213 = vsel %vm368, %v7136, 0.0
        %7214 = vadd.xlane.f32.xlu0 %v7213
        %v7215 = vpop.xlane.xlu0 %7214
        %v7216 = vsel %vm368, %v7138, 0.0
        %7217 = vadd.xlane.f32.xlu0 %v7216
        %v7218 = vpop.xlane.xlu0 %7217
        %v7219 = vsel %vm368, %v7140, 0.0
        %7220 = vadd.xlane.f32.xlu0 %v7219
        %v7221 = vpop.xlane.xlu0 %7220
        %v7222 = vsel %vm368, %v7142, 0.0
        %7223 = vadd.xlane.f32.xlu0 %v7222
        %v7224 = vpop.xlane.xlu0 %7223
        %v7225 = vsel %vm368, %v7144, 0.0
        %7226 = vadd.xlane.f32.xlu0 %v7225
        %v7227 = vpop.xlane.xlu0 %7226
        %v7228 = vsel %vm368, %v7146, 0.0
        %7229 = vadd.xlane.f32.xlu0 %v7228
        %v7230 = vpop.xlane.xlu0 %7229
        %v7231 = vsel %vm368, %v7148, 0.0
        %7232 = vadd.xlane.f32.xlu0 %v7231
        %v7233 = vpop.xlane.xlu0 %7232
        %v7234 = vsel %vm368, %v7150, 0.0
        %7235 = vadd.xlane.f32.xlu0 %v7234
        %v7236 = vpop.xlane.xlu0 %7235
        %v7237 = vsel %vm368, %v7152, 0.0
        %7238 = vadd.xlane.f32.xlu0 %v7237
        %v7239 = vpop.xlane.xlu0 %7238
        %v7240 = vsel %vm368, %v7154, 0.0
        %7241 = vadd.xlane.f32.xlu0 %v7240
        %v7242 = vpop.xlane.xlu0 %7241
        %v7243 = vsel %vm368, %v7156, 0.0
        %7244 = vadd.xlane.f32.xlu0 %v7243
        %v7245 = vpop.xlane.xlu0 %7244
        %v7246 = vsel %vm368, %v7158, 0.0
        %7247 = vadd.xlane.f32.xlu0 %v7246
        %v7248 = vpop.xlane.xlu0 %7247
        %v7249 = vsel %vm368, %v7160, 0.0
        %7250 = vadd.xlane.f32.xlu0 %v7249
        %v7251 = vpop.xlane.xlu0 %7250
        %v7252 = vsel %vm368, %v7162, 0.0
        %7253 = vadd.xlane.f32.xlu0 %v7252
        %v7254 = vpop.xlane.xlu0 %7253
        %v7255 = vsel %vm368, %v7164, 0.0
        %7256 = vadd.xlane.f32.xlu0 %v7255
        %v7257 = vpop.xlane.xlu0 %7256
        %v7258 = vsel %vm368, %v7166, 0.0
        %7259 = vadd.xlane.f32.xlu0 %v7258
        %v7260 = vpop.xlane.xlu0 %7259
        %v7261 = vsel %vm368, %v7168, 0.0
        %7262 = vadd.xlane.f32.xlu0 %v7261
        %v7263 = vpop.xlane.xlu0 %7262
        %v7264 = vsel %vm368, %v7170, 0.0
        %7265 = vadd.xlane.f32.xlu0 %v7264
        %v7266 = vpop.xlane.xlu0 %7265
        %v7267 = vrcp.pop %v7173
        %v7268 = vrcp.pop %v7176
        %v7269 = vrcp.pop %v7179
        %v7270 = vrcp.pop %v7182
        %v7271 = vrcp.pop %v7185
        %v7272 = vrcp.pop %v7188
        %v7273 = vrcp.pop %v7191
        %v7274 = vrcp.pop %v7194
        %v7275 = vrcp.pop %v7197
        %v7276 = vrcp.pop %v7200
        %v7277 = vrcp.pop %v7203
        %v7278 = vrcp.pop %v7206
        %v7279 = vrcp.pop %v7209
        %v7280 = vrcp.pop %v7212
        %v7281 = vrcp.pop %v7215
        %v7282 = vrcp.pop %v7218
        %v7283 = vrcp.pop %v7221
        %v7284 = vrcp.pop %v7224
        %v7285 = vrcp.pop %v7227
        %v7286 = vrcp.pop %v7230
        %v7287 = vrcp.pop %v7233
        %v7288 = vrcp.pop %v7236
        %v7289 = vrcp.pop %v7239
        %v7290 = vrcp.pop %v7242
        %v7291 = vrcp.pop %v7245
        %v7292 = vrcp.pop %v7248
        %v7293 = vrcp.pop %v7251
        %v7294 = vrcp.pop %v7254
        %v7295 = vrcp.pop %v7257
        %v7296 = vrcp.pop %v7260
        %v7297 = vrcp.pop %v7263
        %v7298 = vrcp.pop %v7266
        %v7299 = vmul.f32 %v7108, %v7267
        %v7300 = vmul.f32 %v7110, %v7268
        %v7301 = vmul.f32 %v7112, %v7269
        %v7302 = vmul.f32 %v7114, %v7270
        %v7303 = vmul.f32 %v7116, %v7271
        %v7304 = vmul.f32 %v7118, %v7272
        %v7305 = vmul.f32 %v7120, %v7273
        %v7306 = vmul.f32 %v7122, %v7274
        %v7307 = vmul.f32 %v7124, %v7275
        %v7308 = vmul.f32 %v7126, %v7276
        %v7309 = vmul.f32 %v7128, %v7277
        %v7310 = vmul.f32 %v7130, %v7278
        %v7311 = vmul.f32 %v7132, %v7279
        %v7312 = vmul.f32 %v7134, %v7280
        %v7313 = vmul.f32 %v7136, %v7281
        %v7314 = vmul.f32 %v7138, %v7282
        %v7315 = vmul.f32 %v7140, %v7283
        %v7316 = vmul.f32 %v7142, %v7284
        %v7317 = vmul.f32 %v7144, %v7285
        %v7318 = vmul.f32 %v7146, %v7286
        %v7319 = vmul.f32 %v7148, %v7287
        %v7320 = vmul.f32 %v7150, %v7288
        %v7321 = vmul.f32 %v7152, %v7289
        %v7322 = vmul.f32 %v7154, %v7290
        %v7323 = vmul.f32 %v7156, %v7291
        %v7324 = vmul.f32 %v7158, %v7292
        %v7325 = vmul.f32 %v7160, %v7293
        %v7326 = vmul.f32 %v7162, %v7294
        %v7327 = vmul.f32 %v7164, %v7295
        %v7328 = vmul.f32 %v7166, %v7296
        %v7329 = vmul.f32 %v7168, %v7297
        %v7330 = vmul.f32 %v7170, %v7298
        %7331 = vrot.lane.b32.xlu0 %v6527, 64
        %v7332 = vpop.permute.xlu0 %7331
        %7333 = vrot.lane.b32.xlu0 %v6528, 64
        %v7334 = vpop.permute.xlu0 %7333
        %7335 = vrot.lane.b32.xlu0 %v6529, 64
        %v7336 = vpop.permute.xlu0 %7335
        %7337 = vrot.lane.b32.xlu0 %v6530, 64
        %v7338 = vpop.permute.xlu0 %7337
        %7339 = vrot.lane.b32.xlu0 %v6531, 64
        %v7340 = vpop.permute.xlu0 %7339
        %7341 = vrot.lane.b32.xlu0 %v6532, 64
        %v7342 = vpop.permute.xlu0 %7341
        %7343 = vrot.lane.b32.xlu0 %v6533, 64
        %v7344 = vpop.permute.xlu0 %7343
        %7345 = vrot.lane.b32.xlu0 %v6534, 64
        %v7346 = vpop.permute.xlu0 %7345
        %v7356 = vsel %vm368, %v7299, 0
        %v7359 = vsel %vm368, %v7300, 0
        %v7362 = vsel %vm368, %v7301, 0
        %v7365 = vsel %vm368, %v7302, 0
        %v7368 = vsel %vm368, %v7303, 0
        %v7371 = vsel %vm368, %v7304, 0
        %v7374 = vsel %vm368, %v7305, 0
        %v7377 = vsel %vm368, %v7306, 0
        %7379 = vmatpush.msra.mxu0 0.0
        %7380 = vmatpush.msra.mxu0 0.0
        %7381 = vmatpush.msra.mxu0 0.0
        %7382 = vmatpush.msra.mxu0 0.0
        %7383 = vmatpush.msra.mxu0 0.0
        %7384 = vmatpush.msra.mxu0 0.0
        %7385 = vmatpush.msra.mxu0 0.0
        %7386 = vmatpush.msra.mxu0 0.0
        %7387 = vmatpush.msra.mxu0 %v7346
        %7388 = vmatpush.msra.mxu0 %v7344
        %7389 = vmatpush.msra.mxu0 %v7342
        %7390 = vmatpush.msra.mxu0 %v7340
        %7391 = vmatpush.msra.mxu0 %v7338
        %7392 = vmatpush.msra.mxu0 %v7336
        %7393 = vmatpush.msra.mxu0 %v7334
        %7394 = vmatpush.msra.mxu0 %v7332
        %7395 = vmatmul.f32.gmra.mxu0 %v7356
        %v7396 = vpop.f32.mrf.mxu0
        %v7397 = vadd.f32 0.0, %v7396
        %7398 = vmatmul.f32.gmra.mxu0 %v7359
        %v7399 = vpop.f32.mrf.mxu0
        %v7400 = vadd.f32 0.0, %v7399
        %7401 = vmatmul.f32.gmra.mxu0 %v7362
        %v7402 = vpop.f32.mrf.mxu0
        %v7403 = vadd.f32 0.0, %v7402
        %7404 = vmatmul.f32.gmra.mxu0 %v7365
        %v7405 = vpop.f32.mrf.mxu0
        %v7406 = vadd.f32 0.0, %v7405
        %7407 = vmatmul.f32.gmra.mxu0 %v7368
        %v7408 = vpop.f32.mrf.mxu0
        %v7409 = vadd.f32 0.0, %v7408
        %7410 = vmatmul.f32.gmra.mxu0 %v7371
        %v7411 = vpop.f32.mrf.mxu0
        %v7412 = vadd.f32 0.0, %v7411
        %7413 = vmatmul.f32.gmra.mxu0 %v7374
        %v7414 = vpop.f32.mrf.mxu0
        %v7415 = vadd.f32 0.0, %v7414
        %7416 = vmatmul.f32.gmra.mxu0 %v7377
        %v7417 = vpop.f32.mrf.mxu0
        %v7418 = vadd.f32 0.0, %v7417
        %7419 = vdwg.mxu0
        %7420 = vrot.lane.b32.xlu0 %v6535, 64
        %v7421 = vpop.permute.xlu0 %7420
        %7422 = vrot.lane.b32.xlu0 %v6536, 64
        %v7423 = vpop.permute.xlu0 %7422
        %7424 = vrot.lane.b32.xlu0 %v6537, 64
        %v7425 = vpop.permute.xlu0 %7424
        %7426 = vrot.lane.b32.xlu0 %v6538, 64
        %v7427 = vpop.permute.xlu0 %7426
        %7428 = vrot.lane.b32.xlu0 %v6539, 64
        %v7429 = vpop.permute.xlu0 %7428
        %7430 = vrot.lane.b32.xlu0 %v6540, 64
        %v7431 = vpop.permute.xlu0 %7430
        %7432 = vrot.lane.b32.xlu0 %v6541, 64
        %v7433 = vpop.permute.xlu0 %7432
        %7434 = vrot.lane.b32.xlu0 %v6542, 64
        %v7435 = vpop.permute.xlu0 %7434
        %v7445 = vsel %vm368, %v7307, 0
        %v7448 = vsel %vm368, %v7308, 0
        %v7451 = vsel %vm368, %v7309, 0
        %v7454 = vsel %vm368, %v7310, 0
        %v7457 = vsel %vm368, %v7311, 0
        %v7460 = vsel %vm368, %v7312, 0
        %v7463 = vsel %vm368, %v7313, 0
        %v7466 = vsel %vm368, %v7314, 0
        %7468 = vmatpush.msra.mxu0 0.0
        %7469 = vmatpush.msra.mxu0 0.0
        %7470 = vmatpush.msra.mxu0 0.0
        %7471 = vmatpush.msra.mxu0 0.0
        %7472 = vmatpush.msra.mxu0 0.0
        %7473 = vmatpush.msra.mxu0 0.0
        %7474 = vmatpush.msra.mxu0 0.0
        %7475 = vmatpush.msra.mxu0 0.0
        %7476 = vmatpush.msra.mxu0 %v7435
        %7477 = vmatpush.msra.mxu0 %v7433
        %7478 = vmatpush.msra.mxu0 %v7431
        %7479 = vmatpush.msra.mxu0 %v7429
        %7480 = vmatpush.msra.mxu0 %v7427
        %7481 = vmatpush.msra.mxu0 %v7425
        %7482 = vmatpush.msra.mxu0 %v7423
        %7483 = vmatpush.msra.mxu0 %v7421
        %7484 = vmatmul.f32.gmra.mxu0 %v7445
        %v7485 = vpop.f32.mrf.mxu0
        %v7486 = vadd.f32 0.0, %v7485
        %7487 = vmatmul.f32.gmra.mxu0 %v7448
        %v7488 = vpop.f32.mrf.mxu0
        %v7489 = vadd.f32 0.0, %v7488
        %7490 = vmatmul.f32.gmra.mxu0 %v7451
        %v7491 = vpop.f32.mrf.mxu0
        %v7492 = vadd.f32 0.0, %v7491
        %7493 = vmatmul.f32.gmra.mxu0 %v7454
        %v7494 = vpop.f32.mrf.mxu0
        %v7495 = vadd.f32 0.0, %v7494
        %7496 = vmatmul.f32.gmra.mxu0 %v7457
        %v7497 = vpop.f32.mrf.mxu0
        %v7498 = vadd.f32 0.0, %v7497
        %7499 = vmatmul.f32.gmra.mxu0 %v7460
        %v7500 = vpop.f32.mrf.mxu0
        %v7501 = vadd.f32 0.0, %v7500
        %7502 = vmatmul.f32.gmra.mxu0 %v7463
        %v7503 = vpop.f32.mrf.mxu0
        %v7504 = vadd.f32 0.0, %v7503
        %7505 = vmatmul.f32.gmra.mxu0 %v7466
        %v7506 = vpop.f32.mrf.mxu0
        %v7507 = vadd.f32 0.0, %v7506
        %7508 = vdwg.mxu0
        %7509 = vrot.lane.b32.xlu0 %v6543, 64
        %v7510 = vpop.permute.xlu0 %7509
        %7511 = vrot.lane.b32.xlu0 %v6544, 64
        %v7512 = vpop.permute.xlu0 %7511
        %7513 = vrot.lane.b32.xlu0 %v6545, 64
        %v7514 = vpop.permute.xlu0 %7513
        %7515 = vrot.lane.b32.xlu0 %v6546, 64
        %v7516 = vpop.permute.xlu0 %7515
        %7517 = vrot.lane.b32.xlu0 %v6547, 64
        %v7518 = vpop.permute.xlu0 %7517
        %7519 = vrot.lane.b32.xlu0 %v6548, 64
        %v7520 = vpop.permute.xlu0 %7519
        %7521 = vrot.lane.b32.xlu0 %v6549, 64
        %v7522 = vpop.permute.xlu0 %7521
        %7523 = vrot.lane.b32.xlu0 %v6550, 64
        %v7524 = vpop.permute.xlu0 %7523
        %v7534 = vsel %vm368, %v7315, 0
        %v7537 = vsel %vm368, %v7316, 0
        %v7540 = vsel %vm368, %v7317, 0
        %v7543 = vsel %vm368, %v7318, 0
        %v7546 = vsel %vm368, %v7319, 0
        %v7549 = vsel %vm368, %v7320, 0
        %v7552 = vsel %vm368, %v7321, 0
        %v7555 = vsel %vm368, %v7322, 0
        %7557 = vmatpush.msra.mxu0 0.0
        %7558 = vmatpush.msra.mxu0 0.0
        %7559 = vmatpush.msra.mxu0 0.0
        %7560 = vmatpush.msra.mxu0 0.0
        %7561 = vmatpush.msra.mxu0 0.0
        %7562 = vmatpush.msra.mxu0 0.0
        %7563 = vmatpush.msra.mxu0 0.0
        %7564 = vmatpush.msra.mxu0 0.0
        %7565 = vmatpush.msra.mxu0 %v7524
        %7566 = vmatpush.msra.mxu0 %v7522
        %7567 = vmatpush.msra.mxu0 %v7520
        %7568 = vmatpush.msra.mxu0 %v7518
        %7569 = vmatpush.msra.mxu0 %v7516
        %7570 = vmatpush.msra.mxu0 %v7514
        %7571 = vmatpush.msra.mxu0 %v7512
        %7572 = vmatpush.msra.mxu0 %v7510
        %7573 = vmatmul.f32.gmra.mxu0 %v7534
        %v7574 = vpop.f32.mrf.mxu0
        %v7575 = vadd.f32 0.0, %v7574
        %7576 = vmatmul.f32.gmra.mxu0 %v7537
        %v7577 = vpop.f32.mrf.mxu0
        %v7578 = vadd.f32 0.0, %v7577
        %7579 = vmatmul.f32.gmra.mxu0 %v7540
        %v7580 = vpop.f32.mrf.mxu0
        %v7581 = vadd.f32 0.0, %v7580
        %7582 = vmatmul.f32.gmra.mxu0 %v7543
        %v7583 = vpop.f32.mrf.mxu0
        %v7584 = vadd.f32 0.0, %v7583
        %7585 = vmatmul.f32.gmra.mxu0 %v7546
        %v7586 = vpop.f32.mrf.mxu0
        %v7587 = vadd.f32 0.0, %v7586
        %7588 = vmatmul.f32.gmra.mxu0 %v7549
        %v7589 = vpop.f32.mrf.mxu0
        %v7590 = vadd.f32 0.0, %v7589
        %7591 = vmatmul.f32.gmra.mxu0 %v7552
        %v7592 = vpop.f32.mrf.mxu0
        %v7593 = vadd.f32 0.0, %v7592
        %7594 = vmatmul.f32.gmra.mxu0 %v7555
        %v7595 = vpop.f32.mrf.mxu0
        %v7596 = vadd.f32 0.0, %v7595
        %7597 = vdwg.mxu0
        %7598 = vrot.lane.b32.xlu0 %v6551, 64
        %v7599 = vpop.permute.xlu0 %7598
        %7600 = vrot.lane.b32.xlu0 %v6552, 64
        %v7601 = vpop.permute.xlu0 %7600
        %7602 = vrot.lane.b32.xlu0 %v6553, 64
        %v7603 = vpop.permute.xlu0 %7602
        %7604 = vrot.lane.b32.xlu0 %v6554, 64
        %v7605 = vpop.permute.xlu0 %7604
        %7606 = vrot.lane.b32.xlu0 %v6555, 64
        %v7607 = vpop.permute.xlu0 %7606
        %7608 = vrot.lane.b32.xlu0 %v6556, 64
        %v7609 = vpop.permute.xlu0 %7608
        %7610 = vrot.lane.b32.xlu0 %v6557, 64
        %v7611 = vpop.permute.xlu0 %7610
        %7612 = vrot.lane.b32.xlu0 %v6558, 64
        %v7613 = vpop.permute.xlu0 %7612
        %v7623 = vsel %vm368, %v7323, 0
        %v7626 = vsel %vm368, %v7324, 0
        %v7629 = vsel %vm368, %v7325, 0
        %v7632 = vsel %vm368, %v7326, 0
        %v7635 = vsel %vm368, %v7327, 0
        %v7638 = vsel %vm368, %v7328, 0
        %v7641 = vsel %vm368, %v7329, 0
        %v7644 = vsel %vm368, %v7330, 0
        %7646 = vmatpush.msra.mxu0 0.0
        %7647 = vmatpush.msra.mxu0 0.0
        %7648 = vmatpush.msra.mxu0 0.0
        %7649 = vmatpush.msra.mxu0 0.0
        %7650 = vmatpush.msra.mxu0 0.0
        %7651 = vmatpush.msra.mxu0 0.0
        %7652 = vmatpush.msra.mxu0 0.0
        %7653 = vmatpush.msra.mxu0 0.0
        %7654 = vmatpush.msra.mxu0 %v7613
        %7655 = vmatpush.msra.mxu0 %v7611
        %7656 = vmatpush.msra.mxu0 %v7609
        %7657 = vmatpush.msra.mxu0 %v7607
        %7658 = vmatpush.msra.mxu0 %v7605
        %7659 = vmatpush.msra.mxu0 %v7603
        %7660 = vmatpush.msra.mxu0 %v7601
        %7661 = vmatpush.msra.mxu0 %v7599
        %7662 = vmatmul.f32.gmra.mxu0 %v7623
        %v7663 = vpop.f32.mrf.mxu0
        %v7664 = vadd.f32 0.0, %v7663
        %7665 = vmatmul.f32.gmra.mxu0 %v7626
        %v7666 = vpop.f32.mrf.mxu0
        %v7667 = vadd.f32 0.0, %v7666
        %7668 = vmatmul.f32.gmra.mxu0 %v7629
        %v7669 = vpop.f32.mrf.mxu0
        %v7670 = vadd.f32 0.0, %v7669
        %7671 = vmatmul.f32.gmra.mxu0 %v7632
        %v7672 = vpop.f32.mrf.mxu0
        %v7673 = vadd.f32 0.0, %v7672
        %7674 = vmatmul.f32.gmra.mxu0 %v7635
        %v7675 = vpop.f32.mrf.mxu0
        %v7676 = vadd.f32 0.0, %v7675
        %7677 = vmatmul.f32.gmra.mxu0 %v7638
        %v7678 = vpop.f32.mrf.mxu0
        %v7679 = vadd.f32 0.0, %v7678
        %7680 = vmatmul.f32.gmra.mxu0 %v7641
        %v7681 = vpop.f32.mrf.mxu0
        %v7682 = vadd.f32 0.0, %v7681
        %7683 = vmatmul.f32.gmra.mxu0 %v7644
        %v7684 = vpop.f32.mrf.mxu0
        %v7685 = vadd.f32 0.0, %v7684
        %7686 = vdwg.mxu0
        %v7687 = vld [vmem:[#allocation2 + $0x18] sm:$0xff]
        %v7688 = vld [vmem:[#allocation2 + $0x20] sm:$0xff]
        %v7689 = vld [vmem:[#allocation2 + $0x40] sm:$0xff]
        %v7690 = vld [vmem:[#allocation2 + $0x48] sm:$0xff]
        %v7691 = vld [vmem:[#allocation2 + $0x68] sm:$0xff]
        %v7692 = vld [vmem:[#allocation2 + $0x70] sm:$0xff]
        %v7693 = vld [vmem:[#allocation2 + $0x90] sm:$0xff]
        %v7694 = vld [vmem:[#allocation2 + $0x98] sm:$0xff]
        %v7695 = vld [vmem:[#allocation2 + $0xb8] sm:$0xff]
        %v7696 = vld [vmem:[#allocation2 + $0xc0] sm:$0xff]
        %v7697 = vld [vmem:[#allocation2 + $0xe0] sm:$0xff]
        %v7698 = vld [vmem:[#allocation2 + $0xe8] sm:$0xff]
        %v7699 = vld [vmem:[#allocation2 + $0x108] sm:$0xff]
        %v7700 = vld [vmem:[#allocation2 + $0x110] sm:$0xff]
        %v7701 = vld [vmem:[#allocation2 + $0x130] sm:$0xff]
        %v7702 = vld [vmem:[#allocation2 + $0x138] sm:$0xff]
        %v7703 = vld [vmem:[#allocation2 + $0x158] sm:$0xff]
        %v7704 = vld [vmem:[#allocation2 + $0x160] sm:$0xff]
        %v7705 = vld [vmem:[#allocation2 + $0x180] sm:$0xff]
        %v7706 = vld [vmem:[#allocation2 + $0x188] sm:$0xff]
        %v7707 = vld [vmem:[#allocation2 + $0x1a8] sm:$0xff]
        %v7708 = vld [vmem:[#allocation2 + $0x1b0] sm:$0xff]
        %v7709 = vld [vmem:[#allocation2 + $0x1d0] sm:$0xff]
        %v7710 = vld [vmem:[#allocation2 + $0x1d8] sm:$0xff]
        %v7711 = vld [vmem:[#allocation2 + $0x1f8] sm:$0xff]
        %v7712 = vld [vmem:[#allocation2 + $0x200] sm:$0xff]
        %v7713 = vld [vmem:[#allocation2 + $0x220] sm:$0xff]
        %v7714 = vld [vmem:[#allocation2 + $0x228] sm:$0xff]
        %v7715 = vld [vmem:[#allocation2 + $0x248] sm:$0xff]
        %v7716 = vld [vmem:[#allocation2 + $0x250] sm:$0xff]
        %v7717 = vld [vmem:[#allocation2 + $0x270] sm:$0xff]
        %v7718 = vld [vmem:[#allocation2 + $0x278] sm:$0xff]
        %v7719 = vld [vmem:[#allocation2 + $0x298] sm:$0xff]
        %v7720 = vld [vmem:[#allocation2 + $0x2a0] sm:$0xff]
        %v7721 = vld [vmem:[#allocation2 + $0x2c0] sm:$0xff]
        %v7722 = vld [vmem:[#allocation2 + $0x2c8] sm:$0xff]
        %v7723 = vld [vmem:[#allocation2 + $0x2e8] sm:$0xff]
        %v7724 = vld [vmem:[#allocation2 + $0x2f0] sm:$0xff]
        %v7725 = vld [vmem:[#allocation2 + $0x310] sm:$0xff]
        %v7726 = vld [vmem:[#allocation2 + $0x318] sm:$0xff]
        %v7727 = vld [vmem:[#allocation2 + $0x338] sm:$0xff]
        %v7728 = vld [vmem:[#allocation2 + $0x340] sm:$0xff]
        %v7729 = vld [vmem:[#allocation2 + $0x360] sm:$0xff]
        %v7730 = vld [vmem:[#allocation2 + $0x368] sm:$0xff]
        %v7731 = vld [vmem:[#allocation2 + $0x388] sm:$0xff]
        %v7732 = vld [vmem:[#allocation2 + $0x390] sm:$0xff]
        %v7733 = vld [vmem:[#allocation2 + $0x3b0] sm:$0xff]
        %v7734 = vld [vmem:[#allocation2 + $0x3b8] sm:$0xff]
        %v7735 = vld [vmem:[#allocation2 + $0x3d8] sm:$0xff]
        %v7736 = vld [vmem:[#allocation2 + $0x3e0] sm:$0xff]
        %v7737 = vld [vmem:[#allocation2 + $0x400] sm:$0xff]
        %v7738 = vld [vmem:[#allocation2 + $0x408] sm:$0xff]
        %v7739 = vld [vmem:[#allocation2 + $0x428] sm:$0xff]
        %v7740 = vld [vmem:[#allocation2 + $0x430] sm:$0xff]
        %v7741 = vld [vmem:[#allocation2 + $0x450] sm:$0xff]
        %v7742 = vld [vmem:[#allocation2 + $0x458] sm:$0xff]
        %v7743 = vld [vmem:[#allocation2 + $0x478] sm:$0xff]
        %v7744 = vld [vmem:[#allocation2 + $0x480] sm:$0xff]
        %v7745 = vld [vmem:[#allocation2 + $0x4a0] sm:$0xff]
        %v7746 = vld [vmem:[#allocation2 + $0x4a8] sm:$0xff]
        %v7747 = vld [vmem:[#allocation2 + $0x4c8] sm:$0xff]
        %v7748 = vld [vmem:[#allocation2 + $0x4d0] sm:$0xff]
        %v7749 = vld [vmem:[#allocation2 + $0x4f0] sm:$0xff]
        %v7750 = vld [vmem:[#allocation2 + $0x4f8] sm:$0xff]
        %7759 = vrot.lane.b32.xlu0 %v7687, 32
        %v7760 = vpop.permute.xlu0 %7759
        %7761 = vrot.lane.b32.xlu0 %v7689, 32
        %v7762 = vpop.permute.xlu0 %7761
        %7763 = vrot.lane.b32.xlu0 %v7691, 32
        %v7764 = vpop.permute.xlu0 %7763
        %7765 = vrot.lane.b32.xlu0 %v7693, 32
        %v7766 = vpop.permute.xlu0 %7765
        %7767 = vrot.lane.b32.xlu0 %v7695, 32
        %v7768 = vpop.permute.xlu0 %7767
        %7769 = vrot.lane.b32.xlu0 %v7697, 32
        %v7770 = vpop.permute.xlu0 %7769
        %7771 = vrot.lane.b32.xlu0 %v7699, 32
        %v7772 = vpop.permute.xlu0 %7771
        %7773 = vrot.lane.b32.xlu0 %v7701, 32
        %v7774 = vpop.permute.xlu0 %7773
        %v7775 = vsel %vm1830, %v7760, 0
        %v7777 = vsel %vm1830, %v7762, 0
        %v7779 = vsel %vm1830, %v7764, 0
        %v7781 = vsel %vm1830, %v7766, 0
        %v7783 = vsel %vm1830, %v7768, 0
        %v7785 = vsel %vm1830, %v7770, 0
        %v7787 = vsel %vm1830, %v7772, 0
        %v7789 = vsel %vm1830, %v7774, 0
        %v7792 = vsel %vm1830, %v7688, 0
        %v7795 = vsel %vm1830, %v7690, 0
        %v7798 = vsel %vm1830, %v7692, 0
        %v7801 = vsel %vm1830, %v7694, 0
        %v7804 = vsel %vm1830, %v7696, 0
        %v7807 = vsel %vm1830, %v7698, 0
        %v7810 = vsel %vm1830, %v7700, 0
        %v7813 = vsel %vm1830, %v7702, 0
        %7815 = vmatpush.xpose.msra.mxu0 0.0
        %7816 = vmatpush.xpose.msra.mxu0 0.0
        %7817 = vmatpush.xpose.msra.mxu0 0.0
        %7818 = vmatpush.xpose.msra.mxu0 0.0
        %7819 = vmatpush.xpose.msra.mxu0 0.0
        %7820 = vmatpush.xpose.msra.mxu0 0.0
        %7821 = vmatpush.xpose.msra.mxu0 0.0
        %7822 = vmatpush.xpose.msra.mxu0 0.0
        %7823 = vmatpush.xpose.msra.mxu0 %v7813
        %7824 = vmatpush.xpose.msra.mxu0 %v7810
        %7825 = vmatpush.xpose.msra.mxu0 %v7807
        %7826 = vmatpush.xpose.msra.mxu0 %v7804
        %7827 = vmatpush.xpose.msra.mxu0 %v7801
        %7828 = vmatpush.xpose.msra.mxu0 %v7798
        %7829 = vmatpush.xpose.msra.mxu0 %v7795
        %7830 = vmatpush.xpose.msra.mxu0 %v7792
        %7831 = vmatmul.f32.gmra.mxu0 %v7775
        %v7832 = vpop.f32.mrf.mxu0
        %v7833 = vadd.f32 0.0, %v7832
        %7834 = vmatmul.f32.gmra.mxu0 %v7777
        %v7835 = vpop.f32.mrf.mxu0
        %v7836 = vadd.f32 0.0, %v7835
        %7837 = vmatmul.f32.gmra.mxu0 %v7779
        %v7838 = vpop.f32.mrf.mxu0
        %v7839 = vadd.f32 0.0, %v7838
        %7840 = vmatmul.f32.gmra.mxu0 %v7781
        %v7841 = vpop.f32.mrf.mxu0
        %v7842 = vadd.f32 0.0, %v7841
        %7843 = vmatmul.f32.gmra.mxu0 %v7783
        %v7844 = vpop.f32.mrf.mxu0
        %v7845 = vadd.f32 0.0, %v7844
        %7846 = vmatmul.f32.gmra.mxu0 %v7785
        %v7847 = vpop.f32.mrf.mxu0
        %v7848 = vadd.f32 0.0, %v7847
        %7849 = vmatmul.f32.gmra.mxu0 %v7787
        %v7850 = vpop.f32.mrf.mxu0
        %v7851 = vadd.f32 0.0, %v7850
        %7852 = vmatmul.f32.gmra.mxu0 %v7789
        %v7853 = vpop.f32.mrf.mxu0
        %v7854 = vadd.f32 0.0, %v7853
        %7855 = vdwg.mxu0
        %7864 = vrot.lane.b32.xlu0 %v7703, 32
        %v7865 = vpop.permute.xlu0 %7864
        %7866 = vrot.lane.b32.xlu0 %v7705, 32
        %v7867 = vpop.permute.xlu0 %7866
        %7868 = vrot.lane.b32.xlu0 %v7707, 32
        %v7869 = vpop.permute.xlu0 %7868
        %7870 = vrot.lane.b32.xlu0 %v7709, 32
        %v7871 = vpop.permute.xlu0 %7870
        %7872 = vrot.lane.b32.xlu0 %v7711, 32
        %v7873 = vpop.permute.xlu0 %7872
        %7874 = vrot.lane.b32.xlu0 %v7713, 32
        %v7875 = vpop.permute.xlu0 %7874
        %7876 = vrot.lane.b32.xlu0 %v7715, 32
        %v7877 = vpop.permute.xlu0 %7876
        %7878 = vrot.lane.b32.xlu0 %v7717, 32
        %v7879 = vpop.permute.xlu0 %7878
        %v7880 = vsel %vm1830, %v7865, 0
        %v7882 = vsel %vm1830, %v7867, 0
        %v7884 = vsel %vm1830, %v7869, 0
        %v7886 = vsel %vm1830, %v7871, 0
        %v7888 = vsel %vm1830, %v7873, 0
        %v7890 = vsel %vm1830, %v7875, 0
        %v7892 = vsel %vm1830, %v7877, 0
        %v7894 = vsel %vm1830, %v7879, 0
        %v7897 = vsel %vm1830, %v7704, 0
        %v7900 = vsel %vm1830, %v7706, 0
        %v7903 = vsel %vm1830, %v7708, 0
        %v7906 = vsel %vm1830, %v7710, 0
        %v7909 = vsel %vm1830, %v7712, 0
        %v7912 = vsel %vm1830, %v7714, 0
        %v7915 = vsel %vm1830, %v7716, 0
        %v7918 = vsel %vm1830, %v7718, 0
        %7920 = vmatpush.xpose.msra.mxu0 0.0
        %7921 = vmatpush.xpose.msra.mxu0 0.0
        %7922 = vmatpush.xpose.msra.mxu0 0.0
        %7923 = vmatpush.xpose.msra.mxu0 0.0
        %7924 = vmatpush.xpose.msra.mxu0 0.0
        %7925 = vmatpush.xpose.msra.mxu0 0.0
        %7926 = vmatpush.xpose.msra.mxu0 0.0
        %7927 = vmatpush.xpose.msra.mxu0 0.0
        %7928 = vmatpush.xpose.msra.mxu0 %v7918
        %7929 = vmatpush.xpose.msra.mxu0 %v7915
        %7930 = vmatpush.xpose.msra.mxu0 %v7912
        %7931 = vmatpush.xpose.msra.mxu0 %v7909
        %7932 = vmatpush.xpose.msra.mxu0 %v7906
        %7933 = vmatpush.xpose.msra.mxu0 %v7903
        %7934 = vmatpush.xpose.msra.mxu0 %v7900
        %7935 = vmatpush.xpose.msra.mxu0 %v7897
        %7936 = vmatmul.f32.gmra.mxu0 %v7880
        %v7937 = vpop.f32.mrf.mxu0
        %v7938 = vadd.f32 0.0, %v7937
        %7939 = vmatmul.f32.gmra.mxu0 %v7882
        %v7940 = vpop.f32.mrf.mxu0
        %v7941 = vadd.f32 0.0, %v7940
        %7942 = vmatmul.f32.gmra.mxu0 %v7884
        %v7943 = vpop.f32.mrf.mxu0
        %v7944 = vadd.f32 0.0, %v7943
        %7945 = vmatmul.f32.gmra.mxu0 %v7886
        %v7946 = vpop.f32.mrf.mxu0
        %v7947 = vadd.f32 0.0, %v7946
        %7948 = vmatmul.f32.gmra.mxu0 %v7888
        %v7949 = vpop.f32.mrf.mxu0
        %v7950 = vadd.f32 0.0, %v7949
        %7951 = vmatmul.f32.gmra.mxu0 %v7890
        %v7952 = vpop.f32.mrf.mxu0
        %v7953 = vadd.f32 0.0, %v7952
        %7954 = vmatmul.f32.gmra.mxu0 %v7892
        %v7955 = vpop.f32.mrf.mxu0
        %v7956 = vadd.f32 0.0, %v7955
        %7957 = vmatmul.f32.gmra.mxu0 %v7894
        %v7958 = vpop.f32.mrf.mxu0
        %v7959 = vadd.f32 0.0, %v7958
        %7960 = vdwg.mxu0
        %7969 = vrot.lane.b32.xlu0 %v7719, 32
        %v7970 = vpop.permute.xlu0 %7969
        %7971 = vrot.lane.b32.xlu0 %v7721, 32
        %v7972 = vpop.permute.xlu0 %7971
        %7973 = vrot.lane.b32.xlu0 %v7723, 32
        %v7974 = vpop.permute.xlu0 %7973
        %7975 = vrot.lane.b32.xlu0 %v7725, 32
        %v7976 = vpop.permute.xlu0 %7975
        %7977 = vrot.lane.b32.xlu0 %v7727, 32
        %v7978 = vpop.permute.xlu0 %7977
        %7979 = vrot.lane.b32.xlu0 %v7729, 32
        %v7980 = vpop.permute.xlu0 %7979
        %7981 = vrot.lane.b32.xlu0 %v7731, 32
        %v7982 = vpop.permute.xlu0 %7981
        %7983 = vrot.lane.b32.xlu0 %v7733, 32
        %v7984 = vpop.permute.xlu0 %7983
        %v7985 = vsel %vm1830, %v7970, 0
        %v7987 = vsel %vm1830, %v7972, 0
        %v7989 = vsel %vm1830, %v7974, 0
        %v7991 = vsel %vm1830, %v7976, 0
        %v7993 = vsel %vm1830, %v7978, 0
        %v7995 = vsel %vm1830, %v7980, 0
        %v7997 = vsel %vm1830, %v7982, 0
        %v7999 = vsel %vm1830, %v7984, 0
        %v8002 = vsel %vm1830, %v7720, 0
        %v8005 = vsel %vm1830, %v7722, 0
        %v8008 = vsel %vm1830, %v7724, 0
        %v8011 = vsel %vm1830, %v7726, 0
        %v8014 = vsel %vm1830, %v7728, 0
        %v8017 = vsel %vm1830, %v7730, 0
        %v8020 = vsel %vm1830, %v7732, 0
        %v8023 = vsel %vm1830, %v7734, 0
        %8025 = vmatpush.xpose.msra.mxu0 0.0
        %8026 = vmatpush.xpose.msra.mxu0 0.0
        %8027 = vmatpush.xpose.msra.mxu0 0.0
        %8028 = vmatpush.xpose.msra.mxu0 0.0
        %8029 = vmatpush.xpose.msra.mxu0 0.0
        %8030 = vmatpush.xpose.msra.mxu0 0.0
        %8031 = vmatpush.xpose.msra.mxu0 0.0
        %8032 = vmatpush.xpose.msra.mxu0 0.0
        %8033 = vmatpush.xpose.msra.mxu0 %v8023
        %8034 = vmatpush.xpose.msra.mxu0 %v8020
        %8035 = vmatpush.xpose.msra.mxu0 %v8017
        %8036 = vmatpush.xpose.msra.mxu0 %v8014
        %8037 = vmatpush.xpose.msra.mxu0 %v8011
        %8038 = vmatpush.xpose.msra.mxu0 %v8008
        %8039 = vmatpush.xpose.msra.mxu0 %v8005
        %8040 = vmatpush.xpose.msra.mxu0 %v8002
        %8041 = vmatmul.f32.gmra.mxu0 %v7985
        %v8042 = vpop.f32.mrf.mxu0
        %v8043 = vadd.f32 0.0, %v8042
        %8044 = vmatmul.f32.gmra.mxu0 %v7987
        %v8045 = vpop.f32.mrf.mxu0
        %v8046 = vadd.f32 0.0, %v8045
        %8047 = vmatmul.f32.gmra.mxu0 %v7989
        %v8048 = vpop.f32.mrf.mxu0
        %v8049 = vadd.f32 0.0, %v8048
        %8050 = vmatmul.f32.gmra.mxu0 %v7991
        %v8051 = vpop.f32.mrf.mxu0
        %v8052 = vadd.f32 0.0, %v8051
        %8053 = vmatmul.f32.gmra.mxu0 %v7993
        %v8054 = vpop.f32.mrf.mxu0
        %v8055 = vadd.f32 0.0, %v8054
        %8056 = vmatmul.f32.gmra.mxu0 %v7995
        %v8057 = vpop.f32.mrf.mxu0
        %v8058 = vadd.f32 0.0, %v8057
        %8059 = vmatmul.f32.gmra.mxu0 %v7997
        %v8060 = vpop.f32.mrf.mxu0
        %v8061 = vadd.f32 0.0, %v8060
        %8062 = vmatmul.f32.gmra.mxu0 %v7999
        %v8063 = vpop.f32.mrf.mxu0
        %v8064 = vadd.f32 0.0, %v8063
        %8065 = vdwg.mxu0
        %8074 = vrot.lane.b32.xlu0 %v7735, 32
        %v8075 = vpop.permute.xlu0 %8074
        %8076 = vrot.lane.b32.xlu0 %v7737, 32
        %v8077 = vpop.permute.xlu0 %8076
        %8078 = vrot.lane.b32.xlu0 %v7739, 32
        %v8079 = vpop.permute.xlu0 %8078
        %8080 = vrot.lane.b32.xlu0 %v7741, 32
        %v8081 = vpop.permute.xlu0 %8080
        %8082 = vrot.lane.b32.xlu0 %v7743, 32
        %v8083 = vpop.permute.xlu0 %8082
        %8084 = vrot.lane.b32.xlu0 %v7745, 32
        %v8085 = vpop.permute.xlu0 %8084
        %8086 = vrot.lane.b32.xlu0 %v7747, 32
        %v8087 = vpop.permute.xlu0 %8086
        %8088 = vrot.lane.b32.xlu0 %v7749, 32
        %v8089 = vpop.permute.xlu0 %8088
        %v8090 = vsel %vm1830, %v8075, 0
        %v8092 = vsel %vm1830, %v8077, 0
        %v8094 = vsel %vm1830, %v8079, 0
        %v8096 = vsel %vm1830, %v8081, 0
        %v8098 = vsel %vm1830, %v8083, 0
        %v8100 = vsel %vm1830, %v8085, 0
        %v8102 = vsel %vm1830, %v8087, 0
        %v8104 = vsel %vm1830, %v8089, 0
        %v8107 = vsel %vm1830, %v7736, 0
        %v8110 = vsel %vm1830, %v7738, 0
        %v8113 = vsel %vm1830, %v7740, 0
        %v8116 = vsel %vm1830, %v7742, 0
        %v8119 = vsel %vm1830, %v7744, 0
        %v8122 = vsel %vm1830, %v7746, 0
        %v8125 = vsel %vm1830, %v7748, 0
        %v8128 = vsel %vm1830, %v7750, 0
        %8130 = vmatpush.xpose.msra.mxu0 0.0
        %8131 = vmatpush.xpose.msra.mxu0 0.0
        %8132 = vmatpush.xpose.msra.mxu0 0.0
        %8133 = vmatpush.xpose.msra.mxu0 0.0
        %8134 = vmatpush.xpose.msra.mxu0 0.0
        %8135 = vmatpush.xpose.msra.mxu0 0.0
        %8136 = vmatpush.xpose.msra.mxu0 0.0
        %8137 = vmatpush.xpose.msra.mxu0 0.0
        %8138 = vmatpush.xpose.msra.mxu0 %v8128
        %8139 = vmatpush.xpose.msra.mxu0 %v8125
        %8140 = vmatpush.xpose.msra.mxu0 %v8122
        %8141 = vmatpush.xpose.msra.mxu0 %v8119
        %8142 = vmatpush.xpose.msra.mxu0 %v8116
        %8143 = vmatpush.xpose.msra.mxu0 %v8113
        %8144 = vmatpush.xpose.msra.mxu0 %v8110
        %8145 = vmatpush.xpose.msra.mxu0 %v8107
        %8146 = vmatmul.f32.gmra.mxu0 %v8090
        %v8147 = vpop.f32.mrf.mxu0
        %v8148 = vadd.f32 0.0, %v8147
        %8149 = vmatmul.f32.gmra.mxu0 %v8092
        %v8150 = vpop.f32.mrf.mxu0
        %v8151 = vadd.f32 0.0, %v8150
        %8152 = vmatmul.f32.gmra.mxu0 %v8094
        %v8153 = vpop.f32.mrf.mxu0
        %v8154 = vadd.f32 0.0, %v8153
        %8155 = vmatmul.f32.gmra.mxu0 %v8096
        %v8156 = vpop.f32.mrf.mxu0
        %v8157 = vadd.f32 0.0, %v8156
        %8158 = vmatmul.f32.gmra.mxu0 %v8098
        %v8159 = vpop.f32.mrf.mxu0
        %v8160 = vadd.f32 0.0, %v8159
        %8161 = vmatmul.f32.gmra.mxu0 %v8100
        %v8162 = vpop.f32.mrf.mxu0
        %v8163 = vadd.f32 0.0, %v8162
        %8164 = vmatmul.f32.gmra.mxu0 %v8102
        %v8165 = vpop.f32.mrf.mxu0
        %v8166 = vadd.f32 0.0, %v8165
        %8167 = vmatmul.f32.gmra.mxu0 %v8104
        %v8168 = vpop.f32.mrf.mxu0
        %v8169 = vadd.f32 0.0, %v8168
        %8170 = vdwg.mxu0
        %v8171 = vsel %vm2203, %v7833, -inf
        %v8172 = vsel %vm2204, %v7836, -inf
        %v8173 = vsel %vm2205, %v7839, -inf
        %v8174 = vsel %vm2206, %v7842, -inf
        %v8175 = vsel %vm2207, %v7845, -inf
        %v8176 = vsel %vm2208, %v7848, -inf
        %v8177 = vsel %vm2209, %v7851, -inf
        %v8178 = vsel %vm2210, %v7854, -inf
        %v8179 = vsel %vm2203, %v7938, -inf
        %v8180 = vsel %vm2204, %v7941, -inf
        %v8181 = vsel %vm2205, %v7944, -inf
        %v8182 = vsel %vm2206, %v7947, -inf
        %v8183 = vsel %vm2207, %v7950, -inf
        %v8184 = vsel %vm2208, %v7953, -inf
        %v8185 = vsel %vm2209, %v7956, -inf
        %v8186 = vsel %vm2210, %v7959, -inf
        %v8187 = vsel %vm2203, %v8043, -inf
        %v8188 = vsel %vm2204, %v8046, -inf
        %v8189 = vsel %vm2205, %v8049, -inf
        %v8190 = vsel %vm2206, %v8052, -inf
        %v8191 = vsel %vm2207, %v8055, -inf
        %v8192 = vsel %vm2208, %v8058, -inf
        %v8193 = vsel %vm2209, %v8061, -inf
        %v8194 = vsel %vm2210, %v8064, -inf
        %v8195 = vsel %vm2203, %v8148, -inf
        %v8196 = vsel %vm2204, %v8151, -inf
        %v8197 = vsel %vm2205, %v8154, -inf
        %v8198 = vsel %vm2206, %v8157, -inf
        %v8199 = vsel %vm2207, %v8160, -inf
        %v8200 = vsel %vm2208, %v8163, -inf
        %v8201 = vsel %vm2209, %v8166, -inf
        %v8202 = vsel %vm2210, %v8169, -inf
        %v8203 = vsel %vm368, %v8171, -inf
        %8204 = vmax.xlane.f32.xlu0 %v8203
        %v8205 = vpop.xlane.xlu0 %8204
        %v8206 = vsel %vm368, %v8172, -inf
        %8207 = vmax.xlane.f32.xlu0 %v8206
        %v8208 = vpop.xlane.xlu0 %8207
        %v8209 = vsel %vm368, %v8173, -inf
        %8210 = vmax.xlane.f32.xlu0 %v8209
        %v8211 = vpop.xlane.xlu0 %8210
        %v8212 = vsel %vm368, %v8174, -inf
        %8213 = vmax.xlane.f32.xlu0 %v8212
        %v8214 = vpop.xlane.xlu0 %8213
        %v8215 = vsel %vm368, %v8175, -inf
        %8216 = vmax.xlane.f32.xlu0 %v8215
        %v8217 = vpop.xlane.xlu0 %8216
        %v8218 = vsel %vm368, %v8176, -inf
        %8219 = vmax.xlane.f32.xlu0 %v8218
        %v8220 = vpop.xlane.xlu0 %8219
        %v8221 = vsel %vm368, %v8177, -inf
        %8222 = vmax.xlane.f32.xlu0 %v8221
        %v8223 = vpop.xlane.xlu0 %8222
        %v8224 = vsel %vm368, %v8178, -inf
        %8225 = vmax.xlane.f32.xlu0 %v8224
        %v8226 = vpop.xlane.xlu0 %8225
        %v8227 = vsel %vm368, %v8179, -inf
        %8228 = vmax.xlane.f32.xlu0 %v8227
        %v8229 = vpop.xlane.xlu0 %8228
        %v8230 = vsel %vm368, %v8180, -inf
        %8231 = vmax.xlane.f32.xlu0 %v8230
        %v8232 = vpop.xlane.xlu0 %8231
        %v8233 = vsel %vm368, %v8181, -inf
        %8234 = vmax.xlane.f32.xlu0 %v8233
        %v8235 = vpop.xlane.xlu0 %8234
        %v8236 = vsel %vm368, %v8182, -inf
        %8237 = vmax.xlane.f32.xlu0 %v8236
        %v8238 = vpop.xlane.xlu0 %8237
        %v8239 = vsel %vm368, %v8183, -inf
        %8240 = vmax.xlane.f32.xlu0 %v8239
        %v8241 = vpop.xlane.xlu0 %8240
        %v8242 = vsel %vm368, %v8184, -inf
        %8243 = vmax.xlane.f32.xlu0 %v8242
        %v8244 = vpop.xlane.xlu0 %8243
        %v8245 = vsel %vm368, %v8185, -inf
        %8246 = vmax.xlane.f32.xlu0 %v8245
        %v8247 = vpop.xlane.xlu0 %8246
        %v8248 = vsel %vm368, %v8186, -inf
        %8249 = vmax.xlane.f32.xlu0 %v8248
        %v8250 = vpop.xlane.xlu0 %8249
        %v8251 = vsel %vm368, %v8187, -inf
        %8252 = vmax.xlane.f32.xlu0 %v8251
        %v8253 = vpop.xlane.xlu0 %8252
        %v8254 = vsel %vm368, %v8188, -inf
        %8255 = vmax.xlane.f32.xlu0 %v8254
        %v8256 = vpop.xlane.xlu0 %8255
        %v8257 = vsel %vm368, %v8189, -inf
        %8258 = vmax.xlane.f32.xlu0 %v8257
        %v8259 = vpop.xlane.xlu0 %8258
        %v8260 = vsel %vm368, %v8190, -inf
        %8261 = vmax.xlane.f32.xlu0 %v8260
        %v8262 = vpop.xlane.xlu0 %8261
        %v8263 = vsel %vm368, %v8191, -inf
        %8264 = vmax.xlane.f32.xlu0 %v8263
        %v8265 = vpop.xlane.xlu0 %8264
        %v8266 = vsel %vm368, %v8192, -inf
        %8267 = vmax.xlane.f32.xlu0 %v8266
        %v8268 = vpop.xlane.xlu0 %8267
        %v8269 = vsel %vm368, %v8193, -inf
        %8270 = vmax.xlane.f32.xlu0 %v8269
        %v8271 = vpop.xlane.xlu0 %8270
        %v8272 = vsel %vm368, %v8194, -inf
        %8273 = vmax.xlane.f32.xlu0 %v8272
        %v8274 = vpop.xlane.xlu0 %8273
        %v8275 = vsel %vm368, %v8195, -inf
        %8276 = vmax.xlane.f32.xlu0 %v8275
        %v8277 = vpop.xlane.xlu0 %8276
        %v8278 = vsel %vm368, %v8196, -inf
        %8279 = vmax.xlane.f32.xlu0 %v8278
        %v8280 = vpop.xlane.xlu0 %8279
        %v8281 = vsel %vm368, %v8197, -inf
        %8282 = vmax.xlane.f32.xlu0 %v8281
        %v8283 = vpop.xlane.xlu0 %8282
        %v8284 = vsel %vm368, %v8198, -inf
        %8285 = vmax.xlane.f32.xlu0 %v8284
        %v8286 = vpop.xlane.xlu0 %8285
        %v8287 = vsel %vm368, %v8199, -inf
        %8288 = vmax.xlane.f32.xlu0 %v8287
        %v8289 = vpop.xlane.xlu0 %8288
        %v8290 = vsel %vm368, %v8200, -inf
        %8291 = vmax.xlane.f32.xlu0 %v8290
        %v8292 = vpop.xlane.xlu0 %8291
        %v8293 = vsel %vm368, %v8201, -inf
        %8294 = vmax.xlane.f32.xlu0 %v8293
        %v8295 = vpop.xlane.xlu0 %8294
        %v8296 = vsel %vm368, %v8202, -inf
        %8297 = vmax.xlane.f32.xlu0 %v8296
        %v8298 = vpop.xlane.xlu0 %8297
        %v8299 = vsub.f32 %v8171, %v8205
        %v8300 = vsub.f32 %v8172, %v8208
        %v8301 = vsub.f32 %v8173, %v8211
        %v8302 = vsub.f32 %v8174, %v8214
        %v8303 = vsub.f32 %v8175, %v8217
        %v8304 = vsub.f32 %v8176, %v8220
        %v8305 = vsub.f32 %v8177, %v8223
        %v8306 = vsub.f32 %v8178, %v8226
        %v8307 = vsub.f32 %v8179, %v8229
        %v8308 = vsub.f32 %v8180, %v8232
        %v8309 = vsub.f32 %v8181, %v8235
        %v8310 = vsub.f32 %v8182, %v8238
        %v8311 = vsub.f32 %v8183, %v8241
        %v8312 = vsub.f32 %v8184, %v8244
        %v8313 = vsub.f32 %v8185, %v8247
        %v8314 = vsub.f32 %v8186, %v8250
        %v8315 = vsub.f32 %v8187, %v8253
        %v8316 = vsub.f32 %v8188, %v8256
        %v8317 = vsub.f32 %v8189, %v8259
        %v8318 = vsub.f32 %v8190, %v8262
        %v8319 = vsub.f32 %v8191, %v8265
        %v8320 = vsub.f32 %v8192, %v8268
        %v8321 = vsub.f32 %v8193, %v8271
        %v8322 = vsub.f32 %v8194, %v8274
        %v8323 = vsub.f32 %v8195, %v8277
        %v8324 = vsub.f32 %v8196, %v8280
        %v8325 = vsub.f32 %v8197, %v8283
        %v8326 = vsub.f32 %v8198, %v8286
        %v8327 = vsub.f32 %v8199, %v8289
        %v8328 = vsub.f32 %v8200, %v8292
        %v8329 = vsub.f32 %v8201, %v8295
        %v8330 = vsub.f32 %v8202, %v8298
        %v8331 = vmul.f32 %v8299, 1.442695
        %v8332 = vpow.pop %v8331
        %v8333 = vmul.f32 %v8300, 1.442695
        %v8334 = vpow.pop %v8333
        %v8335 = vmul.f32 %v8301, 1.442695
        %v8336 = vpow.pop %v8335
        %v8337 = vmul.f32 %v8302, 1.442695
        %v8338 = vpow.pop %v8337
        %v8339 = vmul.f32 %v8303, 1.442695
        %v8340 = vpow.pop %v8339
        %v8341 = vmul.f32 %v8304, 1.442695
        %v8342 = vpow.pop %v8341
        %v8343 = vmul.f32 %v8305, 1.442695
        %v8344 = vpow.pop %v8343
        %v8345 = vmul.f32 %v8306, 1.442695
        %v8346 = vpow.pop %v8345
        %v8347 = vmul.f32 %v8307, 1.442695
        %v8348 = vpow.pop %v8347
        %v8349 = vmul.f32 %v8308, 1.442695
        %v8350 = vpow.pop %v8349
        %v8351 = vmul.f32 %v8309, 1.442695
        %v8352 = vpow.pop %v8351
        %v8353 = vmul.f32 %v8310, 1.442695
        %v8354 = vpow.pop %v8353
        %v8355 = vmul.f32 %v8311, 1.442695
        %v8356 = vpow.pop %v8355
        %v8357 = vmul.f32 %v8312, 1.442695
        %v8358 = vpow.pop %v8357
        %v8359 = vmul.f32 %v8313, 1.442695
        %v8360 = vpow.pop %v8359
        %v8361 = vmul.f32 %v8314, 1.442695
        %v8362 = vpow.pop %v8361
        %v8363 = vmul.f32 %v8315, 1.442695
        %v8364 = vpow.pop %v8363
        %v8365 = vmul.f32 %v8316, 1.442695
        %v8366 = vpow.pop %v8365
        %v8367 = vmul.f32 %v8317, 1.442695
        %v8368 = vpow.pop %v8367
        %v8369 = vmul.f32 %v8318, 1.442695
        %v8370 = vpow.pop %v8369
        %v8371 = vmul.f32 %v8319, 1.442695
        %v8372 = vpow.pop %v8371
        %v8373 = vmul.f32 %v8320, 1.442695
        %v8374 = vpow.pop %v8373
        %v8375 = vmul.f32 %v8321, 1.442695
        %v8376 = vpow.pop %v8375
        %v8377 = vmul.f32 %v8322, 1.442695
        %v8378 = vpow.pop %v8377
        %v8379 = vmul.f32 %v8323, 1.442695
        %v8380 = vpow.pop %v8379
        %v8381 = vmul.f32 %v8324, 1.442695
        %v8382 = vpow.pop %v8381
        %v8383 = vmul.f32 %v8325, 1.442695
        %v8384 = vpow.pop %v8383
        %v8385 = vmul.f32 %v8326, 1.442695
        %v8386 = vpow.pop %v8385
        %v8387 = vmul.f32 %v8327, 1.442695
        %v8388 = vpow.pop %v8387
        %v8389 = vmul.f32 %v8328, 1.442695
        %v8390 = vpow.pop %v8389
        %v8391 = vmul.f32 %v8329, 1.442695
        %v8392 = vpow.pop %v8391
        %v8393 = vmul.f32 %v8330, 1.442695
        %v8394 = vpow.pop %v8393
        %v8395 = vsel %vm368, %v8332, 0.0
        %8396 = vadd.xlane.f32.xlu0 %v8395
        %v8397 = vpop.xlane.xlu0 %8396
        %v8398 = vsel %vm368, %v8334, 0.0
        %8399 = vadd.xlane.f32.xlu0 %v8398
        %v8400 = vpop.xlane.xlu0 %8399
        %v8401 = vsel %vm368, %v8336, 0.0
        %8402 = vadd.xlane.f32.xlu0 %v8401
        %v8403 = vpop.xlane.xlu0 %8402
        %v8404 = vsel %vm368, %v8338, 0.0
        %8405 = vadd.xlane.f32.xlu0 %v8404
        %v8406 = vpop.xlane.xlu0 %8405
        %v8407 = vsel %vm368, %v8340, 0.0
        %8408 = vadd.xlane.f32.xlu0 %v8407
        %v8409 = vpop.xlane.xlu0 %8408
        %v8410 = vsel %vm368, %v8342, 0.0
        %8411 = vadd.xlane.f32.xlu0 %v8410
        %v8412 = vpop.xlane.xlu0 %8411
        %v8413 = vsel %vm368, %v8344, 0.0
        %8414 = vadd.xlane.f32.xlu0 %v8413
        %v8415 = vpop.xlane.xlu0 %8414
        %v8416 = vsel %vm368, %v8346, 0.0
        %8417 = vadd.xlane.f32.xlu0 %v8416
        %v8418 = vpop.xlane.xlu0 %8417
        %v8419 = vsel %vm368, %v8348, 0.0
        %8420 = vadd.xlane.f32.xlu0 %v8419
        %v8421 = vpop.xlane.xlu0 %8420
        %v8422 = vsel %vm368, %v8350, 0.0
        %8423 = vadd.xlane.f32.xlu0 %v8422
        %v8424 = vpop.xlane.xlu0 %8423
        %v8425 = vsel %vm368, %v8352, 0.0
        %8426 = vadd.xlane.f32.xlu0 %v8425
        %v8427 = vpop.xlane.xlu0 %8426
        %v8428 = vsel %vm368, %v8354, 0.0
        %8429 = vadd.xlane.f32.xlu0 %v8428
        %v8430 = vpop.xlane.xlu0 %8429
        %v8431 = vsel %vm368, %v8356, 0.0
        %8432 = vadd.xlane.f32.xlu0 %v8431
        %v8433 = vpop.xlane.xlu0 %8432
        %v8434 = vsel %vm368, %v8358, 0.0
        %8435 = vadd.xlane.f32.xlu0 %v8434
        %v8436 = vpop.xlane.xlu0 %8435
        %v8437 = vsel %vm368, %v8360, 0.0
        %8438 = vadd.xlane.f32.xlu0 %v8437
        %v8439 = vpop.xlane.xlu0 %8438
        %v8440 = vsel %vm368, %v8362, 0.0
        %8441 = vadd.xlane.f32.xlu0 %v8440
        %v8442 = vpop.xlane.xlu0 %8441
        %v8443 = vsel %vm368, %v8364, 0.0
        %8444 = vadd.xlane.f32.xlu0 %v8443
        %v8445 = vpop.xlane.xlu0 %8444
        %v8446 = vsel %vm368, %v8366, 0.0
        %8447 = vadd.xlane.f32.xlu0 %v8446
        %v8448 = vpop.xlane.xlu0 %8447
        %v8449 = vsel %vm368, %v8368, 0.0
        %8450 = vadd.xlane.f32.xlu0 %v8449
        %v8451 = vpop.xlane.xlu0 %8450
        %v8452 = vsel %vm368, %v8370, 0.0
        %8453 = vadd.xlane.f32.xlu0 %v8452
        %v8454 = vpop.xlane.xlu0 %8453
        %v8455 = vsel %vm368, %v8372, 0.0
        %8456 = vadd.xlane.f32.xlu0 %v8455
        %v8457 = vpop.xlane.xlu0 %8456
        %v8458 = vsel %vm368, %v8374, 0.0
        %8459 = vadd.xlane.f32.xlu0 %v8458
        %v8460 = vpop.xlane.xlu0 %8459
        %v8461 = vsel %vm368, %v8376, 0.0
        %8462 = vadd.xlane.f32.xlu0 %v8461
        %v8463 = vpop.xlane.xlu0 %8462
        %v8464 = vsel %vm368, %v8378, 0.0
        %8465 = vadd.xlane.f32.xlu0 %v8464
        %v8466 = vpop.xlane.xlu0 %8465
        %v8467 = vsel %vm368, %v8380, 0.0
        %8468 = vadd.xlane.f32.xlu0 %v8467
        %v8469 = vpop.xlane.xlu0 %8468
        %v8470 = vsel %vm368, %v8382, 0.0
        %8471 = vadd.xlane.f32.xlu0 %v8470
        %v8472 = vpop.xlane.xlu0 %8471
        %v8473 = vsel %vm368, %v8384, 0.0
        %8474 = vadd.xlane.f32.xlu0 %v8473
        %v8475 = vpop.xlane.xlu0 %8474
        %v8476 = vsel %vm368, %v8386, 0.0
        %8477 = vadd.xlane.f32.xlu0 %v8476
        %v8478 = vpop.xlane.xlu0 %8477
        %v8479 = vsel %vm368, %v8388, 0.0
        %8480 = vadd.xlane.f32.xlu0 %v8479
        %v8481 = vpop.xlane.xlu0 %8480
        %v8482 = vsel %vm368, %v8390, 0.0
        %8483 = vadd.xlane.f32.xlu0 %v8482
        %v8484 = vpop.xlane.xlu0 %8483
        %v8485 = vsel %vm368, %v8392, 0.0
        %8486 = vadd.xlane.f32.xlu0 %v8485
        %v8487 = vpop.xlane.xlu0 %8486
        %v8488 = vsel %vm368, %v8394, 0.0
        %8489 = vadd.xlane.f32.xlu0 %v8488
        %v8490 = vpop.xlane.xlu0 %8489
        %v8491 = vrcp.pop %v8397
        %v8492 = vrcp.pop %v8400
        %v8493 = vrcp.pop %v8403
        %v8494 = vrcp.pop %v8406
        %v8495 = vrcp.pop %v8409
        %v8496 = vrcp.pop %v8412
        %v8497 = vrcp.pop %v8415
        %v8498 = vrcp.pop %v8418
        %v8499 = vrcp.pop %v8421
        %v8500 = vrcp.pop %v8424
        %v8501 = vrcp.pop %v8427
        %v8502 = vrcp.pop %v8430
        %v8503 = vrcp.pop %v8433
        %v8504 = vrcp.pop %v8436
        %v8505 = vrcp.pop %v8439
        %v8506 = vrcp.pop %v8442
        %v8507 = vrcp.pop %v8445
        %v8508 = vrcp.pop %v8448
        %v8509 = vrcp.pop %v8451
        %v8510 = vrcp.pop %v8454
        %v8511 = vrcp.pop %v8457
        %v8512 = vrcp.pop %v8460
        %v8513 = vrcp.pop %v8463
        %v8514 = vrcp.pop %v8466
        %v8515 = vrcp.pop %v8469
        %v8516 = vrcp.pop %v8472
        %v8517 = vrcp.pop %v8475
        %v8518 = vrcp.pop %v8478
        %v8519 = vrcp.pop %v8481
        %v8520 = vrcp.pop %v8484
        %v8521 = vrcp.pop %v8487
        %v8522 = vrcp.pop %v8490
        %v8523 = vmul.f32 %v8332, %v8491
        %v8524 = vmul.f32 %v8334, %v8492
        %v8525 = vmul.f32 %v8336, %v8493
        %v8526 = vmul.f32 %v8338, %v8494
        %v8527 = vmul.f32 %v8340, %v8495
        %v8528 = vmul.f32 %v8342, %v8496
        %v8529 = vmul.f32 %v8344, %v8497
        %v8530 = vmul.f32 %v8346, %v8498
        %v8531 = vmul.f32 %v8348, %v8499
        %v8532 = vmul.f32 %v8350, %v8500
        %v8533 = vmul.f32 %v8352, %v8501
        %v8534 = vmul.f32 %v8354, %v8502
        %v8535 = vmul.f32 %v8356, %v8503
        %v8536 = vmul.f32 %v8358, %v8504
        %v8537 = vmul.f32 %v8360, %v8505
        %v8538 = vmul.f32 %v8362, %v8506
        %v8539 = vmul.f32 %v8364, %v8507
        %v8540 = vmul.f32 %v8366, %v8508
        %v8541 = vmul.f32 %v8368, %v8509
        %v8542 = vmul.f32 %v8370, %v8510
        %v8543 = vmul.f32 %v8372, %v8511
        %v8544 = vmul.f32 %v8374, %v8512
        %v8545 = vmul.f32 %v8376, %v8513
        %v8546 = vmul.f32 %v8378, %v8514
        %v8547 = vmul.f32 %v8380, %v8515
        %v8548 = vmul.f32 %v8382, %v8516
        %v8549 = vmul.f32 %v8384, %v8517
        %v8550 = vmul.f32 %v8386, %v8518
        %v8551 = vmul.f32 %v8388, %v8519
        %v8552 = vmul.f32 %v8390, %v8520
        %v8553 = vmul.f32 %v8392, %v8521
        %v8554 = vmul.f32 %v8394, %v8522
        %8555 = vrot.lane.b32.xlu0 %v7688, 96
        %v8556 = vpop.permute.xlu0 %8555
        %8557 = vrot.lane.b32.xlu0 %v7690, 96
        %v8558 = vpop.permute.xlu0 %8557
        %8559 = vrot.lane.b32.xlu0 %v7692, 96
        %v8560 = vpop.permute.xlu0 %8559
        %8561 = vrot.lane.b32.xlu0 %v7694, 96
        %v8562 = vpop.permute.xlu0 %8561
        %8563 = vrot.lane.b32.xlu0 %v7696, 96
        %v8564 = vpop.permute.xlu0 %8563
        %8565 = vrot.lane.b32.xlu0 %v7698, 96
        %v8566 = vpop.permute.xlu0 %8565
        %8567 = vrot.lane.b32.xlu0 %v7700, 96
        %v8568 = vpop.permute.xlu0 %8567
        %8569 = vrot.lane.b32.xlu0 %v7702, 96
        %v8570 = vpop.permute.xlu0 %8569
        %v8580 = vsel %vm368, %v8523, 0
        %v8583 = vsel %vm368, %v8524, 0
        %v8586 = vsel %vm368, %v8525, 0
        %v8589 = vsel %vm368, %v8526, 0
        %v8592 = vsel %vm368, %v8527, 0
        %v8595 = vsel %vm368, %v8528, 0
        %v8598 = vsel %vm368, %v8529, 0
        %v8601 = vsel %vm368, %v8530, 0
        %8603 = vmatpush.msra.mxu0 0.0
        %8604 = vmatpush.msra.mxu0 0.0
        %8605 = vmatpush.msra.mxu0 0.0
        %8606 = vmatpush.msra.mxu0 0.0
        %8607 = vmatpush.msra.mxu0 0.0
        %8608 = vmatpush.msra.mxu0 0.0
        %8609 = vmatpush.msra.mxu0 0.0
        %8610 = vmatpush.msra.mxu0 0.0
        %8611 = vmatpush.msra.mxu0 %v8570
        %8612 = vmatpush.msra.mxu0 %v8568
        %8613 = vmatpush.msra.mxu0 %v8566
        %8614 = vmatpush.msra.mxu0 %v8564
        %8615 = vmatpush.msra.mxu0 %v8562
        %8616 = vmatpush.msra.mxu0 %v8560
        %8617 = vmatpush.msra.mxu0 %v8558
        %8618 = vmatpush.msra.mxu0 %v8556
        %8619 = vmatmul.f32.gmra.mxu0 %v8580
        %v8620 = vpop.f32.mrf.mxu0
        %v8621 = vadd.f32 0.0, %v8620
        %8622 = vmatmul.f32.gmra.mxu0 %v8583
        %v8623 = vpop.f32.mrf.mxu0
        %v8624 = vadd.f32 0.0, %v8623
        %8625 = vmatmul.f32.gmra.mxu0 %v8586
        %v8626 = vpop.f32.mrf.mxu0
        %v8627 = vadd.f32 0.0, %v8626
        %8628 = vmatmul.f32.gmra.mxu0 %v8589
        %v8629 = vpop.f32.mrf.mxu0
        %v8630 = vadd.f32 0.0, %v8629
        %8631 = vmatmul.f32.gmra.mxu0 %v8592
        %v8632 = vpop.f32.mrf.mxu0
        %v8633 = vadd.f32 0.0, %v8632
        %8634 = vmatmul.f32.gmra.mxu0 %v8595
        %v8635 = vpop.f32.mrf.mxu0
        %v8636 = vadd.f32 0.0, %v8635
        %8637 = vmatmul.f32.gmra.mxu0 %v8598
        %v8638 = vpop.f32.mrf.mxu0
        %v8639 = vadd.f32 0.0, %v8638
        %8640 = vmatmul.f32.gmra.mxu0 %v8601
        %v8641 = vpop.f32.mrf.mxu0
        %v8642 = vadd.f32 0.0, %v8641
        %8643 = vdwg.mxu0
        %8644 = vrot.lane.b32.xlu0 %v7704, 96
        %v8645 = vpop.permute.xlu0 %8644
        %8646 = vrot.lane.b32.xlu0 %v7706, 96
        %v8647 = vpop.permute.xlu0 %8646
        %8648 = vrot.lane.b32.xlu0 %v7708, 96
        %v8649 = vpop.permute.xlu0 %8648
        %8650 = vrot.lane.b32.xlu0 %v7710, 96
        %v8651 = vpop.permute.xlu0 %8650
        %8652 = vrot.lane.b32.xlu0 %v7712, 96
        %v8653 = vpop.permute.xlu0 %8652
        %8654 = vrot.lane.b32.xlu0 %v7714, 96
        %v8655 = vpop.permute.xlu0 %8654
        %8656 = vrot.lane.b32.xlu0 %v7716, 96
        %v8657 = vpop.permute.xlu0 %8656
        %8658 = vrot.lane.b32.xlu0 %v7718, 96
        %v8659 = vpop.permute.xlu0 %8658
        %v8669 = vsel %vm368, %v8531, 0
        %v8672 = vsel %vm368, %v8532, 0
        %v8675 = vsel %vm368, %v8533, 0
        %v8678 = vsel %vm368, %v8534, 0
        %v8681 = vsel %vm368, %v8535, 0
        %v8684 = vsel %vm368, %v8536, 0
        %v8687 = vsel %vm368, %v8537, 0
        %v8690 = vsel %vm368, %v8538, 0
        %8692 = vmatpush.msra.mxu0 0.0
        %8693 = vmatpush.msra.mxu0 0.0
        %8694 = vmatpush.msra.mxu0 0.0
        %8695 = vmatpush.msra.mxu0 0.0
        %8696 = vmatpush.msra.mxu0 0.0
        %8697 = vmatpush.msra.mxu0 0.0
        %8698 = vmatpush.msra.mxu0 0.0
        %8699 = vmatpush.msra.mxu0 0.0
        %8700 = vmatpush.msra.mxu0 %v8659
        %8701 = vmatpush.msra.mxu0 %v8657
        %8702 = vmatpush.msra.mxu0 %v8655
        %8703 = vmatpush.msra.mxu0 %v8653
        %8704 = vmatpush.msra.mxu0 %v8651
        %8705 = vmatpush.msra.mxu0 %v8649
        %8706 = vmatpush.msra.mxu0 %v8647
        %8707 = vmatpush.msra.mxu0 %v8645
        %8708 = vmatmul.f32.gmra.mxu0 %v8669
        %v8709 = vpop.f32.mrf.mxu0
        %v8710 = vadd.f32 0.0, %v8709
        %8711 = vmatmul.f32.gmra.mxu0 %v8672
        %v8712 = vpop.f32.mrf.mxu0
        %v8713 = vadd.f32 0.0, %v8712
        %8714 = vmatmul.f32.gmra.mxu0 %v8675
        %v8715 = vpop.f32.mrf.mxu0
        %v8716 = vadd.f32 0.0, %v8715
        %8717 = vmatmul.f32.gmra.mxu0 %v8678
        %v8718 = vpop.f32.mrf.mxu0
        %v8719 = vadd.f32 0.0, %v8718
        %8720 = vmatmul.f32.gmra.mxu0 %v8681
        %v8721 = vpop.f32.mrf.mxu0
        %v8722 = vadd.f32 0.0, %v8721
        %8723 = vmatmul.f32.gmra.mxu0 %v8684
        %v8724 = vpop.f32.mrf.mxu0
        %v8725 = vadd.f32 0.0, %v8724
        %8726 = vmatmul.f32.gmra.mxu0 %v8687
        %v8727 = vpop.f32.mrf.mxu0
        %v8728 = vadd.f32 0.0, %v8727
        %8729 = vmatmul.f32.gmra.mxu0 %v8690
        %v8730 = vpop.f32.mrf.mxu0
        %v8731 = vadd.f32 0.0, %v8730
        %8732 = vdwg.mxu0
        %8733 = vrot.lane.b32.xlu0 %v7720, 96
        %v8734 = vpop.permute.xlu0 %8733
        %8735 = vrot.lane.b32.xlu0 %v7722, 96
        %v8736 = vpop.permute.xlu0 %8735
        %8737 = vrot.lane.b32.xlu0 %v7724, 96
        %v8738 = vpop.permute.xlu0 %8737
        %8739 = vrot.lane.b32.xlu0 %v7726, 96
        %v8740 = vpop.permute.xlu0 %8739
        %8741 = vrot.lane.b32.xlu0 %v7728, 96
        %v8742 = vpop.permute.xlu0 %8741
        %8743 = vrot.lane.b32.xlu0 %v7730, 96
        %v8744 = vpop.permute.xlu0 %8743
        %8745 = vrot.lane.b32.xlu0 %v7732, 96
        %v8746 = vpop.permute.xlu0 %8745
        %8747 = vrot.lane.b32.xlu0 %v7734, 96
        %v8748 = vpop.permute.xlu0 %8747
        %v8758 = vsel %vm368, %v8539, 0
        %v8761 = vsel %vm368, %v8540, 0
        %v8764 = vsel %vm368, %v8541, 0
        %v8767 = vsel %vm368, %v8542, 0
        %v8770 = vsel %vm368, %v8543, 0
        %v8773 = vsel %vm368, %v8544, 0
        %v8776 = vsel %vm368, %v8545, 0
        %v8779 = vsel %vm368, %v8546, 0
        %8781 = vmatpush.msra.mxu0 0.0
        %8782 = vmatpush.msra.mxu0 0.0
        %8783 = vmatpush.msra.mxu0 0.0
        %8784 = vmatpush.msra.mxu0 0.0
        %8785 = vmatpush.msra.mxu0 0.0
        %8786 = vmatpush.msra.mxu0 0.0
        %8787 = vmatpush.msra.mxu0 0.0
        %8788 = vmatpush.msra.mxu0 0.0
        %8789 = vmatpush.msra.mxu0 %v8748
        %8790 = vmatpush.msra.mxu0 %v8746
        %8791 = vmatpush.msra.mxu0 %v8744
        %8792 = vmatpush.msra.mxu0 %v8742
        %8793 = vmatpush.msra.mxu0 %v8740
        %8794 = vmatpush.msra.mxu0 %v8738
        %8795 = vmatpush.msra.mxu0 %v8736
        %8796 = vmatpush.msra.mxu0 %v8734
        %8797 = vmatmul.f32.gmra.mxu0 %v8758
        %v8798 = vpop.f32.mrf.mxu0
        %v8799 = vadd.f32 0.0, %v8798
        %8800 = vmatmul.f32.gmra.mxu0 %v8761
        %v8801 = vpop.f32.mrf.mxu0
        %v8802 = vadd.f32 0.0, %v8801
        %8803 = vmatmul.f32.gmra.mxu0 %v8764
        %v8804 = vpop.f32.mrf.mxu0
        %v8805 = vadd.f32 0.0, %v8804
        %8806 = vmatmul.f32.gmra.mxu0 %v8767
        %v8807 = vpop.f32.mrf.mxu0
        %v8808 = vadd.f32 0.0, %v8807
        %8809 = vmatmul.f32.gmra.mxu0 %v8770
        %v8810 = vpop.f32.mrf.mxu0
        %v8811 = vadd.f32 0.0, %v8810
        %8812 = vmatmul.f32.gmra.mxu0 %v8773
        %v8813 = vpop.f32.mrf.mxu0
        %v8814 = vadd.f32 0.0, %v8813
        %8815 = vmatmul.f32.gmra.mxu0 %v8776
        %v8816 = vpop.f32.mrf.mxu0
        %v8817 = vadd.f32 0.0, %v8816
        %8818 = vmatmul.f32.gmra.mxu0 %v8779
        %v8819 = vpop.f32.mrf.mxu0
        %v8820 = vadd.f32 0.0, %v8819
        %8821 = vdwg.mxu0
        %8822 = vrot.lane.b32.xlu0 %v7736, 96
        %v8823 = vpop.permute.xlu0 %8822
        %8824 = vrot.lane.b32.xlu0 %v7738, 96
        %v8825 = vpop.permute.xlu0 %8824
        %8826 = vrot.lane.b32.xlu0 %v7740, 96
        %v8827 = vpop.permute.xlu0 %8826
        %8828 = vrot.lane.b32.xlu0 %v7742, 96
        %v8829 = vpop.permute.xlu0 %8828
        %8830 = vrot.lane.b32.xlu0 %v7744, 96
        %v8831 = vpop.permute.xlu0 %8830
        %8832 = vrot.lane.b32.xlu0 %v7746, 96
        %v8833 = vpop.permute.xlu0 %8832
        %8834 = vrot.lane.b32.xlu0 %v7748, 96
        %v8835 = vpop.permute.xlu0 %8834
        %8836 = vrot.lane.b32.xlu0 %v7750, 96
        %v8837 = vpop.permute.xlu0 %8836
        %v8847 = vsel %vm368, %v8547, 0
        %v8850 = vsel %vm368, %v8548, 0
        %v8853 = vsel %vm368, %v8549, 0
        %v8856 = vsel %vm368, %v8550, 0
        %v8859 = vsel %vm368, %v8551, 0
        %v8862 = vsel %vm368, %v8552, 0
        %v8865 = vsel %vm368, %v8553, 0
        %v8868 = vsel %vm368, %v8554, 0
        %8870 = vmatpush.msra.mxu0 0.0
        %8871 = vmatpush.msra.mxu0 0.0
        %8872 = vmatpush.msra.mxu0 0.0
        %8873 = vmatpush.msra.mxu0 0.0
        %8874 = vmatpush.msra.mxu0 0.0
        %8875 = vmatpush.msra.mxu0 0.0
        %8876 = vmatpush.msra.mxu0 0.0
        %8877 = vmatpush.msra.mxu0 0.0
        %8878 = vmatpush.msra.mxu0 %v8837
        %8879 = vmatpush.msra.mxu0 %v8835
        %8880 = vmatpush.msra.mxu0 %v8833
        %8881 = vmatpush.msra.mxu0 %v8831
        %8882 = vmatpush.msra.mxu0 %v8829
        %8883 = vmatpush.msra.mxu0 %v8827
        %8884 = vmatpush.msra.mxu0 %v8825
        %8885 = vmatpush.msra.mxu0 %v8823
        %8886 = vmatmul.f32.gmra.mxu0 %v8847
        %v8887 = vpop.f32.mrf.mxu0
        %v8888 = vadd.f32 0.0, %v8887
        %8889 = vmatmul.f32.gmra.mxu0 %v8850
        %v8890 = vpop.f32.mrf.mxu0
        %v8891 = vadd.f32 0.0, %v8890
        %8892 = vmatmul.f32.gmra.mxu0 %v8853
        %v8893 = vpop.f32.mrf.mxu0
        %v8894 = vadd.f32 0.0, %v8893
        %8895 = vmatmul.f32.gmra.mxu0 %v8856
        %v8896 = vpop.f32.mrf.mxu0
        %v8897 = vadd.f32 0.0, %v8896
        %8898 = vmatmul.f32.gmra.mxu0 %v8859
        %v8899 = vpop.f32.mrf.mxu0
        %v8900 = vadd.f32 0.0, %v8899
        %8901 = vmatmul.f32.gmra.mxu0 %v8862
        %v8902 = vpop.f32.mrf.mxu0
        %v8903 = vadd.f32 0.0, %v8902
        %8904 = vmatmul.f32.gmra.mxu0 %v8865
        %v8905 = vpop.f32.mrf.mxu0
        %v8906 = vadd.f32 0.0, %v8905
        %8907 = vmatmul.f32.gmra.mxu0 %v8868
        %v8908 = vpop.f32.mrf.mxu0
        %v8909 = vadd.f32 0.0, %v8908
        %8910 = vdwg.mxu0
        %8943 = vrot.lane.b32.xlu0 %v3885, 32
        %v8944 = vpop.permute.xlu0 %8943
        %8945 = vrot.lane.b32.xlu0 %v3888, 32
        %v8946 = vpop.permute.xlu0 %8945
        %8947 = vrot.lane.b32.xlu0 %v3891, 32
        %v8948 = vpop.permute.xlu0 %8947
        %8949 = vrot.lane.b32.xlu0 %v3894, 32
        %v8950 = vpop.permute.xlu0 %8949
        %8951 = vrot.lane.b32.xlu0 %v3897, 32
        %v8952 = vpop.permute.xlu0 %8951
        %8953 = vrot.lane.b32.xlu0 %v3900, 32
        %v8954 = vpop.permute.xlu0 %8953
        %8955 = vrot.lane.b32.xlu0 %v3903, 32
        %v8956 = vpop.permute.xlu0 %8955
        %8957 = vrot.lane.b32.xlu0 %v3906, 32
        %v8958 = vpop.permute.xlu0 %8957
        %8959 = vrot.lane.b32.xlu0 %v3974, 32
        %v8960 = vpop.permute.xlu0 %8959
        %8961 = vrot.lane.b32.xlu0 %v3977, 32
        %v8962 = vpop.permute.xlu0 %8961
        %8963 = vrot.lane.b32.xlu0 %v3980, 32
        %v8964 = vpop.permute.xlu0 %8963
        %8965 = vrot.lane.b32.xlu0 %v3983, 32
        %v8966 = vpop.permute.xlu0 %8965
        %8967 = vrot.lane.b32.xlu0 %v3986, 32
        %v8968 = vpop.permute.xlu0 %8967
        %8969 = vrot.lane.b32.xlu0 %v3989, 32
        %v8970 = vpop.permute.xlu0 %8969
        %8971 = vrot.lane.b32.xlu0 %v3992, 32
        %v8972 = vpop.permute.xlu0 %8971
        %8973 = vrot.lane.b32.xlu0 %v3995, 32
        %v8974 = vpop.permute.xlu0 %8973
        %8975 = vrot.lane.b32.xlu0 %v4063, 32
        %v8976 = vpop.permute.xlu0 %8975
        %8977 = vrot.lane.b32.xlu0 %v4066, 32
        %v8978 = vpop.permute.xlu0 %8977
        %8979 = vrot.lane.b32.xlu0 %v4069, 32
        %v8980 = vpop.permute.xlu0 %8979
        %8981 = vrot.lane.b32.xlu0 %v4072, 32
        %v8982 = vpop.permute.xlu0 %8981
        %8983 = vrot.lane.b32.xlu0 %v4075, 32
        %v8984 = vpop.permute.xlu0 %8983
        %8985 = vrot.lane.b32.xlu0 %v4078, 32
        %v8986 = vpop.permute.xlu0 %8985
        %8987 = vrot.lane.b32.xlu0 %v4081, 32
        %v8988 = vpop.permute.xlu0 %8987
        %8989 = vrot.lane.b32.xlu0 %v4084, 32
        %v8990 = vpop.permute.xlu0 %8989
        %8991 = vrot.lane.b32.xlu0 %v4152, 32
        %v8992 = vpop.permute.xlu0 %8991
        %8993 = vrot.lane.b32.xlu0 %v4155, 32
        %v8994 = vpop.permute.xlu0 %8993
        %8995 = vrot.lane.b32.xlu0 %v4158, 32
        %v8996 = vpop.permute.xlu0 %8995
        %8997 = vrot.lane.b32.xlu0 %v4161, 32
        %v8998 = vpop.permute.xlu0 %8997
        %8999 = vrot.lane.b32.xlu0 %v4164, 32
        %v9000 = vpop.permute.xlu0 %8999
        %9001 = vrot.lane.b32.xlu0 %v4167, 32
        %v9002 = vpop.permute.xlu0 %9001
        %9003 = vrot.lane.b32.xlu0 %v4170, 32
        %v9004 = vpop.permute.xlu0 %9003
        %9005 = vrot.lane.b32.xlu0 %v4173, 32
        %v9006 = vpop.permute.xlu0 %9005
        %9071 = vrot.lane.b32.xlu0 %v5117, 64
        %v9072 = vpop.permute.xlu0 %9071
        %9073 = vrot.lane.b32.xlu0 %v5120, 64
        %v9074 = vpop.permute.xlu0 %9073
        %9075 = vrot.lane.b32.xlu0 %v5123, 64
        %v9076 = vpop.permute.xlu0 %9075
        %9077 = vrot.lane.b32.xlu0 %v5126, 64
        %v9078 = vpop.permute.xlu0 %9077
        %9079 = vrot.lane.b32.xlu0 %v5129, 64
        %v9080 = vpop.permute.xlu0 %9079
        %9081 = vrot.lane.b32.xlu0 %v5132, 64
        %v9082 = vpop.permute.xlu0 %9081
        %9083 = vrot.lane.b32.xlu0 %v5135, 64
        %v9084 = vpop.permute.xlu0 %9083
        %9085 = vrot.lane.b32.xlu0 %v5138, 64
        %v9086 = vpop.permute.xlu0 %9085
        %9087 = vrot.lane.b32.xlu0 %v5182, 64
        %v9088 = vpop.permute.xlu0 %9087
        %9089 = vrot.lane.b32.xlu0 %v5185, 64
        %v9090 = vpop.permute.xlu0 %9089
        %9091 = vrot.lane.b32.xlu0 %v5188, 64
        %v9092 = vpop.permute.xlu0 %9091
        %9093 = vrot.lane.b32.xlu0 %v5191, 64
        %v9094 = vpop.permute.xlu0 %9093
        %9095 = vrot.lane.b32.xlu0 %v5194, 64
        %v9096 = vpop.permute.xlu0 %9095
        %9097 = vrot.lane.b32.xlu0 %v5197, 64
        %v9098 = vpop.permute.xlu0 %9097
        %9099 = vrot.lane.b32.xlu0 %v5200, 64
        %v9100 = vpop.permute.xlu0 %9099
        %9101 = vrot.lane.b32.xlu0 %v5203, 64
        %v9102 = vpop.permute.xlu0 %9101
        %9103 = vrot.lane.b32.xlu0 %v5247, 64
        %v9104 = vpop.permute.xlu0 %9103
        %9105 = vrot.lane.b32.xlu0 %v5250, 64
        %v9106 = vpop.permute.xlu0 %9105
        %9107 = vrot.lane.b32.xlu0 %v5253, 64
        %v9108 = vpop.permute.xlu0 %9107
        %9109 = vrot.lane.b32.xlu0 %v5256, 64
        %v9110 = vpop.permute.xlu0 %9109
        %9111 = vrot.lane.b32.xlu0 %v5259, 64
        %v9112 = vpop.permute.xlu0 %9111
        %9113 = vrot.lane.b32.xlu0 %v5262, 64
        %v9114 = vpop.permute.xlu0 %9113
        %9115 = vrot.lane.b32.xlu0 %v5265, 64
        %v9116 = vpop.permute.xlu0 %9115
        %9117 = vrot.lane.b32.xlu0 %v5268, 64
        %v9118 = vpop.permute.xlu0 %9117
        %9119 = vrot.lane.b32.xlu0 %v5312, 64
        %v9120 = vpop.permute.xlu0 %9119
        %9121 = vrot.lane.b32.xlu0 %v5315, 64
        %v9122 = vpop.permute.xlu0 %9121
        %9123 = vrot.lane.b32.xlu0 %v5318, 64
        %v9124 = vpop.permute.xlu0 %9123
        %9125 = vrot.lane.b32.xlu0 %v5321, 64
        %v9126 = vpop.permute.xlu0 %9125
        %9127 = vrot.lane.b32.xlu0 %v5324, 64
        %v9128 = vpop.permute.xlu0 %9127
        %9129 = vrot.lane.b32.xlu0 %v5327, 64
        %v9130 = vpop.permute.xlu0 %9129
        %9131 = vrot.lane.b32.xlu0 %v5330, 64
        %v9132 = vpop.permute.xlu0 %9131
        %9133 = vrot.lane.b32.xlu0 %v5333, 64
        %v9134 = vpop.permute.xlu0 %9133
        %9199 = vrot.lane.b32.xlu0 %v6237, 96
        %v9200 = vpop.permute.xlu0 %9199
        %9201 = vrot.lane.b32.xlu0 %v6240, 96
        %v9202 = vpop.permute.xlu0 %9201
        %9203 = vrot.lane.b32.xlu0 %v6243, 96
        %v9204 = vpop.permute.xlu0 %9203
        %9205 = vrot.lane.b32.xlu0 %v6246, 96
        %v9206 = vpop.permute.xlu0 %9205
        %9207 = vrot.lane.b32.xlu0 %v6249, 96
        %v9208 = vpop.permute.xlu0 %9207
        %9209 = vrot.lane.b32.xlu0 %v6252, 96
        %v9210 = vpop.permute.xlu0 %9209
        %9211 = vrot.lane.b32.xlu0 %v6255, 96
        %v9212 = vpop.permute.xlu0 %9211
        %9213 = vrot.lane.b32.xlu0 %v6258, 96
        %v9214 = vpop.permute.xlu0 %9213
        %9215 = vrot.lane.b32.xlu0 %v6326, 96
        %v9216 = vpop.permute.xlu0 %9215
        %9217 = vrot.lane.b32.xlu0 %v6329, 96
        %v9218 = vpop.permute.xlu0 %9217
        %9219 = vrot.lane.b32.xlu0 %v6332, 96
        %v9220 = vpop.permute.xlu0 %9219
        %9221 = vrot.lane.b32.xlu0 %v6335, 96
        %v9222 = vpop.permute.xlu0 %9221
        %9223 = vrot.lane.b32.xlu0 %v6338, 96
        %v9224 = vpop.permute.xlu0 %9223
        %9225 = vrot.lane.b32.xlu0 %v6341, 96
        %v9226 = vpop.permute.xlu0 %9225
        %9227 = vrot.lane.b32.xlu0 %v6344, 96
        %v9228 = vpop.permute.xlu0 %9227
        %9229 = vrot.lane.b32.xlu0 %v6347, 96
        %v9230 = vpop.permute.xlu0 %9229
        %9231 = vrot.lane.b32.xlu0 %v6415, 96
        %v9232 = vpop.permute.xlu0 %9231
        %9233 = vrot.lane.b32.xlu0 %v6418, 96
        %v9234 = vpop.permute.xlu0 %9233
        %9235 = vrot.lane.b32.xlu0 %v6421, 96
        %v9236 = vpop.permute.xlu0 %9235
        %9237 = vrot.lane.b32.xlu0 %v6424, 96
        %v9238 = vpop.permute.xlu0 %9237
        %9239 = vrot.lane.b32.xlu0 %v6427, 96
        %v9240 = vpop.permute.xlu0 %9239
        %9241 = vrot.lane.b32.xlu0 %v6430, 96
        %v9242 = vpop.permute.xlu0 %9241
        %9243 = vrot.lane.b32.xlu0 %v6433, 96
        %v9244 = vpop.permute.xlu0 %9243
        %9245 = vrot.lane.b32.xlu0 %v6436, 96
        %v9246 = vpop.permute.xlu0 %9245
        %9247 = vrot.lane.b32.xlu0 %v6504, 96
        %v9248 = vpop.permute.xlu0 %9247
        %9249 = vrot.lane.b32.xlu0 %v6507, 96
        %v9250 = vpop.permute.xlu0 %9249
        %9251 = vrot.lane.b32.xlu0 %v6510, 96
        %v9252 = vpop.permute.xlu0 %9251
        %9253 = vrot.lane.b32.xlu0 %v6513, 96
        %v9254 = vpop.permute.xlu0 %9253
        %9255 = vrot.lane.b32.xlu0 %v6516, 96
        %v9256 = vpop.permute.xlu0 %9255
        %9257 = vrot.lane.b32.xlu0 %v6519, 96
        %v9258 = vpop.permute.xlu0 %9257
        %9259 = vrot.lane.b32.xlu0 %v6522, 96
        %v9260 = vpop.permute.xlu0 %9259
        %9261 = vrot.lane.b32.xlu0 %v6525, 96
        %v9262 = vpop.permute.xlu0 %9261
        %9327 = vrot.lane.b32.xlu0 %v8621, 32
        %v9328 = vpop.permute.xlu0 %9327
        %9329 = vrot.lane.b32.xlu0 %v8624, 32
        %v9330 = vpop.permute.xlu0 %9329
        %9331 = vrot.lane.b32.xlu0 %v8627, 32
        %v9332 = vpop.permute.xlu0 %9331
        %9333 = vrot.lane.b32.xlu0 %v8630, 32
        %v9334 = vpop.permute.xlu0 %9333
        %9335 = vrot.lane.b32.xlu0 %v8633, 32
        %v9336 = vpop.permute.xlu0 %9335
        %9337 = vrot.lane.b32.xlu0 %v8636, 32
        %v9338 = vpop.permute.xlu0 %9337
        %9339 = vrot.lane.b32.xlu0 %v8639, 32
        %v9340 = vpop.permute.xlu0 %9339
        %9341 = vrot.lane.b32.xlu0 %v8642, 32
        %v9342 = vpop.permute.xlu0 %9341
        %9343 = vrot.lane.b32.xlu0 %v8710, 32
        %v9344 = vpop.permute.xlu0 %9343
        %9345 = vrot.lane.b32.xlu0 %v8713, 32
        %v9346 = vpop.permute.xlu0 %9345
        %9347 = vrot.lane.b32.xlu0 %v8716, 32
        %v9348 = vpop.permute.xlu0 %9347
        %9349 = vrot.lane.b32.xlu0 %v8719, 32
        %v9350 = vpop.permute.xlu0 %9349
        %9351 = vrot.lane.b32.xlu0 %v8722, 32
        %v9352 = vpop.permute.xlu0 %9351
        %9353 = vrot.lane.b32.xlu0 %v8725, 32
        %v9354 = vpop.permute.xlu0 %9353
        %9355 = vrot.lane.b32.xlu0 %v8728, 32
        %v9356 = vpop.permute.xlu0 %9355
        %9357 = vrot.lane.b32.xlu0 %v8731, 32
        %v9358 = vpop.permute.xlu0 %9357
        %9359 = vrot.lane.b32.xlu0 %v8799, 32
        %v9360 = vpop.permute.xlu0 %9359
        %9361 = vrot.lane.b32.xlu0 %v8802, 32
        %v9362 = vpop.permute.xlu0 %9361
        %9363 = vrot.lane.b32.xlu0 %v8805, 32
        %v9364 = vpop.permute.xlu0 %9363
        %9365 = vrot.lane.b32.xlu0 %v8808, 32
        %v9366 = vpop.permute.xlu0 %9365
        %9367 = vrot.lane.b32.xlu0 %v8811, 32
        %v9368 = vpop.permute.xlu0 %9367
        %9369 = vrot.lane.b32.xlu0 %v8814, 32
        %v9370 = vpop.permute.xlu0 %9369
        %9371 = vrot.lane.b32.xlu0 %v8817, 32
        %v9372 = vpop.permute.xlu0 %9371
        %9373 = vrot.lane.b32.xlu0 %v8820, 32
        %v9374 = vpop.permute.xlu0 %9373
        %9375 = vrot.lane.b32.xlu0 %v8888, 32
        %v9376 = vpop.permute.xlu0 %9375
        %9377 = vrot.lane.b32.xlu0 %v8891, 32
        %v9378 = vpop.permute.xlu0 %9377
        %9379 = vrot.lane.b32.xlu0 %v8894, 32
        %v9380 = vpop.permute.xlu0 %9379
        %9381 = vrot.lane.b32.xlu0 %v8897, 32
        %v9382 = vpop.permute.xlu0 %9381
        %9383 = vrot.lane.b32.xlu0 %v8900, 32
        %v9384 = vpop.permute.xlu0 %9383
        %9385 = vrot.lane.b32.xlu0 %v8903, 32
        %v9386 = vpop.permute.xlu0 %9385
        %9387 = vrot.lane.b32.xlu0 %v8906, 32
        %v9388 = vpop.permute.xlu0 %9387
        %9389 = vrot.lane.b32.xlu0 %v8909, 32
        %v9390 = vpop.permute.xlu0 %9389
        %v9423 = vsel %vm1830, %v2661, %v8944
        %v9424 = vsel %vm1830, %v2664, %v8946
        %v9425 = vsel %vm1830, %v2667, %v8948
        %v9426 = vsel %vm1830, %v2670, %v8950
        %v9427 = vsel %vm1830, %v2673, %v8952
        %v9428 = vsel %vm1830, %v2676, %v8954
        %v9429 = vsel %vm1830, %v2679, %v8956
        %v9430 = vsel %vm1830, %v2682, %v8958
        %v9431 = vsel %vm1830, %v2750, %v8960
        %v9432 = vsel %vm1830, %v2753, %v8962
        %v9433 = vsel %vm1830, %v2756, %v8964
        %v9434 = vsel %vm1830, %v2759, %v8966
        %v9435 = vsel %vm1830, %v2762, %v8968
        %v9436 = vsel %vm1830, %v2765, %v8970
        %v9437 = vsel %vm1830, %v2768, %v8972
        %v9438 = vsel %vm1830, %v2771, %v8974
        %v9439 = vsel %vm1830, %v2839, %v8976
        %v9440 = vsel %vm1830, %v2842, %v8978
        %v9441 = vsel %vm1830, %v2845, %v8980
        %v9442 = vsel %vm1830, %v2848, %v8982
        %v9443 = vsel %vm1830, %v2851, %v8984
        %v9444 = vsel %vm1830, %v2854, %v8986
        %v9445 = vsel %vm1830, %v2857, %v8988
        %v9446 = vsel %vm1830, %v2860, %v8990
        %v9447 = vsel %vm1830, %v2928, %v8992
        %v9448 = vsel %vm1830, %v2931, %v8994
        %v9449 = vsel %vm1830, %v2934, %v8996
        %v9450 = vsel %vm1830, %v2937, %v8998
        %v9451 = vsel %vm1830, %v2940, %v9000
        %v9452 = vsel %vm1830, %v2943, %v9002
        %v9453 = vsel %vm1830, %v2946, %v9004
        %v9454 = vsel %vm1830, %v2949, %v9006
        %v9455 = vsel %vm368, %v9423, %v9072
        %v9456 = vsel %vm368, %v9424, %v9074
        %v9457 = vsel %vm368, %v9425, %v9076
        %v9458 = vsel %vm368, %v9426, %v9078
        %v9459 = vsel %vm368, %v9427, %v9080
        %v9460 = vsel %vm368, %v9428, %v9082
        %v9461 = vsel %vm368, %v9429, %v9084
        %v9462 = vsel %vm368, %v9430, %v9086
        %v9463 = vsel %vm368, %v9431, %v9088
        %v9464 = vsel %vm368, %v9432, %v9090
        %v9465 = vsel %vm368, %v9433, %v9092
        %v9466 = vsel %vm368, %v9434, %v9094
        %v9467 = vsel %vm368, %v9435, %v9096
        %v9468 = vsel %vm368, %v9436, %v9098
        %v9469 = vsel %vm368, %v9437, %v9100
        %v9470 = vsel %vm368, %v9438, %v9102
        %v9471 = vsel %vm368, %v9439, %v9104
        %v9472 = vsel %vm368, %v9440, %v9106
        %v9473 = vsel %vm368, %v9441, %v9108
        %v9474 = vsel %vm368, %v9442, %v9110
        %v9475 = vsel %vm368, %v9443, %v9112
        %v9476 = vsel %vm368, %v9444, %v9114
        %v9477 = vsel %vm368, %v9445, %v9116
        %v9478 = vsel %vm368, %v9446, %v9118
        %v9479 = vsel %vm368, %v9447, %v9120
        %v9480 = vsel %vm368, %v9448, %v9122
        %v9481 = vsel %vm368, %v9449, %v9124
        %v9482 = vsel %vm368, %v9450, %v9126
        %v9483 = vsel %vm368, %v9451, %v9128
        %v9484 = vsel %vm368, %v9452, %v9130
        %v9485 = vsel %vm368, %v9453, %v9132
        %v9486 = vsel %vm368, %v9454, %v9134
        %vm9487 = vcmask 785408
        %v9488 = vsel %vm9487, %v9455, %v9200
        %v9489 = vsel %vm9487, %v9456, %v9202
        %v9490 = vsel %vm9487, %v9457, %v9204
        %v9491 = vsel %vm9487, %v9458, %v9206
        %v9492 = vsel %vm9487, %v9459, %v9208
        %v9493 = vsel %vm9487, %v9460, %v9210
        %v9494 = vsel %vm9487, %v9461, %v9212
        %v9495 = vsel %vm9487, %v9462, %v9214
        %v9496 = vsel %vm9487, %v9463, %v9216
        %v9497 = vsel %vm9487, %v9464, %v9218
        %v9498 = vsel %vm9487, %v9465, %v9220
        %v9499 = vsel %vm9487, %v9466, %v9222
        %v9500 = vsel %vm9487, %v9467, %v9224
        %v9501 = vsel %vm9487, %v9468, %v9226
        %v9502 = vsel %vm9487, %v9469, %v9228
        %v9503 = vsel %vm9487, %v9470, %v9230
        %v9504 = vsel %vm9487, %v9471, %v9232
        %v9505 = vsel %vm9487, %v9472, %v9234
        %v9506 = vsel %vm9487, %v9473, %v9236
        %v9507 = vsel %vm9487, %v9474, %v9238
        %v9508 = vsel %vm9487, %v9475, %v9240
        %v9509 = vsel %vm9487, %v9476, %v9242
        %v9510 = vsel %vm9487, %v9477, %v9244
        %v9511 = vsel %vm9487, %v9478, %v9246
        %v9512 = vsel %vm9487, %v9479, %v9248
        %v9513 = vsel %vm9487, %v9480, %v9250
        %v9514 = vsel %vm9487, %v9481, %v9252
        %v9515 = vsel %vm9487, %v9482, %v9254
        %v9516 = vsel %vm9487, %v9483, %v9256
        %v9517 = vsel %vm9487, %v9484, %v9258
        %v9518 = vsel %vm9487, %v9485, %v9260
        %v9519 = vsel %vm9487, %v9486, %v9262
        %v9520 = vsel %vm1830, %v7397, %v9328
        %v9521 = vsel %vm1830, %v7400, %v9330
        %v9522 = vsel %vm1830, %v7403, %v9332
        %v9523 = vsel %vm1830, %v7406, %v9334
        %v9524 = vsel %vm1830, %v7409, %v9336
        %v9525 = vsel %vm1830, %v7412, %v9338
        %v9526 = vsel %vm1830, %v7415, %v9340
        %v9527 = vsel %vm1830, %v7418, %v9342
        %v9528 = vsel %vm1830, %v7486, %v9344
        %v9529 = vsel %vm1830, %v7489, %v9346
        %v9530 = vsel %vm1830, %v7492, %v9348
        %v9531 = vsel %vm1830, %v7495, %v9350
        %v9532 = vsel %vm1830, %v7498, %v9352
        %v9533 = vsel %vm1830, %v7501, %v9354
        %v9534 = vsel %vm1830, %v7504, %v9356
        %v9535 = vsel %vm1830, %v7507, %v9358
        %v9536 = vsel %vm1830, %v7575, %v9360
        %v9537 = vsel %vm1830, %v7578, %v9362
        %v9538 = vsel %vm1830, %v7581, %v9364
        %v9539 = vsel %vm1830, %v7584, %v9366
        %v9540 = vsel %vm1830, %v7587, %v9368
        %v9541 = vsel %vm1830, %v7590, %v9370
        %v9542 = vsel %vm1830, %v7593, %v9372
        %v9543 = vsel %vm1830, %v7596, %v9374
        %v9544 = vsel %vm1830, %v7664, %v9376
        %v9545 = vsel %vm1830, %v7667, %v9378
        %v9546 = vsel %vm1830, %v7670, %v9380
        %v9547 = vsel %vm1830, %v7673, %v9382
        %v9548 = vsel %vm1830, %v7676, %v9384
        %v9549 = vsel %vm1830, %v7679, %v9386
        %v9550 = vsel %vm1830, %v7682, %v9388
        %v9551 = vsel %vm1830, %v7685, %v9390
        %9552 = vst [vmem:[%s181] sm:$0xff] %v9488
        %9553 = vst.msk [vmem:[%s181 + $0x8] sm:$0xff] %vm368, %v9520
        %9554 = vst [vmem:[%s181 + $0x10] sm:$0xff] %v9489
        %9555 = vst.msk [vmem:[%s181 + $0x18] sm:$0xff] %vm368, %v9521
        %9556 = vst [vmem:[%s181 + $0x20] sm:$0xff] %v9490
        %9557 = vst.msk [vmem:[%s181 + $0x28] sm:$0xff] %vm368, %v9522
        %9558 = vst [vmem:[%s181 + $0x30] sm:$0xff] %v9491
        %9559 = vst.msk [vmem:[%s181 + $0x38] sm:$0xff] %vm368, %v9523
        %9560 = vst [vmem:[%s181 + $0x40] sm:$0xff] %v9492
        %9561 = vst.msk [vmem:[%s181 + $0x48] sm:$0xff] %vm368, %v9524
        %9562 = vst [vmem:[%s181 + $0x50] sm:$0xff] %v9493
        %9563 = vst.msk [vmem:[%s181 + $0x58] sm:$0xff] %vm368, %v9525
        %9564 = vst [vmem:[%s181 + $0x60] sm:$0xff] %v9494
        %9565 = vst.msk [vmem:[%s181 + $0x68] sm:$0xff] %vm368, %v9526
        %9566 = vst [vmem:[%s181 + $0x70] sm:$0xff] %v9495
        %9567 = vst.msk [vmem:[%s181 + $0x78] sm:$0xff] %vm368, %v9527
        %9568 = vst [vmem:[%s181 + $0x80] sm:$0xff] %v9496
        %9569 = vst.msk [vmem:[%s181 + $0x88] sm:$0xff] %vm368, %v9528
        %9570 = vst [vmem:[%s181 + $0x90] sm:$0xff] %v9497
        %9571 = vst.msk [vmem:[%s181 + $0x98] sm:$0xff] %vm368, %v9529
        %9572 = vst [vmem:[%s181 + $0xa0] sm:$0xff] %v9498
        %9573 = vst.msk [vmem:[%s181 + $0xa8] sm:$0xff] %vm368, %v9530
        %9574 = vst [vmem:[%s181 + $0xb0] sm:$0xff] %v9499
        %9575 = vst.msk [vmem:[%s181 + $0xb8] sm:$0xff] %vm368, %v9531
        %9576 = vst [vmem:[%s181 + $0xc0] sm:$0xff] %v9500
        %9577 = vst.msk [vmem:[%s181 + $0xc8] sm:$0xff] %vm368, %v9532
        %9578 = vst [vmem:[%s181 + $0xd0] sm:$0xff] %v9501
        %9579 = vst.msk [vmem:[%s181 + $0xd8] sm:$0xff] %vm368, %v9533
        %9580 = vst [vmem:[%s181 + $0xe0] sm:$0xff] %v9502
        %9581 = vst.msk [vmem:[%s181 + $0xe8] sm:$0xff] %vm368, %v9534
        %9582 = vst [vmem:[%s181 + $0xf0] sm:$0xff] %v9503
        %9583 = vst.msk [vmem:[%s181 + $0xf8] sm:$0xff] %vm368, %v9535
        %9584 = vst [vmem:[%s181 + $0x100] sm:$0xff] %v9504
        %9585 = vst.msk [vmem:[%s181 + $0x108] sm:$0xff] %vm368, %v9536
        %9586 = vst [vmem:[%s181 + $0x110] sm:$0xff] %v9505
        %9587 = vst.msk [vmem:[%s181 + $0x118] sm:$0xff] %vm368, %v9537
        %9588 = vst [vmem:[%s181 + $0x120] sm:$0xff] %v9506
        %9589 = vst.msk [vmem:[%s181 + $0x128] sm:$0xff] %vm368, %v9538
        %9590 = vst [vmem:[%s181 + $0x130] sm:$0xff] %v9507
        %9591 = vst.msk [vmem:[%s181 + $0x138] sm:$0xff] %vm368, %v9539
        %9592 = vst [vmem:[%s181 + $0x140] sm:$0xff] %v9508
        %9593 = vst.msk [vmem:[%s181 + $0x148] sm:$0xff] %vm368, %v9540
        %9594 = vst [vmem:[%s181 + $0x150] sm:$0xff] %v9509
        %9595 = vst.msk [vmem:[%s181 + $0x158] sm:$0xff] %vm368, %v9541
        %9596 = vst [vmem:[%s181 + $0x160] sm:$0xff] %v9510
        %9597 = vst.msk [vmem:[%s181 + $0x168] sm:$0xff] %vm368, %v9542
        %9598 = vst [vmem:[%s181 + $0x170] sm:$0xff] %v9511
        %9599 = vst.msk [vmem:[%s181 + $0x178] sm:$0xff] %vm368, %v9543
        %9600 = vst [vmem:[%s181 + $0x180] sm:$0xff] %v9512
        %9601 = vst.msk [vmem:[%s181 + $0x188] sm:$0xff] %vm368, %v9544
        %9602 = vst [vmem:[%s181 + $0x190] sm:$0xff] %v9513
        %9603 = vst.msk [vmem:[%s181 + $0x198] sm:$0xff] %vm368, %v9545
        %9604 = vst [vmem:[%s181 + $0x1a0] sm:$0xff] %v9514
        %9605 = vst.msk [vmem:[%s181 + $0x1a8] sm:$0xff] %vm368, %v9546
        %9606 = vst [vmem:[%s181 + $0x1b0] sm:$0xff] %v9515
        %9607 = vst.msk [vmem:[%s181 + $0x1b8] sm:$0xff] %vm368, %v9547
        %9608 = vst [vmem:[%s181 + $0x1c0] sm:$0xff] %v9516
        %9609 = vst.msk [vmem:[%s181 + $0x1c8] sm:$0xff] %vm368, %v9548
        %9610 = vst [vmem:[%s181 + $0x1d0] sm:$0xff] %v9517
        %9611 = vst.msk [vmem:[%s181 + $0x1d8] sm:$0xff] %vm368, %v9549
        %9612 = vst [vmem:[%s181 + $0x1e0] sm:$0xff] %v9518
        %9613 = vst.msk [vmem:[%s181 + $0x1e8] sm:$0xff] %vm368, %v9550
        %9614 = vst [vmem:[%s181 + $0x1f0] sm:$0xff] %v9519
        %9615 = vst.msk [vmem:[%s181 + $0x1f8] sm:$0xff] %vm368, %v9551
        %s9616 = sand.u32 %s75, 1
        %s9617 = scalar_lea.sflag [#allocation5], %s9616
        %s9618 = sand.u32 %s75, 1
        %s9619 = smul.addr %s9618, 512
        %s9620 = scalar_lea.vmem [#allocation8], %s9619
        // Predicated region
        $region37: #{tpu_custom_call.1} parent=27 // pred_check
          %p9621 = pneg %p85
        $region38: #{tpu_custom_call.1} parent=27 // pred_check_branch
          %9623 = sbr.rel (%p9621) target = $region40
        $region39: #{tpu_custom_call.1} parent=27 // pred_region
          %s9624 = smul.u32 4, %s20
          %9626 = vsyncadd %s9617, 0
          %s9627 = smul.addr %s9624, 16
          %s9628 = smul.addr %s9627, 8
          %s9629 = scalar_lea.hbm %s2, %s9628
          %s9630 = sshll.u32 %s9620, 4
          %s9631 = int_to_ptr.vmem [resolvable:$true] %s9630
          %s9632 = sshll.u32 %s9629, 4
          %s9633 = int_to_ptr.hbm [resolvable:$true] %s9632
          %9638 = dma.vmem_to_hbm [thread:$0]  %s9631, 8192, %s9633, %s9617, 256, 256, 16
        $region40: #{tpu_custom_call.1} parent=27 // pred_fallthru
          _
      $region28: #{tpu_custom_call.1} parent=5 // pred_fallthru
        _
      %p9639 = scmp.le.s32.totalorder 2, %s15
      // Predicated region
      $region41: #{tpu_custom_call.1} parent=5 // pred_check
        %p9640 = pneg %p9639
      $region42: #{tpu_custom_call.1} parent=5 // pred_check_branch
        %9642 = sbr.rel (%p9640) target = $region44
      $region43: #{tpu_custom_call.1} parent=5 // pred_region
        %s9643 = ssub.s32 %s15, 2
        // Predicated region
        $region45: #{tpu_custom_call.1} parent=43 // pred_check
          %p9644 = pneg %p91
        $region46: #{tpu_custom_call.1} parent=43 // pred_check_branch
          %9646 = sbr.rel (%p9644) target = $region48
        $region47: #{tpu_custom_call.1} parent=43 // pred_region
          %s9647 = sand.u32 %s76, 1
          %s9648 = scalar_lea.sflag [#allocation5], %s9647
          %s9649 = sand.u32 %s76, 1
          %s9650 = smul.addr %s9649, 512
          %s9651 = scalar_lea.vmem [#allocation8], %s9650
          %9653 = dma.done %s9648, 8192
        $region48: #{tpu_custom_call.1} parent=43 // pred_fallthru
          _
      $region44: #{tpu_custom_call.1} parent=5 // pred_fallthru
        _
    $region6: #{tpu_custom_call.1} parent=1 // loop_footer
      %s19 = sadd.s32 1, %s15
    $region7: #{tpu_custom_call.1} parent=1 // loop_footer_branch
      %14 = sbr.rel target = $region3
    $region8: #{tpu_custom_call.1} parent=1 // loop_exit
      _
    %9654 = vsyncpa [#allocation4], 1
    %s9655 = scalar_lea.sflag [#allocation4], 1
    %9656 = vsyncpa %s9655, 1
    %9657 = vsyncpa [#allocation7], 1
    %9658 = vsyncpa [#allocation5], 1
    %s9659 = scalar_lea.sflag [#allocation5], 1
    %9660 = vsyncpa %s9659, 1

</llo_original>
